<compile_context>
chip_gen: v7x
topology: tpu7x:2x2x1
jax: 0.10.0
libtpu: 0.0.40
codegen_flags: <defaults>
</compile_context>

<pallas_src>
import jax
import jax.numpy as jnp
from jax.experimental import pallas as pl
from jax.experimental.pallas import tpu as pltpu


def _round_up(x: int, m: int) -> int:
    return (x + m - 1) // m * m


# ---------------------------------------------------------------------------
# Kernel body
# ---------------------------------------------------------------------------
def _mlp_kernel(x_ref, w1_ref, b1_ref, w2_ref, b2_ref, o_ref):
    # In-kernel cast of the activation tile to the matmul dtype (bf16 by default).
    # Doing the cast here instead of a separate XLA pass halves x HBM traffic; the
    # VPU cast is free filler under the MXU on all generations.
    x = x_ref[...].astype(w1_ref.dtype)
    # fc1: MXU matmul with f32 accumulation.
    h = jnp.dot(x, w1_ref[...], preferred_element_type=jnp.float32)
    # Bias add + ReLU in f32 on the VPU (b1 is (1, Hp), broadcasts over the batch tile).
    h = jnp.maximum(h + b1_ref[...], 0.0)
    # Dropout(p=0.8) in eval mode == identity (no mask, no 1/(1-p) scale).
    # fc2: cast activations back to the matmul dtype for the second MXU dot.
    h = h.astype(w2_ref.dtype)
    out = jnp.dot(h, w2_ref[...], preferred_element_type=jnp.float32) + b2_ref[...]
    o_ref[...] = out.astype(o_ref.dtype)


# ---------------------------------------------------------------------------
# One-time parameter preparation (do this at init, NOT per forward call)
# ---------------------------------------------------------------------------
def pad_classifier_params(w1, b1, w2, b2, *, matmul_dtype=jnp.bfloat16):
    """Lane-dense padding + dtype cast of the head parameters.

    w1: [F_in, H] fc1 weight stored [in, out];  b1: [H]
    w2: [H, C]    fc2 weight stored [in, out];  b2: [C]
    Returns (padded_params, (F_in, H, C)).  Padded dims are multiples of 128 so the
    kernel runs full-lane MXU tiles and unmasked vector stores; zero padding keeps the
    math exact (padded rows/cols contribute nothing, extra logits are sliced off).
    """
    F_in, H = w1.shape
    H2, C = w2.shape
    assert H2 == H, "fc1 output dim must match fc2 input dim"
    Fp, Hp, Cp = _round_up(F_in, 128), _round_up(H, 128), _round_up(C, 128)
    mm = jnp.dtype(matmul_dtype) if matmul_dtype is not None else jnp.dtype(jnp.float32)

    w1_p = jnp.zeros((Fp, Hp), mm).at[:F_in, :H].set(w1.astype(mm))
    b1_p = jnp.zeros((1, Hp), jnp.float32).at[0, :H].set(b1.astype(jnp.float32))
    w2_p = jnp.zeros((Hp, Cp), mm).at[:H, :C].set(w2.astype(mm))
    b2_p = jnp.zeros((1, Cp), jnp.float32).at[0, :C].set(b2.astype(jnp.float32))
    return (w1_p, b1_p, w2_p, b2_p), (F_in, H, C)


# ---------------------------------------------------------------------------
# pallas_call builder
# ---------------------------------------------------------------------------
def _build_classifier_call(TB, Bp, Fp, Hp, Cp, *, single_buffer_weights):
    # Resident operands (constant index_map) never re-fetch; single-buffering them
    # halves their VMEM footprint.
    res = dict(pipeline_mode=pl.Buffered(1)) if single_buffer_weights else {}
    return pl.pallas_call(
        _mlp_kernel,
        out_shape=jax.ShapeDtypeStruct((Bp, Cp), jnp.float32),
        grid=(Bp // TB,),
        in_specs=[
            pl.BlockSpec((TB, Fp), lambda i: (i, 0)),          # x: tiled over batch
            pl.BlockSpec((Fp, Hp), lambda i: (0, 0), **res),   # W1: resident
            pl.BlockSpec((1, Hp), lambda i: (0, 0), **res),    # b1: resident
            pl.BlockSpec((Hp, Cp), lambda i: (0, 0), **res),   # W2: resident
            pl.BlockSpec((1, Cp), lambda i: (0, 0), **res),    # b2: resident
        ],
        out_specs=pl.BlockSpec((TB, Cp), lambda i: (i, 0)),
        compiler_params=pltpu.CompilerParams(
            dimension_semantics=("parallel",),   # batch axis shards across TCs (v7x megacore)
        ),
    )


_SINGLE_BUFFER_WEIGHTS = True  # flipped off once if this jax build rejects pl.Buffered(1)


def custom_classifier_forward(x, padded_params, dims, *, block_b=256):
    """Classifier head forward: fc1 -> ReLU -> Dropout(eval, identity) -> fc2.

    x:             [B, F_in] flattened pooled features (f32 or bf16).
    padded_params: output of pad_classifier_params (padded once at init).
    dims:          (F_in, H, C) logical dims.
    Returns [B, C] float32 logits.
    """
    global _SINGLE_BUFFER_WEIGHTS
    w1_p, b1_p, w2_p, b2_p = padded_params
    F_in, H, C = dims
    B = x.shape[0]
    Fp, Hp = w1_p.shape
    Cp = w2_p.shape[1]
    assert x.shape[1] == F_in

    # Batch tile: multiple of the packed sublane granularity (16 for bf16, 8 for f32),
    # capped by block_b.  Pad B up to a tile multiple only if needed.
    sub = 16 if w1_p.dtype == jnp.bfloat16 else 8
    TB = min(_round_up(block_b, sub), _round_up(B, sub))
    Bp = _round_up(B, TB)

    # Only materialize a padded copy of x when the shapes actually need it; in the
    # common aligned case x is fed straight to the kernel and cast on-tile in-kernel.
    if (Bp, Fp) != (B, F_in):
        x_in = jnp.zeros((Bp, Fp), x.dtype).at[:B, :F_in].set(x)
    else:
        x_in = x

    args = (x_in, w1_p, b1_p, w2_p, b2_p)
    try:
        out_padded = _build_classifier_call(
            TB, Bp, Fp, Hp, Cp, single_buffer_weights=_SINGLE_BUFFER_WEIGHTS)(*args)
    except Exception:
        if not _SINGLE_BUFFER_WEIGHTS:
            raise
        # Fallback: this jax/Mosaic build rejects pl.Buffered(1); default double
        # buffering gives identical results, just a larger resident-weight footprint.
        _SINGLE_BUFFER_WEIGHTS = False
        out_padded = _build_classifier_call(
            TB, Bp, Fp, Hp, Cp, single_buffer_weights=False)(*args)

    return out_padded[:B, :C]


# ---------------------------------------------------------------------------
# Plain-JAX reference
# ---------------------------------------------------------------------------
def reference_forward(x, w1, b1, w2, b2, matmul_dtype=jnp.bfloat16):
    """Reference with the same matmul-input casts as the kernel."""
    mm = matmul_dtype if matmul_dtype is not None else x.dtype
    h = jnp.dot(x.astype(mm), w1.astype(mm),
                preferred_element_type=jnp.float32) + b1.astype(jnp.float32)
    h = jnp.maximum(h, 0.0)
    out = jnp.dot(h.astype(mm), w2.astype(mm),
                  preferred_element_type=jnp.float32) + b2.astype(jnp.float32)
    return out


if __name__ == "__main__":
    # Shapes consistent with CustomResNet50: ResNet-50 pooled features (2048)
    # -> hidden_features=512 -> num_classes=10, at a small test batch.
    batch = 16
    input_features = 2048
    hidden_features = 512
    num_classes = 10

    key = jax.random.PRNGKey(0)
    kx, kw1, kb1, kw2, kb2 = jax.random.split(key, 5)

    x = jax.random.normal(kx, (batch, input_features), dtype=jnp.float32)

    # PyTorch-Linear-like uniform init (fan_in based), stored as [in, out].
    lim1 = 1.0 / jnp.sqrt(input_features)
    w1 = jax.random.uniform(kw1, (input_features, hidden_features),
                            minval=-lim1, maxval=lim1, dtype=jnp.float32)
    b1 = jax.random.uniform(kb1, (hidden_features,), minval=-lim1, maxval=lim1,
                            dtype=jnp.float32)
    lim2 = 1.0 / jnp.sqrt(hidden_features)
    w2 = jax.random.uniform(kw2, (hidden_features, num_classes),
                            minval=-lim2, maxval=lim2, dtype=jnp.float32)
    b2 = jax.random.uniform(kb2, (num_classes,), minval=-lim2, maxval=lim2,
                            dtype=jnp.float32)

    # --- bf16-MXU path (default configuration), aligned batch -----------------
    params_bf16, dims = pad_classifier_params(w1, b1, w2, b2, matmul_dtype=jnp.bfloat16)
    out_bf16 = custom_classifier_forward(x, params_bf16, dims, block_b=256)
    out_bf16 = jax.block_until_ready(out_bf16)
    ref_bf16 = reference_forward(x, w1, b1, w2, b2, matmul_dtype=jnp.bfloat16)
    assert out_bf16.shape == (batch, num_classes)
    assert jnp.allclose(out_bf16, ref_bf16, atol=2e-2, rtol=2e-2), \
        "bf16 path mismatch vs reference"

    # --- pure-f32 path with an unaligned batch (exercises the x-padding path) -
    xb = x[:batch - 3]  # B = 13: not a multiple of the sublane tile
    params_f32, dims_f32 = pad_classifier_params(w1, b1, w2, b2, matmul_dtype=None)
    out_f32 = custom_classifier_forward(xb, params_f32, dims_f32, block_b=128)
    out_f32 = jax.block_until_ready(out_f32)
    ref_f32 = reference_forward(xb, w1, b1, w2, b2, matmul_dtype=None)
    assert out_f32.shape == (batch - 3, num_classes)
    assert jnp.allclose(out_f32, ref_f32, atol=1e-2, rtol=1e-2), \
        "f32 path mismatch vs reference"

    print("KERNEL_OK")
</pallas_src>

<mosaic_0001>
module attributes {stable_mosaic.version = 11 : i64} {
  func.func @_mlp_kernel(%arg0: i32, %arg1: memref<16x2048xf32, #tpu.memory_space<vmem>>, %arg2: memref<2048x512xbf16, #tpu.memory_space<vmem>>, %arg3: memref<1x512xf32, #tpu.memory_space<vmem>>, %arg4: memref<512x128xbf16, #tpu.memory_space<vmem>>, %arg5: memref<1x128xf32, #tpu.memory_space<vmem>>, %arg6: memref<16x128xf32, #tpu.memory_space<vmem>>) attributes {dimension_semantics = [#tpu.dimension_semantics<parallel>], iteration_bounds = array<i64: 1>, scalar_prefetch = 0 : i64, scratch_operands = 0 : i64, tpu.core_type = #tpu.core_type<tc>, window_params = [{transform_indices = @transform_0, window_bounds = array<i64: 16, 2048>}, {pipeline_mode = #tpu.pipeline_mode<synchronous>, transform_indices = @transform_1, window_bounds = array<i64: 2048, 512>}, {pipeline_mode = #tpu.pipeline_mode<synchronous>, transform_indices = @transform_2, window_bounds = array<i64: 1, 512>}, {pipeline_mode = #tpu.pipeline_mode<synchronous>, transform_indices = @transform_3, window_bounds = array<i64: 512, 128>}, {pipeline_mode = #tpu.pipeline_mode<synchronous>, transform_indices = @transform_4, window_bounds = array<i64: 1, 128>}, {transform_indices = @transform_5, window_bounds = array<i64: 16, 128>}]} {
    %c0 = arith.constant 0 : index
    %c0_0 = arith.constant 0 : index
    %0 = vector.load %arg1[%c0, %c0_0] : memref<16x2048xf32, #tpu.memory_space<vmem>>, vector<16x2048xf32>
    %1 = arith.truncf %0 : vector<16x2048xf32> to vector<16x2048xbf16>
    %c0_1 = arith.constant 0 : index
    %c0_2 = arith.constant 0 : index
    %2 = vector.load %arg2[%c0_1, %c0_2] : memref<2048x512xbf16, #tpu.memory_space<vmem>>, vector<2048x512xbf16>
    %cst = arith.constant dense<0.000000e+00> : vector<16x512xf32>
    %3 = tpu.matmul %1, %2, %cst {dimension_numbers = #tpu.dot_dimension_numbers<[1], [0], [0], [1], [0, 0, 1, 1], [], []>} : vector<16x2048xbf16>, vector<2048x512xbf16>, vector<16x512xf32> -> vector<16x512xf32>
    %c0_3 = arith.constant 0 : index
    %c0_4 = arith.constant 0 : index
    %4 = vector.load %arg3[%c0_3, %c0_4] : memref<1x512xf32, #tpu.memory_space<vmem>>, vector<1x512xf32>
    %5 = vector.broadcast %4 : vector<1x512xf32> to vector<16x512xf32>
    %6 = arith.addf %3, %5 : vector<16x512xf32>
    %cst_5 = arith.constant 0.000000e+00 : f32
    %7 = vector.broadcast %cst_5 : f32 to vector<16x512xf32>
    %8 = arith.maximumf %6, %7 : vector<16x512xf32>
    %9 = arith.truncf %8 : vector<16x512xf32> to vector<16x512xbf16>
    %c0_6 = arith.constant 0 : index
    %c0_7 = arith.constant 0 : index
    %10 = vector.load %arg4[%c0_6, %c0_7] : memref<512x128xbf16, #tpu.memory_space<vmem>>, vector<512x128xbf16>
    %cst_8 = arith.constant dense<0.000000e+00> : vector<16x128xf32>
    %11 = tpu.matmul %9, %10, %cst_8 {dimension_numbers = #tpu.dot_dimension_numbers<[1], [0], [0], [1], [0, 0, 1, 1], [], []>} : vector<16x512xbf16>, vector<512x128xbf16>, vector<16x128xf32> -> vector<16x128xf32>
    %c0_9 = arith.constant 0 : index
    %c0_10 = arith.constant 0 : index
    %12 = vector.load %arg5[%c0_9, %c0_10] : memref<1x128xf32, #tpu.memory_space<vmem>>, vector<1x128xf32>
    %13 = vector.broadcast %12 : vector<1x128xf32> to vector<16x128xf32>
    %14 = arith.addf %11, %13 : vector<16x128xf32>
    %c0_11 = arith.constant 0 : index
    %c0_12 = arith.constant 0 : index
    %15 = vector.load %arg6[%c0_11, %c0_12] : memref<16x128xf32, #tpu.memory_space<vmem>>, vector<16x128xf32>
    tpu.vector_store %arg6[%c0_11, %c0_12], %14 {strides = array<i32>} : memref<16x128xf32, #tpu.memory_space<vmem>>, vector<16x128xf32>,
    return
  }
  func.func @transform_0(%arg0: i32) -> (i32, i32) {
    %c0_i32 = arith.constant 0 : i32
    %c0_i32_0 = arith.constant 0 : i32
    return %arg0, %c0_i32 : i32, i32
  }
  func.func @transform_1(%arg0: i32) -> (i32, i32) {
    %c0_i32 = arith.constant 0 : i32
    %c0_i32_0 = arith.constant 0 : i32
    %c0_i32_1 = arith.constant 0 : i32
    return %c0_i32, %c0_i32_0 : i32, i32
  }
  func.func @transform_2(%arg0: i32) -> (i32, i32) {
    %c0_i32 = arith.constant 0 : i32
    %c0_i32_0 = arith.constant 0 : i32
    %c0_i32_1 = arith.constant 0 : i32
    return %c0_i32, %c0_i32_0 : i32, i32
  }
  func.func @transform_3(%arg0: i32) -> (i32, i32) {
    %c0_i32 = arith.constant 0 : i32
    %c0_i32_0 = arith.constant 0 : i32
    %c0_i32_1 = arith.constant 0 : i32
    return %c0_i32, %c0_i32_0 : i32, i32
  }
  func.func @transform_4(%arg0: i32) -> (i32, i32) {
    %c0_i32 = arith.constant 0 : i32
    %c0_i32_0 = arith.constant 0 : i32
    %c0_i32_1 = arith.constant 0 : i32
    return %c0_i32, %c0_i32_0 : i32, i32
  }
  func.func @transform_5(%arg0: i32) -> (i32, i32) {
    %c0_i32 = arith.constant 0 : i32
    %c0_i32_0 = arith.constant 0 : i32
    return %arg0, %c0_i32 : i32, i32
  }
}

module attributes {stable_mosaic.version = 11 : i64} {
  func.func @_mlp_kernel(%arg0: i32, %arg1: memref<16x2048xf32, #tpu.memory_space<vmem>>, %arg2: memref<2048x512xbf16, #tpu.memory_space<vmem>>, %arg3: memref<1x512xf32, #tpu.memory_space<vmem>>, %arg4: memref<512x128xbf16, #tpu.memory_space<vmem>>, %arg5: memref<1x128xf32, #tpu.memory_space<vmem>>, %arg6: memref<16x128xf32, #tpu.memory_space<vmem>>) attributes {dimension_semantics = [#tpu.dimension_semantics<parallel>], iteration_bounds = array<i64: 1>, scalar_prefetch = 0 : i64, scratch_operands = 0 : i64, tpu.core_type = #tpu.core_type<tc>, window_params = [{transform_indices = @transform_0, window_bounds = array<i64: 16, 2048>}, {pipeline_mode = #tpu.pipeline_mode<synchronous>, transform_indices = @transform_1, window_bounds = array<i64: 2048, 512>}, {pipeline_mode = #tpu.pipeline_mode<synchronous>, transform_indices = @transform_2, window_bounds = array<i64: 1, 512>}, {pipeline_mode = #tpu.pipeline_mode<synchronous>, transform_indices = @transform_3, window_bounds = array<i64: 512, 128>}, {pipeline_mode = #tpu.pipeline_mode<synchronous>, transform_indices = @transform_4, window_bounds = array<i64: 1, 128>}, {transform_indices = @transform_5, window_bounds = array<i64: 16, 128>}]} {
    %c0 = arith.constant 0 : index
    %c0_0 = arith.constant 0 : index
    %0 = vector.load %arg1[%c0, %c0_0] : memref<16x2048xf32, #tpu.memory_space<vmem>>, vector<16x2048xf32>
    %1 = arith.truncf %0 : vector<16x2048xf32> to vector<16x2048xbf16>
    %c0_1 = arith.constant 0 : index
    %c0_2 = arith.constant 0 : index
    %2 = vector.load %arg2[%c0_1, %c0_2] : memref<2048x512xbf16, #tpu.memory_space<vmem>>, vector<2048x512xbf16>
    %cst = arith.constant dense<0.000000e+00> : vector<16x512xf32>
    %3 = tpu.matmul %1, %2, %cst {dimension_numbers = #tpu.dot_dimension_numbers<[1], [0], [0], [1], [0, 0, 1, 1], [], []>} : vector<16x2048xbf16>, vector<2048x512xbf16>, vector<16x512xf32> -> vector<16x512xf32>
    %c0_3 = arith.constant 0 : index
    %c0_4 = arith.constant 0 : index
    %4 = vector.load %arg3[%c0_3, %c0_4] : memref<1x512xf32, #tpu.memory_space<vmem>>, vector<1x512xf32>
    %5 = vector.broadcast %4 : vector<1x512xf32> to vector<16x512xf32>
    %6 = arith.addf %3, %5 : vector<16x512xf32>
    %cst_5 = arith.constant 0.000000e+00 : f32
    %7 = vector.broadcast %cst_5 : f32 to vector<16x512xf32>
    %8 = arith.maximumf %6, %7 : vector<16x512xf32>
    %9 = arith.truncf %8 : vector<16x512xf32> to vector<16x512xbf16>
    %c0_6 = arith.constant 0 : index
    %c0_7 = arith.constant 0 : index
    %10 = vector.load %arg4[%c0_6, %c0_7] : memref<512x128xbf16, #tpu.memory_space<vmem>>, vector<512x128xbf16>
    %cst_8 = arith.constant dense<0.000000e+00> : vector<16x128xf32>
    %11 = tpu.matmul %9, %10, %cst_8 {dimension_numbers = #tpu.dot_dimension_numbers<[1], [0], [0], [1], [0, 0, 1, 1], [], []>} : vector<16x512xbf16>, vector<512x128xbf16>, vector<16x128xf32> -> vector<16x128xf32>
    %c0_9 = arith.constant 0 : index
    %c0_10 = arith.constant 0 : index
    %12 = vector.load %arg5[%c0_9, %c0_10] : memref<1x128xf32, #tpu.memory_space<vmem>>, vector<1x128xf32>
    %13 = vector.broadcast %12 : vector<1x128xf32> to vector<16x128xf32>
    %14 = arith.addf %11, %13 : vector<16x128xf32>
    %c0_11 = arith.constant 0 : index
    %c0_12 = arith.constant 0 : index
    %15 = vector.load %arg6[%c0_11, %c0_12] : memref<16x128xf32, #tpu.memory_space<vmem>>, vector<16x128xf32>
    tpu.vector_store %arg6[%c0_11, %c0_12], %14 {strides = array<i32>} : memref<16x128xf32, #tpu.memory_space<vmem>>, vector<16x128xf32>,
    return
  }
  func.func @transform_0(%arg0: i32) -> (i32, i32) {
    %c0_i32 = arith.constant 0 : i32
    %c0_i32_0 = arith.constant 0 : i32
    return %arg0, %c0_i32 : i32, i32
  }
  func.func @transform_1(%arg0: i32) -> (i32, i32) {
    %c0_i32 = arith.constant 0 : i32
    %c0_i32_0 = arith.constant 0 : i32
    %c0_i32_1 = arith.constant 0 : i32
    return %c0_i32, %c0_i32_0 : i32, i32
  }
  func.func @transform_2(%arg0: i32) -> (i32, i32) {
    %c0_i32 = arith.constant 0 : i32
    %c0_i32_0 = arith.constant 0 : i32
    %c0_i32_1 = arith.constant 0 : i32
    return %c0_i32, %c0_i32_0 : i32, i32
  }
  func.func @transform_3(%arg0: i32) -> (i32, i32) {
    %c0_i32 = arith.constant 0 : i32
    %c0_i32_0 = arith.constant 0 : i32
    %c0_i32_1 = arith.constant 0 : i32
    return %c0_i32, %c0_i32_0 : i32, i32
  }
  func.func @transform_4(%arg0: i32) -> (i32, i32) {
    %c0_i32 = arith.constant 0 : i32
    %c0_i32_0 = arith.constant 0 : i32
    %c0_i32_1 = arith.constant 0 : i32
    return %c0_i32, %c0_i32_0 : i32, i32
  }
  func.func @transform_5(%arg0: i32) -> (i32, i32) {
    %c0_i32 = arith.constant 0 : i32
    %c0_i32_0 = arith.constant 0 : i32
    return %arg0, %c0_i32 : i32, i32
  }
}

</mosaic_0001>

<llo_original>
// kernel: tpu_custom_call.1
$region0: #{tpu_custom_call.1}
  #allocation0 [shape = 'u32[]', space=smem, size = 0x4, offset = 0x4, fixed_abs, tag = 'smem constant byte address 0x4 - core index']
  #allocation1 [shape = 'u32[144,128]{1,0:T(1,128)}', space=vmem, size = 0x12000, scoped, tag = 'internal scratch']
  %s0 = inlined_call_operand.hbm [shape: f32[16,2048], index: 0, kind: input, shape index: {}]
  %s1 = inlined_call_operand.hbm [shape: bf16[2048,512], index: 1, kind: input, shape index: {}]
  %s2 = inlined_call_operand.hbm [shape: f32[1,512], index: 2, kind: input, shape index: {}]
  %s3 = inlined_call_operand.hbm [shape: bf16[512,128], index: 3, kind: input, shape index: {}]
  %s4 = inlined_call_operand.hbm [shape: f32[1,128], index: 4, kind: input, shape index: {}]
  %s5 = inlined_call_operand.hbm [shape: f32[16,128], index: 5, kind: output, shape index: {}]
  %s6 = sld [smem:[#allocation0]]
  $region50: #{tpu_custom_call.1} parent=0
    _
  %s8 = ssub.s32 1, %s6
  %s9 = scalar_select 0, %s8, %s6
  $region1: #{tpu_custom_call.1} parent=0
    #allocation2 [shape = 'u8[131072]{0}', space=vmem, size = 0x20000, scoped, tag = 'input window, operand 0, single buffered']
    #allocation3 [shape = 's32[1]{0}', space=sflag, size = 0x4, scoped, tag = 'scoped memory for tpu_custom_call.1']
    #allocation4 [shape = 's32[1]{0}', space=sflag, size = 0x4, scoped, tag = 'scoped memory for tpu_custom_call.1']
    #allocation5 [shape = 'u8[2097152]{0}', space=vmem, size = 0x200000, scoped, tag = 'input window, operand 1, single buffered']
    #allocation6 [shape = 's32[1]{0}', space=sflag, size = 0x4, scoped, tag = 'scoped memory for tpu_custom_call.1']
    #allocation7 [shape = 'u8[2048]{0}', space=vmem, size = 0x800, scoped, tag = 'input window, operand 2, single buffered']
    #allocation8 [shape = 'u8[131072]{0}', space=vmem, size = 0x20000, scoped, tag = 'input window, operand 3, single buffered']
    #allocation9 [shape = 's32[1]{0}', space=sflag, size = 0x4, scoped, tag = 'scoped memory for tpu_custom_call.1']
    #allocation10 [shape = 'u8[512]{0}', space=vmem, size = 0x400, scoped, tag = 'input window, operand 4, single buffered']
    #allocation11 [shape = 'u8[8192]{0}', space=vmem, size = 0x2000, scoped, tag = 'output window, operand 0, single buffered']
    %10 = vsyncpa [#allocation3], 0
    %11 = vsyncpa [#allocation6], 0
    %12 = vsyncpa [#allocation9], 0
    %13 = vsyncpa [#allocation4], 0
    // Predicated region
    $region2: #{tpu_custom_call.1} parent=1 // pred_check
      _
    $region3: #{tpu_custom_call.1} parent=1 // pred_check_branch
      %15 = sbr.rel (0) target = $region5
    $region4: #{tpu_custom_call.1} parent=1 // pred_region
      %s17 = ssub.s32 4096, 4096
      %18 = vsyncadd [#allocation3], %s17
      %s19 = sshll.u32 [#allocation2], 4
      %s20 = int_to_ptr.vmem [resolvable:$true] %s19
      %25 = dma.hbm_to_vmem [thread:$0]  %s0, 4096, %s20, [#allocation3], 2048, 2048, 128
    $region5: #{tpu_custom_call.1} parent=1 // pred_fallthru
      _
    // Predicated region
    $region6: #{tpu_custom_call.1} parent=1 // pred_check
      _
    $region7: #{tpu_custom_call.1} parent=1 // pred_check_branch
      %27 = sbr.rel (0) target = $region9
    $region8: #{tpu_custom_call.1} parent=1 // pred_region
      %s29 = ssub.s32 65536, 65536
      %30 = vsyncadd [#allocation6], %s29
      %s31 = sshll.u32 [#allocation5], 4
      %s32 = int_to_ptr.vmem [resolvable:$true] %s31
      %37 = dma.hbm_to_vmem [thread:$0]  %s1, 65536, %s32, [#allocation6], 256, 256, 16
    $region9: #{tpu_custom_call.1} parent=1 // pred_fallthru
      _
    // Predicated region
    $region10: #{tpu_custom_call.1} parent=1 // pred_check
      _
    $region11: #{tpu_custom_call.1} parent=1 // pred_check_branch
      %39 = sbr.rel (0) target = $region13
    $region12: #{tpu_custom_call.1} parent=1 // pred_region
      %s41 = ssub.s32 64, 64
      %42 = vsyncadd [#allocation6], %s41
      %s44 = sshll.u32 [#allocation7], 4
      %s45 = int_to_ptr.vmem [resolvable:$true] %s44
      %47 = dma.hbm_to_vmem [thread:$0]  %s2, 64, %s45, [#allocation6]
    $region13: #{tpu_custom_call.1} parent=1 // pred_fallthru
      _
    // Predicated region
    $region14: #{tpu_custom_call.1} parent=1 // pred_check
      _
    $region15: #{tpu_custom_call.1} parent=1 // pred_check_branch
      %49 = sbr.rel (0) target = $region17
    $region16: #{tpu_custom_call.1} parent=1 // pred_region
      %s51 = ssub.s32 4096, 4096
      %52 = vsyncadd [#allocation9], %s51
      %s53 = sshll.u32 [#allocation8], 4
      %s54 = int_to_ptr.vmem [resolvable:$true] %s53
      %59 = dma.hbm_to_vmem [thread:$0]  %s3, 4096, %s54, [#allocation9], 64, 64, 4
    $region17: #{tpu_custom_call.1} parent=1 // pred_fallthru
      _
    // Predicated region
    $region18: #{tpu_custom_call.1} parent=1 // pred_check
      _
    $region19: #{tpu_custom_call.1} parent=1 // pred_check_branch
      %61 = sbr.rel (0) target = $region21
    $region20: #{tpu_custom_call.1} parent=1 // pred_region
      %s63 = ssub.s32 16, 16
      %64 = vsyncadd [#allocation9], %s63
      %s66 = sshll.u32 [#allocation10], 4
      %s67 = int_to_ptr.vmem [resolvable:$true] %s66
      %69 = dma.hbm_to_vmem [thread:$0]  %s4, 16, %s67, [#allocation9]
    $region21: #{tpu_custom_call.1} parent=1 // pred_fallthru
      _
    // Predicated region
    $region22: #{tpu_custom_call.1} parent=1 // pred_check
      _
    $region23: #{tpu_custom_call.1} parent=1 // pred_check_branch
      %71 = sbr.rel (0) target = $region25
    $region24: #{tpu_custom_call.1} parent=1 // pred_region
      %72 = dma.done [#allocation3], 4096
    $region25: #{tpu_custom_call.1} parent=1 // pred_fallthru
      _
    // Predicated region
    $region26: #{tpu_custom_call.1} parent=1 // pred_check
      _
    $region27: #{tpu_custom_call.1} parent=1 // pred_check_branch
      %74 = sbr.rel (0) target = $region29
    $region28: #{tpu_custom_call.1} parent=1 // pred_region
      %75 = dma.done [#allocation6], 65536
    $region29: #{tpu_custom_call.1} parent=1 // pred_fallthru
      _
    // Predicated region
    $region30: #{tpu_custom_call.1} parent=1 // pred_check
      _
    $region31: #{tpu_custom_call.1} parent=1 // pred_check_branch
      %77 = sbr.rel (0) target = $region33
    $region32: #{tpu_custom_call.1} parent=1 // pred_region
      %78 = dma.done [#allocation6], 64
    $region33: #{tpu_custom_call.1} parent=1 // pred_fallthru
      _
    // Predicated region
    $region34: #{tpu_custom_call.1} parent=1 // pred_check
      _
    $region35: #{tpu_custom_call.1} parent=1 // pred_check_branch
      %80 = sbr.rel (0) target = $region37
    $region36: #{tpu_custom_call.1} parent=1 // pred_region
      %81 = dma.done [#allocation9], 4096
    $region37: #{tpu_custom_call.1} parent=1 // pred_fallthru
      _
    // Predicated region
    $region38: #{tpu_custom_call.1} parent=1 // pred_check
      _
    $region39: #{tpu_custom_call.1} parent=1 // pred_check_branch
      %83 = sbr.rel (0) target = $region41
    $region40: #{tpu_custom_call.1} parent=1 // pred_region
      %84 = dma.done [#allocation9], 16
    $region41: #{tpu_custom_call.1} parent=1 // pred_fallthru
      _
    %v86 = vld [vmem:[#allocation2] sm:$0xff]
    %v87 = vld [vmem:[#allocation2 + $0x8] sm:$0xff]
    %v88 = vld [vmem:[#allocation2 + $0x10] sm:$0xff]
    %v89 = vld [vmem:[#allocation2 + $0x18] sm:$0xff]
    %v90 = vld [vmem:[#allocation2 + $0x20] sm:$0xff]
    %v91 = vld [vmem:[#allocation2 + $0x28] sm:$0xff]
    %v92 = vld [vmem:[#allocation2 + $0x30] sm:$0xff]
    %v93 = vld [vmem:[#allocation2 + $0x38] sm:$0xff]
    %v94 = vld [vmem:[#allocation2 + $0x40] sm:$0xff]
    %v95 = vld [vmem:[#allocation2 + $0x48] sm:$0xff]
    %v96 = vld [vmem:[#allocation2 + $0x50] sm:$0xff]
    %v97 = vld [vmem:[#allocation2 + $0x58] sm:$0xff]
    %v98 = vld [vmem:[#allocation2 + $0x60] sm:$0xff]
    %v99 = vld [vmem:[#allocation2 + $0x68] sm:$0xff]
    %v100 = vld [vmem:[#allocation2 + $0x70] sm:$0xff]
    %v101 = vld [vmem:[#allocation2 + $0x78] sm:$0xff]
    %v102 = vld [vmem:[#allocation2 + $0x80] sm:$0xff]
    %v103 = vld [vmem:[#allocation2 + $0x88] sm:$0xff]
    %v104 = vld [vmem:[#allocation2 + $0x90] sm:$0xff]
    %v105 = vld [vmem:[#allocation2 + $0x98] sm:$0xff]
    %v106 = vld [vmem:[#allocation2 + $0xa0] sm:$0xff]
    %v107 = vld [vmem:[#allocation2 + $0xa8] sm:$0xff]
    %v108 = vld [vmem:[#allocation2 + $0xb0] sm:$0xff]
    %v109 = vld [vmem:[#allocation2 + $0xb8] sm:$0xff]
    %v110 = vld [vmem:[#allocation2 + $0xc0] sm:$0xff]
    %v111 = vld [vmem:[#allocation2 + $0xc8] sm:$0xff]
    %v112 = vld [vmem:[#allocation2 + $0xd0] sm:$0xff]
    %v113 = vld [vmem:[#allocation2 + $0xd8] sm:$0xff]
    %v114 = vld [vmem:[#allocation2 + $0xe0] sm:$0xff]
    %v115 = vld [vmem:[#allocation2 + $0xe8] sm:$0xff]
    %v116 = vld [vmem:[#allocation2 + $0xf0] sm:$0xff]
    %v117 = vld [vmem:[#allocation2 + $0xf8] sm:$0xff]
    %v118 = vpack.c.bf16 %v102, %v86
    %v119 = vpack.c.bf16 %v103, %v87
    %v120 = vpack.c.bf16 %v104, %v88
    %v121 = vpack.c.bf16 %v105, %v89
    %v122 = vpack.c.bf16 %v106, %v90
    %v123 = vpack.c.bf16 %v107, %v91
    %v124 = vpack.c.bf16 %v108, %v92
    %v125 = vpack.c.bf16 %v109, %v93
    %v126 = vpack.c.bf16 %v110, %v94
    %v127 = vpack.c.bf16 %v111, %v95
    %v128 = vpack.c.bf16 %v112, %v96
    %v129 = vpack.c.bf16 %v113, %v97
    %v130 = vpack.c.bf16 %v114, %v98
    %v131 = vpack.c.bf16 %v115, %v99
    %v132 = vpack.c.bf16 %v116, %v100
    %v133 = vpack.c.bf16 %v117, %v101
    %v134 = vld [vmem:[#allocation5] sm:$0xff]
    %v135 = vld [vmem:[#allocation5 + $0x8] sm:$0xff]
    %v136 = vld [vmem:[#allocation5 + $0x10] sm:$0xff]
    %v137 = vld [vmem:[#allocation5 + $0x18] sm:$0xff]
    %v138 = vld [vmem:[#allocation5 + $0x20] sm:$0xff]
    %v139 = vld [vmem:[#allocation5 + $0x28] sm:$0xff]
    %v140 = vld [vmem:[#allocation5 + $0x30] sm:$0xff]
    %v141 = vld [vmem:[#allocation5 + $0x38] sm:$0xff]
    %v142 = vld [vmem:[#allocation5 + $0x40] sm:$0xff]
    %v143 = vld [vmem:[#allocation5 + $0x48] sm:$0xff]
    %v144 = vld [vmem:[#allocation5 + $0x50] sm:$0xff]
    %v145 = vld [vmem:[#allocation5 + $0x58] sm:$0xff]
    %v146 = vld [vmem:[#allocation5 + $0x60] sm:$0xff]
    %v147 = vld [vmem:[#allocation5 + $0x68] sm:$0xff]
    %v148 = vld [vmem:[#allocation5 + $0x70] sm:$0xff]
    %v149 = vld [vmem:[#allocation5 + $0x78] sm:$0xff]
    %v150 = vld [vmem:[#allocation5 + $0x80] sm:$0xff]
    %v151 = vld [vmem:[#allocation5 + $0x88] sm:$0xff]
    %v152 = vld [vmem:[#allocation5 + $0x90] sm:$0xff]
    %v153 = vld [vmem:[#allocation5 + $0x98] sm:$0xff]
    %v154 = vld [vmem:[#allocation5 + $0xa0] sm:$0xff]
    %v155 = vld [vmem:[#allocation5 + $0xa8] sm:$0xff]
    %v156 = vld [vmem:[#allocation5 + $0xb0] sm:$0xff]
    %v157 = vld [vmem:[#allocation5 + $0xb8] sm:$0xff]
    %v158 = vld [vmem:[#allocation5 + $0xc0] sm:$0xff]
    %v159 = vld [vmem:[#allocation5 + $0xc8] sm:$0xff]
    %v160 = vld [vmem:[#allocation5 + $0xd0] sm:$0xff]
    %v161 = vld [vmem:[#allocation5 + $0xd8] sm:$0xff]
    %v162 = vld [vmem:[#allocation5 + $0xe0] sm:$0xff]
    %v163 = vld [vmem:[#allocation5 + $0xe8] sm:$0xff]
    %v164 = vld [vmem:[#allocation5 + $0xf0] sm:$0xff]
    %v165 = vld [vmem:[#allocation5 + $0xf8] sm:$0xff]
    %v166 = vld [vmem:[#allocation5 + $0x100] sm:$0xff]
    %v167 = vld [vmem:[#allocation5 + $0x108] sm:$0xff]
    %v168 = vld [vmem:[#allocation5 + $0x110] sm:$0xff]
    %v169 = vld [vmem:[#allocation5 + $0x118] sm:$0xff]
    %v170 = vld [vmem:[#allocation5 + $0x120] sm:$0xff]
    %v171 = vld [vmem:[#allocation5 + $0x128] sm:$0xff]
    %v172 = vld [vmem:[#allocation5 + $0x130] sm:$0xff]
    %v173 = vld [vmem:[#allocation5 + $0x138] sm:$0xff]
    %v174 = vld [vmem:[#allocation5 + $0x140] sm:$0xff]
    %v175 = vld [vmem:[#allocation5 + $0x148] sm:$0xff]
    %v176 = vld [vmem:[#allocation5 + $0x150] sm:$0xff]
    %v177 = vld [vmem:[#allocation5 + $0x158] sm:$0xff]
    %v178 = vld [vmem:[#allocation5 + $0x160] sm:$0xff]
    %v179 = vld [vmem:[#allocation5 + $0x168] sm:$0xff]
    %v180 = vld [vmem:[#allocation5 + $0x170] sm:$0xff]
    %v181 = vld [vmem:[#allocation5 + $0x178] sm:$0xff]
    %v182 = vld [vmem:[#allocation5 + $0x180] sm:$0xff]
    %v183 = vld [vmem:[#allocation5 + $0x188] sm:$0xff]
    %v184 = vld [vmem:[#allocation5 + $0x190] sm:$0xff]
    %v185 = vld [vmem:[#allocation5 + $0x198] sm:$0xff]
    %v186 = vld [vmem:[#allocation5 + $0x1a0] sm:$0xff]
    %v187 = vld [vmem:[#allocation5 + $0x1a8] sm:$0xff]
    %v188 = vld [vmem:[#allocation5 + $0x1b0] sm:$0xff]
    %v189 = vld [vmem:[#allocation5 + $0x1b8] sm:$0xff]
    %v190 = vld [vmem:[#allocation5 + $0x1c0] sm:$0xff]
    %v191 = vld [vmem:[#allocation5 + $0x1c8] sm:$0xff]
    %v192 = vld [vmem:[#allocation5 + $0x1d0] sm:$0xff]
    %v193 = vld [vmem:[#allocation5 + $0x1d8] sm:$0xff]
    %v194 = vld [vmem:[#allocation5 + $0x1e0] sm:$0xff]
    %v195 = vld [vmem:[#allocation5 + $0x1e8] sm:$0xff]
    %v196 = vld [vmem:[#allocation5 + $0x1f0] sm:$0xff]
    %v197 = vld [vmem:[#allocation5 + $0x1f8] sm:$0xff]
    %v198 = vld [vmem:[#allocation5 + $0x200] sm:$0xff]
    %v199 = vld [vmem:[#allocation5 + $0x208] sm:$0xff]
    %v200 = vld [vmem:[#allocation5 + $0x210] sm:$0xff]
    %v201 = vld [vmem:[#allocation5 + $0x218] sm:$0xff]
    %v202 = vld [vmem:[#allocation5 + $0x220] sm:$0xff]
    %v203 = vld [vmem:[#allocation5 + $0x228] sm:$0xff]
    %v204 = vld [vmem:[#allocation5 + $0x230] sm:$0xff]
    %v205 = vld [vmem:[#allocation5 + $0x238] sm:$0xff]
    %v206 = vld [vmem:[#allocation5 + $0x240] sm:$0xff]
    %v207 = vld [vmem:[#allocation5 + $0x248] sm:$0xff]
    %v208 = vld [vmem:[#allocation5 + $0x250] sm:$0xff]
    %v209 = vld [vmem:[#allocation5 + $0x258] sm:$0xff]
    %v210 = vld [vmem:[#allocation5 + $0x260] sm:$0xff]
    %v211 = vld [vmem:[#allocation5 + $0x268] sm:$0xff]
    %v212 = vld [vmem:[#allocation5 + $0x270] sm:$0xff]
    %v213 = vld [vmem:[#allocation5 + $0x278] sm:$0xff]
    %v214 = vld [vmem:[#allocation5 + $0x280] sm:$0xff]
    %v215 = vld [vmem:[#allocation5 + $0x288] sm:$0xff]
    %v216 = vld [vmem:[#allocation5 + $0x290] sm:$0xff]
    %v217 = vld [vmem:[#allocation5 + $0x298] sm:$0xff]
    %v218 = vld [vmem:[#allocation5 + $0x2a0] sm:$0xff]
    %v219 = vld [vmem:[#allocation5 + $0x2a8] sm:$0xff]
    %v220 = vld [vmem:[#allocation5 + $0x2b0] sm:$0xff]
    %v221 = vld [vmem:[#allocation5 + $0x2b8] sm:$0xff]
    %v222 = vld [vmem:[#allocation5 + $0x2c0] sm:$0xff]
    %v223 = vld [vmem:[#allocation5 + $0x2c8] sm:$0xff]
    %v224 = vld [vmem:[#allocation5 + $0x2d0] sm:$0xff]
    %v225 = vld [vmem:[#allocation5 + $0x2d8] sm:$0xff]
    %v226 = vld [vmem:[#allocation5 + $0x2e0] sm:$0xff]
    %v227 = vld [vmem:[#allocation5 + $0x2e8] sm:$0xff]
    %v228 = vld [vmem:[#allocation5 + $0x2f0] sm:$0xff]
    %v229 = vld [vmem:[#allocation5 + $0x2f8] sm:$0xff]
    %v230 = vld [vmem:[#allocation5 + $0x300] sm:$0xff]
    %v231 = vld [vmem:[#allocation5 + $0x308] sm:$0xff]
    %v232 = vld [vmem:[#allocation5 + $0x310] sm:$0xff]
    %v233 = vld [vmem:[#allocation5 + $0x318] sm:$0xff]
    %v234 = vld [vmem:[#allocation5 + $0x320] sm:$0xff]
    %v235 = vld [vmem:[#allocation5 + $0x328] sm:$0xff]
    %v236 = vld [vmem:[#allocation5 + $0x330] sm:$0xff]
    %v237 = vld [vmem:[#allocation5 + $0x338] sm:$0xff]
    %v238 = vld [vmem:[#allocation5 + $0x340] sm:$0xff]
    %v239 = vld [vmem:[#allocation5 + $0x348] sm:$0xff]
    %v240 = vld [vmem:[#allocation5 + $0x350] sm:$0xff]
    %v241 = vld [vmem:[#allocation5 + $0x358] sm:$0xff]
    %v242 = vld [vmem:[#allocation5 + $0x360] sm:$0xff]
    %v243 = vld [vmem:[#allocation5 + $0x368] sm:$0xff]
    %v244 = vld [vmem:[#allocation5 + $0x370] sm:$0xff]
    %v245 = vld [vmem:[#allocation5 + $0x378] sm:$0xff]
    %v246 = vld [vmem:[#allocation5 + $0x380] sm:$0xff]
    %v247 = vld [vmem:[#allocation5 + $0x388] sm:$0xff]
    %v248 = vld [vmem:[#allocation5 + $0x390] sm:$0xff]
    %v249 = vld [vmem:[#allocation5 + $0x398] sm:$0xff]
    %v250 = vld [vmem:[#allocation5 + $0x3a0] sm:$0xff]
    %v251 = vld [vmem:[#allocation5 + $0x3a8] sm:$0xff]
    %v252 = vld [vmem:[#allocation5 + $0x3b0] sm:$0xff]
    %v253 = vld [vmem:[#allocation5 + $0x3b8] sm:$0xff]
    %v254 = vld [vmem:[#allocation5 + $0x3c0] sm:$0xff]
    %v255 = vld [vmem:[#allocation5 + $0x3c8] sm:$0xff]
    %v256 = vld [vmem:[#allocation5 + $0x3d0] sm:$0xff]
    %v257 = vld [vmem:[#allocation5 + $0x3d8] sm:$0xff]
    %v258 = vld [vmem:[#allocation5 + $0x3e0] sm:$0xff]
    %v259 = vld [vmem:[#allocation5 + $0x3e8] sm:$0xff]
    %v260 = vld [vmem:[#allocation5 + $0x3f0] sm:$0xff]
    %v261 = vld [vmem:[#allocation5 + $0x3f8] sm:$0xff]
    %v262 = vld [vmem:[#allocation5 + $0x400] sm:$0xff]
    %v263 = vld [vmem:[#allocation5 + $0x408] sm:$0xff]
    %v264 = vld [vmem:[#allocation5 + $0x410] sm:$0xff]
    %v265 = vld [vmem:[#allocation5 + $0x418] sm:$0xff]
    %v266 = vld [vmem:[#allocation5 + $0x420] sm:$0xff]
    %v267 = vld [vmem:[#allocation5 + $0x428] sm:$0xff]
    %v268 = vld [vmem:[#allocation5 + $0x430] sm:$0xff]
    %v269 = vld [vmem:[#allocation5 + $0x438] sm:$0xff]
    %v270 = vld [vmem:[#allocation5 + $0x440] sm:$0xff]
    %v271 = vld [vmem:[#allocation5 + $0x448] sm:$0xff]
    %v272 = vld [vmem:[#allocation5 + $0x450] sm:$0xff]
    %v273 = vld [vmem:[#allocation5 + $0x458] sm:$0xff]
    %v274 = vld [vmem:[#allocation5 + $0x460] sm:$0xff]
    %v275 = vld [vmem:[#allocation5 + $0x468] sm:$0xff]
    %v276 = vld [vmem:[#allocation5 + $0x470] sm:$0xff]
    %v277 = vld [vmem:[#allocation5 + $0x478] sm:$0xff]
    %v278 = vld [vmem:[#allocation5 + $0x480] sm:$0xff]
    %v279 = vld [vmem:[#allocation5 + $0x488] sm:$0xff]
    %v280 = vld [vmem:[#allocation5 + $0x490] sm:$0xff]
    %v281 = vld [vmem:[#allocation5 + $0x498] sm:$0xff]
    %v282 = vld [vmem:[#allocation5 + $0x4a0] sm:$0xff]
    %v283 = vld [vmem:[#allocation5 + $0x4a8] sm:$0xff]
    %v284 = vld [vmem:[#allocation5 + $0x4b0] sm:$0xff]
    %v285 = vld [vmem:[#allocation5 + $0x4b8] sm:$0xff]
    %v286 = vld [vmem:[#allocation5 + $0x4c0] sm:$0xff]
    %v287 = vld [vmem:[#allocation5 + $0x4c8] sm:$0xff]
    %v288 = vld [vmem:[#allocation5 + $0x4d0] sm:$0xff]
    %v289 = vld [vmem:[#allocation5 + $0x4d8] sm:$0xff]
    %v290 = vld [vmem:[#allocation5 + $0x4e0] sm:$0xff]
    %v291 = vld [vmem:[#allocation5 + $0x4e8] sm:$0xff]
    %v292 = vld [vmem:[#allocation5 + $0x4f0] sm:$0xff]
    %v293 = vld [vmem:[#allocation5 + $0x4f8] sm:$0xff]
    %v294 = vld [vmem:[#allocation5 + $0x500] sm:$0xff]
    %v295 = vld [vmem:[#allocation5 + $0x508] sm:$0xff]
    %v296 = vld [vmem:[#allocation5 + $0x510] sm:$0xff]
    %v297 = vld [vmem:[#allocation5 + $0x518] sm:$0xff]
    %v298 = vld [vmem:[#allocation5 + $0x520] sm:$0xff]
    %v299 = vld [vmem:[#allocation5 + $0x528] sm:$0xff]
    %v300 = vld [vmem:[#allocation5 + $0x530] sm:$0xff]
    %v301 = vld [vmem:[#allocation5 + $0x538] sm:$0xff]
    %v302 = vld [vmem:[#allocation5 + $0x540] sm:$0xff]
    %v303 = vld [vmem:[#allocation5 + $0x548] sm:$0xff]
    %v304 = vld [vmem:[#allocation5 + $0x550] sm:$0xff]
    %v305 = vld [vmem:[#allocation5 + $0x558] sm:$0xff]
    %v306 = vld [vmem:[#allocation5 + $0x560] sm:$0xff]
    %v307 = vld [vmem:[#allocation5 + $0x568] sm:$0xff]
    %v308 = vld [vmem:[#allocation5 + $0x570] sm:$0xff]
    %v309 = vld [vmem:[#allocation5 + $0x578] sm:$0xff]
    %v310 = vld [vmem:[#allocation5 + $0x580] sm:$0xff]
    %v311 = vld [vmem:[#allocation5 + $0x588] sm:$0xff]
    %v312 = vld [vmem:[#allocation5 + $0x590] sm:$0xff]
    %v313 = vld [vmem:[#allocation5 + $0x598] sm:$0xff]
    %v314 = vld [vmem:[#allocation5 + $0x5a0] sm:$0xff]
    %v315 = vld [vmem:[#allocation5 + $0x5a8] sm:$0xff]
    %v316 = vld [vmem:[#allocation5 + $0x5b0] sm:$0xff]
    %v317 = vld [vmem:[#allocation5 + $0x5b8] sm:$0xff]
    %v318 = vld [vmem:[#allocation5 + $0x5c0] sm:$0xff]
    %v319 = vld [vmem:[#allocation5 + $0x5c8] sm:$0xff]
    %v320 = vld [vmem:[#allocation5 + $0x5d0] sm:$0xff]
    %v321 = vld [vmem:[#allocation5 + $0x5d8] sm:$0xff]
    %v322 = vld [vmem:[#allocation5 + $0x5e0] sm:$0xff]
    %v323 = vld [vmem:[#allocation5 + $0x5e8] sm:$0xff]
    %v324 = vld [vmem:[#allocation5 + $0x5f0] sm:$0xff]
    %v325 = vld [vmem:[#allocation5 + $0x5f8] sm:$0xff]
    %v326 = vld [vmem:[#allocation5 + $0x600] sm:$0xff]
    %v327 = vld [vmem:[#allocation5 + $0x608] sm:$0xff]
    %v328 = vld [vmem:[#allocation5 + $0x610] sm:$0xff]
    %v329 = vld [vmem:[#allocation5 + $0x618] sm:$0xff]
    %v330 = vld [vmem:[#allocation5 + $0x620] sm:$0xff]
    %v331 = vld [vmem:[#allocation5 + $0x628] sm:$0xff]
    %v332 = vld [vmem:[#allocation5 + $0x630] sm:$0xff]
    %v333 = vld [vmem:[#allocation5 + $0x638] sm:$0xff]
    %v334 = vld [vmem:[#allocation5 + $0x640] sm:$0xff]
    %v335 = vld [vmem:[#allocation5 + $0x648] sm:$0xff]
    %v336 = vld [vmem:[#allocation5 + $0x650] sm:$0xff]
    %v337 = vld [vmem:[#allocation5 + $0x658] sm:$0xff]
    %v338 = vld [vmem:[#allocation5 + $0x660] sm:$0xff]
    %v339 = vld [vmem:[#allocation5 + $0x668] sm:$0xff]
    %v340 = vld [vmem:[#allocation5 + $0x670] sm:$0xff]
    %v341 = vld [vmem:[#allocation5 + $0x678] sm:$0xff]
    %v342 = vld [vmem:[#allocation5 + $0x680] sm:$0xff]
    %v343 = vld [vmem:[#allocation5 + $0x688] sm:$0xff]
    %v344 = vld [vmem:[#allocation5 + $0x690] sm:$0xff]
    %v345 = vld [vmem:[#allocation5 + $0x698] sm:$0xff]
    %v346 = vld [vmem:[#allocation5 + $0x6a0] sm:$0xff]
    %v347 = vld [vmem:[#allocation5 + $0x6a8] sm:$0xff]
    %v348 = vld [vmem:[#allocation5 + $0x6b0] sm:$0xff]
    %v349 = vld [vmem:[#allocation5 + $0x6b8] sm:$0xff]
    %v350 = vld [vmem:[#allocation5 + $0x6c0] sm:$0xff]
    %v351 = vld [vmem:[#allocation5 + $0x6c8] sm:$0xff]
    %v352 = vld [vmem:[#allocation5 + $0x6d0] sm:$0xff]
    %v353 = vld [vmem:[#allocation5 + $0x6d8] sm:$0xff]
    %v354 = vld [vmem:[#allocation5 + $0x6e0] sm:$0xff]
    %v355 = vld [vmem:[#allocation5 + $0x6e8] sm:$0xff]
    %v356 = vld [vmem:[#allocation5 + $0x6f0] sm:$0xff]
    %v357 = vld [vmem:[#allocation5 + $0x6f8] sm:$0xff]
    %v358 = vld [vmem:[#allocation5 + $0x700] sm:$0xff]
    %v359 = vld [vmem:[#allocation5 + $0x708] sm:$0xff]
    %v360 = vld [vmem:[#allocation5 + $0x710] sm:$0xff]
    %v361 = vld [vmem:[#allocation5 + $0x718] sm:$0xff]
    %v362 = vld [vmem:[#allocation5 + $0x720] sm:$0xff]
    %v363 = vld [vmem:[#allocation5 + $0x728] sm:$0xff]
    %v364 = vld [vmem:[#allocation5 + $0x730] sm:$0xff]
    %v365 = vld [vmem:[#allocation5 + $0x738] sm:$0xff]
    %v366 = vld [vmem:[#allocation5 + $0x740] sm:$0xff]
    %v367 = vld [vmem:[#allocation5 + $0x748] sm:$0xff]
    %v368 = vld [vmem:[#allocation5 + $0x750] sm:$0xff]
    %v369 = vld [vmem:[#allocation5 + $0x758] sm:$0xff]
    %v370 = vld [vmem:[#allocation5 + $0x760] sm:$0xff]
    %v371 = vld [vmem:[#allocation5 + $0x768] sm:$0xff]
    %v372 = vld [vmem:[#allocation5 + $0x770] sm:$0xff]
    %v373 = vld [vmem:[#allocation5 + $0x778] sm:$0xff]
    %v374 = vld [vmem:[#allocation5 + $0x780] sm:$0xff]
    %v375 = vld [vmem:[#allocation5 + $0x788] sm:$0xff]
    %v376 = vld [vmem:[#allocation5 + $0x790] sm:$0xff]
    %v377 = vld [vmem:[#allocation5 + $0x798] sm:$0xff]
    %v378 = vld [vmem:[#allocation5 + $0x7a0] sm:$0xff]
    %v379 = vld [vmem:[#allocation5 + $0x7a8] sm:$0xff]
    %v380 = vld [vmem:[#allocation5 + $0x7b0] sm:$0xff]
    %v381 = vld [vmem:[#allocation5 + $0x7b8] sm:$0xff]
    %v382 = vld [vmem:[#allocation5 + $0x7c0] sm:$0xff]
    %v383 = vld [vmem:[#allocation5 + $0x7c8] sm:$0xff]
    %v384 = vld [vmem:[#allocation5 + $0x7d0] sm:$0xff]
    %v385 = vld [vmem:[#allocation5 + $0x7d8] sm:$0xff]
    %v386 = vld [vmem:[#allocation5 + $0x7e0] sm:$0xff]
    %v387 = vld [vmem:[#allocation5 + $0x7e8] sm:$0xff]
    %v388 = vld [vmem:[#allocation5 + $0x7f0] sm:$0xff]
    %v389 = vld [vmem:[#allocation5 + $0x7f8] sm:$0xff]
    %v390 = vld [vmem:[#allocation5 + $0x800] sm:$0xff]
    %v391 = vld [vmem:[#allocation5 + $0x808] sm:$0xff]
    %v392 = vld [vmem:[#allocation5 + $0x810] sm:$0xff]
    %v393 = vld [vmem:[#allocation5 + $0x818] sm:$0xff]
    %v394 = vld [vmem:[#allocation5 + $0x820] sm:$0xff]
    %v395 = vld [vmem:[#allocation5 + $0x828] sm:$0xff]
    %v396 = vld [vmem:[#allocation5 + $0x830] sm:$0xff]
    %v397 = vld [vmem:[#allocation5 + $0x838] sm:$0xff]
    %v398 = vld [vmem:[#allocation5 + $0x840] sm:$0xff]
    %v399 = vld [vmem:[#allocation5 + $0x848] sm:$0xff]
    %v400 = vld [vmem:[#allocation5 + $0x850] sm:$0xff]
    %v401 = vld [vmem:[#allocation5 + $0x858] sm:$0xff]
    %v402 = vld [vmem:[#allocation5 + $0x860] sm:$0xff]
    %v403 = vld [vmem:[#allocation5 + $0x868] sm:$0xff]
    %v404 = vld [vmem:[#allocation5 + $0x870] sm:$0xff]
    %v405 = vld [vmem:[#allocation5 + $0x878] sm:$0xff]
    %v406 = vld [vmem:[#allocation5 + $0x880] sm:$0xff]
    %v407 = vld [vmem:[#allocation5 + $0x888] sm:$0xff]
    %v408 = vld [vmem:[#allocation5 + $0x890] sm:$0xff]
    %v409 = vld [vmem:[#allocation5 + $0x898] sm:$0xff]
    %v410 = vld [vmem:[#allocation5 + $0x8a0] sm:$0xff]
    %v411 = vld [vmem:[#allocation5 + $0x8a8] sm:$0xff]
    %v412 = vld [vmem:[#allocation5 + $0x8b0] sm:$0xff]
    %v413 = vld [vmem:[#allocation5 + $0x8b8] sm:$0xff]
    %v414 = vld [vmem:[#allocation5 + $0x8c0] sm:$0xff]
    %v415 = vld [vmem:[#allocation5 + $0x8c8] sm:$0xff]
    %v416 = vld [vmem:[#allocation5 + $0x8d0] sm:$0xff]
    %v417 = vld [vmem:[#allocation5 + $0x8d8] sm:$0xff]
    %v418 = vld [vmem:[#allocation5 + $0x8e0] sm:$0xff]
    %v419 = vld [vmem:[#allocation5 + $0x8e8] sm:$0xff]
    %v420 = vld [vmem:[#allocation5 + $0x8f0] sm:$0xff]
    %v421 = vld [vmem:[#allocation5 + $0x8f8] sm:$0xff]
    %v422 = vld [vmem:[#allocation5 + $0x900] sm:$0xff]
    %v423 = vld [vmem:[#allocation5 + $0x908] sm:$0xff]
    %v424 = vld [vmem:[#allocation5 + $0x910] sm:$0xff]
    %v425 = vld [vmem:[#allocation5 + $0x918] sm:$0xff]
    %v426 = vld [vmem:[#allocation5 + $0x920] sm:$0xff]
    %v427 = vld [vmem:[#allocation5 + $0x928] sm:$0xff]
    %v428 = vld [vmem:[#allocation5 + $0x930] sm:$0xff]
    %v429 = vld [vmem:[#allocation5 + $0x938] sm:$0xff]
    %v430 = vld [vmem:[#allocation5 + $0x940] sm:$0xff]
    %v431 = vld [vmem:[#allocation5 + $0x948] sm:$0xff]
    %v432 = vld [vmem:[#allocation5 + $0x950] sm:$0xff]
    %v433 = vld [vmem:[#allocation5 + $0x958] sm:$0xff]
    %v434 = vld [vmem:[#allocation5 + $0x960] sm:$0xff]
    %v435 = vld [vmem:[#allocation5 + $0x968] sm:$0xff]
    %v436 = vld [vmem:[#allocation5 + $0x970] sm:$0xff]
    %v437 = vld [vmem:[#allocation5 + $0x978] sm:$0xff]
    %v438 = vld [vmem:[#allocation5 + $0x980] sm:$0xff]
    %v439 = vld [vmem:[#allocation5 + $0x988] sm:$0xff]
    %v440 = vld [vmem:[#allocation5 + $0x990] sm:$0xff]
    %v441 = vld [vmem:[#allocation5 + $0x998] sm:$0xff]
    %v442 = vld [vmem:[#allocation5 + $0x9a0] sm:$0xff]
    %v443 = vld [vmem:[#allocation5 + $0x9a8] sm:$0xff]
    %v444 = vld [vmem:[#allocation5 + $0x9b0] sm:$0xff]
    %v445 = vld [vmem:[#allocation5 + $0x9b8] sm:$0xff]
    %v446 = vld [vmem:[#allocation5 + $0x9c0] sm:$0xff]
    %v447 = vld [vmem:[#allocation5 + $0x9c8] sm:$0xff]
    %v448 = vld [vmem:[#allocation5 + $0x9d0] sm:$0xff]
    %v449 = vld [vmem:[#allocation5 + $0x9d8] sm:$0xff]
    %v450 = vld [vmem:[#allocation5 + $0x9e0] sm:$0xff]
    %v451 = vld [vmem:[#allocation5 + $0x9e8] sm:$0xff]
    %v452 = vld [vmem:[#allocation5 + $0x9f0] sm:$0xff]
    %v453 = vld [vmem:[#allocation5 + $0x9f8] sm:$0xff]
    %v454 = vld [vmem:[#allocation5 + $0xa00] sm:$0xff]
    %v455 = vld [vmem:[#allocation5 + $0xa08] sm:$0xff]
    %v456 = vld [vmem:[#allocation5 + $0xa10] sm:$0xff]
    %v457 = vld [vmem:[#allocation5 + $0xa18] sm:$0xff]
    %v458 = vld [vmem:[#allocation5 + $0xa20] sm:$0xff]
    %v459 = vld [vmem:[#allocation5 + $0xa28] sm:$0xff]
    %v460 = vld [vmem:[#allocation5 + $0xa30] sm:$0xff]
    %v461 = vld [vmem:[#allocation5 + $0xa38] sm:$0xff]
    %v462 = vld [vmem:[#allocation5 + $0xa40] sm:$0xff]
    %v463 = vld [vmem:[#allocation5 + $0xa48] sm:$0xff]
    %v464 = vld [vmem:[#allocation5 + $0xa50] sm:$0xff]
    %v465 = vld [vmem:[#allocation5 + $0xa58] sm:$0xff]
    %v466 = vld [vmem:[#allocation5 + $0xa60] sm:$0xff]
    %v467 = vld [vmem:[#allocation5 + $0xa68] sm:$0xff]
    %v468 = vld [vmem:[#allocation5 + $0xa70] sm:$0xff]
    %v469 = vld [vmem:[#allocation5 + $0xa78] sm:$0xff]
    %v470 = vld [vmem:[#allocation5 + $0xa80] sm:$0xff]
    %v471 = vld [vmem:[#allocation5 + $0xa88] sm:$0xff]
    %v472 = vld [vmem:[#allocation5 + $0xa90] sm:$0xff]
    %v473 = vld [vmem:[#allocation5 + $0xa98] sm:$0xff]
    %v474 = vld [vmem:[#allocation5 + $0xaa0] sm:$0xff]
    %v475 = vld [vmem:[#allocation5 + $0xaa8] sm:$0xff]
    %v476 = vld [vmem:[#allocation5 + $0xab0] sm:$0xff]
    %v477 = vld [vmem:[#allocation5 + $0xab8] sm:$0xff]
    %v478 = vld [vmem:[#allocation5 + $0xac0] sm:$0xff]
    %v479 = vld [vmem:[#allocation5 + $0xac8] sm:$0xff]
    %v480 = vld [vmem:[#allocation5 + $0xad0] sm:$0xff]
    %v481 = vld [vmem:[#allocation5 + $0xad8] sm:$0xff]
    %v482 = vld [vmem:[#allocation5 + $0xae0] sm:$0xff]
    %v483 = vld [vmem:[#allocation5 + $0xae8] sm:$0xff]
    %v484 = vld [vmem:[#allocation5 + $0xaf0] sm:$0xff]
    %v485 = vld [vmem:[#allocation5 + $0xaf8] sm:$0xff]
    %v486 = vld [vmem:[#allocation5 + $0xb00] sm:$0xff]
    %v487 = vld [vmem:[#allocation5 + $0xb08] sm:$0xff]
    %v488 = vld [vmem:[#allocation5 + $0xb10] sm:$0xff]
    %v489 = vld [vmem:[#allocation5 + $0xb18] sm:$0xff]
    %v490 = vld [vmem:[#allocation5 + $0xb20] sm:$0xff]
    %v491 = vld [vmem:[#allocation5 + $0xb28] sm:$0xff]
    %v492 = vld [vmem:[#allocation5 + $0xb30] sm:$0xff]
    %v493 = vld [vmem:[#allocation5 + $0xb38] sm:$0xff]
    %v494 = vld [vmem:[#allocation5 + $0xb40] sm:$0xff]
    %v495 = vld [vmem:[#allocation5 + $0xb48] sm:$0xff]
    %v496 = vld [vmem:[#allocation5 + $0xb50] sm:$0xff]
    %v497 = vld [vmem:[#allocation5 + $0xb58] sm:$0xff]
    %v498 = vld [vmem:[#allocation5 + $0xb60] sm:$0xff]
    %v499 = vld [vmem:[#allocation5 + $0xb68] sm:$0xff]
    %v500 = vld [vmem:[#allocation5 + $0xb70] sm:$0xff]
    %v501 = vld [vmem:[#allocation5 + $0xb78] sm:$0xff]
    %v502 = vld [vmem:[#allocation5 + $0xb80] sm:$0xff]
    %v503 = vld [vmem:[#allocation5 + $0xb88] sm:$0xff]
    %v504 = vld [vmem:[#allocation5 + $0xb90] sm:$0xff]
    %v505 = vld [vmem:[#allocation5 + $0xb98] sm:$0xff]
    %v506 = vld [vmem:[#allocation5 + $0xba0] sm:$0xff]
    %v507 = vld [vmem:[#allocation5 + $0xba8] sm:$0xff]
    %v508 = vld [vmem:[#allocation5 + $0xbb0] sm:$0xff]
    %v509 = vld [vmem:[#allocation5 + $0xbb8] sm:$0xff]
    %v510 = vld [vmem:[#allocation5 + $0xbc0] sm:$0xff]
    %v511 = vld [vmem:[#allocation5 + $0xbc8] sm:$0xff]
    %v512 = vld [vmem:[#allocation5 + $0xbd0] sm:$0xff]
    %v513 = vld [vmem:[#allocation5 + $0xbd8] sm:$0xff]
    %v514 = vld [vmem:[#allocation5 + $0xbe0] sm:$0xff]
    %v515 = vld [vmem:[#allocation5 + $0xbe8] sm:$0xff]
    %v516 = vld [vmem:[#allocation5 + $0xbf0] sm:$0xff]
    %v517 = vld [vmem:[#allocation5 + $0xbf8] sm:$0xff]
    %v518 = vld [vmem:[#allocation5 + $0xc00] sm:$0xff]
    %v519 = vld [vmem:[#allocation5 + $0xc08] sm:$0xff]
    %v520 = vld [vmem:[#allocation5 + $0xc10] sm:$0xff]
    %v521 = vld [vmem:[#allocation5 + $0xc18] sm:$0xff]
    %v522 = vld [vmem:[#allocation5 + $0xc20] sm:$0xff]
    %v523 = vld [vmem:[#allocation5 + $0xc28] sm:$0xff]
    %v524 = vld [vmem:[#allocation5 + $0xc30] sm:$0xff]
    %v525 = vld [vmem:[#allocation5 + $0xc38] sm:$0xff]
    %v526 = vld [vmem:[#allocation5 + $0xc40] sm:$0xff]
    %v527 = vld [vmem:[#allocation5 + $0xc48] sm:$0xff]
    %v528 = vld [vmem:[#allocation5 + $0xc50] sm:$0xff]
    %v529 = vld [vmem:[#allocation5 + $0xc58] sm:$0xff]
    %v530 = vld [vmem:[#allocation5 + $0xc60] sm:$0xff]
    %v531 = vld [vmem:[#allocation5 + $0xc68] sm:$0xff]
    %v532 = vld [vmem:[#allocation5 + $0xc70] sm:$0xff]
    %v533 = vld [vmem:[#allocation5 + $0xc78] sm:$0xff]
    %v534 = vld [vmem:[#allocation5 + $0xc80] sm:$0xff]
    %v535 = vld [vmem:[#allocation5 + $0xc88] sm:$0xff]
    %v536 = vld [vmem:[#allocation5 + $0xc90] sm:$0xff]
    %v537 = vld [vmem:[#allocation5 + $0xc98] sm:$0xff]
    %v538 = vld [vmem:[#allocation5 + $0xca0] sm:$0xff]
    %v539 = vld [vmem:[#allocation5 + $0xca8] sm:$0xff]
    %v540 = vld [vmem:[#allocation5 + $0xcb0] sm:$0xff]
    %v541 = vld [vmem:[#allocation5 + $0xcb8] sm:$0xff]
    %v542 = vld [vmem:[#allocation5 + $0xcc0] sm:$0xff]
    %v543 = vld [vmem:[#allocation5 + $0xcc8] sm:$0xff]
    %v544 = vld [vmem:[#allocation5 + $0xcd0] sm:$0xff]
    %v545 = vld [vmem:[#allocation5 + $0xcd8] sm:$0xff]
    %v546 = vld [vmem:[#allocation5 + $0xce0] sm:$0xff]
    %v547 = vld [vmem:[#allocation5 + $0xce8] sm:$0xff]
    %v548 = vld [vmem:[#allocation5 + $0xcf0] sm:$0xff]
    %v549 = vld [vmem:[#allocation5 + $0xcf8] sm:$0xff]
    %v550 = vld [vmem:[#allocation5 + $0xd00] sm:$0xff]
    %v551 = vld [vmem:[#allocation5 + $0xd08] sm:$0xff]
    %v552 = vld [vmem:[#allocation5 + $0xd10] sm:$0xff]
    %v553 = vld [vmem:[#allocation5 + $0xd18] sm:$0xff]
    %v554 = vld [vmem:[#allocation5 + $0xd20] sm:$0xff]
    %v555 = vld [vmem:[#allocation5 + $0xd28] sm:$0xff]
    %v556 = vld [vmem:[#allocation5 + $0xd30] sm:$0xff]
    %v557 = vld [vmem:[#allocation5 + $0xd38] sm:$0xff]
    %v558 = vld [vmem:[#allocation5 + $0xd40] sm:$0xff]
    %v559 = vld [vmem:[#allocation5 + $0xd48] sm:$0xff]
    %v560 = vld [vmem:[#allocation5 + $0xd50] sm:$0xff]
    %v561 = vld [vmem:[#allocation5 + $0xd58] sm:$0xff]
    %v562 = vld [vmem:[#allocation5 + $0xd60] sm:$0xff]
    %v563 = vld [vmem:[#allocation5 + $0xd68] sm:$0xff]
    %v564 = vld [vmem:[#allocation5 + $0xd70] sm:$0xff]
    %v565 = vld [vmem:[#allocation5 + $0xd78] sm:$0xff]
    %v566 = vld [vmem:[#allocation5 + $0xd80] sm:$0xff]
    %v567 = vld [vmem:[#allocation5 + $0xd88] sm:$0xff]
    %v568 = vld [vmem:[#allocation5 + $0xd90] sm:$0xff]
    %v569 = vld [vmem:[#allocation5 + $0xd98] sm:$0xff]
    %v570 = vld [vmem:[#allocation5 + $0xda0] sm:$0xff]
    %v571 = vld [vmem:[#allocation5 + $0xda8] sm:$0xff]
    %v572 = vld [vmem:[#allocation5 + $0xdb0] sm:$0xff]
    %v573 = vld [vmem:[#allocation5 + $0xdb8] sm:$0xff]
    %v574 = vld [vmem:[#allocation5 + $0xdc0] sm:$0xff]
    %v575 = vld [vmem:[#allocation5 + $0xdc8] sm:$0xff]
    %v576 = vld [vmem:[#allocation5 + $0xdd0] sm:$0xff]
    %v577 = vld [vmem:[#allocation5 + $0xdd8] sm:$0xff]
    %v578 = vld [vmem:[#allocation5 + $0xde0] sm:$0xff]
    %v579 = vld [vmem:[#allocation5 + $0xde8] sm:$0xff]
    %v580 = vld [vmem:[#allocation5 + $0xdf0] sm:$0xff]
    %v581 = vld [vmem:[#allocation5 + $0xdf8] sm:$0xff]
    %v582 = vld [vmem:[#allocation5 + $0xe00] sm:$0xff]
    %v583 = vld [vmem:[#allocation5 + $0xe08] sm:$0xff]
    %v584 = vld [vmem:[#allocation5 + $0xe10] sm:$0xff]
    %v585 = vld [vmem:[#allocation5 + $0xe18] sm:$0xff]
    %v586 = vld [vmem:[#allocation5 + $0xe20] sm:$0xff]
    %v587 = vld [vmem:[#allocation5 + $0xe28] sm:$0xff]
    %v588 = vld [vmem:[#allocation5 + $0xe30] sm:$0xff]
    %v589 = vld [vmem:[#allocation5 + $0xe38] sm:$0xff]
    %v590 = vld [vmem:[#allocation5 + $0xe40] sm:$0xff]
    %v591 = vld [vmem:[#allocation5 + $0xe48] sm:$0xff]
    %v592 = vld [vmem:[#allocation5 + $0xe50] sm:$0xff]
    %v593 = vld [vmem:[#allocation5 + $0xe58] sm:$0xff]
    %v594 = vld [vmem:[#allocation5 + $0xe60] sm:$0xff]
    %v595 = vld [vmem:[#allocation5 + $0xe68] sm:$0xff]
    %v596 = vld [vmem:[#allocation5 + $0xe70] sm:$0xff]
    %v597 = vld [vmem:[#allocation5 + $0xe78] sm:$0xff]
    %v598 = vld [vmem:[#allocation5 + $0xe80] sm:$0xff]
    %v599 = vld [vmem:[#allocation5 + $0xe88] sm:$0xff]
    %v600 = vld [vmem:[#allocation5 + $0xe90] sm:$0xff]
    %v601 = vld [vmem:[#allocation5 + $0xe98] sm:$0xff]
    %v602 = vld [vmem:[#allocation5 + $0xea0] sm:$0xff]
    %v603 = vld [vmem:[#allocation5 + $0xea8] sm:$0xff]
    %v604 = vld [vmem:[#allocation5 + $0xeb0] sm:$0xff]
    %v605 = vld [vmem:[#allocation5 + $0xeb8] sm:$0xff]
    %v606 = vld [vmem:[#allocation5 + $0xec0] sm:$0xff]
    %v607 = vld [vmem:[#allocation5 + $0xec8] sm:$0xff]
    %v608 = vld [vmem:[#allocation5 + $0xed0] sm:$0xff]
    %v609 = vld [vmem:[#allocation5 + $0xed8] sm:$0xff]
    %v610 = vld [vmem:[#allocation5 + $0xee0] sm:$0xff]
    %v611 = vld [vmem:[#allocation5 + $0xee8] sm:$0xff]
    %v612 = vld [vmem:[#allocation5 + $0xef0] sm:$0xff]
    %v613 = vld [vmem:[#allocation5 + $0xef8] sm:$0xff]
    %v614 = vld [vmem:[#allocation5 + $0xf00] sm:$0xff]
    %v615 = vld [vmem:[#allocation5 + $0xf08] sm:$0xff]
    %v616 = vld [vmem:[#allocation5 + $0xf10] sm:$0xff]
    %v617 = vld [vmem:[#allocation5 + $0xf18] sm:$0xff]
    %v618 = vld [vmem:[#allocation5 + $0xf20] sm:$0xff]
    %v619 = vld [vmem:[#allocation5 + $0xf28] sm:$0xff]
    %v620 = vld [vmem:[#allocation5 + $0xf30] sm:$0xff]
    %v621 = vld [vmem:[#allocation5 + $0xf38] sm:$0xff]
    %v622 = vld [vmem:[#allocation5 + $0xf40] sm:$0xff]
    %v623 = vld [vmem:[#allocation5 + $0xf48] sm:$0xff]
    %v624 = vld [vmem:[#allocation5 + $0xf50] sm:$0xff]
    %v625 = vld [vmem:[#allocation5 + $0xf58] sm:$0xff]
    %v626 = vld [vmem:[#allocation5 + $0xf60] sm:$0xff]
    %v627 = vld [vmem:[#allocation5 + $0xf68] sm:$0xff]
    %v628 = vld [vmem:[#allocation5 + $0xf70] sm:$0xff]
    %v629 = vld [vmem:[#allocation5 + $0xf78] sm:$0xff]
    %v630 = vld [vmem:[#allocation5 + $0xf80] sm:$0xff]
    %v631 = vld [vmem:[#allocation5 + $0xf88] sm:$0xff]
    %v632 = vld [vmem:[#allocation5 + $0xf90] sm:$0xff]
    %v633 = vld [vmem:[#allocation5 + $0xf98] sm:$0xff]
    %v634 = vld [vmem:[#allocation5 + $0xfa0] sm:$0xff]
    %v635 = vld [vmem:[#allocation5 + $0xfa8] sm:$0xff]
    %v636 = vld [vmem:[#allocation5 + $0xfb0] sm:$0xff]
    %v637 = vld [vmem:[#allocation5 + $0xfb8] sm:$0xff]
    %v638 = vld [vmem:[#allocation5 + $0xfc0] sm:$0xff]
    %v639 = vld [vmem:[#allocation5 + $0xfc8] sm:$0xff]
    %v640 = vld [vmem:[#allocation5 + $0xfd0] sm:$0xff]
    %v641 = vld [vmem:[#allocation5 + $0xfd8] sm:$0xff]
    %v642 = vld [vmem:[#allocation5 + $0xfe0] sm:$0xff]
    %v643 = vld [vmem:[#allocation5 + $0xfe8] sm:$0xff]
    %v644 = vld [vmem:[#allocation5 + $0xff0] sm:$0xff]
    %v645 = vld [vmem:[#allocation5 + $0xff8] sm:$0xff]
    %v646 = vld [vmem:[#allocation7] sm:$0xf]
    %v648 = vlaneseq
    %v649 = vshrl.u32 %v648, 7
    %v650 = vsub.s32 0, %v649
    %v651 = vrot.slane %v646, %v650
    %v652 = vlaneseq
    %v653 = vshrl.u32 %v652, 7
    %v654 = vsub.s32 1, %v653
    %v655 = vrot.slane %v646, %v654
    %v656 = vlaneseq
    %v657 = vshrl.u32 %v656, 7
    %v658 = vsub.s32 2, %v657
    %v659 = vrot.slane %v646, %v658
    %v660 = vlaneseq
    %v661 = vshrl.u32 %v660, 7
    %v662 = vsub.s32 3, %v661
    %v663 = vrot.slane %v646, %v662
    %v1180 = vunpack.c.l.b16 %v134
    %v1181 = vunpack.c.h.b16 %v134
    %v1182 = vunpack.c.l.b16 %v135
    %v1183 = vunpack.c.h.b16 %v135
    %v1184 = vunpack.c.l.b16 %v136
    %v1185 = vunpack.c.h.b16 %v136
    %v1186 = vunpack.c.l.b16 %v137
    %v1187 = vunpack.c.h.b16 %v137
    %v1188 = vunpack.c.l.b16 %v138
    %v1189 = vunpack.c.h.b16 %v138
    %v1190 = vunpack.c.l.b16 %v139
    %v1191 = vunpack.c.h.b16 %v139
    %v1192 = vunpack.c.l.b16 %v140
    %v1193 = vunpack.c.h.b16 %v140
    %v1194 = vunpack.c.l.b16 %v141
    %v1195 = vunpack.c.h.b16 %v141
    %v1196 = vunpack.c.l.b16 %v142
    %v1197 = vunpack.c.h.b16 %v142
    %v1198 = vunpack.c.l.b16 %v143
    %v1199 = vunpack.c.h.b16 %v143
    %v1200 = vunpack.c.l.b16 %v144
    %v1201 = vunpack.c.h.b16 %v144
    %v1202 = vunpack.c.l.b16 %v145
    %v1203 = vunpack.c.h.b16 %v145
    %v1204 = vunpack.c.l.b16 %v146
    %v1205 = vunpack.c.h.b16 %v146
    %v1206 = vunpack.c.l.b16 %v147
    %v1207 = vunpack.c.h.b16 %v147
    %v1208 = vunpack.c.l.b16 %v148
    %v1209 = vunpack.c.h.b16 %v148
    %v1210 = vunpack.c.l.b16 %v149
    %v1211 = vunpack.c.h.b16 %v149
    %v1212 = vunpack.c.l.b16 %v150
    %v1213 = vunpack.c.h.b16 %v150
    %v1214 = vunpack.c.l.b16 %v151
    %v1215 = vunpack.c.h.b16 %v151
    %v1216 = vunpack.c.l.b16 %v152
    %v1217 = vunpack.c.h.b16 %v152
    %v1218 = vunpack.c.l.b16 %v153
    %v1219 = vunpack.c.h.b16 %v153
    %v1220 = vunpack.c.l.b16 %v154
    %v1221 = vunpack.c.h.b16 %v154
    %v1222 = vunpack.c.l.b16 %v155
    %v1223 = vunpack.c.h.b16 %v155
    %v1224 = vunpack.c.l.b16 %v156
    %v1225 = vunpack.c.h.b16 %v156
    %v1226 = vunpack.c.l.b16 %v157
    %v1227 = vunpack.c.h.b16 %v157
    %v1228 = vunpack.c.l.b16 %v158
    %v1229 = vunpack.c.h.b16 %v158
    %v1230 = vunpack.c.l.b16 %v159
    %v1231 = vunpack.c.h.b16 %v159
    %v1232 = vunpack.c.l.b16 %v160
    %v1233 = vunpack.c.h.b16 %v160
    %v1234 = vunpack.c.l.b16 %v161
    %v1235 = vunpack.c.h.b16 %v161
    %v1236 = vunpack.c.l.b16 %v162
    %v1237 = vunpack.c.h.b16 %v162
    %v1238 = vunpack.c.l.b16 %v163
    %v1239 = vunpack.c.h.b16 %v163
    %v1240 = vunpack.c.l.b16 %v164
    %v1241 = vunpack.c.h.b16 %v164
    %v1242 = vunpack.c.l.b16 %v165
    %v1243 = vunpack.c.h.b16 %v165
    %v1244 = vunpack.c.l.b16 %v166
    %v1245 = vunpack.c.h.b16 %v166
    %v1246 = vunpack.c.l.b16 %v167
    %v1247 = vunpack.c.h.b16 %v167
    %v1248 = vunpack.c.l.b16 %v168
    %v1249 = vunpack.c.h.b16 %v168
    %v1250 = vunpack.c.l.b16 %v169
    %v1251 = vunpack.c.h.b16 %v169
    %v1252 = vunpack.c.l.b16 %v170
    %v1253 = vunpack.c.h.b16 %v170
    %v1254 = vunpack.c.l.b16 %v171
    %v1255 = vunpack.c.h.b16 %v171
    %v1256 = vunpack.c.l.b16 %v172
    %v1257 = vunpack.c.h.b16 %v172
    %v1258 = vunpack.c.l.b16 %v173
    %v1259 = vunpack.c.h.b16 %v173
    %v1260 = vunpack.c.l.b16 %v174
    %v1261 = vunpack.c.h.b16 %v174
    %v1262 = vunpack.c.l.b16 %v175
    %v1263 = vunpack.c.h.b16 %v175
    %v1264 = vunpack.c.l.b16 %v176
    %v1265 = vunpack.c.h.b16 %v176
    %v1266 = vunpack.c.l.b16 %v177
    %v1267 = vunpack.c.h.b16 %v177
    %v1268 = vunpack.c.l.b16 %v178
    %v1269 = vunpack.c.h.b16 %v178
    %v1270 = vunpack.c.l.b16 %v179
    %v1271 = vunpack.c.h.b16 %v179
    %v1272 = vunpack.c.l.b16 %v180
    %v1273 = vunpack.c.h.b16 %v180
    %v1274 = vunpack.c.l.b16 %v181
    %v1275 = vunpack.c.h.b16 %v181
    %v1276 = vunpack.c.l.b16 %v182
    %v1277 = vunpack.c.h.b16 %v182
    %v1278 = vunpack.c.l.b16 %v183
    %v1279 = vunpack.c.h.b16 %v183
    %v1280 = vunpack.c.l.b16 %v184
    %v1281 = vunpack.c.h.b16 %v184
    %v1282 = vunpack.c.l.b16 %v185
    %v1283 = vunpack.c.h.b16 %v185
    %v1284 = vunpack.c.l.b16 %v186
    %v1285 = vunpack.c.h.b16 %v186
    %v1286 = vunpack.c.l.b16 %v187
    %v1287 = vunpack.c.h.b16 %v187
    %v1288 = vunpack.c.l.b16 %v188
    %v1289 = vunpack.c.h.b16 %v188
    %v1290 = vunpack.c.l.b16 %v189
    %v1291 = vunpack.c.h.b16 %v189
    %v1292 = vunpack.c.l.b16 %v190
    %v1293 = vunpack.c.h.b16 %v190
    %v1294 = vunpack.c.l.b16 %v191
    %v1295 = vunpack.c.h.b16 %v191
    %v1296 = vunpack.c.l.b16 %v192
    %v1297 = vunpack.c.h.b16 %v192
    %v1298 = vunpack.c.l.b16 %v193
    %v1299 = vunpack.c.h.b16 %v193
    %v1300 = vunpack.c.l.b16 %v194
    %v1301 = vunpack.c.h.b16 %v194
    %v1302 = vunpack.c.l.b16 %v195
    %v1303 = vunpack.c.h.b16 %v195
    %v1304 = vunpack.c.l.b16 %v196
    %v1305 = vunpack.c.h.b16 %v196
    %v1306 = vunpack.c.l.b16 %v197
    %v1307 = vunpack.c.h.b16 %v197
    %v1308 = vunpack.c.l.b16 %v198
    %v1309 = vunpack.c.h.b16 %v198
    %v1310 = vunpack.c.l.b16 %v199
    %v1311 = vunpack.c.h.b16 %v199
    %v1312 = vunpack.c.l.b16 %v200
    %v1313 = vunpack.c.h.b16 %v200
    %v1314 = vunpack.c.l.b16 %v201
    %v1315 = vunpack.c.h.b16 %v201
    %v1316 = vunpack.c.l.b16 %v202
    %v1317 = vunpack.c.h.b16 %v202
    %v1318 = vunpack.c.l.b16 %v203
    %v1319 = vunpack.c.h.b16 %v203
    %v1320 = vunpack.c.l.b16 %v204
    %v1321 = vunpack.c.h.b16 %v204
    %v1322 = vunpack.c.l.b16 %v205
    %v1323 = vunpack.c.h.b16 %v205
    %v1324 = vunpack.c.l.b16 %v206
    %v1325 = vunpack.c.h.b16 %v206
    %v1326 = vunpack.c.l.b16 %v207
    %v1327 = vunpack.c.h.b16 %v207
    %v1328 = vunpack.c.l.b16 %v208
    %v1329 = vunpack.c.h.b16 %v208
    %v1330 = vunpack.c.l.b16 %v209
    %v1331 = vunpack.c.h.b16 %v209
    %v1332 = vunpack.c.l.b16 %v210
    %v1333 = vunpack.c.h.b16 %v210
    %v1334 = vunpack.c.l.b16 %v211
    %v1335 = vunpack.c.h.b16 %v211
    %v1336 = vunpack.c.l.b16 %v212
    %v1337 = vunpack.c.h.b16 %v212
    %v1338 = vunpack.c.l.b16 %v213
    %v1339 = vunpack.c.h.b16 %v213
    %v1340 = vunpack.c.l.b16 %v214
    %v1341 = vunpack.c.h.b16 %v214
    %v1342 = vunpack.c.l.b16 %v215
    %v1343 = vunpack.c.h.b16 %v215
    %v1344 = vunpack.c.l.b16 %v216
    %v1345 = vunpack.c.h.b16 %v216
    %v1346 = vunpack.c.l.b16 %v217
    %v1347 = vunpack.c.h.b16 %v217
    %v1348 = vunpack.c.l.b16 %v218
    %v1349 = vunpack.c.h.b16 %v218
    %v1350 = vunpack.c.l.b16 %v219
    %v1351 = vunpack.c.h.b16 %v219
    %v1352 = vunpack.c.l.b16 %v220
    %v1353 = vunpack.c.h.b16 %v220
    %v1354 = vunpack.c.l.b16 %v221
    %v1355 = vunpack.c.h.b16 %v221
    %v1356 = vunpack.c.l.b16 %v222
    %v1357 = vunpack.c.h.b16 %v222
    %v1358 = vunpack.c.l.b16 %v223
    %v1359 = vunpack.c.h.b16 %v223
    %v1360 = vunpack.c.l.b16 %v224
    %v1361 = vunpack.c.h.b16 %v224
    %v1362 = vunpack.c.l.b16 %v225
    %v1363 = vunpack.c.h.b16 %v225
    %v1364 = vunpack.c.l.b16 %v226
    %v1365 = vunpack.c.h.b16 %v226
    %v1366 = vunpack.c.l.b16 %v227
    %v1367 = vunpack.c.h.b16 %v227
    %v1368 = vunpack.c.l.b16 %v228
    %v1369 = vunpack.c.h.b16 %v228
    %v1370 = vunpack.c.l.b16 %v229
    %v1371 = vunpack.c.h.b16 %v229
    %v1372 = vunpack.c.l.b16 %v230
    %v1373 = vunpack.c.h.b16 %v230
    %v1374 = vunpack.c.l.b16 %v231
    %v1375 = vunpack.c.h.b16 %v231
    %v1376 = vunpack.c.l.b16 %v232
    %v1377 = vunpack.c.h.b16 %v232
    %v1378 = vunpack.c.l.b16 %v233
    %v1379 = vunpack.c.h.b16 %v233
    %v1380 = vunpack.c.l.b16 %v234
    %v1381 = vunpack.c.h.b16 %v234
    %v1382 = vunpack.c.l.b16 %v235
    %v1383 = vunpack.c.h.b16 %v235
    %v1384 = vunpack.c.l.b16 %v236
    %v1385 = vunpack.c.h.b16 %v236
    %v1386 = vunpack.c.l.b16 %v237
    %v1387 = vunpack.c.h.b16 %v237
    %v1388 = vunpack.c.l.b16 %v238
    %v1389 = vunpack.c.h.b16 %v238
    %v1390 = vunpack.c.l.b16 %v239
    %v1391 = vunpack.c.h.b16 %v239
    %v1392 = vunpack.c.l.b16 %v240
    %v1393 = vunpack.c.h.b16 %v240
    %v1394 = vunpack.c.l.b16 %v241
    %v1395 = vunpack.c.h.b16 %v241
    %v1396 = vunpack.c.l.b16 %v242
    %v1397 = vunpack.c.h.b16 %v242
    %v1398 = vunpack.c.l.b16 %v243
    %v1399 = vunpack.c.h.b16 %v243
    %v1400 = vunpack.c.l.b16 %v244
    %v1401 = vunpack.c.h.b16 %v244
    %v1402 = vunpack.c.l.b16 %v245
    %v1403 = vunpack.c.h.b16 %v245
    %v1404 = vunpack.c.l.b16 %v246
    %v1405 = vunpack.c.h.b16 %v246
    %v1406 = vunpack.c.l.b16 %v247
    %v1407 = vunpack.c.h.b16 %v247
    %v1408 = vunpack.c.l.b16 %v248
    %v1409 = vunpack.c.h.b16 %v248
    %v1410 = vunpack.c.l.b16 %v249
    %v1411 = vunpack.c.h.b16 %v249
    %v1412 = vunpack.c.l.b16 %v250
    %v1413 = vunpack.c.h.b16 %v250
    %v1414 = vunpack.c.l.b16 %v251
    %v1415 = vunpack.c.h.b16 %v251
    %v1416 = vunpack.c.l.b16 %v252
    %v1417 = vunpack.c.h.b16 %v252
    %v1418 = vunpack.c.l.b16 %v253
    %v1419 = vunpack.c.h.b16 %v253
    %v1420 = vunpack.c.l.b16 %v254
    %v1421 = vunpack.c.h.b16 %v254
    %v1422 = vunpack.c.l.b16 %v255
    %v1423 = vunpack.c.h.b16 %v255
    %v1424 = vunpack.c.l.b16 %v256
    %v1425 = vunpack.c.h.b16 %v256
    %v1426 = vunpack.c.l.b16 %v257
    %v1427 = vunpack.c.h.b16 %v257
    %v1428 = vunpack.c.l.b16 %v258
    %v1429 = vunpack.c.h.b16 %v258
    %v1430 = vunpack.c.l.b16 %v259
    %v1431 = vunpack.c.h.b16 %v259
    %v1432 = vunpack.c.l.b16 %v260
    %v1433 = vunpack.c.h.b16 %v260
    %v1434 = vunpack.c.l.b16 %v261
    %v1435 = vunpack.c.h.b16 %v261
    %v1436 = vunpack.c.l.b16 %v262
    %v1437 = vunpack.c.h.b16 %v262
    %v1438 = vunpack.c.l.b16 %v263
    %v1439 = vunpack.c.h.b16 %v263
    %v1440 = vunpack.c.l.b16 %v264
    %v1441 = vunpack.c.h.b16 %v264
    %v1442 = vunpack.c.l.b16 %v265
    %v1443 = vunpack.c.h.b16 %v265
    %v1444 = vunpack.c.l.b16 %v266
    %v1445 = vunpack.c.h.b16 %v266
    %v1446 = vunpack.c.l.b16 %v267
    %v1447 = vunpack.c.h.b16 %v267
    %v1448 = vunpack.c.l.b16 %v268
    %v1449 = vunpack.c.h.b16 %v268
    %v1450 = vunpack.c.l.b16 %v269
    %v1451 = vunpack.c.h.b16 %v269
    %v1452 = vunpack.c.l.b16 %v270
    %v1453 = vunpack.c.h.b16 %v270
    %v1454 = vunpack.c.l.b16 %v271
    %v1455 = vunpack.c.h.b16 %v271
    %v1456 = vunpack.c.l.b16 %v272
    %v1457 = vunpack.c.h.b16 %v272
    %v1458 = vunpack.c.l.b16 %v273
    %v1459 = vunpack.c.h.b16 %v273
    %v1460 = vunpack.c.l.b16 %v274
    %v1461 = vunpack.c.h.b16 %v274
    %v1462 = vunpack.c.l.b16 %v275
    %v1463 = vunpack.c.h.b16 %v275
    %v1464 = vunpack.c.l.b16 %v276
    %v1465 = vunpack.c.h.b16 %v276
    %v1466 = vunpack.c.l.b16 %v277
    %v1467 = vunpack.c.h.b16 %v277
    %v1468 = vunpack.c.l.b16 %v278
    %v1469 = vunpack.c.h.b16 %v278
    %v1470 = vunpack.c.l.b16 %v279
    %v1471 = vunpack.c.h.b16 %v279
    %v1472 = vunpack.c.l.b16 %v280
    %v1473 = vunpack.c.h.b16 %v280
    %v1474 = vunpack.c.l.b16 %v281
    %v1475 = vunpack.c.h.b16 %v281
    %v1476 = vunpack.c.l.b16 %v282
    %v1477 = vunpack.c.h.b16 %v282
    %v1478 = vunpack.c.l.b16 %v283
    %v1479 = vunpack.c.h.b16 %v283
    %v1480 = vunpack.c.l.b16 %v284
    %v1481 = vunpack.c.h.b16 %v284
    %v1482 = vunpack.c.l.b16 %v285
    %v1483 = vunpack.c.h.b16 %v285
    %v1484 = vunpack.c.l.b16 %v286
    %v1485 = vunpack.c.h.b16 %v286
    %v1486 = vunpack.c.l.b16 %v287
    %v1487 = vunpack.c.h.b16 %v287
    %v1488 = vunpack.c.l.b16 %v288
    %v1489 = vunpack.c.h.b16 %v288
    %v1490 = vunpack.c.l.b16 %v289
    %v1491 = vunpack.c.h.b16 %v289
    %v1492 = vunpack.c.l.b16 %v290
    %v1493 = vunpack.c.h.b16 %v290
    %v1494 = vunpack.c.l.b16 %v291
    %v1495 = vunpack.c.h.b16 %v291
    %v1496 = vunpack.c.l.b16 %v292
    %v1497 = vunpack.c.h.b16 %v292
    %v1498 = vunpack.c.l.b16 %v293
    %v1499 = vunpack.c.h.b16 %v293
    %v1500 = vunpack.c.l.b16 %v294
    %v1501 = vunpack.c.h.b16 %v294
    %v1502 = vunpack.c.l.b16 %v295
    %v1503 = vunpack.c.h.b16 %v295
    %v1504 = vunpack.c.l.b16 %v296
    %v1505 = vunpack.c.h.b16 %v296
    %v1506 = vunpack.c.l.b16 %v297
    %v1507 = vunpack.c.h.b16 %v297
    %v1508 = vunpack.c.l.b16 %v298
    %v1509 = vunpack.c.h.b16 %v298
    %v1510 = vunpack.c.l.b16 %v299
    %v1511 = vunpack.c.h.b16 %v299
    %v1512 = vunpack.c.l.b16 %v300
    %v1513 = vunpack.c.h.b16 %v300
    %v1514 = vunpack.c.l.b16 %v301
    %v1515 = vunpack.c.h.b16 %v301
    %v1516 = vunpack.c.l.b16 %v302
    %v1517 = vunpack.c.h.b16 %v302
    %v1518 = vunpack.c.l.b16 %v303
    %v1519 = vunpack.c.h.b16 %v303
    %v1520 = vunpack.c.l.b16 %v304
    %v1521 = vunpack.c.h.b16 %v304
    %v1522 = vunpack.c.l.b16 %v305
    %v1523 = vunpack.c.h.b16 %v305
    %v1524 = vunpack.c.l.b16 %v306
    %v1525 = vunpack.c.h.b16 %v306
    %v1526 = vunpack.c.l.b16 %v307
    %v1527 = vunpack.c.h.b16 %v307
    %v1528 = vunpack.c.l.b16 %v308
    %v1529 = vunpack.c.h.b16 %v308
    %v1530 = vunpack.c.l.b16 %v309
    %v1531 = vunpack.c.h.b16 %v309
    %v1532 = vunpack.c.l.b16 %v310
    %v1533 = vunpack.c.h.b16 %v310
    %v1534 = vunpack.c.l.b16 %v311
    %v1535 = vunpack.c.h.b16 %v311
    %v1536 = vunpack.c.l.b16 %v312
    %v1537 = vunpack.c.h.b16 %v312
    %v1538 = vunpack.c.l.b16 %v313
    %v1539 = vunpack.c.h.b16 %v313
    %v1540 = vunpack.c.l.b16 %v314
    %v1541 = vunpack.c.h.b16 %v314
    %v1542 = vunpack.c.l.b16 %v315
    %v1543 = vunpack.c.h.b16 %v315
    %v1544 = vunpack.c.l.b16 %v316
    %v1545 = vunpack.c.h.b16 %v316
    %v1546 = vunpack.c.l.b16 %v317
    %v1547 = vunpack.c.h.b16 %v317
    %v1548 = vunpack.c.l.b16 %v318
    %v1549 = vunpack.c.h.b16 %v318
    %v1550 = vunpack.c.l.b16 %v319
    %v1551 = vunpack.c.h.b16 %v319
    %v1552 = vunpack.c.l.b16 %v320
    %v1553 = vunpack.c.h.b16 %v320
    %v1554 = vunpack.c.l.b16 %v321
    %v1555 = vunpack.c.h.b16 %v321
    %v1556 = vunpack.c.l.b16 %v322
    %v1557 = vunpack.c.h.b16 %v322
    %v1558 = vunpack.c.l.b16 %v323
    %v1559 = vunpack.c.h.b16 %v323
    %v1560 = vunpack.c.l.b16 %v324
    %v1561 = vunpack.c.h.b16 %v324
    %v1562 = vunpack.c.l.b16 %v325
    %v1563 = vunpack.c.h.b16 %v325
    %v1564 = vunpack.c.l.b16 %v326
    %v1565 = vunpack.c.h.b16 %v326
    %v1566 = vunpack.c.l.b16 %v327
    %v1567 = vunpack.c.h.b16 %v327
    %v1568 = vunpack.c.l.b16 %v328
    %v1569 = vunpack.c.h.b16 %v328
    %v1570 = vunpack.c.l.b16 %v329
    %v1571 = vunpack.c.h.b16 %v329
    %v1572 = vunpack.c.l.b16 %v330
    %v1573 = vunpack.c.h.b16 %v330
    %v1574 = vunpack.c.l.b16 %v331
    %v1575 = vunpack.c.h.b16 %v331
    %v1576 = vunpack.c.l.b16 %v332
    %v1577 = vunpack.c.h.b16 %v332
    %v1578 = vunpack.c.l.b16 %v333
    %v1579 = vunpack.c.h.b16 %v333
    %v1580 = vunpack.c.l.b16 %v334
    %v1581 = vunpack.c.h.b16 %v334
    %v1582 = vunpack.c.l.b16 %v335
    %v1583 = vunpack.c.h.b16 %v335
    %v1584 = vunpack.c.l.b16 %v336
    %v1585 = vunpack.c.h.b16 %v336
    %v1586 = vunpack.c.l.b16 %v337
    %v1587 = vunpack.c.h.b16 %v337
    %v1588 = vunpack.c.l.b16 %v338
    %v1589 = vunpack.c.h.b16 %v338
    %v1590 = vunpack.c.l.b16 %v339
    %v1591 = vunpack.c.h.b16 %v339
    %v1592 = vunpack.c.l.b16 %v340
    %v1593 = vunpack.c.h.b16 %v340
    %v1594 = vunpack.c.l.b16 %v341
    %v1595 = vunpack.c.h.b16 %v341
    %v1596 = vunpack.c.l.b16 %v342
    %v1597 = vunpack.c.h.b16 %v342
    %v1598 = vunpack.c.l.b16 %v343
    %v1599 = vunpack.c.h.b16 %v343
    %v1600 = vunpack.c.l.b16 %v344
    %v1601 = vunpack.c.h.b16 %v344
    %v1602 = vunpack.c.l.b16 %v345
    %v1603 = vunpack.c.h.b16 %v345
    %v1604 = vunpack.c.l.b16 %v346
    %v1605 = vunpack.c.h.b16 %v346
    %v1606 = vunpack.c.l.b16 %v347
    %v1607 = vunpack.c.h.b16 %v347
    %v1608 = vunpack.c.l.b16 %v348
    %v1609 = vunpack.c.h.b16 %v348
    %v1610 = vunpack.c.l.b16 %v349
    %v1611 = vunpack.c.h.b16 %v349
    %v1612 = vunpack.c.l.b16 %v350
    %v1613 = vunpack.c.h.b16 %v350
    %v1614 = vunpack.c.l.b16 %v351
    %v1615 = vunpack.c.h.b16 %v351
    %v1616 = vunpack.c.l.b16 %v352
    %v1617 = vunpack.c.h.b16 %v352
    %v1618 = vunpack.c.l.b16 %v353
    %v1619 = vunpack.c.h.b16 %v353
    %v1620 = vunpack.c.l.b16 %v354
    %v1621 = vunpack.c.h.b16 %v354
    %v1622 = vunpack.c.l.b16 %v355
    %v1623 = vunpack.c.h.b16 %v355
    %v1624 = vunpack.c.l.b16 %v356
    %v1625 = vunpack.c.h.b16 %v356
    %v1626 = vunpack.c.l.b16 %v357
    %v1627 = vunpack.c.h.b16 %v357
    %v1628 = vunpack.c.l.b16 %v358
    %v1629 = vunpack.c.h.b16 %v358
    %v1630 = vunpack.c.l.b16 %v359
    %v1631 = vunpack.c.h.b16 %v359
    %v1632 = vunpack.c.l.b16 %v360
    %v1633 = vunpack.c.h.b16 %v360
    %v1634 = vunpack.c.l.b16 %v361
    %v1635 = vunpack.c.h.b16 %v361
    %v1636 = vunpack.c.l.b16 %v362
    %v1637 = vunpack.c.h.b16 %v362
    %v1638 = vunpack.c.l.b16 %v363
    %v1639 = vunpack.c.h.b16 %v363
    %v1640 = vunpack.c.l.b16 %v364
    %v1641 = vunpack.c.h.b16 %v364
    %v1642 = vunpack.c.l.b16 %v365
    %v1643 = vunpack.c.h.b16 %v365
    %v1644 = vunpack.c.l.b16 %v366
    %v1645 = vunpack.c.h.b16 %v366
    %v1646 = vunpack.c.l.b16 %v367
    %v1647 = vunpack.c.h.b16 %v367
    %v1648 = vunpack.c.l.b16 %v368
    %v1649 = vunpack.c.h.b16 %v368
    %v1650 = vunpack.c.l.b16 %v369
    %v1651 = vunpack.c.h.b16 %v369
    %v1652 = vunpack.c.l.b16 %v370
    %v1653 = vunpack.c.h.b16 %v370
    %v1654 = vunpack.c.l.b16 %v371
    %v1655 = vunpack.c.h.b16 %v371
    %v1656 = vunpack.c.l.b16 %v372
    %v1657 = vunpack.c.h.b16 %v372
    %v1658 = vunpack.c.l.b16 %v373
    %v1659 = vunpack.c.h.b16 %v373
    %v1660 = vunpack.c.l.b16 %v374
    %v1661 = vunpack.c.h.b16 %v374
    %v1662 = vunpack.c.l.b16 %v375
    %v1663 = vunpack.c.h.b16 %v375
    %v1664 = vunpack.c.l.b16 %v376
    %v1665 = vunpack.c.h.b16 %v376
    %v1666 = vunpack.c.l.b16 %v377
    %v1667 = vunpack.c.h.b16 %v377
    %v1668 = vunpack.c.l.b16 %v378
    %v1669 = vunpack.c.h.b16 %v378
    %v1670 = vunpack.c.l.b16 %v379
    %v1671 = vunpack.c.h.b16 %v379
    %v1672 = vunpack.c.l.b16 %v380
    %v1673 = vunpack.c.h.b16 %v380
    %v1674 = vunpack.c.l.b16 %v381
    %v1675 = vunpack.c.h.b16 %v381
    %v1676 = vunpack.c.l.b16 %v382
    %v1677 = vunpack.c.h.b16 %v382
    %v1678 = vunpack.c.l.b16 %v383
    %v1679 = vunpack.c.h.b16 %v383
    %v1680 = vunpack.c.l.b16 %v384
    %v1681 = vunpack.c.h.b16 %v384
    %v1682 = vunpack.c.l.b16 %v385
    %v1683 = vunpack.c.h.b16 %v385
    %v1684 = vunpack.c.l.b16 %v386
    %v1685 = vunpack.c.h.b16 %v386
    %v1686 = vunpack.c.l.b16 %v387
    %v1687 = vunpack.c.h.b16 %v387
    %v1688 = vunpack.c.l.b16 %v388
    %v1689 = vunpack.c.h.b16 %v388
    %v1690 = vunpack.c.l.b16 %v389
    %v1691 = vunpack.c.h.b16 %v389
    %v1692 = vunpack.c.l.b16 %v390
    %v1693 = vunpack.c.h.b16 %v390
    %v1694 = vunpack.c.l.b16 %v391
    %v1695 = vunpack.c.h.b16 %v391
    %v1696 = vunpack.c.l.b16 %v392
    %v1697 = vunpack.c.h.b16 %v392
    %v1698 = vunpack.c.l.b16 %v393
    %v1699 = vunpack.c.h.b16 %v393
    %v1700 = vunpack.c.l.b16 %v394
    %v1701 = vunpack.c.h.b16 %v394
    %v1702 = vunpack.c.l.b16 %v395
    %v1703 = vunpack.c.h.b16 %v395
    %v1704 = vunpack.c.l.b16 %v396
    %v1705 = vunpack.c.h.b16 %v396
    %v1706 = vunpack.c.l.b16 %v397
    %v1707 = vunpack.c.h.b16 %v397
    %v1708 = vunpack.c.l.b16 %v398
    %v1709 = vunpack.c.h.b16 %v398
    %v1710 = vunpack.c.l.b16 %v399
    %v1711 = vunpack.c.h.b16 %v399
    %v1712 = vunpack.c.l.b16 %v400
    %v1713 = vunpack.c.h.b16 %v400
    %v1714 = vunpack.c.l.b16 %v401
    %v1715 = vunpack.c.h.b16 %v401
    %v1716 = vunpack.c.l.b16 %v402
    %v1717 = vunpack.c.h.b16 %v402
    %v1718 = vunpack.c.l.b16 %v403
    %v1719 = vunpack.c.h.b16 %v403
    %v1720 = vunpack.c.l.b16 %v404
    %v1721 = vunpack.c.h.b16 %v404
    %v1722 = vunpack.c.l.b16 %v405
    %v1723 = vunpack.c.h.b16 %v405
    %v1724 = vunpack.c.l.b16 %v406
    %v1725 = vunpack.c.h.b16 %v406
    %v1726 = vunpack.c.l.b16 %v407
    %v1727 = vunpack.c.h.b16 %v407
    %v1728 = vunpack.c.l.b16 %v408
    %v1729 = vunpack.c.h.b16 %v408
    %v1730 = vunpack.c.l.b16 %v409
    %v1731 = vunpack.c.h.b16 %v409
    %v1732 = vunpack.c.l.b16 %v410
    %v1733 = vunpack.c.h.b16 %v410
    %v1734 = vunpack.c.l.b16 %v411
    %v1735 = vunpack.c.h.b16 %v411
    %v1736 = vunpack.c.l.b16 %v412
    %v1737 = vunpack.c.h.b16 %v412
    %v1738 = vunpack.c.l.b16 %v413
    %v1739 = vunpack.c.h.b16 %v413
    %v1740 = vunpack.c.l.b16 %v414
    %v1741 = vunpack.c.h.b16 %v414
    %v1742 = vunpack.c.l.b16 %v415
    %v1743 = vunpack.c.h.b16 %v415
    %v1744 = vunpack.c.l.b16 %v416
    %v1745 = vunpack.c.h.b16 %v416
    %v1746 = vunpack.c.l.b16 %v417
    %v1747 = vunpack.c.h.b16 %v417
    %v1748 = vunpack.c.l.b16 %v418
    %v1749 = vunpack.c.h.b16 %v418
    %v1750 = vunpack.c.l.b16 %v419
    %v1751 = vunpack.c.h.b16 %v419
    %v1752 = vunpack.c.l.b16 %v420
    %v1753 = vunpack.c.h.b16 %v420
    %v1754 = vunpack.c.l.b16 %v421
    %v1755 = vunpack.c.h.b16 %v421
    %v1756 = vunpack.c.l.b16 %v422
    %v1757 = vunpack.c.h.b16 %v422
    %v1758 = vunpack.c.l.b16 %v423
    %v1759 = vunpack.c.h.b16 %v423
    %v1760 = vunpack.c.l.b16 %v424
    %v1761 = vunpack.c.h.b16 %v424
    %v1762 = vunpack.c.l.b16 %v425
    %v1763 = vunpack.c.h.b16 %v425
    %v1764 = vunpack.c.l.b16 %v426
    %v1765 = vunpack.c.h.b16 %v426
    %v1766 = vunpack.c.l.b16 %v427
    %v1767 = vunpack.c.h.b16 %v427
    %v1768 = vunpack.c.l.b16 %v428
    %v1769 = vunpack.c.h.b16 %v428
    %v1770 = vunpack.c.l.b16 %v429
    %v1771 = vunpack.c.h.b16 %v429
    %v1772 = vunpack.c.l.b16 %v430
    %v1773 = vunpack.c.h.b16 %v430
    %v1774 = vunpack.c.l.b16 %v431
    %v1775 = vunpack.c.h.b16 %v431
    %v1776 = vunpack.c.l.b16 %v432
    %v1777 = vunpack.c.h.b16 %v432
    %v1778 = vunpack.c.l.b16 %v433
    %v1779 = vunpack.c.h.b16 %v433
    %v1780 = vunpack.c.l.b16 %v434
    %v1781 = vunpack.c.h.b16 %v434
    %v1782 = vunpack.c.l.b16 %v435
    %v1783 = vunpack.c.h.b16 %v435
    %v1784 = vunpack.c.l.b16 %v436
    %v1785 = vunpack.c.h.b16 %v436
    %v1786 = vunpack.c.l.b16 %v437
    %v1787 = vunpack.c.h.b16 %v437
    %v1788 = vunpack.c.l.b16 %v438
    %v1789 = vunpack.c.h.b16 %v438
    %v1790 = vunpack.c.l.b16 %v439
    %v1791 = vunpack.c.h.b16 %v439
    %v1792 = vunpack.c.l.b16 %v440
    %v1793 = vunpack.c.h.b16 %v440
    %v1794 = vunpack.c.l.b16 %v441
    %v1795 = vunpack.c.h.b16 %v441
    %v1796 = vunpack.c.l.b16 %v442
    %v1797 = vunpack.c.h.b16 %v442
    %v1798 = vunpack.c.l.b16 %v443
    %v1799 = vunpack.c.h.b16 %v443
    %v1800 = vunpack.c.l.b16 %v444
    %v1801 = vunpack.c.h.b16 %v444
    %v1802 = vunpack.c.l.b16 %v445
    %v1803 = vunpack.c.h.b16 %v445
    %v1804 = vunpack.c.l.b16 %v446
    %v1805 = vunpack.c.h.b16 %v446
    %v1806 = vunpack.c.l.b16 %v447
    %v1807 = vunpack.c.h.b16 %v447
    %v1808 = vunpack.c.l.b16 %v448
    %v1809 = vunpack.c.h.b16 %v448
    %v1810 = vunpack.c.l.b16 %v449
    %v1811 = vunpack.c.h.b16 %v449
    %v1812 = vunpack.c.l.b16 %v450
    %v1813 = vunpack.c.h.b16 %v450
    %v1814 = vunpack.c.l.b16 %v451
    %v1815 = vunpack.c.h.b16 %v451
    %v1816 = vunpack.c.l.b16 %v452
    %v1817 = vunpack.c.h.b16 %v452
    %v1818 = vunpack.c.l.b16 %v453
    %v1819 = vunpack.c.h.b16 %v453
    %v1820 = vunpack.c.l.b16 %v454
    %v1821 = vunpack.c.h.b16 %v454
    %v1822 = vunpack.c.l.b16 %v455
    %v1823 = vunpack.c.h.b16 %v455
    %v1824 = vunpack.c.l.b16 %v456
    %v1825 = vunpack.c.h.b16 %v456
    %v1826 = vunpack.c.l.b16 %v457
    %v1827 = vunpack.c.h.b16 %v457
    %v1828 = vunpack.c.l.b16 %v458
    %v1829 = vunpack.c.h.b16 %v458
    %v1830 = vunpack.c.l.b16 %v459
    %v1831 = vunpack.c.h.b16 %v459
    %v1832 = vunpack.c.l.b16 %v460
    %v1833 = vunpack.c.h.b16 %v460
    %v1834 = vunpack.c.l.b16 %v461
    %v1835 = vunpack.c.h.b16 %v461
    %v1836 = vunpack.c.l.b16 %v462
    %v1837 = vunpack.c.h.b16 %v462
    %v1838 = vunpack.c.l.b16 %v463
    %v1839 = vunpack.c.h.b16 %v463
    %v1840 = vunpack.c.l.b16 %v464
    %v1841 = vunpack.c.h.b16 %v464
    %v1842 = vunpack.c.l.b16 %v465
    %v1843 = vunpack.c.h.b16 %v465
    %v1844 = vunpack.c.l.b16 %v466
    %v1845 = vunpack.c.h.b16 %v466
    %v1846 = vunpack.c.l.b16 %v467
    %v1847 = vunpack.c.h.b16 %v467
    %v1848 = vunpack.c.l.b16 %v468
    %v1849 = vunpack.c.h.b16 %v468
    %v1850 = vunpack.c.l.b16 %v469
    %v1851 = vunpack.c.h.b16 %v469
    %v1852 = vunpack.c.l.b16 %v470
    %v1853 = vunpack.c.h.b16 %v470
    %v1854 = vunpack.c.l.b16 %v471
    %v1855 = vunpack.c.h.b16 %v471
    %v1856 = vunpack.c.l.b16 %v472
    %v1857 = vunpack.c.h.b16 %v472
    %v1858 = vunpack.c.l.b16 %v473
    %v1859 = vunpack.c.h.b16 %v473
    %v1860 = vunpack.c.l.b16 %v474
    %v1861 = vunpack.c.h.b16 %v474
    %v1862 = vunpack.c.l.b16 %v475
    %v1863 = vunpack.c.h.b16 %v475
    %v1864 = vunpack.c.l.b16 %v476
    %v1865 = vunpack.c.h.b16 %v476
    %v1866 = vunpack.c.l.b16 %v477
    %v1867 = vunpack.c.h.b16 %v477
    %v1868 = vunpack.c.l.b16 %v478
    %v1869 = vunpack.c.h.b16 %v478
    %v1870 = vunpack.c.l.b16 %v479
    %v1871 = vunpack.c.h.b16 %v479
    %v1872 = vunpack.c.l.b16 %v480
    %v1873 = vunpack.c.h.b16 %v480
    %v1874 = vunpack.c.l.b16 %v481
    %v1875 = vunpack.c.h.b16 %v481
    %v1876 = vunpack.c.l.b16 %v482
    %v1877 = vunpack.c.h.b16 %v482
    %v1878 = vunpack.c.l.b16 %v483
    %v1879 = vunpack.c.h.b16 %v483
    %v1880 = vunpack.c.l.b16 %v484
    %v1881 = vunpack.c.h.b16 %v484
    %v1882 = vunpack.c.l.b16 %v485
    %v1883 = vunpack.c.h.b16 %v485
    %v1884 = vunpack.c.l.b16 %v486
    %v1885 = vunpack.c.h.b16 %v486
    %v1886 = vunpack.c.l.b16 %v487
    %v1887 = vunpack.c.h.b16 %v487
    %v1888 = vunpack.c.l.b16 %v488
    %v1889 = vunpack.c.h.b16 %v488
    %v1890 = vunpack.c.l.b16 %v489
    %v1891 = vunpack.c.h.b16 %v489
    %v1892 = vunpack.c.l.b16 %v490
    %v1893 = vunpack.c.h.b16 %v490
    %v1894 = vunpack.c.l.b16 %v491
    %v1895 = vunpack.c.h.b16 %v491
    %v1896 = vunpack.c.l.b16 %v492
    %v1897 = vunpack.c.h.b16 %v492
    %v1898 = vunpack.c.l.b16 %v493
    %v1899 = vunpack.c.h.b16 %v493
    %v1900 = vunpack.c.l.b16 %v494
    %v1901 = vunpack.c.h.b16 %v494
    %v1902 = vunpack.c.l.b16 %v495
    %v1903 = vunpack.c.h.b16 %v495
    %v1904 = vunpack.c.l.b16 %v496
    %v1905 = vunpack.c.h.b16 %v496
    %v1906 = vunpack.c.l.b16 %v497
    %v1907 = vunpack.c.h.b16 %v497
    %v1908 = vunpack.c.l.b16 %v498
    %v1909 = vunpack.c.h.b16 %v498
    %v1910 = vunpack.c.l.b16 %v499
    %v1911 = vunpack.c.h.b16 %v499
    %v1912 = vunpack.c.l.b16 %v500
    %v1913 = vunpack.c.h.b16 %v500
    %v1914 = vunpack.c.l.b16 %v501
    %v1915 = vunpack.c.h.b16 %v501
    %v1916 = vunpack.c.l.b16 %v502
    %v1917 = vunpack.c.h.b16 %v502
    %v1918 = vunpack.c.l.b16 %v503
    %v1919 = vunpack.c.h.b16 %v503
    %v1920 = vunpack.c.l.b16 %v504
    %v1921 = vunpack.c.h.b16 %v504
    %v1922 = vunpack.c.l.b16 %v505
    %v1923 = vunpack.c.h.b16 %v505
    %v1924 = vunpack.c.l.b16 %v506
    %v1925 = vunpack.c.h.b16 %v506
    %v1926 = vunpack.c.l.b16 %v507
    %v1927 = vunpack.c.h.b16 %v507
    %v1928 = vunpack.c.l.b16 %v508
    %v1929 = vunpack.c.h.b16 %v508
    %v1930 = vunpack.c.l.b16 %v509
    %v1931 = vunpack.c.h.b16 %v509
    %v1932 = vunpack.c.l.b16 %v510
    %v1933 = vunpack.c.h.b16 %v510
    %v1934 = vunpack.c.l.b16 %v511
    %v1935 = vunpack.c.h.b16 %v511
    %v1936 = vunpack.c.l.b16 %v512
    %v1937 = vunpack.c.h.b16 %v512
    %v1938 = vunpack.c.l.b16 %v513
    %v1939 = vunpack.c.h.b16 %v513
    %v1940 = vunpack.c.l.b16 %v514
    %v1941 = vunpack.c.h.b16 %v514
    %v1942 = vunpack.c.l.b16 %v515
    %v1943 = vunpack.c.h.b16 %v515
    %v1944 = vunpack.c.l.b16 %v516
    %v1945 = vunpack.c.h.b16 %v516
    %v1946 = vunpack.c.l.b16 %v517
    %v1947 = vunpack.c.h.b16 %v517
    %v1948 = vunpack.c.l.b16 %v518
    %v1949 = vunpack.c.h.b16 %v518
    %v1950 = vunpack.c.l.b16 %v519
    %v1951 = vunpack.c.h.b16 %v519
    %v1952 = vunpack.c.l.b16 %v520
    %v1953 = vunpack.c.h.b16 %v520
    %v1954 = vunpack.c.l.b16 %v521
    %v1955 = vunpack.c.h.b16 %v521
    %v1956 = vunpack.c.l.b16 %v522
    %v1957 = vunpack.c.h.b16 %v522
    %v1958 = vunpack.c.l.b16 %v523
    %v1959 = vunpack.c.h.b16 %v523
    %v1960 = vunpack.c.l.b16 %v524
    %v1961 = vunpack.c.h.b16 %v524
    %v1962 = vunpack.c.l.b16 %v525
    %v1963 = vunpack.c.h.b16 %v525
    %v1964 = vunpack.c.l.b16 %v526
    %v1965 = vunpack.c.h.b16 %v526
    %v1966 = vunpack.c.l.b16 %v527
    %v1967 = vunpack.c.h.b16 %v527
    %v1968 = vunpack.c.l.b16 %v528
    %v1969 = vunpack.c.h.b16 %v528
    %v1970 = vunpack.c.l.b16 %v529
    %v1971 = vunpack.c.h.b16 %v529
    %v1972 = vunpack.c.l.b16 %v530
    %v1973 = vunpack.c.h.b16 %v530
    %v1974 = vunpack.c.l.b16 %v531
    %v1975 = vunpack.c.h.b16 %v531
    %v1976 = vunpack.c.l.b16 %v532
    %v1977 = vunpack.c.h.b16 %v532
    %v1978 = vunpack.c.l.b16 %v533
    %v1979 = vunpack.c.h.b16 %v533
    %v1980 = vunpack.c.l.b16 %v534
    %v1981 = vunpack.c.h.b16 %v534
    %v1982 = vunpack.c.l.b16 %v535
    %v1983 = vunpack.c.h.b16 %v535
    %v1984 = vunpack.c.l.b16 %v536
    %v1985 = vunpack.c.h.b16 %v536
    %v1986 = vunpack.c.l.b16 %v537
    %v1987 = vunpack.c.h.b16 %v537
    %v1988 = vunpack.c.l.b16 %v538
    %v1989 = vunpack.c.h.b16 %v538
    %v1990 = vunpack.c.l.b16 %v539
    %v1991 = vunpack.c.h.b16 %v539
    %v1992 = vunpack.c.l.b16 %v540
    %v1993 = vunpack.c.h.b16 %v540
    %v1994 = vunpack.c.l.b16 %v541
    %v1995 = vunpack.c.h.b16 %v541
    %v1996 = vunpack.c.l.b16 %v542
    %v1997 = vunpack.c.h.b16 %v542
    %v1998 = vunpack.c.l.b16 %v543
    %v1999 = vunpack.c.h.b16 %v543
    %v2000 = vunpack.c.l.b16 %v544
    %v2001 = vunpack.c.h.b16 %v544
    %v2002 = vunpack.c.l.b16 %v545
    %v2003 = vunpack.c.h.b16 %v545
    %v2004 = vunpack.c.l.b16 %v546
    %v2005 = vunpack.c.h.b16 %v546
    %v2006 = vunpack.c.l.b16 %v547
    %v2007 = vunpack.c.h.b16 %v547
    %v2008 = vunpack.c.l.b16 %v548
    %v2009 = vunpack.c.h.b16 %v548
    %v2010 = vunpack.c.l.b16 %v549
    %v2011 = vunpack.c.h.b16 %v549
    %v2012 = vunpack.c.l.b16 %v550
    %v2013 = vunpack.c.h.b16 %v550
    %v2014 = vunpack.c.l.b16 %v551
    %v2015 = vunpack.c.h.b16 %v551
    %v2016 = vunpack.c.l.b16 %v552
    %v2017 = vunpack.c.h.b16 %v552
    %v2018 = vunpack.c.l.b16 %v553
    %v2019 = vunpack.c.h.b16 %v553
    %v2020 = vunpack.c.l.b16 %v554
    %v2021 = vunpack.c.h.b16 %v554
    %v2022 = vunpack.c.l.b16 %v555
    %v2023 = vunpack.c.h.b16 %v555
    %v2024 = vunpack.c.l.b16 %v556
    %v2025 = vunpack.c.h.b16 %v556
    %v2026 = vunpack.c.l.b16 %v557
    %v2027 = vunpack.c.h.b16 %v557
    %v2028 = vunpack.c.l.b16 %v558
    %v2029 = vunpack.c.h.b16 %v558
    %v2030 = vunpack.c.l.b16 %v559
    %v2031 = vunpack.c.h.b16 %v559
    %v2032 = vunpack.c.l.b16 %v560
    %v2033 = vunpack.c.h.b16 %v560
    %v2034 = vunpack.c.l.b16 %v561
    %v2035 = vunpack.c.h.b16 %v561
    %v2036 = vunpack.c.l.b16 %v562
    %v2037 = vunpack.c.h.b16 %v562
    %v2038 = vunpack.c.l.b16 %v563
    %v2039 = vunpack.c.h.b16 %v563
    %v2040 = vunpack.c.l.b16 %v564
    %v2041 = vunpack.c.h.b16 %v564
    %v2042 = vunpack.c.l.b16 %v565
    %v2043 = vunpack.c.h.b16 %v565
    %v2044 = vunpack.c.l.b16 %v566
    %v2045 = vunpack.c.h.b16 %v566
    %v2046 = vunpack.c.l.b16 %v567
    %v2047 = vunpack.c.h.b16 %v567
    %v2048 = vunpack.c.l.b16 %v568
    %v2049 = vunpack.c.h.b16 %v568
    %v2050 = vunpack.c.l.b16 %v569
    %v2051 = vunpack.c.h.b16 %v569
    %v2052 = vunpack.c.l.b16 %v570
    %v2053 = vunpack.c.h.b16 %v570
    %v2054 = vunpack.c.l.b16 %v571
    %v2055 = vunpack.c.h.b16 %v571
    %v2056 = vunpack.c.l.b16 %v572
    %v2057 = vunpack.c.h.b16 %v572
    %v2058 = vunpack.c.l.b16 %v573
    %v2059 = vunpack.c.h.b16 %v573
    %v2060 = vunpack.c.l.b16 %v574
    %v2061 = vunpack.c.h.b16 %v574
    %v2062 = vunpack.c.l.b16 %v575
    %v2063 = vunpack.c.h.b16 %v575
    %v2064 = vunpack.c.l.b16 %v576
    %v2065 = vunpack.c.h.b16 %v576
    %v2066 = vunpack.c.l.b16 %v577
    %v2067 = vunpack.c.h.b16 %v577
    %v2068 = vunpack.c.l.b16 %v578
    %v2069 = vunpack.c.h.b16 %v578
    %v2070 = vunpack.c.l.b16 %v579
    %v2071 = vunpack.c.h.b16 %v579
    %v2072 = vunpack.c.l.b16 %v580
    %v2073 = vunpack.c.h.b16 %v580
    %v2074 = vunpack.c.l.b16 %v581
    %v2075 = vunpack.c.h.b16 %v581
    %v2076 = vunpack.c.l.b16 %v582
    %v2077 = vunpack.c.h.b16 %v582
    %v2078 = vunpack.c.l.b16 %v583
    %v2079 = vunpack.c.h.b16 %v583
    %v2080 = vunpack.c.l.b16 %v584
    %v2081 = vunpack.c.h.b16 %v584
    %v2082 = vunpack.c.l.b16 %v585
    %v2083 = vunpack.c.h.b16 %v585
    %v2084 = vunpack.c.l.b16 %v586
    %v2085 = vunpack.c.h.b16 %v586
    %v2086 = vunpack.c.l.b16 %v587
    %v2087 = vunpack.c.h.b16 %v587
    %v2088 = vunpack.c.l.b16 %v588
    %v2089 = vunpack.c.h.b16 %v588
    %v2090 = vunpack.c.l.b16 %v589
    %v2091 = vunpack.c.h.b16 %v589
    %v2092 = vunpack.c.l.b16 %v590
    %v2093 = vunpack.c.h.b16 %v590
    %v2094 = vunpack.c.l.b16 %v591
    %v2095 = vunpack.c.h.b16 %v591
    %v2096 = vunpack.c.l.b16 %v592
    %v2097 = vunpack.c.h.b16 %v592
    %v2098 = vunpack.c.l.b16 %v593
    %v2099 = vunpack.c.h.b16 %v593
    %v2100 = vunpack.c.l.b16 %v594
    %v2101 = vunpack.c.h.b16 %v594
    %v2102 = vunpack.c.l.b16 %v595
    %v2103 = vunpack.c.h.b16 %v595
    %v2104 = vunpack.c.l.b16 %v596
    %v2105 = vunpack.c.h.b16 %v596
    %v2106 = vunpack.c.l.b16 %v597
    %v2107 = vunpack.c.h.b16 %v597
    %v2108 = vunpack.c.l.b16 %v598
    %v2109 = vunpack.c.h.b16 %v598
    %v2110 = vunpack.c.l.b16 %v599
    %v2111 = vunpack.c.h.b16 %v599
    %v2112 = vunpack.c.l.b16 %v600
    %v2113 = vunpack.c.h.b16 %v600
    %v2114 = vunpack.c.l.b16 %v601
    %v2115 = vunpack.c.h.b16 %v601
    %v2116 = vunpack.c.l.b16 %v602
    %v2117 = vunpack.c.h.b16 %v602
    %v2118 = vunpack.c.l.b16 %v603
    %v2119 = vunpack.c.h.b16 %v603
    %v2120 = vunpack.c.l.b16 %v604
    %v2121 = vunpack.c.h.b16 %v604
    %v2122 = vunpack.c.l.b16 %v605
    %v2123 = vunpack.c.h.b16 %v605
    %v2124 = vunpack.c.l.b16 %v606
    %v2125 = vunpack.c.h.b16 %v606
    %v2126 = vunpack.c.l.b16 %v607
    %v2127 = vunpack.c.h.b16 %v607
    %v2128 = vunpack.c.l.b16 %v608
    %v2129 = vunpack.c.h.b16 %v608
    %v2130 = vunpack.c.l.b16 %v609
    %v2131 = vunpack.c.h.b16 %v609
    %v2132 = vunpack.c.l.b16 %v610
    %v2133 = vunpack.c.h.b16 %v610
    %v2134 = vunpack.c.l.b16 %v611
    %v2135 = vunpack.c.h.b16 %v611
    %v2136 = vunpack.c.l.b16 %v612
    %v2137 = vunpack.c.h.b16 %v612
    %v2138 = vunpack.c.l.b16 %v613
    %v2139 = vunpack.c.h.b16 %v613
    %v2140 = vunpack.c.l.b16 %v614
    %v2141 = vunpack.c.h.b16 %v614
    %v2142 = vunpack.c.l.b16 %v615
    %v2143 = vunpack.c.h.b16 %v615
    %v2144 = vunpack.c.l.b16 %v616
    %v2145 = vunpack.c.h.b16 %v616
    %v2146 = vunpack.c.l.b16 %v617
    %v2147 = vunpack.c.h.b16 %v617
    %v2148 = vunpack.c.l.b16 %v618
    %v2149 = vunpack.c.h.b16 %v618
    %v2150 = vunpack.c.l.b16 %v619
    %v2151 = vunpack.c.h.b16 %v619
    %v2152 = vunpack.c.l.b16 %v620
    %v2153 = vunpack.c.h.b16 %v620
    %v2154 = vunpack.c.l.b16 %v621
    %v2155 = vunpack.c.h.b16 %v621
    %v2156 = vunpack.c.l.b16 %v622
    %v2157 = vunpack.c.h.b16 %v622
    %v2158 = vunpack.c.l.b16 %v623
    %v2159 = vunpack.c.h.b16 %v623
    %v2160 = vunpack.c.l.b16 %v624
    %v2161 = vunpack.c.h.b16 %v624
    %v2162 = vunpack.c.l.b16 %v625
    %v2163 = vunpack.c.h.b16 %v625
    %v2164 = vunpack.c.l.b16 %v626
    %v2165 = vunpack.c.h.b16 %v626
    %v2166 = vunpack.c.l.b16 %v627
    %v2167 = vunpack.c.h.b16 %v627
    %v2168 = vunpack.c.l.b16 %v628
    %v2169 = vunpack.c.h.b16 %v628
    %v2170 = vunpack.c.l.b16 %v629
    %v2171 = vunpack.c.h.b16 %v629
    %v2172 = vunpack.c.l.b16 %v630
    %v2173 = vunpack.c.h.b16 %v630
    %v2174 = vunpack.c.l.b16 %v631
    %v2175 = vunpack.c.h.b16 %v631
    %v2176 = vunpack.c.l.b16 %v632
    %v2177 = vunpack.c.h.b16 %v632
    %v2178 = vunpack.c.l.b16 %v633
    %v2179 = vunpack.c.h.b16 %v633
    %v2180 = vunpack.c.l.b16 %v634
    %v2181 = vunpack.c.h.b16 %v634
    %v2182 = vunpack.c.l.b16 %v635
    %v2183 = vunpack.c.h.b16 %v635
    %v2184 = vunpack.c.l.b16 %v636
    %v2185 = vunpack.c.h.b16 %v636
    %v2186 = vunpack.c.l.b16 %v637
    %v2187 = vunpack.c.h.b16 %v637
    %v2188 = vunpack.c.l.b16 %v638
    %v2189 = vunpack.c.h.b16 %v638
    %v2190 = vunpack.c.l.b16 %v639
    %v2191 = vunpack.c.h.b16 %v639
    %v2192 = vunpack.c.l.b16 %v640
    %v2193 = vunpack.c.h.b16 %v640
    %v2194 = vunpack.c.l.b16 %v641
    %v2195 = vunpack.c.h.b16 %v641
    %v2196 = vunpack.c.l.b16 %v642
    %v2197 = vunpack.c.h.b16 %v642
    %v2198 = vunpack.c.l.b16 %v643
    %v2199 = vunpack.c.h.b16 %v643
    %v2200 = vunpack.c.l.b16 %v644
    %v2201 = vunpack.c.h.b16 %v644
    %v2202 = vunpack.c.l.b16 %v645
    %v2203 = vunpack.c.h.b16 %v645
    %v2204 = vpack.c.b16 %v1184, %v1180
    %v2205 = vpack.c.b16 %v1185, %v1181
    %v2206 = vpack.c.b16 %v1186, %v1182
    %v2207 = vpack.c.b16 %v1187, %v1183
    %v2208 = vpack.c.b16 %v1192, %v1188
    %v2209 = vpack.c.b16 %v1193, %v1189
    %v2210 = vpack.c.b16 %v1194, %v1190
    %v2211 = vpack.c.b16 %v1195, %v1191
    %v2212 = vpack.c.b16 %v1200, %v1196
    %v2213 = vpack.c.b16 %v1201, %v1197
    %v2214 = vpack.c.b16 %v1202, %v1198
    %v2215 = vpack.c.b16 %v1203, %v1199
    %v2216 = vpack.c.b16 %v1208, %v1204
    %v2217 = vpack.c.b16 %v1209, %v1205
    %v2218 = vpack.c.b16 %v1210, %v1206
    %v2219 = vpack.c.b16 %v1211, %v1207
    %v2220 = vpack.c.b16 %v1216, %v1212
    %v2221 = vpack.c.b16 %v1217, %v1213
    %v2222 = vpack.c.b16 %v1218, %v1214
    %v2223 = vpack.c.b16 %v1219, %v1215
    %v2224 = vpack.c.b16 %v1224, %v1220
    %v2225 = vpack.c.b16 %v1225, %v1221
    %v2226 = vpack.c.b16 %v1226, %v1222
    %v2227 = vpack.c.b16 %v1227, %v1223
    %v2228 = vpack.c.b16 %v1232, %v1228
    %v2229 = vpack.c.b16 %v1233, %v1229
    %v2230 = vpack.c.b16 %v1234, %v1230
    %v2231 = vpack.c.b16 %v1235, %v1231
    %v2232 = vpack.c.b16 %v1240, %v1236
    %v2233 = vpack.c.b16 %v1241, %v1237
    %v2234 = vpack.c.b16 %v1242, %v1238
    %v2235 = vpack.c.b16 %v1243, %v1239
    %v2236 = vpack.c.b16 %v1248, %v1244
    %v2237 = vpack.c.b16 %v1249, %v1245
    %v2238 = vpack.c.b16 %v1250, %v1246
    %v2239 = vpack.c.b16 %v1251, %v1247
    %v2240 = vpack.c.b16 %v1256, %v1252
    %v2241 = vpack.c.b16 %v1257, %v1253
    %v2242 = vpack.c.b16 %v1258, %v1254
    %v2243 = vpack.c.b16 %v1259, %v1255
    %v2244 = vpack.c.b16 %v1264, %v1260
    %v2245 = vpack.c.b16 %v1265, %v1261
    %v2246 = vpack.c.b16 %v1266, %v1262
    %v2247 = vpack.c.b16 %v1267, %v1263
    %v2248 = vpack.c.b16 %v1272, %v1268
    %v2249 = vpack.c.b16 %v1273, %v1269
    %v2250 = vpack.c.b16 %v1274, %v1270
    %v2251 = vpack.c.b16 %v1275, %v1271
    %v2252 = vpack.c.b16 %v1280, %v1276
    %v2253 = vpack.c.b16 %v1281, %v1277
    %v2254 = vpack.c.b16 %v1282, %v1278
    %v2255 = vpack.c.b16 %v1283, %v1279
    %v2256 = vpack.c.b16 %v1288, %v1284
    %v2257 = vpack.c.b16 %v1289, %v1285
    %v2258 = vpack.c.b16 %v1290, %v1286
    %v2259 = vpack.c.b16 %v1291, %v1287
    %v2260 = vpack.c.b16 %v1296, %v1292
    %v2261 = vpack.c.b16 %v1297, %v1293
    %v2262 = vpack.c.b16 %v1298, %v1294
    %v2263 = vpack.c.b16 %v1299, %v1295
    %v2264 = vpack.c.b16 %v1304, %v1300
    %v2265 = vpack.c.b16 %v1305, %v1301
    %v2266 = vpack.c.b16 %v1306, %v1302
    %v2267 = vpack.c.b16 %v1307, %v1303
    %v2268 = vpack.c.b16 %v1312, %v1308
    %v2269 = vpack.c.b16 %v1313, %v1309
    %v2270 = vpack.c.b16 %v1314, %v1310
    %v2271 = vpack.c.b16 %v1315, %v1311
    %v2272 = vpack.c.b16 %v1320, %v1316
    %v2273 = vpack.c.b16 %v1321, %v1317
    %v2274 = vpack.c.b16 %v1322, %v1318
    %v2275 = vpack.c.b16 %v1323, %v1319
    %v2276 = vpack.c.b16 %v1328, %v1324
    %v2277 = vpack.c.b16 %v1329, %v1325
    %v2278 = vpack.c.b16 %v1330, %v1326
    %v2279 = vpack.c.b16 %v1331, %v1327
    %v2280 = vpack.c.b16 %v1336, %v1332
    %v2281 = vpack.c.b16 %v1337, %v1333
    %v2282 = vpack.c.b16 %v1338, %v1334
    %v2283 = vpack.c.b16 %v1339, %v1335
    %v2284 = vpack.c.b16 %v1344, %v1340
    %v2285 = vpack.c.b16 %v1345, %v1341
    %v2286 = vpack.c.b16 %v1346, %v1342
    %v2287 = vpack.c.b16 %v1347, %v1343
    %v2288 = vpack.c.b16 %v1352, %v1348
    %v2289 = vpack.c.b16 %v1353, %v1349
    %v2290 = vpack.c.b16 %v1354, %v1350
    %v2291 = vpack.c.b16 %v1355, %v1351
    %v2292 = vpack.c.b16 %v1360, %v1356
    %v2293 = vpack.c.b16 %v1361, %v1357
    %v2294 = vpack.c.b16 %v1362, %v1358
    %v2295 = vpack.c.b16 %v1363, %v1359
    %v2296 = vpack.c.b16 %v1368, %v1364
    %v2297 = vpack.c.b16 %v1369, %v1365
    %v2298 = vpack.c.b16 %v1370, %v1366
    %v2299 = vpack.c.b16 %v1371, %v1367
    %v2300 = vpack.c.b16 %v1376, %v1372
    %v2301 = vpack.c.b16 %v1377, %v1373
    %v2302 = vpack.c.b16 %v1378, %v1374
    %v2303 = vpack.c.b16 %v1379, %v1375
    %v2304 = vpack.c.b16 %v1384, %v1380
    %v2305 = vpack.c.b16 %v1385, %v1381
    %v2306 = vpack.c.b16 %v1386, %v1382
    %v2307 = vpack.c.b16 %v1387, %v1383
    %v2308 = vpack.c.b16 %v1392, %v1388
    %v2309 = vpack.c.b16 %v1393, %v1389
    %v2310 = vpack.c.b16 %v1394, %v1390
    %v2311 = vpack.c.b16 %v1395, %v1391
    %v2312 = vpack.c.b16 %v1400, %v1396
    %v2313 = vpack.c.b16 %v1401, %v1397
    %v2314 = vpack.c.b16 %v1402, %v1398
    %v2315 = vpack.c.b16 %v1403, %v1399
    %v2316 = vpack.c.b16 %v1408, %v1404
    %v2317 = vpack.c.b16 %v1409, %v1405
    %v2318 = vpack.c.b16 %v1410, %v1406
    %v2319 = vpack.c.b16 %v1411, %v1407
    %v2320 = vpack.c.b16 %v1416, %v1412
    %v2321 = vpack.c.b16 %v1417, %v1413
    %v2322 = vpack.c.b16 %v1418, %v1414
    %v2323 = vpack.c.b16 %v1419, %v1415
    %v2324 = vpack.c.b16 %v1424, %v1420
    %v2325 = vpack.c.b16 %v1425, %v1421
    %v2326 = vpack.c.b16 %v1426, %v1422
    %v2327 = vpack.c.b16 %v1427, %v1423
    %v2328 = vpack.c.b16 %v1432, %v1428
    %v2329 = vpack.c.b16 %v1433, %v1429
    %v2330 = vpack.c.b16 %v1434, %v1430
    %v2331 = vpack.c.b16 %v1435, %v1431
    %v2332 = vpack.c.b16 %v1440, %v1436
    %v2333 = vpack.c.b16 %v1441, %v1437
    %v2334 = vpack.c.b16 %v1442, %v1438
    %v2335 = vpack.c.b16 %v1443, %v1439
    %v2336 = vpack.c.b16 %v1448, %v1444
    %v2337 = vpack.c.b16 %v1449, %v1445
    %v2338 = vpack.c.b16 %v1450, %v1446
    %v2339 = vpack.c.b16 %v1451, %v1447
    %v2340 = vpack.c.b16 %v1456, %v1452
    %v2341 = vpack.c.b16 %v1457, %v1453
    %v2342 = vpack.c.b16 %v1458, %v1454
    %v2343 = vpack.c.b16 %v1459, %v1455
    %v2344 = vpack.c.b16 %v1464, %v1460
    %v2345 = vpack.c.b16 %v1465, %v1461
    %v2346 = vpack.c.b16 %v1466, %v1462
    %v2347 = vpack.c.b16 %v1467, %v1463
    %v2348 = vpack.c.b16 %v1472, %v1468
    %v2349 = vpack.c.b16 %v1473, %v1469
    %v2350 = vpack.c.b16 %v1474, %v1470
    %v2351 = vpack.c.b16 %v1475, %v1471
    %v2352 = vpack.c.b16 %v1480, %v1476
    %v2353 = vpack.c.b16 %v1481, %v1477
    %v2354 = vpack.c.b16 %v1482, %v1478
    %v2355 = vpack.c.b16 %v1483, %v1479
    %v2356 = vpack.c.b16 %v1488, %v1484
    %v2357 = vpack.c.b16 %v1489, %v1485
    %v2358 = vpack.c.b16 %v1490, %v1486
    %v2359 = vpack.c.b16 %v1491, %v1487
    %v2360 = vpack.c.b16 %v1496, %v1492
    %v2361 = vpack.c.b16 %v1497, %v1493
    %v2362 = vpack.c.b16 %v1498, %v1494
    %v2363 = vpack.c.b16 %v1499, %v1495
    %v2364 = vpack.c.b16 %v1504, %v1500
    %v2365 = vpack.c.b16 %v1505, %v1501
    %v2366 = vpack.c.b16 %v1506, %v1502
    %v2367 = vpack.c.b16 %v1507, %v1503
    %v2368 = vpack.c.b16 %v1512, %v1508
    %v2369 = vpack.c.b16 %v1513, %v1509
    %v2370 = vpack.c.b16 %v1514, %v1510
    %v2371 = vpack.c.b16 %v1515, %v1511
    %v2372 = vpack.c.b16 %v1520, %v1516
    %v2373 = vpack.c.b16 %v1521, %v1517
    %v2374 = vpack.c.b16 %v1522, %v1518
    %v2375 = vpack.c.b16 %v1523, %v1519
    %v2376 = vpack.c.b16 %v1528, %v1524
    %v2377 = vpack.c.b16 %v1529, %v1525
    %v2378 = vpack.c.b16 %v1530, %v1526
    %v2379 = vpack.c.b16 %v1531, %v1527
    %v2380 = vpack.c.b16 %v1536, %v1532
    %v2381 = vpack.c.b16 %v1537, %v1533
    %v2382 = vpack.c.b16 %v1538, %v1534
    %v2383 = vpack.c.b16 %v1539, %v1535
    %v2384 = vpack.c.b16 %v1544, %v1540
    %v2385 = vpack.c.b16 %v1545, %v1541
    %v2386 = vpack.c.b16 %v1546, %v1542
    %v2387 = vpack.c.b16 %v1547, %v1543
    %v2388 = vpack.c.b16 %v1552, %v1548
    %v2389 = vpack.c.b16 %v1553, %v1549
    %v2390 = vpack.c.b16 %v1554, %v1550
    %v2391 = vpack.c.b16 %v1555, %v1551
    %v2392 = vpack.c.b16 %v1560, %v1556
    %v2393 = vpack.c.b16 %v1561, %v1557
    %v2394 = vpack.c.b16 %v1562, %v1558
    %v2395 = vpack.c.b16 %v1563, %v1559
    %v2396 = vpack.c.b16 %v1568, %v1564
    %v2397 = vpack.c.b16 %v1569, %v1565
    %v2398 = vpack.c.b16 %v1570, %v1566
    %v2399 = vpack.c.b16 %v1571, %v1567
    %v2400 = vpack.c.b16 %v1576, %v1572
    %v2401 = vpack.c.b16 %v1577, %v1573
    %v2402 = vpack.c.b16 %v1578, %v1574
    %v2403 = vpack.c.b16 %v1579, %v1575
    %v2404 = vpack.c.b16 %v1584, %v1580
    %v2405 = vpack.c.b16 %v1585, %v1581
    %v2406 = vpack.c.b16 %v1586, %v1582
    %v2407 = vpack.c.b16 %v1587, %v1583
    %v2408 = vpack.c.b16 %v1592, %v1588
    %v2409 = vpack.c.b16 %v1593, %v1589
    %v2410 = vpack.c.b16 %v1594, %v1590
    %v2411 = vpack.c.b16 %v1595, %v1591
    %v2412 = vpack.c.b16 %v1600, %v1596
    %v2413 = vpack.c.b16 %v1601, %v1597
    %v2414 = vpack.c.b16 %v1602, %v1598
    %v2415 = vpack.c.b16 %v1603, %v1599
    %v2416 = vpack.c.b16 %v1608, %v1604
    %v2417 = vpack.c.b16 %v1609, %v1605
    %v2418 = vpack.c.b16 %v1610, %v1606
    %v2419 = vpack.c.b16 %v1611, %v1607
    %v2420 = vpack.c.b16 %v1616, %v1612
    %v2421 = vpack.c.b16 %v1617, %v1613
    %v2422 = vpack.c.b16 %v1618, %v1614
    %v2423 = vpack.c.b16 %v1619, %v1615
    %v2424 = vpack.c.b16 %v1624, %v1620
    %v2425 = vpack.c.b16 %v1625, %v1621
    %v2426 = vpack.c.b16 %v1626, %v1622
    %v2427 = vpack.c.b16 %v1627, %v1623
    %v2428 = vpack.c.b16 %v1632, %v1628
    %v2429 = vpack.c.b16 %v1633, %v1629
    %v2430 = vpack.c.b16 %v1634, %v1630
    %v2431 = vpack.c.b16 %v1635, %v1631
    %v2432 = vpack.c.b16 %v1640, %v1636
    %v2433 = vpack.c.b16 %v1641, %v1637
    %v2434 = vpack.c.b16 %v1642, %v1638
    %v2435 = vpack.c.b16 %v1643, %v1639
    %v2436 = vpack.c.b16 %v1648, %v1644
    %v2437 = vpack.c.b16 %v1649, %v1645
    %v2438 = vpack.c.b16 %v1650, %v1646
    %v2439 = vpack.c.b16 %v1651, %v1647
    %v2440 = vpack.c.b16 %v1656, %v1652
    %v2441 = vpack.c.b16 %v1657, %v1653
    %v2442 = vpack.c.b16 %v1658, %v1654
    %v2443 = vpack.c.b16 %v1659, %v1655
    %v2444 = vpack.c.b16 %v1664, %v1660
    %v2445 = vpack.c.b16 %v1665, %v1661
    %v2446 = vpack.c.b16 %v1666, %v1662
    %v2447 = vpack.c.b16 %v1667, %v1663
    %v2448 = vpack.c.b16 %v1672, %v1668
    %v2449 = vpack.c.b16 %v1673, %v1669
    %v2450 = vpack.c.b16 %v1674, %v1670
    %v2451 = vpack.c.b16 %v1675, %v1671
    %v2452 = vpack.c.b16 %v1680, %v1676
    %v2453 = vpack.c.b16 %v1681, %v1677
    %v2454 = vpack.c.b16 %v1682, %v1678
    %v2455 = vpack.c.b16 %v1683, %v1679
    %v2456 = vpack.c.b16 %v1688, %v1684
    %v2457 = vpack.c.b16 %v1689, %v1685
    %v2458 = vpack.c.b16 %v1690, %v1686
    %v2459 = vpack.c.b16 %v1691, %v1687
    %v2460 = vpack.c.b16 %v1696, %v1692
    %v2461 = vpack.c.b16 %v1697, %v1693
    %v2462 = vpack.c.b16 %v1698, %v1694
    %v2463 = vpack.c.b16 %v1699, %v1695
    %v2464 = vpack.c.b16 %v1704, %v1700
    %v2465 = vpack.c.b16 %v1705, %v1701
    %v2466 = vpack.c.b16 %v1706, %v1702
    %v2467 = vpack.c.b16 %v1707, %v1703
    %v2468 = vpack.c.b16 %v1712, %v1708
    %v2469 = vpack.c.b16 %v1713, %v1709
    %v2470 = vpack.c.b16 %v1714, %v1710
    %v2471 = vpack.c.b16 %v1715, %v1711
    %v2472 = vpack.c.b16 %v1720, %v1716
    %v2473 = vpack.c.b16 %v1721, %v1717
    %v2474 = vpack.c.b16 %v1722, %v1718
    %v2475 = vpack.c.b16 %v1723, %v1719
    %v2476 = vpack.c.b16 %v1728, %v1724
    %v2477 = vpack.c.b16 %v1729, %v1725
    %v2478 = vpack.c.b16 %v1730, %v1726
    %v2479 = vpack.c.b16 %v1731, %v1727
    %v2480 = vpack.c.b16 %v1736, %v1732
    %v2481 = vpack.c.b16 %v1737, %v1733
    %v2482 = vpack.c.b16 %v1738, %v1734
    %v2483 = vpack.c.b16 %v1739, %v1735
    %v2484 = vpack.c.b16 %v1744, %v1740
    %v2485 = vpack.c.b16 %v1745, %v1741
    %v2486 = vpack.c.b16 %v1746, %v1742
    %v2487 = vpack.c.b16 %v1747, %v1743
    %v2488 = vpack.c.b16 %v1752, %v1748
    %v2489 = vpack.c.b16 %v1753, %v1749
    %v2490 = vpack.c.b16 %v1754, %v1750
    %v2491 = vpack.c.b16 %v1755, %v1751
    %v2492 = vpack.c.b16 %v1760, %v1756
    %v2493 = vpack.c.b16 %v1761, %v1757
    %v2494 = vpack.c.b16 %v1762, %v1758
    %v2495 = vpack.c.b16 %v1763, %v1759
    %v2496 = vpack.c.b16 %v1768, %v1764
    %v2497 = vpack.c.b16 %v1769, %v1765
    %v2498 = vpack.c.b16 %v1770, %v1766
    %v2499 = vpack.c.b16 %v1771, %v1767
    %v2500 = vpack.c.b16 %v1776, %v1772
    %v2501 = vpack.c.b16 %v1777, %v1773
    %v2502 = vpack.c.b16 %v1778, %v1774
    %v2503 = vpack.c.b16 %v1779, %v1775
    %v2504 = vpack.c.b16 %v1784, %v1780
    %v2505 = vpack.c.b16 %v1785, %v1781
    %v2506 = vpack.c.b16 %v1786, %v1782
    %v2507 = vpack.c.b16 %v1787, %v1783
    %v2508 = vpack.c.b16 %v1792, %v1788
    %v2509 = vpack.c.b16 %v1793, %v1789
    %v2510 = vpack.c.b16 %v1794, %v1790
    %v2511 = vpack.c.b16 %v1795, %v1791
    %v2512 = vpack.c.b16 %v1800, %v1796
    %v2513 = vpack.c.b16 %v1801, %v1797
    %v2514 = vpack.c.b16 %v1802, %v1798
    %v2515 = vpack.c.b16 %v1803, %v1799
    %v2516 = vpack.c.b16 %v1808, %v1804
    %v2517 = vpack.c.b16 %v1809, %v1805
    %v2518 = vpack.c.b16 %v1810, %v1806
    %v2519 = vpack.c.b16 %v1811, %v1807
    %v2520 = vpack.c.b16 %v1816, %v1812
    %v2521 = vpack.c.b16 %v1817, %v1813
    %v2522 = vpack.c.b16 %v1818, %v1814
    %v2523 = vpack.c.b16 %v1819, %v1815
    %v2524 = vpack.c.b16 %v1824, %v1820
    %v2525 = vpack.c.b16 %v1825, %v1821
    %v2526 = vpack.c.b16 %v1826, %v1822
    %v2527 = vpack.c.b16 %v1827, %v1823
    %v2528 = vpack.c.b16 %v1832, %v1828
    %v2529 = vpack.c.b16 %v1833, %v1829
    %v2530 = vpack.c.b16 %v1834, %v1830
    %v2531 = vpack.c.b16 %v1835, %v1831
    %v2532 = vpack.c.b16 %v1840, %v1836
    %v2533 = vpack.c.b16 %v1841, %v1837
    %v2534 = vpack.c.b16 %v1842, %v1838
    %v2535 = vpack.c.b16 %v1843, %v1839
    %v2536 = vpack.c.b16 %v1848, %v1844
    %v2537 = vpack.c.b16 %v1849, %v1845
    %v2538 = vpack.c.b16 %v1850, %v1846
    %v2539 = vpack.c.b16 %v1851, %v1847
    %v2540 = vpack.c.b16 %v1856, %v1852
    %v2541 = vpack.c.b16 %v1857, %v1853
    %v2542 = vpack.c.b16 %v1858, %v1854
    %v2543 = vpack.c.b16 %v1859, %v1855
    %v2544 = vpack.c.b16 %v1864, %v1860
    %v2545 = vpack.c.b16 %v1865, %v1861
    %v2546 = vpack.c.b16 %v1866, %v1862
    %v2547 = vpack.c.b16 %v1867, %v1863
    %v2548 = vpack.c.b16 %v1872, %v1868
    %v2549 = vpack.c.b16 %v1873, %v1869
    %v2550 = vpack.c.b16 %v1874, %v1870
    %v2551 = vpack.c.b16 %v1875, %v1871
    %v2552 = vpack.c.b16 %v1880, %v1876
    %v2553 = vpack.c.b16 %v1881, %v1877
    %v2554 = vpack.c.b16 %v1882, %v1878
    %v2555 = vpack.c.b16 %v1883, %v1879
    %v2556 = vpack.c.b16 %v1888, %v1884
    %v2557 = vpack.c.b16 %v1889, %v1885
    %v2558 = vpack.c.b16 %v1890, %v1886
    %v2559 = vpack.c.b16 %v1891, %v1887
    %v2560 = vpack.c.b16 %v1896, %v1892
    %v2561 = vpack.c.b16 %v1897, %v1893
    %v2562 = vpack.c.b16 %v1898, %v1894
    %v2563 = vpack.c.b16 %v1899, %v1895
    %v2564 = vpack.c.b16 %v1904, %v1900
    %v2565 = vpack.c.b16 %v1905, %v1901
    %v2566 = vpack.c.b16 %v1906, %v1902
    %v2567 = vpack.c.b16 %v1907, %v1903
    %v2568 = vpack.c.b16 %v1912, %v1908
    %v2569 = vpack.c.b16 %v1913, %v1909
    %v2570 = vpack.c.b16 %v1914, %v1910
    %v2571 = vpack.c.b16 %v1915, %v1911
    %v2572 = vpack.c.b16 %v1920, %v1916
    %v2573 = vpack.c.b16 %v1921, %v1917
    %v2574 = vpack.c.b16 %v1922, %v1918
    %v2575 = vpack.c.b16 %v1923, %v1919
    %v2576 = vpack.c.b16 %v1928, %v1924
    %v2577 = vpack.c.b16 %v1929, %v1925
    %v2578 = vpack.c.b16 %v1930, %v1926
    %v2579 = vpack.c.b16 %v1931, %v1927
    %v2580 = vpack.c.b16 %v1936, %v1932
    %v2581 = vpack.c.b16 %v1937, %v1933
    %v2582 = vpack.c.b16 %v1938, %v1934
    %v2583 = vpack.c.b16 %v1939, %v1935
    %v2584 = vpack.c.b16 %v1944, %v1940
    %v2585 = vpack.c.b16 %v1945, %v1941
    %v2586 = vpack.c.b16 %v1946, %v1942
    %v2587 = vpack.c.b16 %v1947, %v1943
    %v2588 = vpack.c.b16 %v1952, %v1948
    %v2589 = vpack.c.b16 %v1953, %v1949
    %v2590 = vpack.c.b16 %v1954, %v1950
    %v2591 = vpack.c.b16 %v1955, %v1951
    %v2592 = vpack.c.b16 %v1960, %v1956
    %v2593 = vpack.c.b16 %v1961, %v1957
    %v2594 = vpack.c.b16 %v1962, %v1958
    %v2595 = vpack.c.b16 %v1963, %v1959
    %v2596 = vpack.c.b16 %v1968, %v1964
    %v2597 = vpack.c.b16 %v1969, %v1965
    %v2598 = vpack.c.b16 %v1970, %v1966
    %v2599 = vpack.c.b16 %v1971, %v1967
    %v2600 = vpack.c.b16 %v1976, %v1972
    %v2601 = vpack.c.b16 %v1977, %v1973
    %v2602 = vpack.c.b16 %v1978, %v1974
    %v2603 = vpack.c.b16 %v1979, %v1975
    %v2604 = vpack.c.b16 %v1984, %v1980
    %v2605 = vpack.c.b16 %v1985, %v1981
    %v2606 = vpack.c.b16 %v1986, %v1982
    %v2607 = vpack.c.b16 %v1987, %v1983
    %v2608 = vpack.c.b16 %v1992, %v1988
    %v2609 = vpack.c.b16 %v1993, %v1989
    %v2610 = vpack.c.b16 %v1994, %v1990
    %v2611 = vpack.c.b16 %v1995, %v1991
    %v2612 = vpack.c.b16 %v2000, %v1996
    %v2613 = vpack.c.b16 %v2001, %v1997
    %v2614 = vpack.c.b16 %v2002, %v1998
    %v2615 = vpack.c.b16 %v2003, %v1999
    %v2616 = vpack.c.b16 %v2008, %v2004
    %v2617 = vpack.c.b16 %v2009, %v2005
    %v2618 = vpack.c.b16 %v2010, %v2006
    %v2619 = vpack.c.b16 %v2011, %v2007
    %v2620 = vpack.c.b16 %v2016, %v2012
    %v2621 = vpack.c.b16 %v2017, %v2013
    %v2622 = vpack.c.b16 %v2018, %v2014
    %v2623 = vpack.c.b16 %v2019, %v2015
    %v2624 = vpack.c.b16 %v2024, %v2020
    %v2625 = vpack.c.b16 %v2025, %v2021
    %v2626 = vpack.c.b16 %v2026, %v2022
    %v2627 = vpack.c.b16 %v2027, %v2023
    %v2628 = vpack.c.b16 %v2032, %v2028
    %v2629 = vpack.c.b16 %v2033, %v2029
    %v2630 = vpack.c.b16 %v2034, %v2030
    %v2631 = vpack.c.b16 %v2035, %v2031
    %v2632 = vpack.c.b16 %v2040, %v2036
    %v2633 = vpack.c.b16 %v2041, %v2037
    %v2634 = vpack.c.b16 %v2042, %v2038
    %v2635 = vpack.c.b16 %v2043, %v2039
    %v2636 = vpack.c.b16 %v2048, %v2044
    %v2637 = vpack.c.b16 %v2049, %v2045
    %v2638 = vpack.c.b16 %v2050, %v2046
    %v2639 = vpack.c.b16 %v2051, %v2047
    %v2640 = vpack.c.b16 %v2056, %v2052
    %v2641 = vpack.c.b16 %v2057, %v2053
    %v2642 = vpack.c.b16 %v2058, %v2054
    %v2643 = vpack.c.b16 %v2059, %v2055
    %v2644 = vpack.c.b16 %v2064, %v2060
    %v2645 = vpack.c.b16 %v2065, %v2061
    %v2646 = vpack.c.b16 %v2066, %v2062
    %v2647 = vpack.c.b16 %v2067, %v2063
    %v2648 = vpack.c.b16 %v2072, %v2068
    %v2649 = vpack.c.b16 %v2073, %v2069
    %v2650 = vpack.c.b16 %v2074, %v2070
    %v2651 = vpack.c.b16 %v2075, %v2071
    %v2652 = vpack.c.b16 %v2080, %v2076
    %v2653 = vpack.c.b16 %v2081, %v2077
    %v2654 = vpack.c.b16 %v2082, %v2078
    %v2655 = vpack.c.b16 %v2083, %v2079
    %v2656 = vpack.c.b16 %v2088, %v2084
    %v2657 = vpack.c.b16 %v2089, %v2085
    %v2658 = vpack.c.b16 %v2090, %v2086
    %v2659 = vpack.c.b16 %v2091, %v2087
    %v2660 = vpack.c.b16 %v2096, %v2092
    %v2661 = vpack.c.b16 %v2097, %v2093
    %v2662 = vpack.c.b16 %v2098, %v2094
    %v2663 = vpack.c.b16 %v2099, %v2095
    %v2664 = vpack.c.b16 %v2104, %v2100
    %v2665 = vpack.c.b16 %v2105, %v2101
    %v2666 = vpack.c.b16 %v2106, %v2102
    %v2667 = vpack.c.b16 %v2107, %v2103
    %v2668 = vpack.c.b16 %v2112, %v2108
    %v2669 = vpack.c.b16 %v2113, %v2109
    %v2670 = vpack.c.b16 %v2114, %v2110
    %v2671 = vpack.c.b16 %v2115, %v2111
    %v2672 = vpack.c.b16 %v2120, %v2116
    %v2673 = vpack.c.b16 %v2121, %v2117
    %v2674 = vpack.c.b16 %v2122, %v2118
    %v2675 = vpack.c.b16 %v2123, %v2119
    %v2676 = vpack.c.b16 %v2128, %v2124
    %v2677 = vpack.c.b16 %v2129, %v2125
    %v2678 = vpack.c.b16 %v2130, %v2126
    %v2679 = vpack.c.b16 %v2131, %v2127
    %v2680 = vpack.c.b16 %v2136, %v2132
    %v2681 = vpack.c.b16 %v2137, %v2133
    %v2682 = vpack.c.b16 %v2138, %v2134
    %v2683 = vpack.c.b16 %v2139, %v2135
    %v2684 = vpack.c.b16 %v2144, %v2140
    %v2685 = vpack.c.b16 %v2145, %v2141
    %v2686 = vpack.c.b16 %v2146, %v2142
    %v2687 = vpack.c.b16 %v2147, %v2143
    %v2688 = vpack.c.b16 %v2152, %v2148
    %v2689 = vpack.c.b16 %v2153, %v2149
    %v2690 = vpack.c.b16 %v2154, %v2150
    %v2691 = vpack.c.b16 %v2155, %v2151
    %v2692 = vpack.c.b16 %v2160, %v2156
    %v2693 = vpack.c.b16 %v2161, %v2157
    %v2694 = vpack.c.b16 %v2162, %v2158
    %v2695 = vpack.c.b16 %v2163, %v2159
    %v2696 = vpack.c.b16 %v2168, %v2164
    %v2697 = vpack.c.b16 %v2169, %v2165
    %v2698 = vpack.c.b16 %v2170, %v2166
    %v2699 = vpack.c.b16 %v2171, %v2167
    %v2700 = vpack.c.b16 %v2176, %v2172
    %v2701 = vpack.c.b16 %v2177, %v2173
    %v2702 = vpack.c.b16 %v2178, %v2174
    %v2703 = vpack.c.b16 %v2179, %v2175
    %v2704 = vpack.c.b16 %v2184, %v2180
    %v2705 = vpack.c.b16 %v2185, %v2181
    %v2706 = vpack.c.b16 %v2186, %v2182
    %v2707 = vpack.c.b16 %v2187, %v2183
    %v2708 = vpack.c.b16 %v2192, %v2188
    %v2709 = vpack.c.b16 %v2193, %v2189
    %v2710 = vpack.c.b16 %v2194, %v2190
    %v2711 = vpack.c.b16 %v2195, %v2191
    %v2712 = vpack.c.b16 %v2200, %v2196
    %v2713 = vpack.c.b16 %v2201, %v2197
    %v2714 = vpack.c.b16 %v2202, %v2198
    %v2715 = vpack.c.b16 %v2203, %v2199
    %3228 = vmatprep.subr.bf16.mxu0 %v2205
    %3229 = vmatpush1.bf16.msra.mxu0 %v2204
    %3230 = vmatprep.subr.bf16.mxu0 %v2209
    %3231 = vmatpush1.bf16.msra.mxu0 %v2208
    %3232 = vmatprep.subr.bf16.mxu0 %v2213
    %3233 = vmatpush1.bf16.msra.mxu0 %v2212
    %3234 = vmatprep.subr.bf16.mxu0 %v2217
    %3235 = vmatpush1.bf16.msra.mxu0 %v2216
    %3236 = vmatprep.subr.bf16.mxu0 %v2221
    %3237 = vmatpush1.bf16.msra.mxu0 %v2220
    %3238 = vmatprep.subr.bf16.mxu0 %v2225
    %3239 = vmatpush1.bf16.msra.mxu0 %v2224
    %3240 = vmatprep.subr.bf16.mxu0 %v2229
    %3241 = vmatpush1.bf16.msra.mxu0 %v2228
    %3242 = vmatprep.subr.bf16.mxu0 %v2233
    %3243 = vmatpush1.bf16.msra.mxu0 %v2232
    %3244 = vmatprep.subr.bf16.mxu0 %v2237
    %3245 = vmatpush1.bf16.msra.mxu0 %v2236
    %3246 = vmatprep.subr.bf16.mxu0 %v2241
    %3247 = vmatpush1.bf16.msra.mxu0 %v2240
    %3248 = vmatprep.subr.bf16.mxu0 %v2245
    %3249 = vmatpush1.bf16.msra.mxu0 %v2244
    %3250 = vmatprep.subr.bf16.mxu0 %v2249
    %3251 = vmatpush1.bf16.msra.mxu0 %v2248
    %3252 = vmatprep.subr.bf16.mxu0 %v2253
    %3253 = vmatpush1.bf16.msra.mxu0 %v2252
    %3254 = vmatprep.subr.bf16.mxu0 %v2257
    %3255 = vmatpush1.bf16.msra.mxu0 %v2256
    %3256 = vmatprep.subr.bf16.mxu0 %v2261
    %3257 = vmatpush1.bf16.msra.mxu0 %v2260
    %3258 = vmatprep.subr.bf16.mxu0 %v2265
    %3259 = vmatpush1.bf16.msra.mxu0 %v2264
    %3260 = vmatprep.mubr.bf16.mxu0 %v119
    %3261 = vmatmul.mubr.bf16.gmra.mrb[0].mxu0 %v118
    %v3262 = vpop.f32.mrb[0].mxu0
    %v3263 = vadd.f32 %v651, %v3262
    %v3264 = vpop.f32.mrb[0].mxu0
    %v3265 = vadd.f32 %v655, %v3264
    %v3266 = vpop.f32.mrb[0].mxu0
    %v3267 = vadd.f32 %v651, %v3266
    %v3268 = vpop.f32.mrb[0].mxu0
    %v3269 = vadd.f32 %v655, %v3268
    %3270 = vdwg.mxu0
    %3271 = vmatprep.subr.bf16.mxu0 %v2269
    %3272 = vmatpush1.bf16.msra.mxu0 %v2268
    %3273 = vmatprep.subr.bf16.mxu0 %v2273
    %3274 = vmatpush1.bf16.msra.mxu0 %v2272
    %3275 = vmatprep.subr.bf16.mxu0 %v2277
    %3276 = vmatpush1.bf16.msra.mxu0 %v2276
    %3277 = vmatprep.subr.bf16.mxu0 %v2281
    %3278 = vmatpush1.bf16.msra.mxu0 %v2280
    %3279 = vmatprep.subr.bf16.mxu0 %v2285
    %3280 = vmatpush1.bf16.msra.mxu0 %v2284
    %3281 = vmatprep.subr.bf16.mxu0 %v2289
    %3282 = vmatpush1.bf16.msra.mxu0 %v2288
    %3283 = vmatprep.subr.bf16.mxu0 %v2293
    %3284 = vmatpush1.bf16.msra.mxu0 %v2292
    %3285 = vmatprep.subr.bf16.mxu0 %v2297
    %3286 = vmatpush1.bf16.msra.mxu0 %v2296
    %3287 = vmatprep.subr.bf16.mxu0 %v2301
    %3288 = vmatpush1.bf16.msra.mxu0 %v2300
    %3289 = vmatprep.subr.bf16.mxu0 %v2305
    %3290 = vmatpush1.bf16.msra.mxu0 %v2304
    %3291 = vmatprep.subr.bf16.mxu0 %v2309
    %3292 = vmatpush1.bf16.msra.mxu0 %v2308
    %3293 = vmatprep.subr.bf16.mxu0 %v2313
    %3294 = vmatpush1.bf16.msra.mxu0 %v2312
    %3295 = vmatprep.subr.bf16.mxu0 %v2317
    %3296 = vmatpush1.bf16.msra.mxu0 %v2316
    %3297 = vmatprep.subr.bf16.mxu0 %v2321
    %3298 = vmatpush1.bf16.msra.mxu0 %v2320
    %3299 = vmatprep.subr.bf16.mxu0 %v2325
    %3300 = vmatpush1.bf16.msra.mxu0 %v2324
    %3301 = vmatprep.subr.bf16.mxu0 %v2329
    %3302 = vmatpush1.bf16.msra.mxu0 %v2328
    %3303 = vmatprep.mubr.bf16.mxu0 %v121
    %3304 = vmatmul.mubr.bf16.gmra.mrb[0].mxu0 %v120
    %v3305 = vpop.f32.mrb[0].mxu0
    %v3306 = vadd.f32 %v3263, %v3305
    %v3307 = vpop.f32.mrb[0].mxu0
    %v3308 = vadd.f32 %v3265, %v3307
    %v3309 = vpop.f32.mrb[0].mxu0
    %v3310 = vadd.f32 %v3267, %v3309
    %v3311 = vpop.f32.mrb[0].mxu0
    %v3312 = vadd.f32 %v3269, %v3311
    %3313 = vdwg.mxu0
    %3314 = vmatprep.subr.bf16.mxu0 %v2333
    %3315 = vmatpush1.bf16.msra.mxu0 %v2332
    %3316 = vmatprep.subr.bf16.mxu0 %v2337
    %3317 = vmatpush1.bf16.msra.mxu0 %v2336
    %3318 = vmatprep.subr.bf16.mxu0 %v2341
    %3319 = vmatpush1.bf16.msra.mxu0 %v2340
    %3320 = vmatprep.subr.bf16.mxu0 %v2345
    %3321 = vmatpush1.bf16.msra.mxu0 %v2344
    %3322 = vmatprep.subr.bf16.mxu0 %v2349
    %3323 = vmatpush1.bf16.msra.mxu0 %v2348
    %3324 = vmatprep.subr.bf16.mxu0 %v2353
    %3325 = vmatpush1.bf16.msra.mxu0 %v2352
    %3326 = vmatprep.subr.bf16.mxu0 %v2357
    %3327 = vmatpush1.bf16.msra.mxu0 %v2356
    %3328 = vmatprep.subr.bf16.mxu0 %v2361
    %3329 = vmatpush1.bf16.msra.mxu0 %v2360
    %3330 = vmatprep.subr.bf16.mxu0 %v2365
    %3331 = vmatpush1.bf16.msra.mxu0 %v2364
    %3332 = vmatprep.subr.bf16.mxu0 %v2369
    %3333 = vmatpush1.bf16.msra.mxu0 %v2368
    %3334 = vmatprep.subr.bf16.mxu0 %v2373
    %3335 = vmatpush1.bf16.msra.mxu0 %v2372
    %3336 = vmatprep.subr.bf16.mxu0 %v2377
    %3337 = vmatpush1.bf16.msra.mxu0 %v2376
    %3338 = vmatprep.subr.bf16.mxu0 %v2381
    %3339 = vmatpush1.bf16.msra.mxu0 %v2380
    %3340 = vmatprep.subr.bf16.mxu0 %v2385
    %3341 = vmatpush1.bf16.msra.mxu0 %v2384
    %3342 = vmatprep.subr.bf16.mxu0 %v2389
    %3343 = vmatpush1.bf16.msra.mxu0 %v2388
    %3344 = vmatprep.subr.bf16.mxu0 %v2393
    %3345 = vmatpush1.bf16.msra.mxu0 %v2392
    %3346 = vmatprep.mubr.bf16.mxu0 %v123
    %3347 = vmatmul.mubr.bf16.gmra.mrb[0].mxu0 %v122
    %v3348 = vpop.f32.mrb[0].mxu0
    %v3349 = vadd.f32 %v3306, %v3348
    %v3350 = vpop.f32.mrb[0].mxu0
    %v3351 = vadd.f32 %v3308, %v3350
    %v3352 = vpop.f32.mrb[0].mxu0
    %v3353 = vadd.f32 %v3310, %v3352
    %v3354 = vpop.f32.mrb[0].mxu0
    %v3355 = vadd.f32 %v3312, %v3354
    %3356 = vdwg.mxu0
    %3357 = vmatprep.subr.bf16.mxu0 %v2397
    %3358 = vmatpush1.bf16.msra.mxu0 %v2396
    %3359 = vmatprep.subr.bf16.mxu0 %v2401
    %3360 = vmatpush1.bf16.msra.mxu0 %v2400
    %3361 = vmatprep.subr.bf16.mxu0 %v2405
    %3362 = vmatpush1.bf16.msra.mxu0 %v2404
    %3363 = vmatprep.subr.bf16.mxu0 %v2409
    %3364 = vmatpush1.bf16.msra.mxu0 %v2408
    %3365 = vmatprep.subr.bf16.mxu0 %v2413
    %3366 = vmatpush1.bf16.msra.mxu0 %v2412
    %3367 = vmatprep.subr.bf16.mxu0 %v2417
    %3368 = vmatpush1.bf16.msra.mxu0 %v2416
    %3369 = vmatprep.subr.bf16.mxu0 %v2421
    %3370 = vmatpush1.bf16.msra.mxu0 %v2420
    %3371 = vmatprep.subr.bf16.mxu0 %v2425
    %3372 = vmatpush1.bf16.msra.mxu0 %v2424
    %3373 = vmatprep.subr.bf16.mxu0 %v2429
    %3374 = vmatpush1.bf16.msra.mxu0 %v2428
    %3375 = vmatprep.subr.bf16.mxu0 %v2433
    %3376 = vmatpush1.bf16.msra.mxu0 %v2432
    %3377 = vmatprep.subr.bf16.mxu0 %v2437
    %3378 = vmatpush1.bf16.msra.mxu0 %v2436
    %3379 = vmatprep.subr.bf16.mxu0 %v2441
    %3380 = vmatpush1.bf16.msra.mxu0 %v2440
    %3381 = vmatprep.subr.bf16.mxu0 %v2445
    %3382 = vmatpush1.bf16.msra.mxu0 %v2444
    %3383 = vmatprep.subr.bf16.mxu0 %v2449
    %3384 = vmatpush1.bf16.msra.mxu0 %v2448
    %3385 = vmatprep.subr.bf16.mxu0 %v2453
    %3386 = vmatpush1.bf16.msra.mxu0 %v2452
    %3387 = vmatprep.subr.bf16.mxu0 %v2457
    %3388 = vmatpush1.bf16.msra.mxu0 %v2456
    %3389 = vmatprep.mubr.bf16.mxu0 %v125
    %3390 = vmatmul.mubr.bf16.gmra.mrb[0].mxu0 %v124
    %v3391 = vpop.f32.mrb[0].mxu0
    %v3392 = vadd.f32 %v3349, %v3391
    %v3393 = vpop.f32.mrb[0].mxu0
    %v3394 = vadd.f32 %v3351, %v3393
    %v3395 = vpop.f32.mrb[0].mxu0
    %v3396 = vadd.f32 %v3353, %v3395
    %v3397 = vpop.f32.mrb[0].mxu0
    %v3398 = vadd.f32 %v3355, %v3397
    %3399 = vdwg.mxu0
    %3400 = vmatprep.subr.bf16.mxu0 %v2461
    %3401 = vmatpush1.bf16.msra.mxu0 %v2460
    %3402 = vmatprep.subr.bf16.mxu0 %v2465
    %3403 = vmatpush1.bf16.msra.mxu0 %v2464
    %3404 = vmatprep.subr.bf16.mxu0 %v2469
    %3405 = vmatpush1.bf16.msra.mxu0 %v2468
    %3406 = vmatprep.subr.bf16.mxu0 %v2473
    %3407 = vmatpush1.bf16.msra.mxu0 %v2472
    %3408 = vmatprep.subr.bf16.mxu0 %v2477
    %3409 = vmatpush1.bf16.msra.mxu0 %v2476
    %3410 = vmatprep.subr.bf16.mxu0 %v2481
    %3411 = vmatpush1.bf16.msra.mxu0 %v2480
    %3412 = vmatprep.subr.bf16.mxu0 %v2485
    %3413 = vmatpush1.bf16.msra.mxu0 %v2484
    %3414 = vmatprep.subr.bf16.mxu0 %v2489
    %3415 = vmatpush1.bf16.msra.mxu0 %v2488
    %3416 = vmatprep.subr.bf16.mxu0 %v2493
    %3417 = vmatpush1.bf16.msra.mxu0 %v2492
    %3418 = vmatprep.subr.bf16.mxu0 %v2497
    %3419 = vmatpush1.bf16.msra.mxu0 %v2496
    %3420 = vmatprep.subr.bf16.mxu0 %v2501
    %3421 = vmatpush1.bf16.msra.mxu0 %v2500
    %3422 = vmatprep.subr.bf16.mxu0 %v2505
    %3423 = vmatpush1.bf16.msra.mxu0 %v2504
    %3424 = vmatprep.subr.bf16.mxu0 %v2509
    %3425 = vmatpush1.bf16.msra.mxu0 %v2508
    %3426 = vmatprep.subr.bf16.mxu0 %v2513
    %3427 = vmatpush1.bf16.msra.mxu0 %v2512
    %3428 = vmatprep.subr.bf16.mxu0 %v2517
    %3429 = vmatpush1.bf16.msra.mxu0 %v2516
    %3430 = vmatprep.subr.bf16.mxu0 %v2521
    %3431 = vmatpush1.bf16.msra.mxu0 %v2520
    %3432 = vmatprep.mubr.bf16.mxu0 %v127
    %3433 = vmatmul.mubr.bf16.gmra.mrb[0].mxu0 %v126
    %v3434 = vpop.f32.mrb[0].mxu0
    %v3435 = vadd.f32 %v3392, %v3434
    %v3436 = vpop.f32.mrb[0].mxu0
    %v3437 = vadd.f32 %v3394, %v3436
    %v3438 = vpop.f32.mrb[0].mxu0
    %v3439 = vadd.f32 %v3396, %v3438
    %v3440 = vpop.f32.mrb[0].mxu0
    %v3441 = vadd.f32 %v3398, %v3440
    %3442 = vdwg.mxu0
    %3443 = vmatprep.subr.bf16.mxu0 %v2525
    %3444 = vmatpush1.bf16.msra.mxu0 %v2524
    %3445 = vmatprep.subr.bf16.mxu0 %v2529
    %3446 = vmatpush1.bf16.msra.mxu0 %v2528
    %3447 = vmatprep.subr.bf16.mxu0 %v2533
    %3448 = vmatpush1.bf16.msra.mxu0 %v2532
    %3449 = vmatprep.subr.bf16.mxu0 %v2537
    %3450 = vmatpush1.bf16.msra.mxu0 %v2536
    %3451 = vmatprep.subr.bf16.mxu0 %v2541
    %3452 = vmatpush1.bf16.msra.mxu0 %v2540
    %3453 = vmatprep.subr.bf16.mxu0 %v2545
    %3454 = vmatpush1.bf16.msra.mxu0 %v2544
    %3455 = vmatprep.subr.bf16.mxu0 %v2549
    %3456 = vmatpush1.bf16.msra.mxu0 %v2548
    %3457 = vmatprep.subr.bf16.mxu0 %v2553
    %3458 = vmatpush1.bf16.msra.mxu0 %v2552
    %3459 = vmatprep.subr.bf16.mxu0 %v2557
    %3460 = vmatpush1.bf16.msra.mxu0 %v2556
    %3461 = vmatprep.subr.bf16.mxu0 %v2561
    %3462 = vmatpush1.bf16.msra.mxu0 %v2560
    %3463 = vmatprep.subr.bf16.mxu0 %v2565
    %3464 = vmatpush1.bf16.msra.mxu0 %v2564
    %3465 = vmatprep.subr.bf16.mxu0 %v2569
    %3466 = vmatpush1.bf16.msra.mxu0 %v2568
    %3467 = vmatprep.subr.bf16.mxu0 %v2573
    %3468 = vmatpush1.bf16.msra.mxu0 %v2572
    %3469 = vmatprep.subr.bf16.mxu0 %v2577
    %3470 = vmatpush1.bf16.msra.mxu0 %v2576
    %3471 = vmatprep.subr.bf16.mxu0 %v2581
    %3472 = vmatpush1.bf16.msra.mxu0 %v2580
    %3473 = vmatprep.subr.bf16.mxu0 %v2585
    %3474 = vmatpush1.bf16.msra.mxu0 %v2584
    %3475 = vmatprep.mubr.bf16.mxu0 %v129
    %3476 = vmatmul.mubr.bf16.gmra.mrb[0].mxu0 %v128
    %v3477 = vpop.f32.mrb[0].mxu0
    %v3478 = vadd.f32 %v3435, %v3477
    %v3479 = vpop.f32.mrb[0].mxu0
    %v3480 = vadd.f32 %v3437, %v3479
    %v3481 = vpop.f32.mrb[0].mxu0
    %v3482 = vadd.f32 %v3439, %v3481
    %v3483 = vpop.f32.mrb[0].mxu0
    %v3484 = vadd.f32 %v3441, %v3483
    %3485 = vdwg.mxu0
    %3486 = vmatprep.subr.bf16.mxu0 %v2589
    %3487 = vmatpush1.bf16.msra.mxu0 %v2588
    %3488 = vmatprep.subr.bf16.mxu0 %v2593
    %3489 = vmatpush1.bf16.msra.mxu0 %v2592
    %3490 = vmatprep.subr.bf16.mxu0 %v2597
    %3491 = vmatpush1.bf16.msra.mxu0 %v2596
    %3492 = vmatprep.subr.bf16.mxu0 %v2601
    %3493 = vmatpush1.bf16.msra.mxu0 %v2600
    %3494 = vmatprep.subr.bf16.mxu0 %v2605
    %3495 = vmatpush1.bf16.msra.mxu0 %v2604
    %3496 = vmatprep.subr.bf16.mxu0 %v2609
    %3497 = vmatpush1.bf16.msra.mxu0 %v2608
    %3498 = vmatprep.subr.bf16.mxu0 %v2613
    %3499 = vmatpush1.bf16.msra.mxu0 %v2612
    %3500 = vmatprep.subr.bf16.mxu0 %v2617
    %3501 = vmatpush1.bf16.msra.mxu0 %v2616
    %3502 = vmatprep.subr.bf16.mxu0 %v2621
    %3503 = vmatpush1.bf16.msra.mxu0 %v2620
    %3504 = vmatprep.subr.bf16.mxu0 %v2625
    %3505 = vmatpush1.bf16.msra.mxu0 %v2624
    %3506 = vmatprep.subr.bf16.mxu0 %v2629
    %3507 = vmatpush1.bf16.msra.mxu0 %v2628
    %3508 = vmatprep.subr.bf16.mxu0 %v2633
    %3509 = vmatpush1.bf16.msra.mxu0 %v2632
    %3510 = vmatprep.subr.bf16.mxu0 %v2637
    %3511 = vmatpush1.bf16.msra.mxu0 %v2636
    %3512 = vmatprep.subr.bf16.mxu0 %v2641
    %3513 = vmatpush1.bf16.msra.mxu0 %v2640
    %3514 = vmatprep.subr.bf16.mxu0 %v2645
    %3515 = vmatpush1.bf16.msra.mxu0 %v2644
    %3516 = vmatprep.subr.bf16.mxu0 %v2649
    %3517 = vmatpush1.bf16.msra.mxu0 %v2648
    %3518 = vmatprep.mubr.bf16.mxu0 %v131
    %3519 = vmatmul.mubr.bf16.gmra.mrb[0].mxu0 %v130
    %v3520 = vpop.f32.mrb[0].mxu0
    %v3521 = vadd.f32 %v3478, %v3520
    %v3522 = vpop.f32.mrb[0].mxu0
    %v3523 = vadd.f32 %v3480, %v3522
    %v3524 = vpop.f32.mrb[0].mxu0
    %v3525 = vadd.f32 %v3482, %v3524
    %v3526 = vpop.f32.mrb[0].mxu0
    %v3527 = vadd.f32 %v3484, %v3526
    %3528 = vdwg.mxu0
    %3529 = vmatprep.subr.bf16.mxu0 %v2653
    %3530 = vmatpush1.bf16.msra.mxu0 %v2652
    %3531 = vmatprep.subr.bf16.mxu0 %v2657
    %3532 = vmatpush1.bf16.msra.mxu0 %v2656
    %3533 = vmatprep.subr.bf16.mxu0 %v2661
    %3534 = vmatpush1.bf16.msra.mxu0 %v2660
    %3535 = vmatprep.subr.bf16.mxu0 %v2665
    %3536 = vmatpush1.bf16.msra.mxu0 %v2664
    %3537 = vmatprep.subr.bf16.mxu0 %v2669
    %3538 = vmatpush1.bf16.msra.mxu0 %v2668
    %3539 = vmatprep.subr.bf16.mxu0 %v2673
    %3540 = vmatpush1.bf16.msra.mxu0 %v2672
    %3541 = vmatprep.subr.bf16.mxu0 %v2677
    %3542 = vmatpush1.bf16.msra.mxu0 %v2676
    %3543 = vmatprep.subr.bf16.mxu0 %v2681
    %3544 = vmatpush1.bf16.msra.mxu0 %v2680
    %3545 = vmatprep.subr.bf16.mxu0 %v2685
    %3546 = vmatpush1.bf16.msra.mxu0 %v2684
    %3547 = vmatprep.subr.bf16.mxu0 %v2689
    %3548 = vmatpush1.bf16.msra.mxu0 %v2688
    %3549 = vmatprep.subr.bf16.mxu0 %v2693
    %3550 = vmatpush1.bf16.msra.mxu0 %v2692
    %3551 = vmatprep.subr.bf16.mxu0 %v2697
    %3552 = vmatpush1.bf16.msra.mxu0 %v2696
    %3553 = vmatprep.subr.bf16.mxu0 %v2701
    %3554 = vmatpush1.bf16.msra.mxu0 %v2700
    %3555 = vmatprep.subr.bf16.mxu0 %v2705
    %3556 = vmatpush1.bf16.msra.mxu0 %v2704
    %3557 = vmatprep.subr.bf16.mxu0 %v2709
    %3558 = vmatpush1.bf16.msra.mxu0 %v2708
    %3559 = vmatprep.subr.bf16.mxu0 %v2713
    %3560 = vmatpush1.bf16.msra.mxu0 %v2712
    %3561 = vmatprep.mubr.bf16.mxu0 %v133
    %3562 = vmatmul.mubr.bf16.gmra.mrb[0].mxu0 %v132
    %v3563 = vpop.f32.mrb[0].mxu0
    %v3564 = vadd.f32 %v3521, %v3563
    %v3565 = vpop.f32.mrb[0].mxu0
    %v3566 = vadd.f32 %v3523, %v3565
    %v3567 = vpop.f32.mrb[0].mxu0
    %v3568 = vadd.f32 %v3525, %v3567
    %v3569 = vpop.f32.mrb[0].mxu0
    %v3570 = vadd.f32 %v3527, %v3569
    %3571 = vdwg.mxu0
    %3572 = vmatprep.subr.bf16.mxu0 %v2207
    %3573 = vmatpush1.bf16.msra.mxu0 %v2206
    %3574 = vmatprep.subr.bf16.mxu0 %v2211
    %3575 = vmatpush1.bf16.msra.mxu0 %v2210
    %3576 = vmatprep.subr.bf16.mxu0 %v2215
    %3577 = vmatpush1.bf16.msra.mxu0 %v2214
    %3578 = vmatprep.subr.bf16.mxu0 %v2219
    %3579 = vmatpush1.bf16.msra.mxu0 %v2218
    %3580 = vmatprep.subr.bf16.mxu0 %v2223
    %3581 = vmatpush1.bf16.msra.mxu0 %v2222
    %3582 = vmatprep.subr.bf16.mxu0 %v2227
    %3583 = vmatpush1.bf16.msra.mxu0 %v2226
    %3584 = vmatprep.subr.bf16.mxu0 %v2231
    %3585 = vmatpush1.bf16.msra.mxu0 %v2230
    %3586 = vmatprep.subr.bf16.mxu0 %v2235
    %3587 = vmatpush1.bf16.msra.mxu0 %v2234
    %3588 = vmatprep.subr.bf16.mxu0 %v2239
    %3589 = vmatpush1.bf16.msra.mxu0 %v2238
    %3590 = vmatprep.subr.bf16.mxu0 %v2243
    %3591 = vmatpush1.bf16.msra.mxu0 %v2242
    %3592 = vmatprep.subr.bf16.mxu0 %v2247
    %3593 = vmatpush1.bf16.msra.mxu0 %v2246
    %3594 = vmatprep.subr.bf16.mxu0 %v2251
    %3595 = vmatpush1.bf16.msra.mxu0 %v2250
    %3596 = vmatprep.subr.bf16.mxu0 %v2255
    %3597 = vmatpush1.bf16.msra.mxu0 %v2254
    %3598 = vmatprep.subr.bf16.mxu0 %v2259
    %3599 = vmatpush1.bf16.msra.mxu0 %v2258
    %3600 = vmatprep.subr.bf16.mxu0 %v2263
    %3601 = vmatpush1.bf16.msra.mxu0 %v2262
    %3602 = vmatprep.subr.bf16.mxu0 %v2267
    %3603 = vmatpush1.bf16.msra.mxu0 %v2266
    %3604 = vmatprep.mubr.bf16.mxu0 %v119
    %3605 = vmatmul.mubr.bf16.gmra.mrb[0].mxu0 %v118
    %v3606 = vpop.f32.mrb[0].mxu0
    %v3607 = vadd.f32 %v659, %v3606
    %v3608 = vpop.f32.mrb[0].mxu0
    %v3609 = vadd.f32 %v663, %v3608
    %v3610 = vpop.f32.mrb[0].mxu0
    %v3611 = vadd.f32 %v659, %v3610
    %v3612 = vpop.f32.mrb[0].mxu0
    %v3613 = vadd.f32 %v663, %v3612
    %3614 = vdwg.mxu0
    %3615 = vmatprep.subr.bf16.mxu0 %v2271
    %3616 = vmatpush1.bf16.msra.mxu0 %v2270
    %3617 = vmatprep.subr.bf16.mxu0 %v2275
    %3618 = vmatpush1.bf16.msra.mxu0 %v2274
    %3619 = vmatprep.subr.bf16.mxu0 %v2279
    %3620 = vmatpush1.bf16.msra.mxu0 %v2278
    %3621 = vmatprep.subr.bf16.mxu0 %v2283
    %3622 = vmatpush1.bf16.msra.mxu0 %v2282
    %3623 = vmatprep.subr.bf16.mxu0 %v2287
    %3624 = vmatpush1.bf16.msra.mxu0 %v2286
    %3625 = vmatprep.subr.bf16.mxu0 %v2291
    %3626 = vmatpush1.bf16.msra.mxu0 %v2290
    %3627 = vmatprep.subr.bf16.mxu0 %v2295
    %3628 = vmatpush1.bf16.msra.mxu0 %v2294
    %3629 = vmatprep.subr.bf16.mxu0 %v2299
    %3630 = vmatpush1.bf16.msra.mxu0 %v2298
    %3631 = vmatprep.subr.bf16.mxu0 %v2303
    %3632 = vmatpush1.bf16.msra.mxu0 %v2302
    %3633 = vmatprep.subr.bf16.mxu0 %v2307
    %3634 = vmatpush1.bf16.msra.mxu0 %v2306
    %3635 = vmatprep.subr.bf16.mxu0 %v2311
    %3636 = vmatpush1.bf16.msra.mxu0 %v2310
    %3637 = vmatprep.subr.bf16.mxu0 %v2315
    %3638 = vmatpush1.bf16.msra.mxu0 %v2314
    %3639 = vmatprep.subr.bf16.mxu0 %v2319
    %3640 = vmatpush1.bf16.msra.mxu0 %v2318
    %3641 = vmatprep.subr.bf16.mxu0 %v2323
    %3642 = vmatpush1.bf16.msra.mxu0 %v2322
    %3643 = vmatprep.subr.bf16.mxu0 %v2327
    %3644 = vmatpush1.bf16.msra.mxu0 %v2326
    %3645 = vmatprep.subr.bf16.mxu0 %v2331
    %3646 = vmatpush1.bf16.msra.mxu0 %v2330
    %3647 = vmatprep.mubr.bf16.mxu0 %v121
    %3648 = vmatmul.mubr.bf16.gmra.mrb[0].mxu0 %v120
    %v3649 = vpop.f32.mrb[0].mxu0
    %v3650 = vadd.f32 %v3607, %v3649
    %v3651 = vpop.f32.mrb[0].mxu0
    %v3652 = vadd.f32 %v3609, %v3651
    %v3653 = vpop.f32.mrb[0].mxu0
    %v3654 = vadd.f32 %v3611, %v3653
    %v3655 = vpop.f32.mrb[0].mxu0
    %v3656 = vadd.f32 %v3613, %v3655
    %3657 = vdwg.mxu0
    %3658 = vmatprep.subr.bf16.mxu0 %v2335
    %3659 = vmatpush1.bf16.msra.mxu0 %v2334
    %3660 = vmatprep.subr.bf16.mxu0 %v2339
    %3661 = vmatpush1.bf16.msra.mxu0 %v2338
    %3662 = vmatprep.subr.bf16.mxu0 %v2343
    %3663 = vmatpush1.bf16.msra.mxu0 %v2342
    %3664 = vmatprep.subr.bf16.mxu0 %v2347
    %3665 = vmatpush1.bf16.msra.mxu0 %v2346
    %3666 = vmatprep.subr.bf16.mxu0 %v2351
    %3667 = vmatpush1.bf16.msra.mxu0 %v2350
    %3668 = vmatprep.subr.bf16.mxu0 %v2355
    %3669 = vmatpush1.bf16.msra.mxu0 %v2354
    %3670 = vmatprep.subr.bf16.mxu0 %v2359
    %3671 = vmatpush1.bf16.msra.mxu0 %v2358
    %3672 = vmatprep.subr.bf16.mxu0 %v2363
    %3673 = vmatpush1.bf16.msra.mxu0 %v2362
    %3674 = vmatprep.subr.bf16.mxu0 %v2367
    %3675 = vmatpush1.bf16.msra.mxu0 %v2366
    %3676 = vmatprep.subr.bf16.mxu0 %v2371
    %3677 = vmatpush1.bf16.msra.mxu0 %v2370
    %3678 = vmatprep.subr.bf16.mxu0 %v2375
    %3679 = vmatpush1.bf16.msra.mxu0 %v2374
    %3680 = vmatprep.subr.bf16.mxu0 %v2379
    %3681 = vmatpush1.bf16.msra.mxu0 %v2378
    %3682 = vmatprep.subr.bf16.mxu0 %v2383
    %3683 = vmatpush1.bf16.msra.mxu0 %v2382
    %3684 = vmatprep.subr.bf16.mxu0 %v2387
    %3685 = vmatpush1.bf16.msra.mxu0 %v2386
    %3686 = vmatprep.subr.bf16.mxu0 %v2391
    %3687 = vmatpush1.bf16.msra.mxu0 %v2390
    %3688 = vmatprep.subr.bf16.mxu0 %v2395
    %3689 = vmatpush1.bf16.msra.mxu0 %v2394
    %3690 = vmatprep.mubr.bf16.mxu0 %v123
    %3691 = vmatmul.mubr.bf16.gmra.mrb[0].mxu0 %v122
    %v3692 = vpop.f32.mrb[0].mxu0
    %v3693 = vadd.f32 %v3650, %v3692
    %v3694 = vpop.f32.mrb[0].mxu0
    %v3695 = vadd.f32 %v3652, %v3694
    %v3696 = vpop.f32.mrb[0].mxu0
    %v3697 = vadd.f32 %v3654, %v3696
    %v3698 = vpop.f32.mrb[0].mxu0
    %v3699 = vadd.f32 %v3656, %v3698
    %3700 = vdwg.mxu0
    %3701 = vmatprep.subr.bf16.mxu0 %v2399
    %3702 = vmatpush1.bf16.msra.mxu0 %v2398
    %3703 = vmatprep.subr.bf16.mxu0 %v2403
    %3704 = vmatpush1.bf16.msra.mxu0 %v2402
    %3705 = vmatprep.subr.bf16.mxu0 %v2407
    %3706 = vmatpush1.bf16.msra.mxu0 %v2406
    %3707 = vmatprep.subr.bf16.mxu0 %v2411
    %3708 = vmatpush1.bf16.msra.mxu0 %v2410
    %3709 = vmatprep.subr.bf16.mxu0 %v2415
    %3710 = vmatpush1.bf16.msra.mxu0 %v2414
    %3711 = vmatprep.subr.bf16.mxu0 %v2419
    %3712 = vmatpush1.bf16.msra.mxu0 %v2418
    %3713 = vmatprep.subr.bf16.mxu0 %v2423
    %3714 = vmatpush1.bf16.msra.mxu0 %v2422
    %3715 = vmatprep.subr.bf16.mxu0 %v2427
    %3716 = vmatpush1.bf16.msra.mxu0 %v2426
    %3717 = vmatprep.subr.bf16.mxu0 %v2431
    %3718 = vmatpush1.bf16.msra.mxu0 %v2430
    %3719 = vmatprep.subr.bf16.mxu0 %v2435
    %3720 = vmatpush1.bf16.msra.mxu0 %v2434
    %3721 = vmatprep.subr.bf16.mxu0 %v2439
    %3722 = vmatpush1.bf16.msra.mxu0 %v2438
    %3723 = vmatprep.subr.bf16.mxu0 %v2443
    %3724 = vmatpush1.bf16.msra.mxu0 %v2442
    %3725 = vmatprep.subr.bf16.mxu0 %v2447
    %3726 = vmatpush1.bf16.msra.mxu0 %v2446
    %3727 = vmatprep.subr.bf16.mxu0 %v2451
    %3728 = vmatpush1.bf16.msra.mxu0 %v2450
    %3729 = vmatprep.subr.bf16.mxu0 %v2455
    %3730 = vmatpush1.bf16.msra.mxu0 %v2454
    %3731 = vmatprep.subr.bf16.mxu0 %v2459
    %3732 = vmatpush1.bf16.msra.mxu0 %v2458
    %3733 = vmatprep.mubr.bf16.mxu0 %v125
    %3734 = vmatmul.mubr.bf16.gmra.mrb[0].mxu0 %v124
    %v3735 = vpop.f32.mrb[0].mxu0
    %v3736 = vadd.f32 %v3693, %v3735
    %v3737 = vpop.f32.mrb[0].mxu0
    %v3738 = vadd.f32 %v3695, %v3737
    %v3739 = vpop.f32.mrb[0].mxu0
    %v3740 = vadd.f32 %v3697, %v3739
    %v3741 = vpop.f32.mrb[0].mxu0
    %v3742 = vadd.f32 %v3699, %v3741
    %3743 = vdwg.mxu0
    %3744 = vmatprep.subr.bf16.mxu0 %v2463
    %3745 = vmatpush1.bf16.msra.mxu0 %v2462
    %3746 = vmatprep.subr.bf16.mxu0 %v2467
    %3747 = vmatpush1.bf16.msra.mxu0 %v2466
    %3748 = vmatprep.subr.bf16.mxu0 %v2471
    %3749 = vmatpush1.bf16.msra.mxu0 %v2470
    %3750 = vmatprep.subr.bf16.mxu0 %v2475
    %3751 = vmatpush1.bf16.msra.mxu0 %v2474
    %3752 = vmatprep.subr.bf16.mxu0 %v2479
    %3753 = vmatpush1.bf16.msra.mxu0 %v2478
    %3754 = vmatprep.subr.bf16.mxu0 %v2483
    %3755 = vmatpush1.bf16.msra.mxu0 %v2482
    %3756 = vmatprep.subr.bf16.mxu0 %v2487
    %3757 = vmatpush1.bf16.msra.mxu0 %v2486
    %3758 = vmatprep.subr.bf16.mxu0 %v2491
    %3759 = vmatpush1.bf16.msra.mxu0 %v2490
    %3760 = vmatprep.subr.bf16.mxu0 %v2495
    %3761 = vmatpush1.bf16.msra.mxu0 %v2494
    %3762 = vmatprep.subr.bf16.mxu0 %v2499
    %3763 = vmatpush1.bf16.msra.mxu0 %v2498
    %3764 = vmatprep.subr.bf16.mxu0 %v2503
    %3765 = vmatpush1.bf16.msra.mxu0 %v2502
    %3766 = vmatprep.subr.bf16.mxu0 %v2507
    %3767 = vmatpush1.bf16.msra.mxu0 %v2506
    %3768 = vmatprep.subr.bf16.mxu0 %v2511
    %3769 = vmatpush1.bf16.msra.mxu0 %v2510
    %3770 = vmatprep.subr.bf16.mxu0 %v2515
    %3771 = vmatpush1.bf16.msra.mxu0 %v2514
    %3772 = vmatprep.subr.bf16.mxu0 %v2519
    %3773 = vmatpush1.bf16.msra.mxu0 %v2518
    %3774 = vmatprep.subr.bf16.mxu0 %v2523
    %3775 = vmatpush1.bf16.msra.mxu0 %v2522
    %3776 = vmatprep.mubr.bf16.mxu0 %v127
    %3777 = vmatmul.mubr.bf16.gmra.mrb[0].mxu0 %v126
    %v3778 = vpop.f32.mrb[0].mxu0
    %v3779 = vadd.f32 %v3736, %v3778
    %v3780 = vpop.f32.mrb[0].mxu0
    %v3781 = vadd.f32 %v3738, %v3780
    %v3782 = vpop.f32.mrb[0].mxu0
    %v3783 = vadd.f32 %v3740, %v3782
    %v3784 = vpop.f32.mrb[0].mxu0
    %v3785 = vadd.f32 %v3742, %v3784
    %3786 = vdwg.mxu0
    %3787 = vmatprep.subr.bf16.mxu0 %v2527
    %3788 = vmatpush1.bf16.msra.mxu0 %v2526
    %3789 = vmatprep.subr.bf16.mxu0 %v2531
    %3790 = vmatpush1.bf16.msra.mxu0 %v2530
    %3791 = vmatprep.subr.bf16.mxu0 %v2535
    %3792 = vmatpush1.bf16.msra.mxu0 %v2534
    %3793 = vmatprep.subr.bf16.mxu0 %v2539
    %3794 = vmatpush1.bf16.msra.mxu0 %v2538
    %3795 = vmatprep.subr.bf16.mxu0 %v2543
    %3796 = vmatpush1.bf16.msra.mxu0 %v2542
    %3797 = vmatprep.subr.bf16.mxu0 %v2547
    %3798 = vmatpush1.bf16.msra.mxu0 %v2546
    %3799 = vmatprep.subr.bf16.mxu0 %v2551
    %3800 = vmatpush1.bf16.msra.mxu0 %v2550
    %3801 = vmatprep.subr.bf16.mxu0 %v2555
    %3802 = vmatpush1.bf16.msra.mxu0 %v2554
    %3803 = vmatprep.subr.bf16.mxu0 %v2559
    %3804 = vmatpush1.bf16.msra.mxu0 %v2558
    %3805 = vmatprep.subr.bf16.mxu0 %v2563
    %3806 = vmatpush1.bf16.msra.mxu0 %v2562
    %3807 = vmatprep.subr.bf16.mxu0 %v2567
    %3808 = vmatpush1.bf16.msra.mxu0 %v2566
    %3809 = vmatprep.subr.bf16.mxu0 %v2571
    %3810 = vmatpush1.bf16.msra.mxu0 %v2570
    %3811 = vmatprep.subr.bf16.mxu0 %v2575
    %3812 = vmatpush1.bf16.msra.mxu0 %v2574
    %3813 = vmatprep.subr.bf16.mxu0 %v2579
    %3814 = vmatpush1.bf16.msra.mxu0 %v2578
    %3815 = vmatprep.subr.bf16.mxu0 %v2583
    %3816 = vmatpush1.bf16.msra.mxu0 %v2582
    %3817 = vmatprep.subr.bf16.mxu0 %v2587
    %3818 = vmatpush1.bf16.msra.mxu0 %v2586
    %3819 = vmatprep.mubr.bf16.mxu0 %v129
    %3820 = vmatmul.mubr.bf16.gmra.mrb[0].mxu0 %v128
    %v3821 = vpop.f32.mrb[0].mxu0
    %v3822 = vadd.f32 %v3779, %v3821
    %v3823 = vpop.f32.mrb[0].mxu0
    %v3824 = vadd.f32 %v3781, %v3823
    %v3825 = vpop.f32.mrb[0].mxu0
    %v3826 = vadd.f32 %v3783, %v3825
    %v3827 = vpop.f32.mrb[0].mxu0
    %v3828 = vadd.f32 %v3785, %v3827
    %3829 = vdwg.mxu0
    %3830 = vmatprep.subr.bf16.mxu0 %v2591
    %3831 = vmatpush1.bf16.msra.mxu0 %v2590
    %3832 = vmatprep.subr.bf16.mxu0 %v2595
    %3833 = vmatpush1.bf16.msra.mxu0 %v2594
    %3834 = vmatprep.subr.bf16.mxu0 %v2599
    %3835 = vmatpush1.bf16.msra.mxu0 %v2598
    %3836 = vmatprep.subr.bf16.mxu0 %v2603
    %3837 = vmatpush1.bf16.msra.mxu0 %v2602
    %3838 = vmatprep.subr.bf16.mxu0 %v2607
    %3839 = vmatpush1.bf16.msra.mxu0 %v2606
    %3840 = vmatprep.subr.bf16.mxu0 %v2611
    %3841 = vmatpush1.bf16.msra.mxu0 %v2610
    %3842 = vmatprep.subr.bf16.mxu0 %v2615
    %3843 = vmatpush1.bf16.msra.mxu0 %v2614
    %3844 = vmatprep.subr.bf16.mxu0 %v2619
    %3845 = vmatpush1.bf16.msra.mxu0 %v2618
    %3846 = vmatprep.subr.bf16.mxu0 %v2623
    %3847 = vmatpush1.bf16.msra.mxu0 %v2622
    %3848 = vmatprep.subr.bf16.mxu0 %v2627
    %3849 = vmatpush1.bf16.msra.mxu0 %v2626
    %3850 = vmatprep.subr.bf16.mxu0 %v2631
    %3851 = vmatpush1.bf16.msra.mxu0 %v2630
    %3852 = vmatprep.subr.bf16.mxu0 %v2635
    %3853 = vmatpush1.bf16.msra.mxu0 %v2634
    %3854 = vmatprep.subr.bf16.mxu0 %v2639
    %3855 = vmatpush1.bf16.msra.mxu0 %v2638
    %3856 = vmatprep.subr.bf16.mxu0 %v2643
    %3857 = vmatpush1.bf16.msra.mxu0 %v2642
    %3858 = vmatprep.subr.bf16.mxu0 %v2647
    %3859 = vmatpush1.bf16.msra.mxu0 %v2646
    %3860 = vmatprep.subr.bf16.mxu0 %v2651
    %3861 = vmatpush1.bf16.msra.mxu0 %v2650
    %3862 = vmatprep.mubr.bf16.mxu0 %v131
    %3863 = vmatmul.mubr.bf16.gmra.mrb[0].mxu0 %v130
    %v3864 = vpop.f32.mrb[0].mxu0
    %v3865 = vadd.f32 %v3822, %v3864
    %v3866 = vpop.f32.mrb[0].mxu0
    %v3867 = vadd.f32 %v3824, %v3866
    %v3868 = vpop.f32.mrb[0].mxu0
    %v3869 = vadd.f32 %v3826, %v3868
    %v3870 = vpop.f32.mrb[0].mxu0
    %v3871 = vadd.f32 %v3828, %v3870
    %3872 = vdwg.mxu0
    %3873 = vmatprep.subr.bf16.mxu0 %v2655
    %3874 = vmatpush1.bf16.msra.mxu0 %v2654
    %3875 = vmatprep.subr.bf16.mxu0 %v2659
    %3876 = vmatpush1.bf16.msra.mxu0 %v2658
    %3877 = vmatprep.subr.bf16.mxu0 %v2663
    %3878 = vmatpush1.bf16.msra.mxu0 %v2662
    %3879 = vmatprep.subr.bf16.mxu0 %v2667
    %3880 = vmatpush1.bf16.msra.mxu0 %v2666
    %3881 = vmatprep.subr.bf16.mxu0 %v2671
    %3882 = vmatpush1.bf16.msra.mxu0 %v2670
    %3883 = vmatprep.subr.bf16.mxu0 %v2675
    %3884 = vmatpush1.bf16.msra.mxu0 %v2674
    %3885 = vmatprep.subr.bf16.mxu0 %v2679
    %3886 = vmatpush1.bf16.msra.mxu0 %v2678
    %3887 = vmatprep.subr.bf16.mxu0 %v2683
    %3888 = vmatpush1.bf16.msra.mxu0 %v2682
    %3889 = vmatprep.subr.bf16.mxu0 %v2687
    %3890 = vmatpush1.bf16.msra.mxu0 %v2686
    %3891 = vmatprep.subr.bf16.mxu0 %v2691
    %3892 = vmatpush1.bf16.msra.mxu0 %v2690
    %3893 = vmatprep.subr.bf16.mxu0 %v2695
    %3894 = vmatpush1.bf16.msra.mxu0 %v2694
    %3895 = vmatprep.subr.bf16.mxu0 %v2699
    %3896 = vmatpush1.bf16.msra.mxu0 %v2698
    %3897 = vmatprep.subr.bf16.mxu0 %v2703
    %3898 = vmatpush1.bf16.msra.mxu0 %v2702
    %3899 = vmatprep.subr.bf16.mxu0 %v2707
    %3900 = vmatpush1.bf16.msra.mxu0 %v2706
    %3901 = vmatprep.subr.bf16.mxu0 %v2711
    %3902 = vmatpush1.bf16.msra.mxu0 %v2710
    %3903 = vmatprep.subr.bf16.mxu0 %v2715
    %3904 = vmatpush1.bf16.msra.mxu0 %v2714
    %3905 = vmatprep.mubr.bf16.mxu0 %v133
    %3906 = vmatmul.mubr.bf16.gmra.mrb[0].mxu0 %v132
    %v3907 = vpop.f32.mrb[0].mxu0
    %v3908 = vadd.f32 %v3865, %v3907
    %v3909 = vpop.f32.mrb[0].mxu0
    %v3910 = vadd.f32 %v3867, %v3909
    %v3911 = vpop.f32.mrb[0].mxu0
    %v3912 = vadd.f32 %v3869, %v3911
    %v3913 = vpop.f32.mrb[0].mxu0
    %v3914 = vadd.f32 %v3871, %v3913
    %3915 = vdwg.mxu0
    %v3916 = vmax.f32 %v3564, 0.0
    %v3917 = vmax.f32 %v3566, 0.0
    %v3918 = vmax.f32 %v3908, 0.0
    %v3919 = vmax.f32 %v3910, 0.0
    %v3920 = vmax.f32 %v3568, 0.0
    %v3921 = vmax.f32 %v3570, 0.0
    %v3922 = vmax.f32 %v3912, 0.0
    %v3923 = vmax.f32 %v3914, 0.0
    %v3924 = vpack.c.bf16 %v3920, %v3916
    %v3925 = vpack.c.bf16 %v3921, %v3917
    %v3926 = vpack.c.bf16 %v3922, %v3918
    %v3927 = vpack.c.bf16 %v3923, %v3919
    %v3928 = vld [vmem:[#allocation8] sm:$0xf]
    %v3929 = vld [vmem:[#allocation8 + $0x4] sm:$0xf]
    %v3930 = vld [vmem:[#allocation8 + $0x8] sm:$0xf]
    %v3931 = vld [vmem:[#allocation8 + $0xc] sm:$0xf]
    %v3932 = vld [vmem:[#allocation8 + $0x10] sm:$0xf]
    %v3933 = vld [vmem:[#allocation8 + $0x14] sm:$0xf]
    %v3934 = vld [vmem:[#allocation8 + $0x18] sm:$0xf]
    %v3935 = vld [vmem:[#allocation8 + $0x1c] sm:$0xf]
    %v3936 = vld [vmem:[#allocation8 + $0x20] sm:$0xf]
    %v3937 = vld [vmem:[#allocation8 + $0x24] sm:$0xf]
    %v3938 = vld [vmem:[#allocation8 + $0x28] sm:$0xf]
    %v3939 = vld [vmem:[#allocation8 + $0x2c] sm:$0xf]
    %v3940 = vld [vmem:[#allocation8 + $0x30] sm:$0xf]
    %v3941 = vld [vmem:[#allocation8 + $0x34] sm:$0xf]
    %v3942 = vld [vmem:[#allocation8 + $0x38] sm:$0xf]
    %v3943 = vld [vmem:[#allocation8 + $0x3c] sm:$0xf]
    %v3944 = vld [vmem:[#allocation8 + $0x40] sm:$0xf]
    %v3945 = vld [vmem:[#allocation8 + $0x44] sm:$0xf]
    %v3946 = vld [vmem:[#allocation8 + $0x48] sm:$0xf]
    %v3947 = vld [vmem:[#allocation8 + $0x4c] sm:$0xf]
    %v3948 = vld [vmem:[#allocation8 + $0x50] sm:$0xf]
    %v3949 = vld [vmem:[#allocation8 + $0x54] sm:$0xf]
    %v3950 = vld [vmem:[#allocation8 + $0x58] sm:$0xf]
    %v3951 = vld [vmem:[#allocation8 + $0x5c] sm:$0xf]
    %v3952 = vld [vmem:[#allocation8 + $0x60] sm:$0xf]
    %v3953 = vld [vmem:[#allocation8 + $0x64] sm:$0xf]
    %v3954 = vld [vmem:[#allocation8 + $0x68] sm:$0xf]
    %v3955 = vld [vmem:[#allocation8 + $0x6c] sm:$0xf]
    %v3956 = vld [vmem:[#allocation8 + $0x70] sm:$0xf]
    %v3957 = vld [vmem:[#allocation8 + $0x74] sm:$0xf]
    %v3958 = vld [vmem:[#allocation8 + $0x78] sm:$0xf]
    %v3959 = vld [vmem:[#allocation8 + $0x7c] sm:$0xf]
    %v3960 = vld [vmem:[#allocation8 + $0x80] sm:$0xf]
    %v3961 = vld [vmem:[#allocation8 + $0x84] sm:$0xf]
    %v3962 = vld [vmem:[#allocation8 + $0x88] sm:$0xf]
    %v3963 = vld [vmem:[#allocation8 + $0x8c] sm:$0xf]
    %v3964 = vld [vmem:[#allocation8 + $0x90] sm:$0xf]
    %v3965 = vld [vmem:[#allocation8 + $0x94] sm:$0xf]
    %v3966 = vld [vmem:[#allocation8 + $0x98] sm:$0xf]
    %v3967 = vld [vmem:[#allocation8 + $0x9c] sm:$0xf]
    %v3968 = vld [vmem:[#allocation8 + $0xa0] sm:$0xf]
    %v3969 = vld [vmem:[#allocation8 + $0xa4] sm:$0xf]
    %v3970 = vld [vmem:[#allocation8 + $0xa8] sm:$0xf]
    %v3971 = vld [vmem:[#allocation8 + $0xac] sm:$0xf]
    %v3972 = vld [vmem:[#allocation8 + $0xb0] sm:$0xf]
    %v3973 = vld [vmem:[#allocation8 + $0xb4] sm:$0xf]
    %v3974 = vld [vmem:[#allocation8 + $0xb8] sm:$0xf]
    %v3975 = vld [vmem:[#allocation8 + $0xbc] sm:$0xf]
    %v3976 = vld [vmem:[#allocation8 + $0xc0] sm:$0xf]
    %v3977 = vld [vmem:[#allocation8 + $0xc4] sm:$0xf]
    %v3978 = vld [vmem:[#allocation8 + $0xc8] sm:$0xf]
    %v3979 = vld [vmem:[#allocation8 + $0xcc] sm:$0xf]
    %v3980 = vld [vmem:[#allocation8 + $0xd0] sm:$0xf]
    %v3981 = vld [vmem:[#allocation8 + $0xd4] sm:$0xf]
    %v3982 = vld [vmem:[#allocation8 + $0xd8] sm:$0xf]
    %v3983 = vld [vmem:[#allocation8 + $0xdc] sm:$0xf]
    %v3984 = vld [vmem:[#allocation8 + $0xe0] sm:$0xf]
    %v3985 = vld [vmem:[#allocation8 + $0xe4] sm:$0xf]
    %v3986 = vld [vmem:[#allocation8 + $0xe8] sm:$0xf]
    %v3987 = vld [vmem:[#allocation8 + $0xec] sm:$0xf]
    %v3988 = vld [vmem:[#allocation8 + $0xf0] sm:$0xf]
    %v3989 = vld [vmem:[#allocation8 + $0xf4] sm:$0xf]
    %v3990 = vld [vmem:[#allocation8 + $0xf8] sm:$0xf]
    %v3991 = vld [vmem:[#allocation8 + $0xfc] sm:$0xf]
    %v3992 = vld [vmem:[#allocation10] sm:$0x1]
    %v3994 = vlaneseq
    %v3995 = vshrl.u32 %v3994, 7
    %v3996 = vsub.s32 0, %v3995
    %v3997 = vrot.slane %v3992, %v3996
    %v4063 = vunpack.c.l.b16 %v3928
    %v4064 = vunpack.c.l.b16 %v3929
    %v4065 = vunpack.c.l.b16 %v3930
    %v4066 = vunpack.c.l.b16 %v3931
    %v4067 = vunpack.c.l.b16 %v3932
    %v4068 = vunpack.c.l.b16 %v3933
    %v4069 = vunpack.c.l.b16 %v3934
    %v4070 = vunpack.c.l.b16 %v3935
    %v4071 = vunpack.c.l.b16 %v3936
    %v4072 = vunpack.c.l.b16 %v3937
    %v4073 = vunpack.c.l.b16 %v3938
    %v4074 = vunpack.c.l.b16 %v3939
    %v4075 = vunpack.c.l.b16 %v3940
    %v4076 = vunpack.c.l.b16 %v3941
    %v4077 = vunpack.c.l.b16 %v3942
    %v4078 = vunpack.c.l.b16 %v3943
    %v4079 = vunpack.c.l.b16 %v3944
    %v4080 = vunpack.c.l.b16 %v3945
    %v4081 = vunpack.c.l.b16 %v3946
    %v4082 = vunpack.c.l.b16 %v3947
    %v4083 = vunpack.c.l.b16 %v3948
    %v4084 = vunpack.c.l.b16 %v3949
    %v4085 = vunpack.c.l.b16 %v3950
    %v4086 = vunpack.c.l.b16 %v3951
    %v4087 = vunpack.c.l.b16 %v3952
    %v4088 = vunpack.c.l.b16 %v3953
    %v4089 = vunpack.c.l.b16 %v3954
    %v4090 = vunpack.c.l.b16 %v3955
    %v4091 = vunpack.c.l.b16 %v3956
    %v4092 = vunpack.c.l.b16 %v3957
    %v4093 = vunpack.c.l.b16 %v3958
    %v4094 = vunpack.c.l.b16 %v3959
    %v4095 = vunpack.c.l.b16 %v3960
    %v4096 = vunpack.c.l.b16 %v3961
    %v4097 = vunpack.c.l.b16 %v3962
    %v4098 = vunpack.c.l.b16 %v3963
    %v4099 = vunpack.c.l.b16 %v3964
    %v4100 = vunpack.c.l.b16 %v3965
    %v4101 = vunpack.c.l.b16 %v3966
    %v4102 = vunpack.c.l.b16 %v3967
    %v4103 = vunpack.c.l.b16 %v3968
    %v4104 = vunpack.c.l.b16 %v3969
    %v4105 = vunpack.c.l.b16 %v3970
    %v4106 = vunpack.c.l.b16 %v3971
    %v4107 = vunpack.c.l.b16 %v3972
    %v4108 = vunpack.c.l.b16 %v3973
    %v4109 = vunpack.c.l.b16 %v3974
    %v4110 = vunpack.c.l.b16 %v3975
    %v4111 = vunpack.c.l.b16 %v3976
    %v4112 = vunpack.c.l.b16 %v3977
    %v4113 = vunpack.c.l.b16 %v3978
    %v4114 = vunpack.c.l.b16 %v3979
    %v4115 = vunpack.c.l.b16 %v3980
    %v4116 = vunpack.c.l.b16 %v3981
    %v4117 = vunpack.c.l.b16 %v3982
    %v4118 = vunpack.c.l.b16 %v3983
    %v4119 = vunpack.c.l.b16 %v3984
    %v4120 = vunpack.c.l.b16 %v3985
    %v4121 = vunpack.c.l.b16 %v3986
    %v4122 = vunpack.c.l.b16 %v3987
    %v4123 = vunpack.c.l.b16 %v3988
    %v4124 = vunpack.c.l.b16 %v3989
    %v4125 = vunpack.c.l.b16 %v3990
    %v4126 = vunpack.c.l.b16 %v3991
    %v4127 = vpack.c.b16 %v4064, %v4063
    %v4128 = vpack.c.b16 %v4066, %v4065
    %v4129 = vpack.c.b16 %v4068, %v4067
    %v4130 = vpack.c.b16 %v4070, %v4069
    %v4131 = vpack.c.b16 %v4072, %v4071
    %v4132 = vpack.c.b16 %v4074, %v4073
    %v4133 = vpack.c.b16 %v4076, %v4075
    %v4134 = vpack.c.b16 %v4078, %v4077
    %v4135 = vpack.c.b16 %v4080, %v4079
    %v4136 = vpack.c.b16 %v4082, %v4081
    %v4137 = vpack.c.b16 %v4084, %v4083
    %v4138 = vpack.c.b16 %v4086, %v4085
    %v4139 = vpack.c.b16 %v4088, %v4087
    %v4140 = vpack.c.b16 %v4090, %v4089
    %v4141 = vpack.c.b16 %v4092, %v4091
    %v4142 = vpack.c.b16 %v4094, %v4093
    %v4143 = vpack.c.b16 %v4096, %v4095
    %v4144 = vpack.c.b16 %v4098, %v4097
    %v4145 = vpack.c.b16 %v4100, %v4099
    %v4146 = vpack.c.b16 %v4102, %v4101
    %v4147 = vpack.c.b16 %v4104, %v4103
    %v4148 = vpack.c.b16 %v4106, %v4105
    %v4149 = vpack.c.b16 %v4108, %v4107
    %v4150 = vpack.c.b16 %v4110, %v4109
    %v4151 = vpack.c.b16 %v4112, %v4111
    %v4152 = vpack.c.b16 %v4114, %v4113
    %v4153 = vpack.c.b16 %v4116, %v4115
    %v4154 = vpack.c.b16 %v4118, %v4117
    %v4155 = vpack.c.b16 %v4120, %v4119
    %v4156 = vpack.c.b16 %v4122, %v4121
    %v4157 = vpack.c.b16 %v4124, %v4123
    %v4158 = vpack.c.b16 %v4126, %v4125
    %4191 = vmatprep.subr.bf16.mxu0 0
    %4192 = vmatpush1.bf16.msra.mxu0 %v4127
    %4193 = vmatprep.subr.bf16.mxu0 0
    %4194 = vmatpush1.bf16.msra.mxu0 %v4128
    %4195 = vmatprep.subr.bf16.mxu0 0
    %4196 = vmatpush1.bf16.msra.mxu0 %v4129
    %4197 = vmatprep.subr.bf16.mxu0 0
    %4198 = vmatpush1.bf16.msra.mxu0 %v4130
    %4199 = vmatprep.subr.bf16.mxu0 0
    %4200 = vmatpush1.bf16.msra.mxu0 %v4131
    %4201 = vmatprep.subr.bf16.mxu0 0
    %4202 = vmatpush1.bf16.msra.mxu0 %v4132
    %4203 = vmatprep.subr.bf16.mxu0 0
    %4204 = vmatpush1.bf16.msra.mxu0 %v4133
    %4205 = vmatprep.subr.bf16.mxu0 0
    %4206 = vmatpush1.bf16.msra.mxu0 %v4134
    %4207 = vmatprep.subr.bf16.mxu0 0
    %4208 = vmatpush1.bf16.msra.mxu0 %v4135
    %4209 = vmatprep.subr.bf16.mxu0 0
    %4210 = vmatpush1.bf16.msra.mxu0 %v4136
    %4211 = vmatprep.subr.bf16.mxu0 0
    %4212 = vmatpush1.bf16.msra.mxu0 %v4137
    %4213 = vmatprep.subr.bf16.mxu0 0
    %4214 = vmatpush1.bf16.msra.mxu0 %v4138
    %4215 = vmatprep.subr.bf16.mxu0 0
    %4216 = vmatpush1.bf16.msra.mxu0 %v4139
    %4217 = vmatprep.subr.bf16.mxu0 0
    %4218 = vmatpush1.bf16.msra.mxu0 %v4140
    %4219 = vmatprep.subr.bf16.mxu0 0
    %4220 = vmatpush1.bf16.msra.mxu0 %v4141
    %4221 = vmatprep.subr.bf16.mxu0 0
    %4222 = vmatpush1.bf16.msra.mxu0 %v4142
    %4223 = vmatprep.mubr.bf16.mxu0 %v3925
    %4224 = vmatmul.mubr.bf16.gmra.mrb[0].mxu0 %v3924
    %v4225 = vpop.f32.mrb[0].mxu0
    %v4226 = vadd.f32 %v3997, %v4225
    %v4227 = vpop.f32.mrb[0].mxu0
    %v4228 = vpop.f32.mrb[0].mxu0
    %v4229 = vadd.f32 %v3997, %v4228
    %v4230 = vpop.f32.mrb[0].mxu0
    %4231 = vdwg.mxu0
    %4232 = vmatprep.subr.bf16.mxu0 0
    %4233 = vmatpush1.bf16.msra.mxu0 %v4143
    %4234 = vmatprep.subr.bf16.mxu0 0
    %4235 = vmatpush1.bf16.msra.mxu0 %v4144
    %4236 = vmatprep.subr.bf16.mxu0 0
    %4237 = vmatpush1.bf16.msra.mxu0 %v4145
    %4238 = vmatprep.subr.bf16.mxu0 0
    %4239 = vmatpush1.bf16.msra.mxu0 %v4146
    %4240 = vmatprep.subr.bf16.mxu0 0
    %4241 = vmatpush1.bf16.msra.mxu0 %v4147
    %4242 = vmatprep.subr.bf16.mxu0 0
    %4243 = vmatpush1.bf16.msra.mxu0 %v4148
    %4244 = vmatprep.subr.bf16.mxu0 0
    %4245 = vmatpush1.bf16.msra.mxu0 %v4149
    %4246 = vmatprep.subr.bf16.mxu0 0
    %4247 = vmatpush1.bf16.msra.mxu0 %v4150
    %4248 = vmatprep.subr.bf16.mxu0 0
    %4249 = vmatpush1.bf16.msra.mxu0 %v4151
    %4250 = vmatprep.subr.bf16.mxu0 0
    %4251 = vmatpush1.bf16.msra.mxu0 %v4152
    %4252 = vmatprep.subr.bf16.mxu0 0
    %4253 = vmatpush1.bf16.msra.mxu0 %v4153
    %4254 = vmatprep.subr.bf16.mxu0 0
    %4255 = vmatpush1.bf16.msra.mxu0 %v4154
    %4256 = vmatprep.subr.bf16.mxu0 0
    %4257 = vmatpush1.bf16.msra.mxu0 %v4155
    %4258 = vmatprep.subr.bf16.mxu0 0
    %4259 = vmatpush1.bf16.msra.mxu0 %v4156
    %4260 = vmatprep.subr.bf16.mxu0 0
    %4261 = vmatpush1.bf16.msra.mxu0 %v4157
    %4262 = vmatprep.subr.bf16.mxu0 0
    %4263 = vmatpush1.bf16.msra.mxu0 %v4158
    %4264 = vmatprep.mubr.bf16.mxu0 %v3927
    %4265 = vmatmul.mubr.bf16.gmra.mrb[0].mxu0 %v3926
    %v4266 = vpop.f32.mrb[0].mxu0
    %v4267 = vadd.f32 %v4226, %v4266
    %v4268 = vpop.f32.mrb[0].mxu0
    %v4269 = vpop.f32.mrb[0].mxu0
    %v4270 = vadd.f32 %v4229, %v4269
    %v4271 = vpop.f32.mrb[0].mxu0
    %4272 = vdwg.mxu0
    %4273 = vst [vmem:[#allocation11] sm:$0xff] %v4267
    %4274 = vst [vmem:[#allocation11 + $0x8] sm:$0xff] %v4270
    // Predicated region
    $region42: #{tpu_custom_call.1} parent=1 // pred_check
      _
    $region43: #{tpu_custom_call.1} parent=1 // pred_check_branch
      %4276 = sbr.rel (0) target = $region45
    $region44: #{tpu_custom_call.1} parent=1 // pred_region
      %s4278 = ssub.s32 256, 256
      %4279 = vsyncadd [#allocation4], %s4278
      %s4280 = sshll.u32 [#allocation11], 4
      %s4281 = int_to_ptr.vmem [resolvable:$true] %s4280
      %4286 = dma.vmem_to_hbm [thread:$0]  %s4281, 256, %s5, [#allocation4], 128, 128, 8
    $region45: #{tpu_custom_call.1} parent=1 // pred_fallthru
      _
    // Predicated region
    $region46: #{tpu_custom_call.1} parent=1 // pred_check
      _
    $region47: #{tpu_custom_call.1} parent=1 // pred_check_branch
      %4288 = sbr.rel (0) target = $region49
    $region48: #{tpu_custom_call.1} parent=1 // pred_region
      %4289 = dma.done [#allocation4], 256
    $region49: #{tpu_custom_call.1} parent=1 // pred_fallthru
      _
    %4290 = vsyncpa [#allocation3], 1
    %4291 = vsyncpa [#allocation6], 1
    %4292 = vsyncpa [#allocation9], 1
    %4293 = vsyncpa [#allocation4], 1

// kernel: tpu_custom_call.1
$region0: #{tpu_custom_call.1}
  #allocation0 [shape = 'u32[]', space=smem, size = 0x4, offset = 0x4, fixed_abs, tag = 'smem constant byte address 0x4 - core index']
  #allocation1 [shape = 'u32[144,128]{1,0:T(1,128)}', space=vmem, size = 0x12000, scoped, tag = 'internal scratch']
  %s0 = inlined_call_operand.hbm [shape: f32[16,2048], index: 0, kind: input, shape index: {}]
  %s1 = inlined_call_operand.hbm [shape: bf16[2048,512], index: 1, kind: input, shape index: {}]
  %s2 = inlined_call_operand.hbm [shape: f32[1,512], index: 2, kind: input, shape index: {}]
  %s3 = inlined_call_operand.hbm [shape: bf16[512,128], index: 3, kind: input, shape index: {}]
  %s4 = inlined_call_operand.hbm [shape: f32[1,128], index: 4, kind: input, shape index: {}]
  %s5 = inlined_call_operand.hbm [shape: f32[16,128], index: 5, kind: output, shape index: {}]
  %s6 = sld [smem:[#allocation0]]
  $region50: #{tpu_custom_call.1} parent=0
    _
  %s8 = ssub.s32 1, %s6
  %s9 = scalar_select 0, %s8, %s6
  $region1: #{tpu_custom_call.1} parent=0
    #allocation2 [shape = 'u8[131072]{0}', space=vmem, size = 0x20000, scoped, tag = 'input window, operand 0, single buffered']
    #allocation3 [shape = 's32[1]{0}', space=sflag, size = 0x4, scoped, tag = 'scoped memory for tpu_custom_call.1']
    #allocation4 [shape = 's32[1]{0}', space=sflag, size = 0x4, scoped, tag = 'scoped memory for tpu_custom_call.1']
    #allocation5 [shape = 'u8[2097152]{0}', space=vmem, size = 0x200000, scoped, tag = 'input window, operand 1, single buffered']
    #allocation6 [shape = 's32[1]{0}', space=sflag, size = 0x4, scoped, tag = 'scoped memory for tpu_custom_call.1']
    #allocation7 [shape = 'u8[2048]{0}', space=vmem, size = 0x800, scoped, tag = 'input window, operand 2, single buffered']
    #allocation8 [shape = 'u8[131072]{0}', space=vmem, size = 0x20000, scoped, tag = 'input window, operand 3, single buffered']
    #allocation9 [shape = 's32[1]{0}', space=sflag, size = 0x4, scoped, tag = 'scoped memory for tpu_custom_call.1']
    #allocation10 [shape = 'u8[512]{0}', space=vmem, size = 0x400, scoped, tag = 'input window, operand 4, single buffered']
    #allocation11 [shape = 'u8[8192]{0}', space=vmem, size = 0x2000, scoped, tag = 'output window, operand 0, single buffered']
    %10 = vsyncpa [#allocation3], 0
    %11 = vsyncpa [#allocation6], 0
    %12 = vsyncpa [#allocation9], 0
    %13 = vsyncpa [#allocation4], 0
    // Predicated region
    $region2: #{tpu_custom_call.1} parent=1 // pred_check
      _
    $region3: #{tpu_custom_call.1} parent=1 // pred_check_branch
      %15 = sbr.rel (0) target = $region5
    $region4: #{tpu_custom_call.1} parent=1 // pred_region
      %s17 = ssub.s32 4096, 4096
      %18 = vsyncadd [#allocation3], %s17
      %s19 = sshll.u32 [#allocation2], 4
      %s20 = int_to_ptr.vmem [resolvable:$true] %s19
      %25 = dma.hbm_to_vmem [thread:$0]  %s0, 4096, %s20, [#allocation3], 2048, 2048, 128
    $region5: #{tpu_custom_call.1} parent=1 // pred_fallthru
      _
    // Predicated region
    $region6: #{tpu_custom_call.1} parent=1 // pred_check
      _
    $region7: #{tpu_custom_call.1} parent=1 // pred_check_branch
      %27 = sbr.rel (0) target = $region9
    $region8: #{tpu_custom_call.1} parent=1 // pred_region
      %s29 = ssub.s32 65536, 65536
      %30 = vsyncadd [#allocation6], %s29
      %s31 = sshll.u32 [#allocation5], 4
      %s32 = int_to_ptr.vmem [resolvable:$true] %s31
      %37 = dma.hbm_to_vmem [thread:$0]  %s1, 65536, %s32, [#allocation6], 256, 256, 16
    $region9: #{tpu_custom_call.1} parent=1 // pred_fallthru
      _
    // Predicated region
    $region10: #{tpu_custom_call.1} parent=1 // pred_check
      _
    $region11: #{tpu_custom_call.1} parent=1 // pred_check_branch
      %39 = sbr.rel (0) target = $region13
    $region12: #{tpu_custom_call.1} parent=1 // pred_region
      %s41 = ssub.s32 64, 64
      %42 = vsyncadd [#allocation6], %s41
      %s44 = sshll.u32 [#allocation7], 4
      %s45 = int_to_ptr.vmem [resolvable:$true] %s44
      %47 = dma.hbm_to_vmem [thread:$0]  %s2, 64, %s45, [#allocation6]
    $region13: #{tpu_custom_call.1} parent=1 // pred_fallthru
      _
    // Predicated region
    $region14: #{tpu_custom_call.1} parent=1 // pred_check
      _
    $region15: #{tpu_custom_call.1} parent=1 // pred_check_branch
      %49 = sbr.rel (0) target = $region17
    $region16: #{tpu_custom_call.1} parent=1 // pred_region
      %s51 = ssub.s32 4096, 4096
      %52 = vsyncadd [#allocation9], %s51
      %s53 = sshll.u32 [#allocation8], 4
      %s54 = int_to_ptr.vmem [resolvable:$true] %s53
      %59 = dma.hbm_to_vmem [thread:$0]  %s3, 4096, %s54, [#allocation9], 64, 64, 4
    $region17: #{tpu_custom_call.1} parent=1 // pred_fallthru
      _
    // Predicated region
    $region18: #{tpu_custom_call.1} parent=1 // pred_check
      _
    $region19: #{tpu_custom_call.1} parent=1 // pred_check_branch
      %61 = sbr.rel (0) target = $region21
    $region20: #{tpu_custom_call.1} parent=1 // pred_region
      %s63 = ssub.s32 16, 16
      %64 = vsyncadd [#allocation9], %s63
      %s66 = sshll.u32 [#allocation10], 4
      %s67 = int_to_ptr.vmem [resolvable:$true] %s66
      %69 = dma.hbm_to_vmem [thread:$0]  %s4, 16, %s67, [#allocation9]
    $region21: #{tpu_custom_call.1} parent=1 // pred_fallthru
      _
    // Predicated region
    $region22: #{tpu_custom_call.1} parent=1 // pred_check
      _
    $region23: #{tpu_custom_call.1} parent=1 // pred_check_branch
      %71 = sbr.rel (0) target = $region25
    $region24: #{tpu_custom_call.1} parent=1 // pred_region
      %72 = dma.done [#allocation3], 4096
    $region25: #{tpu_custom_call.1} parent=1 // pred_fallthru
      _
    // Predicated region
    $region26: #{tpu_custom_call.1} parent=1 // pred_check
      _
    $region27: #{tpu_custom_call.1} parent=1 // pred_check_branch
      %74 = sbr.rel (0) target = $region29
    $region28: #{tpu_custom_call.1} parent=1 // pred_region
      %75 = dma.done [#allocation6], 65536
    $region29: #{tpu_custom_call.1} parent=1 // pred_fallthru
      _
    // Predicated region
    $region30: #{tpu_custom_call.1} parent=1 // pred_check
      _
    $region31: #{tpu_custom_call.1} parent=1 // pred_check_branch
      %77 = sbr.rel (0) target = $region33
    $region32: #{tpu_custom_call.1} parent=1 // pred_region
      %78 = dma.done [#allocation6], 64
    $region33: #{tpu_custom_call.1} parent=1 // pred_fallthru
      _
    // Predicated region
    $region34: #{tpu_custom_call.1} parent=1 // pred_check
      _
    $region35: #{tpu_custom_call.1} parent=1 // pred_check_branch
      %80 = sbr.rel (0) target = $region37
    $region36: #{tpu_custom_call.1} parent=1 // pred_region
      %81 = dma.done [#allocation9], 4096
    $region37: #{tpu_custom_call.1} parent=1 // pred_fallthru
      _
    // Predicated region
    $region38: #{tpu_custom_call.1} parent=1 // pred_check
      _
    $region39: #{tpu_custom_call.1} parent=1 // pred_check_branch
      %83 = sbr.rel (0) target = $region41
    $region40: #{tpu_custom_call.1} parent=1 // pred_region
      %84 = dma.done [#allocation9], 16
    $region41: #{tpu_custom_call.1} parent=1 // pred_fallthru
      _
    %v86 = vld [vmem:[#allocation2] sm:$0xff]
    %v87 = vld [vmem:[#allocation2 + $0x8] sm:$0xff]
    %v88 = vld [vmem:[#allocation2 + $0x10] sm:$0xff]
    %v89 = vld [vmem:[#allocation2 + $0x18] sm:$0xff]
    %v90 = vld [vmem:[#allocation2 + $0x20] sm:$0xff]
    %v91 = vld [vmem:[#allocation2 + $0x28] sm:$0xff]
    %v92 = vld [vmem:[#allocation2 + $0x30] sm:$0xff]
    %v93 = vld [vmem:[#allocation2 + $0x38] sm:$0xff]
    %v94 = vld [vmem:[#allocation2 + $0x40] sm:$0xff]
    %v95 = vld [vmem:[#allocation2 + $0x48] sm:$0xff]
    %v96 = vld [vmem:[#allocation2 + $0x50] sm:$0xff]
    %v97 = vld [vmem:[#allocation2 + $0x58] sm:$0xff]
    %v98 = vld [vmem:[#allocation2 + $0x60] sm:$0xff]
    %v99 = vld [vmem:[#allocation2 + $0x68] sm:$0xff]
    %v100 = vld [vmem:[#allocation2 + $0x70] sm:$0xff]
    %v101 = vld [vmem:[#allocation2 + $0x78] sm:$0xff]
    %v102 = vld [vmem:[#allocation2 + $0x80] sm:$0xff]
    %v103 = vld [vmem:[#allocation2 + $0x88] sm:$0xff]
    %v104 = vld [vmem:[#allocation2 + $0x90] sm:$0xff]
    %v105 = vld [vmem:[#allocation2 + $0x98] sm:$0xff]
    %v106 = vld [vmem:[#allocation2 + $0xa0] sm:$0xff]
    %v107 = vld [vmem:[#allocation2 + $0xa8] sm:$0xff]
    %v108 = vld [vmem:[#allocation2 + $0xb0] sm:$0xff]
    %v109 = vld [vmem:[#allocation2 + $0xb8] sm:$0xff]
    %v110 = vld [vmem:[#allocation2 + $0xc0] sm:$0xff]
    %v111 = vld [vmem:[#allocation2 + $0xc8] sm:$0xff]
    %v112 = vld [vmem:[#allocation2 + $0xd0] sm:$0xff]
    %v113 = vld [vmem:[#allocation2 + $0xd8] sm:$0xff]
    %v114 = vld [vmem:[#allocation2 + $0xe0] sm:$0xff]
    %v115 = vld [vmem:[#allocation2 + $0xe8] sm:$0xff]
    %v116 = vld [vmem:[#allocation2 + $0xf0] sm:$0xff]
    %v117 = vld [vmem:[#allocation2 + $0xf8] sm:$0xff]
    %v118 = vpack.c.bf16 %v102, %v86
    %v119 = vpack.c.bf16 %v103, %v87
    %v120 = vpack.c.bf16 %v104, %v88
    %v121 = vpack.c.bf16 %v105, %v89
    %v122 = vpack.c.bf16 %v106, %v90
    %v123 = vpack.c.bf16 %v107, %v91
    %v124 = vpack.c.bf16 %v108, %v92
    %v125 = vpack.c.bf16 %v109, %v93
    %v126 = vpack.c.bf16 %v110, %v94
    %v127 = vpack.c.bf16 %v111, %v95
    %v128 = vpack.c.bf16 %v112, %v96
    %v129 = vpack.c.bf16 %v113, %v97
    %v130 = vpack.c.bf16 %v114, %v98
    %v131 = vpack.c.bf16 %v115, %v99
    %v132 = vpack.c.bf16 %v116, %v100
    %v133 = vpack.c.bf16 %v117, %v101
    %v134 = vld [vmem:[#allocation5] sm:$0xff]
    %v135 = vld [vmem:[#allocation5 + $0x8] sm:$0xff]
    %v136 = vld [vmem:[#allocation5 + $0x10] sm:$0xff]
    %v137 = vld [vmem:[#allocation5 + $0x18] sm:$0xff]
    %v138 = vld [vmem:[#allocation5 + $0x20] sm:$0xff]
    %v139 = vld [vmem:[#allocation5 + $0x28] sm:$0xff]
    %v140 = vld [vmem:[#allocation5 + $0x30] sm:$0xff]
    %v141 = vld [vmem:[#allocation5 + $0x38] sm:$0xff]
    %v142 = vld [vmem:[#allocation5 + $0x40] sm:$0xff]
    %v143 = vld [vmem:[#allocation5 + $0x48] sm:$0xff]
    %v144 = vld [vmem:[#allocation5 + $0x50] sm:$0xff]
    %v145 = vld [vmem:[#allocation5 + $0x58] sm:$0xff]
    %v146 = vld [vmem:[#allocation5 + $0x60] sm:$0xff]
    %v147 = vld [vmem:[#allocation5 + $0x68] sm:$0xff]
    %v148 = vld [vmem:[#allocation5 + $0x70] sm:$0xff]
    %v149 = vld [vmem:[#allocation5 + $0x78] sm:$0xff]
    %v150 = vld [vmem:[#allocation5 + $0x80] sm:$0xff]
    %v151 = vld [vmem:[#allocation5 + $0x88] sm:$0xff]
    %v152 = vld [vmem:[#allocation5 + $0x90] sm:$0xff]
    %v153 = vld [vmem:[#allocation5 + $0x98] sm:$0xff]
    %v154 = vld [vmem:[#allocation5 + $0xa0] sm:$0xff]
    %v155 = vld [vmem:[#allocation5 + $0xa8] sm:$0xff]
    %v156 = vld [vmem:[#allocation5 + $0xb0] sm:$0xff]
    %v157 = vld [vmem:[#allocation5 + $0xb8] sm:$0xff]
    %v158 = vld [vmem:[#allocation5 + $0xc0] sm:$0xff]
    %v159 = vld [vmem:[#allocation5 + $0xc8] sm:$0xff]
    %v160 = vld [vmem:[#allocation5 + $0xd0] sm:$0xff]
    %v161 = vld [vmem:[#allocation5 + $0xd8] sm:$0xff]
    %v162 = vld [vmem:[#allocation5 + $0xe0] sm:$0xff]
    %v163 = vld [vmem:[#allocation5 + $0xe8] sm:$0xff]
    %v164 = vld [vmem:[#allocation5 + $0xf0] sm:$0xff]
    %v165 = vld [vmem:[#allocation5 + $0xf8] sm:$0xff]
    %v166 = vld [vmem:[#allocation5 + $0x100] sm:$0xff]
    %v167 = vld [vmem:[#allocation5 + $0x108] sm:$0xff]
    %v168 = vld [vmem:[#allocation5 + $0x110] sm:$0xff]
    %v169 = vld [vmem:[#allocation5 + $0x118] sm:$0xff]
    %v170 = vld [vmem:[#allocation5 + $0x120] sm:$0xff]
    %v171 = vld [vmem:[#allocation5 + $0x128] sm:$0xff]
    %v172 = vld [vmem:[#allocation5 + $0x130] sm:$0xff]
    %v173 = vld [vmem:[#allocation5 + $0x138] sm:$0xff]
    %v174 = vld [vmem:[#allocation5 + $0x140] sm:$0xff]
    %v175 = vld [vmem:[#allocation5 + $0x148] sm:$0xff]
    %v176 = vld [vmem:[#allocation5 + $0x150] sm:$0xff]
    %v177 = vld [vmem:[#allocation5 + $0x158] sm:$0xff]
    %v178 = vld [vmem:[#allocation5 + $0x160] sm:$0xff]
    %v179 = vld [vmem:[#allocation5 + $0x168] sm:$0xff]
    %v180 = vld [vmem:[#allocation5 + $0x170] sm:$0xff]
    %v181 = vld [vmem:[#allocation5 + $0x178] sm:$0xff]
    %v182 = vld [vmem:[#allocation5 + $0x180] sm:$0xff]
    %v183 = vld [vmem:[#allocation5 + $0x188] sm:$0xff]
    %v184 = vld [vmem:[#allocation5 + $0x190] sm:$0xff]
    %v185 = vld [vmem:[#allocation5 + $0x198] sm:$0xff]
    %v186 = vld [vmem:[#allocation5 + $0x1a0] sm:$0xff]
    %v187 = vld [vmem:[#allocation5 + $0x1a8] sm:$0xff]
    %v188 = vld [vmem:[#allocation5 + $0x1b0] sm:$0xff]
    %v189 = vld [vmem:[#allocation5 + $0x1b8] sm:$0xff]
    %v190 = vld [vmem:[#allocation5 + $0x1c0] sm:$0xff]
    %v191 = vld [vmem:[#allocation5 + $0x1c8] sm:$0xff]
    %v192 = vld [vmem:[#allocation5 + $0x1d0] sm:$0xff]
    %v193 = vld [vmem:[#allocation5 + $0x1d8] sm:$0xff]
    %v194 = vld [vmem:[#allocation5 + $0x1e0] sm:$0xff]
    %v195 = vld [vmem:[#allocation5 + $0x1e8] sm:$0xff]
    %v196 = vld [vmem:[#allocation5 + $0x1f0] sm:$0xff]
    %v197 = vld [vmem:[#allocation5 + $0x1f8] sm:$0xff]
    %v198 = vld [vmem:[#allocation5 + $0x200] sm:$0xff]
    %v199 = vld [vmem:[#allocation5 + $0x208] sm:$0xff]
    %v200 = vld [vmem:[#allocation5 + $0x210] sm:$0xff]
    %v201 = vld [vmem:[#allocation5 + $0x218] sm:$0xff]
    %v202 = vld [vmem:[#allocation5 + $0x220] sm:$0xff]
    %v203 = vld [vmem:[#allocation5 + $0x228] sm:$0xff]
    %v204 = vld [vmem:[#allocation5 + $0x230] sm:$0xff]
    %v205 = vld [vmem:[#allocation5 + $0x238] sm:$0xff]
    %v206 = vld [vmem:[#allocation5 + $0x240] sm:$0xff]
    %v207 = vld [vmem:[#allocation5 + $0x248] sm:$0xff]
    %v208 = vld [vmem:[#allocation5 + $0x250] sm:$0xff]
    %v209 = vld [vmem:[#allocation5 + $0x258] sm:$0xff]
    %v210 = vld [vmem:[#allocation5 + $0x260] sm:$0xff]
    %v211 = vld [vmem:[#allocation5 + $0x268] sm:$0xff]
    %v212 = vld [vmem:[#allocation5 + $0x270] sm:$0xff]
    %v213 = vld [vmem:[#allocation5 + $0x278] sm:$0xff]
    %v214 = vld [vmem:[#allocation5 + $0x280] sm:$0xff]
    %v215 = vld [vmem:[#allocation5 + $0x288] sm:$0xff]
    %v216 = vld [vmem:[#allocation5 + $0x290] sm:$0xff]
    %v217 = vld [vmem:[#allocation5 + $0x298] sm:$0xff]
    %v218 = vld [vmem:[#allocation5 + $0x2a0] sm:$0xff]
    %v219 = vld [vmem:[#allocation5 + $0x2a8] sm:$0xff]
    %v220 = vld [vmem:[#allocation5 + $0x2b0] sm:$0xff]
    %v221 = vld [vmem:[#allocation5 + $0x2b8] sm:$0xff]
    %v222 = vld [vmem:[#allocation5 + $0x2c0] sm:$0xff]
    %v223 = vld [vmem:[#allocation5 + $0x2c8] sm:$0xff]
    %v224 = vld [vmem:[#allocation5 + $0x2d0] sm:$0xff]
    %v225 = vld [vmem:[#allocation5 + $0x2d8] sm:$0xff]
    %v226 = vld [vmem:[#allocation5 + $0x2e0] sm:$0xff]
    %v227 = vld [vmem:[#allocation5 + $0x2e8] sm:$0xff]
    %v228 = vld [vmem:[#allocation5 + $0x2f0] sm:$0xff]
    %v229 = vld [vmem:[#allocation5 + $0x2f8] sm:$0xff]
    %v230 = vld [vmem:[#allocation5 + $0x300] sm:$0xff]
    %v231 = vld [vmem:[#allocation5 + $0x308] sm:$0xff]
    %v232 = vld [vmem:[#allocation5 + $0x310] sm:$0xff]
    %v233 = vld [vmem:[#allocation5 + $0x318] sm:$0xff]
    %v234 = vld [vmem:[#allocation5 + $0x320] sm:$0xff]
    %v235 = vld [vmem:[#allocation5 + $0x328] sm:$0xff]
    %v236 = vld [vmem:[#allocation5 + $0x330] sm:$0xff]
    %v237 = vld [vmem:[#allocation5 + $0x338] sm:$0xff]
    %v238 = vld [vmem:[#allocation5 + $0x340] sm:$0xff]
    %v239 = vld [vmem:[#allocation5 + $0x348] sm:$0xff]
    %v240 = vld [vmem:[#allocation5 + $0x350] sm:$0xff]
    %v241 = vld [vmem:[#allocation5 + $0x358] sm:$0xff]
    %v242 = vld [vmem:[#allocation5 + $0x360] sm:$0xff]
    %v243 = vld [vmem:[#allocation5 + $0x368] sm:$0xff]
    %v244 = vld [vmem:[#allocation5 + $0x370] sm:$0xff]
    %v245 = vld [vmem:[#allocation5 + $0x378] sm:$0xff]
    %v246 = vld [vmem:[#allocation5 + $0x380] sm:$0xff]
    %v247 = vld [vmem:[#allocation5 + $0x388] sm:$0xff]
    %v248 = vld [vmem:[#allocation5 + $0x390] sm:$0xff]
    %v249 = vld [vmem:[#allocation5 + $0x398] sm:$0xff]
    %v250 = vld [vmem:[#allocation5 + $0x3a0] sm:$0xff]
    %v251 = vld [vmem:[#allocation5 + $0x3a8] sm:$0xff]
    %v252 = vld [vmem:[#allocation5 + $0x3b0] sm:$0xff]
    %v253 = vld [vmem:[#allocation5 + $0x3b8] sm:$0xff]
    %v254 = vld [vmem:[#allocation5 + $0x3c0] sm:$0xff]
    %v255 = vld [vmem:[#allocation5 + $0x3c8] sm:$0xff]
    %v256 = vld [vmem:[#allocation5 + $0x3d0] sm:$0xff]
    %v257 = vld [vmem:[#allocation5 + $0x3d8] sm:$0xff]
    %v258 = vld [vmem:[#allocation5 + $0x3e0] sm:$0xff]
    %v259 = vld [vmem:[#allocation5 + $0x3e8] sm:$0xff]
    %v260 = vld [vmem:[#allocation5 + $0x3f0] sm:$0xff]
    %v261 = vld [vmem:[#allocation5 + $0x3f8] sm:$0xff]
    %v262 = vld [vmem:[#allocation5 + $0x400] sm:$0xff]
    %v263 = vld [vmem:[#allocation5 + $0x408] sm:$0xff]
    %v264 = vld [vmem:[#allocation5 + $0x410] sm:$0xff]
    %v265 = vld [vmem:[#allocation5 + $0x418] sm:$0xff]
    %v266 = vld [vmem:[#allocation5 + $0x420] sm:$0xff]
    %v267 = vld [vmem:[#allocation5 + $0x428] sm:$0xff]
    %v268 = vld [vmem:[#allocation5 + $0x430] sm:$0xff]
    %v269 = vld [vmem:[#allocation5 + $0x438] sm:$0xff]
    %v270 = vld [vmem:[#allocation5 + $0x440] sm:$0xff]
    %v271 = vld [vmem:[#allocation5 + $0x448] sm:$0xff]
    %v272 = vld [vmem:[#allocation5 + $0x450] sm:$0xff]
    %v273 = vld [vmem:[#allocation5 + $0x458] sm:$0xff]
    %v274 = vld [vmem:[#allocation5 + $0x460] sm:$0xff]
    %v275 = vld [vmem:[#allocation5 + $0x468] sm:$0xff]
    %v276 = vld [vmem:[#allocation5 + $0x470] sm:$0xff]
    %v277 = vld [vmem:[#allocation5 + $0x478] sm:$0xff]
    %v278 = vld [vmem:[#allocation5 + $0x480] sm:$0xff]
    %v279 = vld [vmem:[#allocation5 + $0x488] sm:$0xff]
    %v280 = vld [vmem:[#allocation5 + $0x490] sm:$0xff]
    %v281 = vld [vmem:[#allocation5 + $0x498] sm:$0xff]
    %v282 = vld [vmem:[#allocation5 + $0x4a0] sm:$0xff]
    %v283 = vld [vmem:[#allocation5 + $0x4a8] sm:$0xff]
    %v284 = vld [vmem:[#allocation5 + $0x4b0] sm:$0xff]
    %v285 = vld [vmem:[#allocation5 + $0x4b8] sm:$0xff]
    %v286 = vld [vmem:[#allocation5 + $0x4c0] sm:$0xff]
    %v287 = vld [vmem:[#allocation5 + $0x4c8] sm:$0xff]
    %v288 = vld [vmem:[#allocation5 + $0x4d0] sm:$0xff]
    %v289 = vld [vmem:[#allocation5 + $0x4d8] sm:$0xff]
    %v290 = vld [vmem:[#allocation5 + $0x4e0] sm:$0xff]
    %v291 = vld [vmem:[#allocation5 + $0x4e8] sm:$0xff]
    %v292 = vld [vmem:[#allocation5 + $0x4f0] sm:$0xff]
    %v293 = vld [vmem:[#allocation5 + $0x4f8] sm:$0xff]
    %v294 = vld [vmem:[#allocation5 + $0x500] sm:$0xff]
    %v295 = vld [vmem:[#allocation5 + $0x508] sm:$0xff]
    %v296 = vld [vmem:[#allocation5 + $0x510] sm:$0xff]
    %v297 = vld [vmem:[#allocation5 + $0x518] sm:$0xff]
    %v298 = vld [vmem:[#allocation5 + $0x520] sm:$0xff]
    %v299 = vld [vmem:[#allocation5 + $0x528] sm:$0xff]
    %v300 = vld [vmem:[#allocation5 + $0x530] sm:$0xff]
    %v301 = vld [vmem:[#allocation5 + $0x538] sm:$0xff]
    %v302 = vld [vmem:[#allocation5 + $0x540] sm:$0xff]
    %v303 = vld [vmem:[#allocation5 + $0x548] sm:$0xff]
    %v304 = vld [vmem:[#allocation5 + $0x550] sm:$0xff]
    %v305 = vld [vmem:[#allocation5 + $0x558] sm:$0xff]
    %v306 = vld [vmem:[#allocation5 + $0x560] sm:$0xff]
    %v307 = vld [vmem:[#allocation5 + $0x568] sm:$0xff]
    %v308 = vld [vmem:[#allocation5 + $0x570] sm:$0xff]
    %v309 = vld [vmem:[#allocation5 + $0x578] sm:$0xff]
    %v310 = vld [vmem:[#allocation5 + $0x580] sm:$0xff]
    %v311 = vld [vmem:[#allocation5 + $0x588] sm:$0xff]
    %v312 = vld [vmem:[#allocation5 + $0x590] sm:$0xff]
    %v313 = vld [vmem:[#allocation5 + $0x598] sm:$0xff]
    %v314 = vld [vmem:[#allocation5 + $0x5a0] sm:$0xff]
    %v315 = vld [vmem:[#allocation5 + $0x5a8] sm:$0xff]
    %v316 = vld [vmem:[#allocation5 + $0x5b0] sm:$0xff]
    %v317 = vld [vmem:[#allocation5 + $0x5b8] sm:$0xff]
    %v318 = vld [vmem:[#allocation5 + $0x5c0] sm:$0xff]
    %v319 = vld [vmem:[#allocation5 + $0x5c8] sm:$0xff]
    %v320 = vld [vmem:[#allocation5 + $0x5d0] sm:$0xff]
    %v321 = vld [vmem:[#allocation5 + $0x5d8] sm:$0xff]
    %v322 = vld [vmem:[#allocation5 + $0x5e0] sm:$0xff]
    %v323 = vld [vmem:[#allocation5 + $0x5e8] sm:$0xff]
    %v324 = vld [vmem:[#allocation5 + $0x5f0] sm:$0xff]
    %v325 = vld [vmem:[#allocation5 + $0x5f8] sm:$0xff]
    %v326 = vld [vmem:[#allocation5 + $0x600] sm:$0xff]
    %v327 = vld [vmem:[#allocation5 + $0x608] sm:$0xff]
    %v328 = vld [vmem:[#allocation5 + $0x610] sm:$0xff]
    %v329 = vld [vmem:[#allocation5 + $0x618] sm:$0xff]
    %v330 = vld [vmem:[#allocation5 + $0x620] sm:$0xff]
    %v331 = vld [vmem:[#allocation5 + $0x628] sm:$0xff]
    %v332 = vld [vmem:[#allocation5 + $0x630] sm:$0xff]
    %v333 = vld [vmem:[#allocation5 + $0x638] sm:$0xff]
    %v334 = vld [vmem:[#allocation5 + $0x640] sm:$0xff]
    %v335 = vld [vmem:[#allocation5 + $0x648] sm:$0xff]
    %v336 = vld [vmem:[#allocation5 + $0x650] sm:$0xff]
    %v337 = vld [vmem:[#allocation5 + $0x658] sm:$0xff]
    %v338 = vld [vmem:[#allocation5 + $0x660] sm:$0xff]
    %v339 = vld [vmem:[#allocation5 + $0x668] sm:$0xff]
    %v340 = vld [vmem:[#allocation5 + $0x670] sm:$0xff]
    %v341 = vld [vmem:[#allocation5 + $0x678] sm:$0xff]
    %v342 = vld [vmem:[#allocation5 + $0x680] sm:$0xff]
    %v343 = vld [vmem:[#allocation5 + $0x688] sm:$0xff]
    %v344 = vld [vmem:[#allocation5 + $0x690] sm:$0xff]
    %v345 = vld [vmem:[#allocation5 + $0x698] sm:$0xff]
    %v346 = vld [vmem:[#allocation5 + $0x6a0] sm:$0xff]
    %v347 = vld [vmem:[#allocation5 + $0x6a8] sm:$0xff]
    %v348 = vld [vmem:[#allocation5 + $0x6b0] sm:$0xff]
    %v349 = vld [vmem:[#allocation5 + $0x6b8] sm:$0xff]
    %v350 = vld [vmem:[#allocation5 + $0x6c0] sm:$0xff]
    %v351 = vld [vmem:[#allocation5 + $0x6c8] sm:$0xff]
    %v352 = vld [vmem:[#allocation5 + $0x6d0] sm:$0xff]
    %v353 = vld [vmem:[#allocation5 + $0x6d8] sm:$0xff]
    %v354 = vld [vmem:[#allocation5 + $0x6e0] sm:$0xff]
    %v355 = vld [vmem:[#allocation5 + $0x6e8] sm:$0xff]
    %v356 = vld [vmem:[#allocation5 + $0x6f0] sm:$0xff]
    %v357 = vld [vmem:[#allocation5 + $0x6f8] sm:$0xff]
    %v358 = vld [vmem:[#allocation5 + $0x700] sm:$0xff]
    %v359 = vld [vmem:[#allocation5 + $0x708] sm:$0xff]
    %v360 = vld [vmem:[#allocation5 + $0x710] sm:$0xff]
    %v361 = vld [vmem:[#allocation5 + $0x718] sm:$0xff]
    %v362 = vld [vmem:[#allocation5 + $0x720] sm:$0xff]
    %v363 = vld [vmem:[#allocation5 + $0x728] sm:$0xff]
    %v364 = vld [vmem:[#allocation5 + $0x730] sm:$0xff]
    %v365 = vld [vmem:[#allocation5 + $0x738] sm:$0xff]
    %v366 = vld [vmem:[#allocation5 + $0x740] sm:$0xff]
    %v367 = vld [vmem:[#allocation5 + $0x748] sm:$0xff]
    %v368 = vld [vmem:[#allocation5 + $0x750] sm:$0xff]
    %v369 = vld [vmem:[#allocation5 + $0x758] sm:$0xff]
    %v370 = vld [vmem:[#allocation5 + $0x760] sm:$0xff]
    %v371 = vld [vmem:[#allocation5 + $0x768] sm:$0xff]
    %v372 = vld [vmem:[#allocation5 + $0x770] sm:$0xff]
    %v373 = vld [vmem:[#allocation5 + $0x778] sm:$0xff]
    %v374 = vld [vmem:[#allocation5 + $0x780] sm:$0xff]
    %v375 = vld [vmem:[#allocation5 + $0x788] sm:$0xff]
    %v376 = vld [vmem:[#allocation5 + $0x790] sm:$0xff]
    %v377 = vld [vmem:[#allocation5 + $0x798] sm:$0xff]
    %v378 = vld [vmem:[#allocation5 + $0x7a0] sm:$0xff]
    %v379 = vld [vmem:[#allocation5 + $0x7a8] sm:$0xff]
    %v380 = vld [vmem:[#allocation5 + $0x7b0] sm:$0xff]
    %v381 = vld [vmem:[#allocation5 + $0x7b8] sm:$0xff]
    %v382 = vld [vmem:[#allocation5 + $0x7c0] sm:$0xff]
    %v383 = vld [vmem:[#allocation5 + $0x7c8] sm:$0xff]
    %v384 = vld [vmem:[#allocation5 + $0x7d0] sm:$0xff]
    %v385 = vld [vmem:[#allocation5 + $0x7d8] sm:$0xff]
    %v386 = vld [vmem:[#allocation5 + $0x7e0] sm:$0xff]
    %v387 = vld [vmem:[#allocation5 + $0x7e8] sm:$0xff]
    %v388 = vld [vmem:[#allocation5 + $0x7f0] sm:$0xff]
    %v389 = vld [vmem:[#allocation5 + $0x7f8] sm:$0xff]
    %v390 = vld [vmem:[#allocation5 + $0x800] sm:$0xff]
    %v391 = vld [vmem:[#allocation5 + $0x808] sm:$0xff]
    %v392 = vld [vmem:[#allocation5 + $0x810] sm:$0xff]
    %v393 = vld [vmem:[#allocation5 + $0x818] sm:$0xff]
    %v394 = vld [vmem:[#allocation5 + $0x820] sm:$0xff]
    %v395 = vld [vmem:[#allocation5 + $0x828] sm:$0xff]
    %v396 = vld [vmem:[#allocation5 + $0x830] sm:$0xff]
    %v397 = vld [vmem:[#allocation5 + $0x838] sm:$0xff]
    %v398 = vld [vmem:[#allocation5 + $0x840] sm:$0xff]
    %v399 = vld [vmem:[#allocation5 + $0x848] sm:$0xff]
    %v400 = vld [vmem:[#allocation5 + $0x850] sm:$0xff]
    %v401 = vld [vmem:[#allocation5 + $0x858] sm:$0xff]
    %v402 = vld [vmem:[#allocation5 + $0x860] sm:$0xff]
    %v403 = vld [vmem:[#allocation5 + $0x868] sm:$0xff]
    %v404 = vld [vmem:[#allocation5 + $0x870] sm:$0xff]
    %v405 = vld [vmem:[#allocation5 + $0x878] sm:$0xff]
    %v406 = vld [vmem:[#allocation5 + $0x880] sm:$0xff]
    %v407 = vld [vmem:[#allocation5 + $0x888] sm:$0xff]
    %v408 = vld [vmem:[#allocation5 + $0x890] sm:$0xff]
    %v409 = vld [vmem:[#allocation5 + $0x898] sm:$0xff]
    %v410 = vld [vmem:[#allocation5 + $0x8a0] sm:$0xff]
    %v411 = vld [vmem:[#allocation5 + $0x8a8] sm:$0xff]
    %v412 = vld [vmem:[#allocation5 + $0x8b0] sm:$0xff]
    %v413 = vld [vmem:[#allocation5 + $0x8b8] sm:$0xff]
    %v414 = vld [vmem:[#allocation5 + $0x8c0] sm:$0xff]
    %v415 = vld [vmem:[#allocation5 + $0x8c8] sm:$0xff]
    %v416 = vld [vmem:[#allocation5 + $0x8d0] sm:$0xff]
    %v417 = vld [vmem:[#allocation5 + $0x8d8] sm:$0xff]
    %v418 = vld [vmem:[#allocation5 + $0x8e0] sm:$0xff]
    %v419 = vld [vmem:[#allocation5 + $0x8e8] sm:$0xff]
    %v420 = vld [vmem:[#allocation5 + $0x8f0] sm:$0xff]
    %v421 = vld [vmem:[#allocation5 + $0x8f8] sm:$0xff]
    %v422 = vld [vmem:[#allocation5 + $0x900] sm:$0xff]
    %v423 = vld [vmem:[#allocation5 + $0x908] sm:$0xff]
    %v424 = vld [vmem:[#allocation5 + $0x910] sm:$0xff]
    %v425 = vld [vmem:[#allocation5 + $0x918] sm:$0xff]
    %v426 = vld [vmem:[#allocation5 + $0x920] sm:$0xff]
    %v427 = vld [vmem:[#allocation5 + $0x928] sm:$0xff]
    %v428 = vld [vmem:[#allocation5 + $0x930] sm:$0xff]
    %v429 = vld [vmem:[#allocation5 + $0x938] sm:$0xff]
    %v430 = vld [vmem:[#allocation5 + $0x940] sm:$0xff]
    %v431 = vld [vmem:[#allocation5 + $0x948] sm:$0xff]
    %v432 = vld [vmem:[#allocation5 + $0x950] sm:$0xff]
    %v433 = vld [vmem:[#allocation5 + $0x958] sm:$0xff]
    %v434 = vld [vmem:[#allocation5 + $0x960] sm:$0xff]
    %v435 = vld [vmem:[#allocation5 + $0x968] sm:$0xff]
    %v436 = vld [vmem:[#allocation5 + $0x970] sm:$0xff]
    %v437 = vld [vmem:[#allocation5 + $0x978] sm:$0xff]
    %v438 = vld [vmem:[#allocation5 + $0x980] sm:$0xff]
    %v439 = vld [vmem:[#allocation5 + $0x988] sm:$0xff]
    %v440 = vld [vmem:[#allocation5 + $0x990] sm:$0xff]
    %v441 = vld [vmem:[#allocation5 + $0x998] sm:$0xff]
    %v442 = vld [vmem:[#allocation5 + $0x9a0] sm:$0xff]
    %v443 = vld [vmem:[#allocation5 + $0x9a8] sm:$0xff]
    %v444 = vld [vmem:[#allocation5 + $0x9b0] sm:$0xff]
    %v445 = vld [vmem:[#allocation5 + $0x9b8] sm:$0xff]
    %v446 = vld [vmem:[#allocation5 + $0x9c0] sm:$0xff]
    %v447 = vld [vmem:[#allocation5 + $0x9c8] sm:$0xff]
    %v448 = vld [vmem:[#allocation5 + $0x9d0] sm:$0xff]
    %v449 = vld [vmem:[#allocation5 + $0x9d8] sm:$0xff]
    %v450 = vld [vmem:[#allocation5 + $0x9e0] sm:$0xff]
    %v451 = vld [vmem:[#allocation5 + $0x9e8] sm:$0xff]
    %v452 = vld [vmem:[#allocation5 + $0x9f0] sm:$0xff]
    %v453 = vld [vmem:[#allocation5 + $0x9f8] sm:$0xff]
    %v454 = vld [vmem:[#allocation5 + $0xa00] sm:$0xff]
    %v455 = vld [vmem:[#allocation5 + $0xa08] sm:$0xff]
    %v456 = vld [vmem:[#allocation5 + $0xa10] sm:$0xff]
    %v457 = vld [vmem:[#allocation5 + $0xa18] sm:$0xff]
    %v458 = vld [vmem:[#allocation5 + $0xa20] sm:$0xff]
    %v459 = vld [vmem:[#allocation5 + $0xa28] sm:$0xff]
    %v460 = vld [vmem:[#allocation5 + $0xa30] sm:$0xff]
    %v461 = vld [vmem:[#allocation5 + $0xa38] sm:$0xff]
    %v462 = vld [vmem:[#allocation5 + $0xa40] sm:$0xff]
    %v463 = vld [vmem:[#allocation5 + $0xa48] sm:$0xff]
    %v464 = vld [vmem:[#allocation5 + $0xa50] sm:$0xff]
    %v465 = vld [vmem:[#allocation5 + $0xa58] sm:$0xff]
    %v466 = vld [vmem:[#allocation5 + $0xa60] sm:$0xff]
    %v467 = vld [vmem:[#allocation5 + $0xa68] sm:$0xff]
    %v468 = vld [vmem:[#allocation5 + $0xa70] sm:$0xff]
    %v469 = vld [vmem:[#allocation5 + $0xa78] sm:$0xff]
    %v470 = vld [vmem:[#allocation5 + $0xa80] sm:$0xff]
    %v471 = vld [vmem:[#allocation5 + $0xa88] sm:$0xff]
    %v472 = vld [vmem:[#allocation5 + $0xa90] sm:$0xff]
    %v473 = vld [vmem:[#allocation5 + $0xa98] sm:$0xff]
    %v474 = vld [vmem:[#allocation5 + $0xaa0] sm:$0xff]
    %v475 = vld [vmem:[#allocation5 + $0xaa8] sm:$0xff]
    %v476 = vld [vmem:[#allocation5 + $0xab0] sm:$0xff]
    %v477 = vld [vmem:[#allocation5 + $0xab8] sm:$0xff]
    %v478 = vld [vmem:[#allocation5 + $0xac0] sm:$0xff]
    %v479 = vld [vmem:[#allocation5 + $0xac8] sm:$0xff]
    %v480 = vld [vmem:[#allocation5 + $0xad0] sm:$0xff]
    %v481 = vld [vmem:[#allocation5 + $0xad8] sm:$0xff]
    %v482 = vld [vmem:[#allocation5 + $0xae0] sm:$0xff]
    %v483 = vld [vmem:[#allocation5 + $0xae8] sm:$0xff]
    %v484 = vld [vmem:[#allocation5 + $0xaf0] sm:$0xff]
    %v485 = vld [vmem:[#allocation5 + $0xaf8] sm:$0xff]
    %v486 = vld [vmem:[#allocation5 + $0xb00] sm:$0xff]
    %v487 = vld [vmem:[#allocation5 + $0xb08] sm:$0xff]
    %v488 = vld [vmem:[#allocation5 + $0xb10] sm:$0xff]
    %v489 = vld [vmem:[#allocation5 + $0xb18] sm:$0xff]
    %v490 = vld [vmem:[#allocation5 + $0xb20] sm:$0xff]
    %v491 = vld [vmem:[#allocation5 + $0xb28] sm:$0xff]
    %v492 = vld [vmem:[#allocation5 + $0xb30] sm:$0xff]
    %v493 = vld [vmem:[#allocation5 + $0xb38] sm:$0xff]
    %v494 = vld [vmem:[#allocation5 + $0xb40] sm:$0xff]
    %v495 = vld [vmem:[#allocation5 + $0xb48] sm:$0xff]
    %v496 = vld [vmem:[#allocation5 + $0xb50] sm:$0xff]
    %v497 = vld [vmem:[#allocation5 + $0xb58] sm:$0xff]
    %v498 = vld [vmem:[#allocation5 + $0xb60] sm:$0xff]
    %v499 = vld [vmem:[#allocation5 + $0xb68] sm:$0xff]
    %v500 = vld [vmem:[#allocation5 + $0xb70] sm:$0xff]
    %v501 = vld [vmem:[#allocation5 + $0xb78] sm:$0xff]
    %v502 = vld [vmem:[#allocation5 + $0xb80] sm:$0xff]
    %v503 = vld [vmem:[#allocation5 + $0xb88] sm:$0xff]
    %v504 = vld [vmem:[#allocation5 + $0xb90] sm:$0xff]
    %v505 = vld [vmem:[#allocation5 + $0xb98] sm:$0xff]
    %v506 = vld [vmem:[#allocation5 + $0xba0] sm:$0xff]
    %v507 = vld [vmem:[#allocation5 + $0xba8] sm:$0xff]
    %v508 = vld [vmem:[#allocation5 + $0xbb0] sm:$0xff]
    %v509 = vld [vmem:[#allocation5 + $0xbb8] sm:$0xff]
    %v510 = vld [vmem:[#allocation5 + $0xbc0] sm:$0xff]
    %v511 = vld [vmem:[#allocation5 + $0xbc8] sm:$0xff]
    %v512 = vld [vmem:[#allocation5 + $0xbd0] sm:$0xff]
    %v513 = vld [vmem:[#allocation5 + $0xbd8] sm:$0xff]
    %v514 = vld [vmem:[#allocation5 + $0xbe0] sm:$0xff]
    %v515 = vld [vmem:[#allocation5 + $0xbe8] sm:$0xff]
    %v516 = vld [vmem:[#allocation5 + $0xbf0] sm:$0xff]
    %v517 = vld [vmem:[#allocation5 + $0xbf8] sm:$0xff]
    %v518 = vld [vmem:[#allocation5 + $0xc00] sm:$0xff]
    %v519 = vld [vmem:[#allocation5 + $0xc08] sm:$0xff]
    %v520 = vld [vmem:[#allocation5 + $0xc10] sm:$0xff]
    %v521 = vld [vmem:[#allocation5 + $0xc18] sm:$0xff]
    %v522 = vld [vmem:[#allocation5 + $0xc20] sm:$0xff]
    %v523 = vld [vmem:[#allocation5 + $0xc28] sm:$0xff]
    %v524 = vld [vmem:[#allocation5 + $0xc30] sm:$0xff]
    %v525 = vld [vmem:[#allocation5 + $0xc38] sm:$0xff]
    %v526 = vld [vmem:[#allocation5 + $0xc40] sm:$0xff]
    %v527 = vld [vmem:[#allocation5 + $0xc48] sm:$0xff]
    %v528 = vld [vmem:[#allocation5 + $0xc50] sm:$0xff]
    %v529 = vld [vmem:[#allocation5 + $0xc58] sm:$0xff]
    %v530 = vld [vmem:[#allocation5 + $0xc60] sm:$0xff]
    %v531 = vld [vmem:[#allocation5 + $0xc68] sm:$0xff]
    %v532 = vld [vmem:[#allocation5 + $0xc70] sm:$0xff]
    %v533 = vld [vmem:[#allocation5 + $0xc78] sm:$0xff]
    %v534 = vld [vmem:[#allocation5 + $0xc80] sm:$0xff]
    %v535 = vld [vmem:[#allocation5 + $0xc88] sm:$0xff]
    %v536 = vld [vmem:[#allocation5 + $0xc90] sm:$0xff]
    %v537 = vld [vmem:[#allocation5 + $0xc98] sm:$0xff]
    %v538 = vld [vmem:[#allocation5 + $0xca0] sm:$0xff]
    %v539 = vld [vmem:[#allocation5 + $0xca8] sm:$0xff]
    %v540 = vld [vmem:[#allocation5 + $0xcb0] sm:$0xff]
    %v541 = vld [vmem:[#allocation5 + $0xcb8] sm:$0xff]
    %v542 = vld [vmem:[#allocation5 + $0xcc0] sm:$0xff]
    %v543 = vld [vmem:[#allocation5 + $0xcc8] sm:$0xff]
    %v544 = vld [vmem:[#allocation5 + $0xcd0] sm:$0xff]
    %v545 = vld [vmem:[#allocation5 + $0xcd8] sm:$0xff]
    %v546 = vld [vmem:[#allocation5 + $0xce0] sm:$0xff]
    %v547 = vld [vmem:[#allocation5 + $0xce8] sm:$0xff]
    %v548 = vld [vmem:[#allocation5 + $0xcf0] sm:$0xff]
    %v549 = vld [vmem:[#allocation5 + $0xcf8] sm:$0xff]
    %v550 = vld [vmem:[#allocation5 + $0xd00] sm:$0xff]
    %v551 = vld [vmem:[#allocation5 + $0xd08] sm:$0xff]
    %v552 = vld [vmem:[#allocation5 + $0xd10] sm:$0xff]
    %v553 = vld [vmem:[#allocation5 + $0xd18] sm:$0xff]
    %v554 = vld [vmem:[#allocation5 + $0xd20] sm:$0xff]
    %v555 = vld [vmem:[#allocation5 + $0xd28] sm:$0xff]
    %v556 = vld [vmem:[#allocation5 + $0xd30] sm:$0xff]
    %v557 = vld [vmem:[#allocation5 + $0xd38] sm:$0xff]
    %v558 = vld [vmem:[#allocation5 + $0xd40] sm:$0xff]
    %v559 = vld [vmem:[#allocation5 + $0xd48] sm:$0xff]
    %v560 = vld [vmem:[#allocation5 + $0xd50] sm:$0xff]
    %v561 = vld [vmem:[#allocation5 + $0xd58] sm:$0xff]
    %v562 = vld [vmem:[#allocation5 + $0xd60] sm:$0xff]
    %v563 = vld [vmem:[#allocation5 + $0xd68] sm:$0xff]
    %v564 = vld [vmem:[#allocation5 + $0xd70] sm:$0xff]
    %v565 = vld [vmem:[#allocation5 + $0xd78] sm:$0xff]
    %v566 = vld [vmem:[#allocation5 + $0xd80] sm:$0xff]
    %v567 = vld [vmem:[#allocation5 + $0xd88] sm:$0xff]
    %v568 = vld [vmem:[#allocation5 + $0xd90] sm:$0xff]
    %v569 = vld [vmem:[#allocation5 + $0xd98] sm:$0xff]
    %v570 = vld [vmem:[#allocation5 + $0xda0] sm:$0xff]
    %v571 = vld [vmem:[#allocation5 + $0xda8] sm:$0xff]
    %v572 = vld [vmem:[#allocation5 + $0xdb0] sm:$0xff]
    %v573 = vld [vmem:[#allocation5 + $0xdb8] sm:$0xff]
    %v574 = vld [vmem:[#allocation5 + $0xdc0] sm:$0xff]
    %v575 = vld [vmem:[#allocation5 + $0xdc8] sm:$0xff]
    %v576 = vld [vmem:[#allocation5 + $0xdd0] sm:$0xff]
    %v577 = vld [vmem:[#allocation5 + $0xdd8] sm:$0xff]
    %v578 = vld [vmem:[#allocation5 + $0xde0] sm:$0xff]
    %v579 = vld [vmem:[#allocation5 + $0xde8] sm:$0xff]
    %v580 = vld [vmem:[#allocation5 + $0xdf0] sm:$0xff]
    %v581 = vld [vmem:[#allocation5 + $0xdf8] sm:$0xff]
    %v582 = vld [vmem:[#allocation5 + $0xe00] sm:$0xff]
    %v583 = vld [vmem:[#allocation5 + $0xe08] sm:$0xff]
    %v584 = vld [vmem:[#allocation5 + $0xe10] sm:$0xff]
    %v585 = vld [vmem:[#allocation5 + $0xe18] sm:$0xff]
    %v586 = vld [vmem:[#allocation5 + $0xe20] sm:$0xff]
    %v587 = vld [vmem:[#allocation5 + $0xe28] sm:$0xff]
    %v588 = vld [vmem:[#allocation5 + $0xe30] sm:$0xff]
    %v589 = vld [vmem:[#allocation5 + $0xe38] sm:$0xff]
    %v590 = vld [vmem:[#allocation5 + $0xe40] sm:$0xff]
    %v591 = vld [vmem:[#allocation5 + $0xe48] sm:$0xff]
    %v592 = vld [vmem:[#allocation5 + $0xe50] sm:$0xff]
    %v593 = vld [vmem:[#allocation5 + $0xe58] sm:$0xff]
    %v594 = vld [vmem:[#allocation5 + $0xe60] sm:$0xff]
    %v595 = vld [vmem:[#allocation5 + $0xe68] sm:$0xff]
    %v596 = vld [vmem:[#allocation5 + $0xe70] sm:$0xff]
    %v597 = vld [vmem:[#allocation5 + $0xe78] sm:$0xff]
    %v598 = vld [vmem:[#allocation5 + $0xe80] sm:$0xff]
    %v599 = vld [vmem:[#allocation5 + $0xe88] sm:$0xff]
    %v600 = vld [vmem:[#allocation5 + $0xe90] sm:$0xff]
    %v601 = vld [vmem:[#allocation5 + $0xe98] sm:$0xff]
    %v602 = vld [vmem:[#allocation5 + $0xea0] sm:$0xff]
    %v603 = vld [vmem:[#allocation5 + $0xea8] sm:$0xff]
    %v604 = vld [vmem:[#allocation5 + $0xeb0] sm:$0xff]
    %v605 = vld [vmem:[#allocation5 + $0xeb8] sm:$0xff]
    %v606 = vld [vmem:[#allocation5 + $0xec0] sm:$0xff]
    %v607 = vld [vmem:[#allocation5 + $0xec8] sm:$0xff]
    %v608 = vld [vmem:[#allocation5 + $0xed0] sm:$0xff]
    %v609 = vld [vmem:[#allocation5 + $0xed8] sm:$0xff]
    %v610 = vld [vmem:[#allocation5 + $0xee0] sm:$0xff]
    %v611 = vld [vmem:[#allocation5 + $0xee8] sm:$0xff]
    %v612 = vld [vmem:[#allocation5 + $0xef0] sm:$0xff]
    %v613 = vld [vmem:[#allocation5 + $0xef8] sm:$0xff]
    %v614 = vld [vmem:[#allocation5 + $0xf00] sm:$0xff]
    %v615 = vld [vmem:[#allocation5 + $0xf08] sm:$0xff]
    %v616 = vld [vmem:[#allocation5 + $0xf10] sm:$0xff]
    %v617 = vld [vmem:[#allocation5 + $0xf18] sm:$0xff]
    %v618 = vld [vmem:[#allocation5 + $0xf20] sm:$0xff]
    %v619 = vld [vmem:[#allocation5 + $0xf28] sm:$0xff]
    %v620 = vld [vmem:[#allocation5 + $0xf30] sm:$0xff]
    %v621 = vld [vmem:[#allocation5 + $0xf38] sm:$0xff]
    %v622 = vld [vmem:[#allocation5 + $0xf40] sm:$0xff]
    %v623 = vld [vmem:[#allocation5 + $0xf48] sm:$0xff]
    %v624 = vld [vmem:[#allocation5 + $0xf50] sm:$0xff]
    %v625 = vld [vmem:[#allocation5 + $0xf58] sm:$0xff]
    %v626 = vld [vmem:[#allocation5 + $0xf60] sm:$0xff]
    %v627 = vld [vmem:[#allocation5 + $0xf68] sm:$0xff]
    %v628 = vld [vmem:[#allocation5 + $0xf70] sm:$0xff]
    %v629 = vld [vmem:[#allocation5 + $0xf78] sm:$0xff]
    %v630 = vld [vmem:[#allocation5 + $0xf80] sm:$0xff]
    %v631 = vld [vmem:[#allocation5 + $0xf88] sm:$0xff]
    %v632 = vld [vmem:[#allocation5 + $0xf90] sm:$0xff]
    %v633 = vld [vmem:[#allocation5 + $0xf98] sm:$0xff]
    %v634 = vld [vmem:[#allocation5 + $0xfa0] sm:$0xff]
    %v635 = vld [vmem:[#allocation5 + $0xfa8] sm:$0xff]
    %v636 = vld [vmem:[#allocation5 + $0xfb0] sm:$0xff]
    %v637 = vld [vmem:[#allocation5 + $0xfb8] sm:$0xff]
    %v638 = vld [vmem:[#allocation5 + $0xfc0] sm:$0xff]
    %v639 = vld [vmem:[#allocation5 + $0xfc8] sm:$0xff]
    %v640 = vld [vmem:[#allocation5 + $0xfd0] sm:$0xff]
    %v641 = vld [vmem:[#allocation5 + $0xfd8] sm:$0xff]
    %v642 = vld [vmem:[#allocation5 + $0xfe0] sm:$0xff]
    %v643 = vld [vmem:[#allocation5 + $0xfe8] sm:$0xff]
    %v644 = vld [vmem:[#allocation5 + $0xff0] sm:$0xff]
    %v645 = vld [vmem:[#allocation5 + $0xff8] sm:$0xff]
    %v646 = vld [vmem:[#allocation7] sm:$0xf]
    %v648 = vlaneseq
    %v649 = vshrl.u32 %v648, 7
    %v650 = vsub.s32 0, %v649
    %v651 = vrot.slane %v646, %v650
    %v652 = vlaneseq
    %v653 = vshrl.u32 %v652, 7
    %v654 = vsub.s32 1, %v653
    %v655 = vrot.slane %v646, %v654
    %v656 = vlaneseq
    %v657 = vshrl.u32 %v656, 7
    %v658 = vsub.s32 2, %v657
    %v659 = vrot.slane %v646, %v658
    %v660 = vlaneseq
    %v661 = vshrl.u32 %v660, 7
    %v662 = vsub.s32 3, %v661
    %v663 = vrot.slane %v646, %v662
    %v1180 = vunpack.c.l.b16 %v134
    %v1181 = vunpack.c.h.b16 %v134
    %v1182 = vunpack.c.l.b16 %v135
    %v1183 = vunpack.c.h.b16 %v135
    %v1184 = vunpack.c.l.b16 %v136
    %v1185 = vunpack.c.h.b16 %v136
    %v1186 = vunpack.c.l.b16 %v137
    %v1187 = vunpack.c.h.b16 %v137
    %v1188 = vunpack.c.l.b16 %v138
    %v1189 = vunpack.c.h.b16 %v138
    %v1190 = vunpack.c.l.b16 %v139
    %v1191 = vunpack.c.h.b16 %v139
    %v1192 = vunpack.c.l.b16 %v140
    %v1193 = vunpack.c.h.b16 %v140
    %v1194 = vunpack.c.l.b16 %v141
    %v1195 = vunpack.c.h.b16 %v141
    %v1196 = vunpack.c.l.b16 %v142
    %v1197 = vunpack.c.h.b16 %v142
    %v1198 = vunpack.c.l.b16 %v143
    %v1199 = vunpack.c.h.b16 %v143
    %v1200 = vunpack.c.l.b16 %v144
    %v1201 = vunpack.c.h.b16 %v144
    %v1202 = vunpack.c.l.b16 %v145
    %v1203 = vunpack.c.h.b16 %v145
    %v1204 = vunpack.c.l.b16 %v146
    %v1205 = vunpack.c.h.b16 %v146
    %v1206 = vunpack.c.l.b16 %v147
    %v1207 = vunpack.c.h.b16 %v147
    %v1208 = vunpack.c.l.b16 %v148
    %v1209 = vunpack.c.h.b16 %v148
    %v1210 = vunpack.c.l.b16 %v149
    %v1211 = vunpack.c.h.b16 %v149
    %v1212 = vunpack.c.l.b16 %v150
    %v1213 = vunpack.c.h.b16 %v150
    %v1214 = vunpack.c.l.b16 %v151
    %v1215 = vunpack.c.h.b16 %v151
    %v1216 = vunpack.c.l.b16 %v152
    %v1217 = vunpack.c.h.b16 %v152
    %v1218 = vunpack.c.l.b16 %v153
    %v1219 = vunpack.c.h.b16 %v153
    %v1220 = vunpack.c.l.b16 %v154
    %v1221 = vunpack.c.h.b16 %v154
    %v1222 = vunpack.c.l.b16 %v155
    %v1223 = vunpack.c.h.b16 %v155
    %v1224 = vunpack.c.l.b16 %v156
    %v1225 = vunpack.c.h.b16 %v156
    %v1226 = vunpack.c.l.b16 %v157
    %v1227 = vunpack.c.h.b16 %v157
    %v1228 = vunpack.c.l.b16 %v158
    %v1229 = vunpack.c.h.b16 %v158
    %v1230 = vunpack.c.l.b16 %v159
    %v1231 = vunpack.c.h.b16 %v159
    %v1232 = vunpack.c.l.b16 %v160
    %v1233 = vunpack.c.h.b16 %v160
    %v1234 = vunpack.c.l.b16 %v161
    %v1235 = vunpack.c.h.b16 %v161
    %v1236 = vunpack.c.l.b16 %v162
    %v1237 = vunpack.c.h.b16 %v162
    %v1238 = vunpack.c.l.b16 %v163
    %v1239 = vunpack.c.h.b16 %v163
    %v1240 = vunpack.c.l.b16 %v164
    %v1241 = vunpack.c.h.b16 %v164
    %v1242 = vunpack.c.l.b16 %v165
    %v1243 = vunpack.c.h.b16 %v165
    %v1244 = vunpack.c.l.b16 %v166
    %v1245 = vunpack.c.h.b16 %v166
    %v1246 = vunpack.c.l.b16 %v167
    %v1247 = vunpack.c.h.b16 %v167
    %v1248 = vunpack.c.l.b16 %v168
    %v1249 = vunpack.c.h.b16 %v168
    %v1250 = vunpack.c.l.b16 %v169
    %v1251 = vunpack.c.h.b16 %v169
    %v1252 = vunpack.c.l.b16 %v170
    %v1253 = vunpack.c.h.b16 %v170
    %v1254 = vunpack.c.l.b16 %v171
    %v1255 = vunpack.c.h.b16 %v171
    %v1256 = vunpack.c.l.b16 %v172
    %v1257 = vunpack.c.h.b16 %v172
    %v1258 = vunpack.c.l.b16 %v173
    %v1259 = vunpack.c.h.b16 %v173
    %v1260 = vunpack.c.l.b16 %v174
    %v1261 = vunpack.c.h.b16 %v174
    %v1262 = vunpack.c.l.b16 %v175
    %v1263 = vunpack.c.h.b16 %v175
    %v1264 = vunpack.c.l.b16 %v176
    %v1265 = vunpack.c.h.b16 %v176
    %v1266 = vunpack.c.l.b16 %v177
    %v1267 = vunpack.c.h.b16 %v177
    %v1268 = vunpack.c.l.b16 %v178
    %v1269 = vunpack.c.h.b16 %v178
    %v1270 = vunpack.c.l.b16 %v179
    %v1271 = vunpack.c.h.b16 %v179
    %v1272 = vunpack.c.l.b16 %v180
    %v1273 = vunpack.c.h.b16 %v180
    %v1274 = vunpack.c.l.b16 %v181
    %v1275 = vunpack.c.h.b16 %v181
    %v1276 = vunpack.c.l.b16 %v182
    %v1277 = vunpack.c.h.b16 %v182
    %v1278 = vunpack.c.l.b16 %v183
    %v1279 = vunpack.c.h.b16 %v183
    %v1280 = vunpack.c.l.b16 %v184
    %v1281 = vunpack.c.h.b16 %v184
    %v1282 = vunpack.c.l.b16 %v185
    %v1283 = vunpack.c.h.b16 %v185
    %v1284 = vunpack.c.l.b16 %v186
    %v1285 = vunpack.c.h.b16 %v186
    %v1286 = vunpack.c.l.b16 %v187
    %v1287 = vunpack.c.h.b16 %v187
    %v1288 = vunpack.c.l.b16 %v188
    %v1289 = vunpack.c.h.b16 %v188
    %v1290 = vunpack.c.l.b16 %v189
    %v1291 = vunpack.c.h.b16 %v189
    %v1292 = vunpack.c.l.b16 %v190
    %v1293 = vunpack.c.h.b16 %v190
    %v1294 = vunpack.c.l.b16 %v191
    %v1295 = vunpack.c.h.b16 %v191
    %v1296 = vunpack.c.l.b16 %v192
    %v1297 = vunpack.c.h.b16 %v192
    %v1298 = vunpack.c.l.b16 %v193
    %v1299 = vunpack.c.h.b16 %v193
    %v1300 = vunpack.c.l.b16 %v194
    %v1301 = vunpack.c.h.b16 %v194
    %v1302 = vunpack.c.l.b16 %v195
    %v1303 = vunpack.c.h.b16 %v195
    %v1304 = vunpack.c.l.b16 %v196
    %v1305 = vunpack.c.h.b16 %v196
    %v1306 = vunpack.c.l.b16 %v197
    %v1307 = vunpack.c.h.b16 %v197
    %v1308 = vunpack.c.l.b16 %v198
    %v1309 = vunpack.c.h.b16 %v198
    %v1310 = vunpack.c.l.b16 %v199
    %v1311 = vunpack.c.h.b16 %v199
    %v1312 = vunpack.c.l.b16 %v200
    %v1313 = vunpack.c.h.b16 %v200
    %v1314 = vunpack.c.l.b16 %v201
    %v1315 = vunpack.c.h.b16 %v201
    %v1316 = vunpack.c.l.b16 %v202
    %v1317 = vunpack.c.h.b16 %v202
    %v1318 = vunpack.c.l.b16 %v203
    %v1319 = vunpack.c.h.b16 %v203
    %v1320 = vunpack.c.l.b16 %v204
    %v1321 = vunpack.c.h.b16 %v204
    %v1322 = vunpack.c.l.b16 %v205
    %v1323 = vunpack.c.h.b16 %v205
    %v1324 = vunpack.c.l.b16 %v206
    %v1325 = vunpack.c.h.b16 %v206
    %v1326 = vunpack.c.l.b16 %v207
    %v1327 = vunpack.c.h.b16 %v207
    %v1328 = vunpack.c.l.b16 %v208
    %v1329 = vunpack.c.h.b16 %v208
    %v1330 = vunpack.c.l.b16 %v209
    %v1331 = vunpack.c.h.b16 %v209
    %v1332 = vunpack.c.l.b16 %v210
    %v1333 = vunpack.c.h.b16 %v210
    %v1334 = vunpack.c.l.b16 %v211
    %v1335 = vunpack.c.h.b16 %v211
    %v1336 = vunpack.c.l.b16 %v212
    %v1337 = vunpack.c.h.b16 %v212
    %v1338 = vunpack.c.l.b16 %v213
    %v1339 = vunpack.c.h.b16 %v213
    %v1340 = vunpack.c.l.b16 %v214
    %v1341 = vunpack.c.h.b16 %v214
    %v1342 = vunpack.c.l.b16 %v215
    %v1343 = vunpack.c.h.b16 %v215
    %v1344 = vunpack.c.l.b16 %v216
    %v1345 = vunpack.c.h.b16 %v216
    %v1346 = vunpack.c.l.b16 %v217
    %v1347 = vunpack.c.h.b16 %v217
    %v1348 = vunpack.c.l.b16 %v218
    %v1349 = vunpack.c.h.b16 %v218
    %v1350 = vunpack.c.l.b16 %v219
    %v1351 = vunpack.c.h.b16 %v219
    %v1352 = vunpack.c.l.b16 %v220
    %v1353 = vunpack.c.h.b16 %v220
    %v1354 = vunpack.c.l.b16 %v221
    %v1355 = vunpack.c.h.b16 %v221
    %v1356 = vunpack.c.l.b16 %v222
    %v1357 = vunpack.c.h.b16 %v222
    %v1358 = vunpack.c.l.b16 %v223
    %v1359 = vunpack.c.h.b16 %v223
    %v1360 = vunpack.c.l.b16 %v224
    %v1361 = vunpack.c.h.b16 %v224
    %v1362 = vunpack.c.l.b16 %v225
    %v1363 = vunpack.c.h.b16 %v225
    %v1364 = vunpack.c.l.b16 %v226
    %v1365 = vunpack.c.h.b16 %v226
    %v1366 = vunpack.c.l.b16 %v227
    %v1367 = vunpack.c.h.b16 %v227
    %v1368 = vunpack.c.l.b16 %v228
    %v1369 = vunpack.c.h.b16 %v228
    %v1370 = vunpack.c.l.b16 %v229
    %v1371 = vunpack.c.h.b16 %v229
    %v1372 = vunpack.c.l.b16 %v230
    %v1373 = vunpack.c.h.b16 %v230
    %v1374 = vunpack.c.l.b16 %v231
    %v1375 = vunpack.c.h.b16 %v231
    %v1376 = vunpack.c.l.b16 %v232
    %v1377 = vunpack.c.h.b16 %v232
    %v1378 = vunpack.c.l.b16 %v233
    %v1379 = vunpack.c.h.b16 %v233
    %v1380 = vunpack.c.l.b16 %v234
    %v1381 = vunpack.c.h.b16 %v234
    %v1382 = vunpack.c.l.b16 %v235
    %v1383 = vunpack.c.h.b16 %v235
    %v1384 = vunpack.c.l.b16 %v236
    %v1385 = vunpack.c.h.b16 %v236
    %v1386 = vunpack.c.l.b16 %v237
    %v1387 = vunpack.c.h.b16 %v237
    %v1388 = vunpack.c.l.b16 %v238
    %v1389 = vunpack.c.h.b16 %v238
    %v1390 = vunpack.c.l.b16 %v239
    %v1391 = vunpack.c.h.b16 %v239
    %v1392 = vunpack.c.l.b16 %v240
    %v1393 = vunpack.c.h.b16 %v240
    %v1394 = vunpack.c.l.b16 %v241
    %v1395 = vunpack.c.h.b16 %v241
    %v1396 = vunpack.c.l.b16 %v242
    %v1397 = vunpack.c.h.b16 %v242
    %v1398 = vunpack.c.l.b16 %v243
    %v1399 = vunpack.c.h.b16 %v243
    %v1400 = vunpack.c.l.b16 %v244
    %v1401 = vunpack.c.h.b16 %v244
    %v1402 = vunpack.c.l.b16 %v245
    %v1403 = vunpack.c.h.b16 %v245
    %v1404 = vunpack.c.l.b16 %v246
    %v1405 = vunpack.c.h.b16 %v246
    %v1406 = vunpack.c.l.b16 %v247
    %v1407 = vunpack.c.h.b16 %v247
    %v1408 = vunpack.c.l.b16 %v248
    %v1409 = vunpack.c.h.b16 %v248
    %v1410 = vunpack.c.l.b16 %v249
    %v1411 = vunpack.c.h.b16 %v249
    %v1412 = vunpack.c.l.b16 %v250
    %v1413 = vunpack.c.h.b16 %v250
    %v1414 = vunpack.c.l.b16 %v251
    %v1415 = vunpack.c.h.b16 %v251
    %v1416 = vunpack.c.l.b16 %v252
    %v1417 = vunpack.c.h.b16 %v252
    %v1418 = vunpack.c.l.b16 %v253
    %v1419 = vunpack.c.h.b16 %v253
    %v1420 = vunpack.c.l.b16 %v254
    %v1421 = vunpack.c.h.b16 %v254
    %v1422 = vunpack.c.l.b16 %v255
    %v1423 = vunpack.c.h.b16 %v255
    %v1424 = vunpack.c.l.b16 %v256
    %v1425 = vunpack.c.h.b16 %v256
    %v1426 = vunpack.c.l.b16 %v257
    %v1427 = vunpack.c.h.b16 %v257
    %v1428 = vunpack.c.l.b16 %v258
    %v1429 = vunpack.c.h.b16 %v258
    %v1430 = vunpack.c.l.b16 %v259
    %v1431 = vunpack.c.h.b16 %v259
    %v1432 = vunpack.c.l.b16 %v260
    %v1433 = vunpack.c.h.b16 %v260
    %v1434 = vunpack.c.l.b16 %v261
    %v1435 = vunpack.c.h.b16 %v261
    %v1436 = vunpack.c.l.b16 %v262
    %v1437 = vunpack.c.h.b16 %v262
    %v1438 = vunpack.c.l.b16 %v263
    %v1439 = vunpack.c.h.b16 %v263
    %v1440 = vunpack.c.l.b16 %v264
    %v1441 = vunpack.c.h.b16 %v264
    %v1442 = vunpack.c.l.b16 %v265
    %v1443 = vunpack.c.h.b16 %v265
    %v1444 = vunpack.c.l.b16 %v266
    %v1445 = vunpack.c.h.b16 %v266
    %v1446 = vunpack.c.l.b16 %v267
    %v1447 = vunpack.c.h.b16 %v267
    %v1448 = vunpack.c.l.b16 %v268
    %v1449 = vunpack.c.h.b16 %v268
    %v1450 = vunpack.c.l.b16 %v269
    %v1451 = vunpack.c.h.b16 %v269
    %v1452 = vunpack.c.l.b16 %v270
    %v1453 = vunpack.c.h.b16 %v270
    %v1454 = vunpack.c.l.b16 %v271
    %v1455 = vunpack.c.h.b16 %v271
    %v1456 = vunpack.c.l.b16 %v272
    %v1457 = vunpack.c.h.b16 %v272
    %v1458 = vunpack.c.l.b16 %v273
    %v1459 = vunpack.c.h.b16 %v273
    %v1460 = vunpack.c.l.b16 %v274
    %v1461 = vunpack.c.h.b16 %v274
    %v1462 = vunpack.c.l.b16 %v275
    %v1463 = vunpack.c.h.b16 %v275
    %v1464 = vunpack.c.l.b16 %v276
    %v1465 = vunpack.c.h.b16 %v276
    %v1466 = vunpack.c.l.b16 %v277
    %v1467 = vunpack.c.h.b16 %v277
    %v1468 = vunpack.c.l.b16 %v278
    %v1469 = vunpack.c.h.b16 %v278
    %v1470 = vunpack.c.l.b16 %v279
    %v1471 = vunpack.c.h.b16 %v279
    %v1472 = vunpack.c.l.b16 %v280
    %v1473 = vunpack.c.h.b16 %v280
    %v1474 = vunpack.c.l.b16 %v281
    %v1475 = vunpack.c.h.b16 %v281
    %v1476 = vunpack.c.l.b16 %v282
    %v1477 = vunpack.c.h.b16 %v282
    %v1478 = vunpack.c.l.b16 %v283
    %v1479 = vunpack.c.h.b16 %v283
    %v1480 = vunpack.c.l.b16 %v284
    %v1481 = vunpack.c.h.b16 %v284
    %v1482 = vunpack.c.l.b16 %v285
    %v1483 = vunpack.c.h.b16 %v285
    %v1484 = vunpack.c.l.b16 %v286
    %v1485 = vunpack.c.h.b16 %v286
    %v1486 = vunpack.c.l.b16 %v287
    %v1487 = vunpack.c.h.b16 %v287
    %v1488 = vunpack.c.l.b16 %v288
    %v1489 = vunpack.c.h.b16 %v288
    %v1490 = vunpack.c.l.b16 %v289
    %v1491 = vunpack.c.h.b16 %v289
    %v1492 = vunpack.c.l.b16 %v290
    %v1493 = vunpack.c.h.b16 %v290
    %v1494 = vunpack.c.l.b16 %v291
    %v1495 = vunpack.c.h.b16 %v291
    %v1496 = vunpack.c.l.b16 %v292
    %v1497 = vunpack.c.h.b16 %v292
    %v1498 = vunpack.c.l.b16 %v293
    %v1499 = vunpack.c.h.b16 %v293
    %v1500 = vunpack.c.l.b16 %v294
    %v1501 = vunpack.c.h.b16 %v294
    %v1502 = vunpack.c.l.b16 %v295
    %v1503 = vunpack.c.h.b16 %v295
    %v1504 = vunpack.c.l.b16 %v296
    %v1505 = vunpack.c.h.b16 %v296
    %v1506 = vunpack.c.l.b16 %v297
    %v1507 = vunpack.c.h.b16 %v297
    %v1508 = vunpack.c.l.b16 %v298
    %v1509 = vunpack.c.h.b16 %v298
    %v1510 = vunpack.c.l.b16 %v299
    %v1511 = vunpack.c.h.b16 %v299
    %v1512 = vunpack.c.l.b16 %v300
    %v1513 = vunpack.c.h.b16 %v300
    %v1514 = vunpack.c.l.b16 %v301
    %v1515 = vunpack.c.h.b16 %v301
    %v1516 = vunpack.c.l.b16 %v302
    %v1517 = vunpack.c.h.b16 %v302
    %v1518 = vunpack.c.l.b16 %v303
    %v1519 = vunpack.c.h.b16 %v303
    %v1520 = vunpack.c.l.b16 %v304
    %v1521 = vunpack.c.h.b16 %v304
    %v1522 = vunpack.c.l.b16 %v305
    %v1523 = vunpack.c.h.b16 %v305
    %v1524 = vunpack.c.l.b16 %v306
    %v1525 = vunpack.c.h.b16 %v306
    %v1526 = vunpack.c.l.b16 %v307
    %v1527 = vunpack.c.h.b16 %v307
    %v1528 = vunpack.c.l.b16 %v308
    %v1529 = vunpack.c.h.b16 %v308
    %v1530 = vunpack.c.l.b16 %v309
    %v1531 = vunpack.c.h.b16 %v309
    %v1532 = vunpack.c.l.b16 %v310
    %v1533 = vunpack.c.h.b16 %v310
    %v1534 = vunpack.c.l.b16 %v311
    %v1535 = vunpack.c.h.b16 %v311
    %v1536 = vunpack.c.l.b16 %v312
    %v1537 = vunpack.c.h.b16 %v312
    %v1538 = vunpack.c.l.b16 %v313
    %v1539 = vunpack.c.h.b16 %v313
    %v1540 = vunpack.c.l.b16 %v314
    %v1541 = vunpack.c.h.b16 %v314
    %v1542 = vunpack.c.l.b16 %v315
    %v1543 = vunpack.c.h.b16 %v315
    %v1544 = vunpack.c.l.b16 %v316
    %v1545 = vunpack.c.h.b16 %v316
    %v1546 = vunpack.c.l.b16 %v317
    %v1547 = vunpack.c.h.b16 %v317
    %v1548 = vunpack.c.l.b16 %v318
    %v1549 = vunpack.c.h.b16 %v318
    %v1550 = vunpack.c.l.b16 %v319
    %v1551 = vunpack.c.h.b16 %v319
    %v1552 = vunpack.c.l.b16 %v320
    %v1553 = vunpack.c.h.b16 %v320
    %v1554 = vunpack.c.l.b16 %v321
    %v1555 = vunpack.c.h.b16 %v321
    %v1556 = vunpack.c.l.b16 %v322
    %v1557 = vunpack.c.h.b16 %v322
    %v1558 = vunpack.c.l.b16 %v323
    %v1559 = vunpack.c.h.b16 %v323
    %v1560 = vunpack.c.l.b16 %v324
    %v1561 = vunpack.c.h.b16 %v324
    %v1562 = vunpack.c.l.b16 %v325
    %v1563 = vunpack.c.h.b16 %v325
    %v1564 = vunpack.c.l.b16 %v326
    %v1565 = vunpack.c.h.b16 %v326
    %v1566 = vunpack.c.l.b16 %v327
    %v1567 = vunpack.c.h.b16 %v327
    %v1568 = vunpack.c.l.b16 %v328
    %v1569 = vunpack.c.h.b16 %v328
    %v1570 = vunpack.c.l.b16 %v329
    %v1571 = vunpack.c.h.b16 %v329
    %v1572 = vunpack.c.l.b16 %v330
    %v1573 = vunpack.c.h.b16 %v330
    %v1574 = vunpack.c.l.b16 %v331
    %v1575 = vunpack.c.h.b16 %v331
    %v1576 = vunpack.c.l.b16 %v332
    %v1577 = vunpack.c.h.b16 %v332
    %v1578 = vunpack.c.l.b16 %v333
    %v1579 = vunpack.c.h.b16 %v333
    %v1580 = vunpack.c.l.b16 %v334
    %v1581 = vunpack.c.h.b16 %v334
    %v1582 = vunpack.c.l.b16 %v335
    %v1583 = vunpack.c.h.b16 %v335
    %v1584 = vunpack.c.l.b16 %v336
    %v1585 = vunpack.c.h.b16 %v336
    %v1586 = vunpack.c.l.b16 %v337
    %v1587 = vunpack.c.h.b16 %v337
    %v1588 = vunpack.c.l.b16 %v338
    %v1589 = vunpack.c.h.b16 %v338
    %v1590 = vunpack.c.l.b16 %v339
    %v1591 = vunpack.c.h.b16 %v339
    %v1592 = vunpack.c.l.b16 %v340
    %v1593 = vunpack.c.h.b16 %v340
    %v1594 = vunpack.c.l.b16 %v341
    %v1595 = vunpack.c.h.b16 %v341
    %v1596 = vunpack.c.l.b16 %v342
    %v1597 = vunpack.c.h.b16 %v342
    %v1598 = vunpack.c.l.b16 %v343
    %v1599 = vunpack.c.h.b16 %v343
    %v1600 = vunpack.c.l.b16 %v344
    %v1601 = vunpack.c.h.b16 %v344
    %v1602 = vunpack.c.l.b16 %v345
    %v1603 = vunpack.c.h.b16 %v345
    %v1604 = vunpack.c.l.b16 %v346
    %v1605 = vunpack.c.h.b16 %v346
    %v1606 = vunpack.c.l.b16 %v347
    %v1607 = vunpack.c.h.b16 %v347
    %v1608 = vunpack.c.l.b16 %v348
    %v1609 = vunpack.c.h.b16 %v348
    %v1610 = vunpack.c.l.b16 %v349
    %v1611 = vunpack.c.h.b16 %v349
    %v1612 = vunpack.c.l.b16 %v350
    %v1613 = vunpack.c.h.b16 %v350
    %v1614 = vunpack.c.l.b16 %v351
    %v1615 = vunpack.c.h.b16 %v351
    %v1616 = vunpack.c.l.b16 %v352
    %v1617 = vunpack.c.h.b16 %v352
    %v1618 = vunpack.c.l.b16 %v353
    %v1619 = vunpack.c.h.b16 %v353
    %v1620 = vunpack.c.l.b16 %v354
    %v1621 = vunpack.c.h.b16 %v354
    %v1622 = vunpack.c.l.b16 %v355
    %v1623 = vunpack.c.h.b16 %v355
    %v1624 = vunpack.c.l.b16 %v356
    %v1625 = vunpack.c.h.b16 %v356
    %v1626 = vunpack.c.l.b16 %v357
    %v1627 = vunpack.c.h.b16 %v357
    %v1628 = vunpack.c.l.b16 %v358
    %v1629 = vunpack.c.h.b16 %v358
    %v1630 = vunpack.c.l.b16 %v359
    %v1631 = vunpack.c.h.b16 %v359
    %v1632 = vunpack.c.l.b16 %v360
    %v1633 = vunpack.c.h.b16 %v360
    %v1634 = vunpack.c.l.b16 %v361
    %v1635 = vunpack.c.h.b16 %v361
    %v1636 = vunpack.c.l.b16 %v362
    %v1637 = vunpack.c.h.b16 %v362
    %v1638 = vunpack.c.l.b16 %v363
    %v1639 = vunpack.c.h.b16 %v363
    %v1640 = vunpack.c.l.b16 %v364
    %v1641 = vunpack.c.h.b16 %v364
    %v1642 = vunpack.c.l.b16 %v365
    %v1643 = vunpack.c.h.b16 %v365
    %v1644 = vunpack.c.l.b16 %v366
    %v1645 = vunpack.c.h.b16 %v366
    %v1646 = vunpack.c.l.b16 %v367
    %v1647 = vunpack.c.h.b16 %v367
    %v1648 = vunpack.c.l.b16 %v368
    %v1649 = vunpack.c.h.b16 %v368
    %v1650 = vunpack.c.l.b16 %v369
    %v1651 = vunpack.c.h.b16 %v369
    %v1652 = vunpack.c.l.b16 %v370
    %v1653 = vunpack.c.h.b16 %v370
    %v1654 = vunpack.c.l.b16 %v371
    %v1655 = vunpack.c.h.b16 %v371
    %v1656 = vunpack.c.l.b16 %v372
    %v1657 = vunpack.c.h.b16 %v372
    %v1658 = vunpack.c.l.b16 %v373
    %v1659 = vunpack.c.h.b16 %v373
    %v1660 = vunpack.c.l.b16 %v374
    %v1661 = vunpack.c.h.b16 %v374
    %v1662 = vunpack.c.l.b16 %v375
    %v1663 = vunpack.c.h.b16 %v375
    %v1664 = vunpack.c.l.b16 %v376
    %v1665 = vunpack.c.h.b16 %v376
    %v1666 = vunpack.c.l.b16 %v377
    %v1667 = vunpack.c.h.b16 %v377
    %v1668 = vunpack.c.l.b16 %v378
    %v1669 = vunpack.c.h.b16 %v378
    %v1670 = vunpack.c.l.b16 %v379
    %v1671 = vunpack.c.h.b16 %v379
    %v1672 = vunpack.c.l.b16 %v380
    %v1673 = vunpack.c.h.b16 %v380
    %v1674 = vunpack.c.l.b16 %v381
    %v1675 = vunpack.c.h.b16 %v381
    %v1676 = vunpack.c.l.b16 %v382
    %v1677 = vunpack.c.h.b16 %v382
    %v1678 = vunpack.c.l.b16 %v383
    %v1679 = vunpack.c.h.b16 %v383
    %v1680 = vunpack.c.l.b16 %v384
    %v1681 = vunpack.c.h.b16 %v384
    %v1682 = vunpack.c.l.b16 %v385
    %v1683 = vunpack.c.h.b16 %v385
    %v1684 = vunpack.c.l.b16 %v386
    %v1685 = vunpack.c.h.b16 %v386
    %v1686 = vunpack.c.l.b16 %v387
    %v1687 = vunpack.c.h.b16 %v387
    %v1688 = vunpack.c.l.b16 %v388
    %v1689 = vunpack.c.h.b16 %v388
    %v1690 = vunpack.c.l.b16 %v389
    %v1691 = vunpack.c.h.b16 %v389
    %v1692 = vunpack.c.l.b16 %v390
    %v1693 = vunpack.c.h.b16 %v390
    %v1694 = vunpack.c.l.b16 %v391
    %v1695 = vunpack.c.h.b16 %v391
    %v1696 = vunpack.c.l.b16 %v392
    %v1697 = vunpack.c.h.b16 %v392
    %v1698 = vunpack.c.l.b16 %v393
    %v1699 = vunpack.c.h.b16 %v393
    %v1700 = vunpack.c.l.b16 %v394
    %v1701 = vunpack.c.h.b16 %v394
    %v1702 = vunpack.c.l.b16 %v395
    %v1703 = vunpack.c.h.b16 %v395
    %v1704 = vunpack.c.l.b16 %v396
    %v1705 = vunpack.c.h.b16 %v396
    %v1706 = vunpack.c.l.b16 %v397
    %v1707 = vunpack.c.h.b16 %v397
    %v1708 = vunpack.c.l.b16 %v398
    %v1709 = vunpack.c.h.b16 %v398
    %v1710 = vunpack.c.l.b16 %v399
    %v1711 = vunpack.c.h.b16 %v399
    %v1712 = vunpack.c.l.b16 %v400
    %v1713 = vunpack.c.h.b16 %v400
    %v1714 = vunpack.c.l.b16 %v401
    %v1715 = vunpack.c.h.b16 %v401
    %v1716 = vunpack.c.l.b16 %v402
    %v1717 = vunpack.c.h.b16 %v402
    %v1718 = vunpack.c.l.b16 %v403
    %v1719 = vunpack.c.h.b16 %v403
    %v1720 = vunpack.c.l.b16 %v404
    %v1721 = vunpack.c.h.b16 %v404
    %v1722 = vunpack.c.l.b16 %v405
    %v1723 = vunpack.c.h.b16 %v405
    %v1724 = vunpack.c.l.b16 %v406
    %v1725 = vunpack.c.h.b16 %v406
    %v1726 = vunpack.c.l.b16 %v407
    %v1727 = vunpack.c.h.b16 %v407
    %v1728 = vunpack.c.l.b16 %v408
    %v1729 = vunpack.c.h.b16 %v408
    %v1730 = vunpack.c.l.b16 %v409
    %v1731 = vunpack.c.h.b16 %v409
    %v1732 = vunpack.c.l.b16 %v410
    %v1733 = vunpack.c.h.b16 %v410
    %v1734 = vunpack.c.l.b16 %v411
    %v1735 = vunpack.c.h.b16 %v411
    %v1736 = vunpack.c.l.b16 %v412
    %v1737 = vunpack.c.h.b16 %v412
    %v1738 = vunpack.c.l.b16 %v413
    %v1739 = vunpack.c.h.b16 %v413
    %v1740 = vunpack.c.l.b16 %v414
    %v1741 = vunpack.c.h.b16 %v414
    %v1742 = vunpack.c.l.b16 %v415
    %v1743 = vunpack.c.h.b16 %v415
    %v1744 = vunpack.c.l.b16 %v416
    %v1745 = vunpack.c.h.b16 %v416
    %v1746 = vunpack.c.l.b16 %v417
    %v1747 = vunpack.c.h.b16 %v417
    %v1748 = vunpack.c.l.b16 %v418
    %v1749 = vunpack.c.h.b16 %v418
    %v1750 = vunpack.c.l.b16 %v419
    %v1751 = vunpack.c.h.b16 %v419
    %v1752 = vunpack.c.l.b16 %v420
    %v1753 = vunpack.c.h.b16 %v420
    %v1754 = vunpack.c.l.b16 %v421
    %v1755 = vunpack.c.h.b16 %v421
    %v1756 = vunpack.c.l.b16 %v422
    %v1757 = vunpack.c.h.b16 %v422
    %v1758 = vunpack.c.l.b16 %v423
    %v1759 = vunpack.c.h.b16 %v423
    %v1760 = vunpack.c.l.b16 %v424
    %v1761 = vunpack.c.h.b16 %v424
    %v1762 = vunpack.c.l.b16 %v425
    %v1763 = vunpack.c.h.b16 %v425
    %v1764 = vunpack.c.l.b16 %v426
    %v1765 = vunpack.c.h.b16 %v426
    %v1766 = vunpack.c.l.b16 %v427
    %v1767 = vunpack.c.h.b16 %v427
    %v1768 = vunpack.c.l.b16 %v428
    %v1769 = vunpack.c.h.b16 %v428
    %v1770 = vunpack.c.l.b16 %v429
    %v1771 = vunpack.c.h.b16 %v429
    %v1772 = vunpack.c.l.b16 %v430
    %v1773 = vunpack.c.h.b16 %v430
    %v1774 = vunpack.c.l.b16 %v431
    %v1775 = vunpack.c.h.b16 %v431
    %v1776 = vunpack.c.l.b16 %v432
    %v1777 = vunpack.c.h.b16 %v432
    %v1778 = vunpack.c.l.b16 %v433
    %v1779 = vunpack.c.h.b16 %v433
    %v1780 = vunpack.c.l.b16 %v434
    %v1781 = vunpack.c.h.b16 %v434
    %v1782 = vunpack.c.l.b16 %v435
    %v1783 = vunpack.c.h.b16 %v435
    %v1784 = vunpack.c.l.b16 %v436
    %v1785 = vunpack.c.h.b16 %v436
    %v1786 = vunpack.c.l.b16 %v437
    %v1787 = vunpack.c.h.b16 %v437
    %v1788 = vunpack.c.l.b16 %v438
    %v1789 = vunpack.c.h.b16 %v438
    %v1790 = vunpack.c.l.b16 %v439
    %v1791 = vunpack.c.h.b16 %v439
    %v1792 = vunpack.c.l.b16 %v440
    %v1793 = vunpack.c.h.b16 %v440
    %v1794 = vunpack.c.l.b16 %v441
    %v1795 = vunpack.c.h.b16 %v441
    %v1796 = vunpack.c.l.b16 %v442
    %v1797 = vunpack.c.h.b16 %v442
    %v1798 = vunpack.c.l.b16 %v443
    %v1799 = vunpack.c.h.b16 %v443
    %v1800 = vunpack.c.l.b16 %v444
    %v1801 = vunpack.c.h.b16 %v444
    %v1802 = vunpack.c.l.b16 %v445
    %v1803 = vunpack.c.h.b16 %v445
    %v1804 = vunpack.c.l.b16 %v446
    %v1805 = vunpack.c.h.b16 %v446
    %v1806 = vunpack.c.l.b16 %v447
    %v1807 = vunpack.c.h.b16 %v447
    %v1808 = vunpack.c.l.b16 %v448
    %v1809 = vunpack.c.h.b16 %v448
    %v1810 = vunpack.c.l.b16 %v449
    %v1811 = vunpack.c.h.b16 %v449
    %v1812 = vunpack.c.l.b16 %v450
    %v1813 = vunpack.c.h.b16 %v450
    %v1814 = vunpack.c.l.b16 %v451
    %v1815 = vunpack.c.h.b16 %v451
    %v1816 = vunpack.c.l.b16 %v452
    %v1817 = vunpack.c.h.b16 %v452
    %v1818 = vunpack.c.l.b16 %v453
    %v1819 = vunpack.c.h.b16 %v453
    %v1820 = vunpack.c.l.b16 %v454
    %v1821 = vunpack.c.h.b16 %v454
    %v1822 = vunpack.c.l.b16 %v455
    %v1823 = vunpack.c.h.b16 %v455
    %v1824 = vunpack.c.l.b16 %v456
    %v1825 = vunpack.c.h.b16 %v456
    %v1826 = vunpack.c.l.b16 %v457
    %v1827 = vunpack.c.h.b16 %v457
    %v1828 = vunpack.c.l.b16 %v458
    %v1829 = vunpack.c.h.b16 %v458
    %v1830 = vunpack.c.l.b16 %v459
    %v1831 = vunpack.c.h.b16 %v459
    %v1832 = vunpack.c.l.b16 %v460
    %v1833 = vunpack.c.h.b16 %v460
    %v1834 = vunpack.c.l.b16 %v461
    %v1835 = vunpack.c.h.b16 %v461
    %v1836 = vunpack.c.l.b16 %v462
    %v1837 = vunpack.c.h.b16 %v462
    %v1838 = vunpack.c.l.b16 %v463
    %v1839 = vunpack.c.h.b16 %v463
    %v1840 = vunpack.c.l.b16 %v464
    %v1841 = vunpack.c.h.b16 %v464
    %v1842 = vunpack.c.l.b16 %v465
    %v1843 = vunpack.c.h.b16 %v465
    %v1844 = vunpack.c.l.b16 %v466
    %v1845 = vunpack.c.h.b16 %v466
    %v1846 = vunpack.c.l.b16 %v467
    %v1847 = vunpack.c.h.b16 %v467
    %v1848 = vunpack.c.l.b16 %v468
    %v1849 = vunpack.c.h.b16 %v468
    %v1850 = vunpack.c.l.b16 %v469
    %v1851 = vunpack.c.h.b16 %v469
    %v1852 = vunpack.c.l.b16 %v470
    %v1853 = vunpack.c.h.b16 %v470
    %v1854 = vunpack.c.l.b16 %v471
    %v1855 = vunpack.c.h.b16 %v471
    %v1856 = vunpack.c.l.b16 %v472
    %v1857 = vunpack.c.h.b16 %v472
    %v1858 = vunpack.c.l.b16 %v473
    %v1859 = vunpack.c.h.b16 %v473
    %v1860 = vunpack.c.l.b16 %v474
    %v1861 = vunpack.c.h.b16 %v474
    %v1862 = vunpack.c.l.b16 %v475
    %v1863 = vunpack.c.h.b16 %v475
    %v1864 = vunpack.c.l.b16 %v476
    %v1865 = vunpack.c.h.b16 %v476
    %v1866 = vunpack.c.l.b16 %v477
    %v1867 = vunpack.c.h.b16 %v477
    %v1868 = vunpack.c.l.b16 %v478
    %v1869 = vunpack.c.h.b16 %v478
    %v1870 = vunpack.c.l.b16 %v479
    %v1871 = vunpack.c.h.b16 %v479
    %v1872 = vunpack.c.l.b16 %v480
    %v1873 = vunpack.c.h.b16 %v480
    %v1874 = vunpack.c.l.b16 %v481
    %v1875 = vunpack.c.h.b16 %v481
    %v1876 = vunpack.c.l.b16 %v482
    %v1877 = vunpack.c.h.b16 %v482
    %v1878 = vunpack.c.l.b16 %v483
    %v1879 = vunpack.c.h.b16 %v483
    %v1880 = vunpack.c.l.b16 %v484
    %v1881 = vunpack.c.h.b16 %v484
    %v1882 = vunpack.c.l.b16 %v485
    %v1883 = vunpack.c.h.b16 %v485
    %v1884 = vunpack.c.l.b16 %v486
    %v1885 = vunpack.c.h.b16 %v486
    %v1886 = vunpack.c.l.b16 %v487
    %v1887 = vunpack.c.h.b16 %v487
    %v1888 = vunpack.c.l.b16 %v488
    %v1889 = vunpack.c.h.b16 %v488
    %v1890 = vunpack.c.l.b16 %v489
    %v1891 = vunpack.c.h.b16 %v489
    %v1892 = vunpack.c.l.b16 %v490
    %v1893 = vunpack.c.h.b16 %v490
    %v1894 = vunpack.c.l.b16 %v491
    %v1895 = vunpack.c.h.b16 %v491
    %v1896 = vunpack.c.l.b16 %v492
    %v1897 = vunpack.c.h.b16 %v492
    %v1898 = vunpack.c.l.b16 %v493
    %v1899 = vunpack.c.h.b16 %v493
    %v1900 = vunpack.c.l.b16 %v494
    %v1901 = vunpack.c.h.b16 %v494
    %v1902 = vunpack.c.l.b16 %v495
    %v1903 = vunpack.c.h.b16 %v495
    %v1904 = vunpack.c.l.b16 %v496
    %v1905 = vunpack.c.h.b16 %v496
    %v1906 = vunpack.c.l.b16 %v497
    %v1907 = vunpack.c.h.b16 %v497
    %v1908 = vunpack.c.l.b16 %v498
    %v1909 = vunpack.c.h.b16 %v498
    %v1910 = vunpack.c.l.b16 %v499
    %v1911 = vunpack.c.h.b16 %v499
    %v1912 = vunpack.c.l.b16 %v500
    %v1913 = vunpack.c.h.b16 %v500
    %v1914 = vunpack.c.l.b16 %v501
    %v1915 = vunpack.c.h.b16 %v501
    %v1916 = vunpack.c.l.b16 %v502
    %v1917 = vunpack.c.h.b16 %v502
    %v1918 = vunpack.c.l.b16 %v503
    %v1919 = vunpack.c.h.b16 %v503
    %v1920 = vunpack.c.l.b16 %v504
    %v1921 = vunpack.c.h.b16 %v504
    %v1922 = vunpack.c.l.b16 %v505
    %v1923 = vunpack.c.h.b16 %v505
    %v1924 = vunpack.c.l.b16 %v506
    %v1925 = vunpack.c.h.b16 %v506
    %v1926 = vunpack.c.l.b16 %v507
    %v1927 = vunpack.c.h.b16 %v507
    %v1928 = vunpack.c.l.b16 %v508
    %v1929 = vunpack.c.h.b16 %v508
    %v1930 = vunpack.c.l.b16 %v509
    %v1931 = vunpack.c.h.b16 %v509
    %v1932 = vunpack.c.l.b16 %v510
    %v1933 = vunpack.c.h.b16 %v510
    %v1934 = vunpack.c.l.b16 %v511
    %v1935 = vunpack.c.h.b16 %v511
    %v1936 = vunpack.c.l.b16 %v512
    %v1937 = vunpack.c.h.b16 %v512
    %v1938 = vunpack.c.l.b16 %v513
    %v1939 = vunpack.c.h.b16 %v513
    %v1940 = vunpack.c.l.b16 %v514
    %v1941 = vunpack.c.h.b16 %v514
    %v1942 = vunpack.c.l.b16 %v515
    %v1943 = vunpack.c.h.b16 %v515
    %v1944 = vunpack.c.l.b16 %v516
    %v1945 = vunpack.c.h.b16 %v516
    %v1946 = vunpack.c.l.b16 %v517
    %v1947 = vunpack.c.h.b16 %v517
    %v1948 = vunpack.c.l.b16 %v518
    %v1949 = vunpack.c.h.b16 %v518
    %v1950 = vunpack.c.l.b16 %v519
    %v1951 = vunpack.c.h.b16 %v519
    %v1952 = vunpack.c.l.b16 %v520
    %v1953 = vunpack.c.h.b16 %v520
    %v1954 = vunpack.c.l.b16 %v521
    %v1955 = vunpack.c.h.b16 %v521
    %v1956 = vunpack.c.l.b16 %v522
    %v1957 = vunpack.c.h.b16 %v522
    %v1958 = vunpack.c.l.b16 %v523
    %v1959 = vunpack.c.h.b16 %v523
    %v1960 = vunpack.c.l.b16 %v524
    %v1961 = vunpack.c.h.b16 %v524
    %v1962 = vunpack.c.l.b16 %v525
    %v1963 = vunpack.c.h.b16 %v525
    %v1964 = vunpack.c.l.b16 %v526
    %v1965 = vunpack.c.h.b16 %v526
    %v1966 = vunpack.c.l.b16 %v527
    %v1967 = vunpack.c.h.b16 %v527
    %v1968 = vunpack.c.l.b16 %v528
    %v1969 = vunpack.c.h.b16 %v528
    %v1970 = vunpack.c.l.b16 %v529
    %v1971 = vunpack.c.h.b16 %v529
    %v1972 = vunpack.c.l.b16 %v530
    %v1973 = vunpack.c.h.b16 %v530
    %v1974 = vunpack.c.l.b16 %v531
    %v1975 = vunpack.c.h.b16 %v531
    %v1976 = vunpack.c.l.b16 %v532
    %v1977 = vunpack.c.h.b16 %v532
    %v1978 = vunpack.c.l.b16 %v533
    %v1979 = vunpack.c.h.b16 %v533
    %v1980 = vunpack.c.l.b16 %v534
    %v1981 = vunpack.c.h.b16 %v534
    %v1982 = vunpack.c.l.b16 %v535
    %v1983 = vunpack.c.h.b16 %v535
    %v1984 = vunpack.c.l.b16 %v536
    %v1985 = vunpack.c.h.b16 %v536
    %v1986 = vunpack.c.l.b16 %v537
    %v1987 = vunpack.c.h.b16 %v537
    %v1988 = vunpack.c.l.b16 %v538
    %v1989 = vunpack.c.h.b16 %v538
    %v1990 = vunpack.c.l.b16 %v539
    %v1991 = vunpack.c.h.b16 %v539
    %v1992 = vunpack.c.l.b16 %v540
    %v1993 = vunpack.c.h.b16 %v540
    %v1994 = vunpack.c.l.b16 %v541
    %v1995 = vunpack.c.h.b16 %v541
    %v1996 = vunpack.c.l.b16 %v542
    %v1997 = vunpack.c.h.b16 %v542
    %v1998 = vunpack.c.l.b16 %v543
    %v1999 = vunpack.c.h.b16 %v543
    %v2000 = vunpack.c.l.b16 %v544
    %v2001 = vunpack.c.h.b16 %v544
    %v2002 = vunpack.c.l.b16 %v545
    %v2003 = vunpack.c.h.b16 %v545
    %v2004 = vunpack.c.l.b16 %v546
    %v2005 = vunpack.c.h.b16 %v546
    %v2006 = vunpack.c.l.b16 %v547
    %v2007 = vunpack.c.h.b16 %v547
    %v2008 = vunpack.c.l.b16 %v548
    %v2009 = vunpack.c.h.b16 %v548
    %v2010 = vunpack.c.l.b16 %v549
    %v2011 = vunpack.c.h.b16 %v549
    %v2012 = vunpack.c.l.b16 %v550
    %v2013 = vunpack.c.h.b16 %v550
    %v2014 = vunpack.c.l.b16 %v551
    %v2015 = vunpack.c.h.b16 %v551
    %v2016 = vunpack.c.l.b16 %v552
    %v2017 = vunpack.c.h.b16 %v552
    %v2018 = vunpack.c.l.b16 %v553
    %v2019 = vunpack.c.h.b16 %v553
    %v2020 = vunpack.c.l.b16 %v554
    %v2021 = vunpack.c.h.b16 %v554
    %v2022 = vunpack.c.l.b16 %v555
    %v2023 = vunpack.c.h.b16 %v555
    %v2024 = vunpack.c.l.b16 %v556
    %v2025 = vunpack.c.h.b16 %v556
    %v2026 = vunpack.c.l.b16 %v557
    %v2027 = vunpack.c.h.b16 %v557
    %v2028 = vunpack.c.l.b16 %v558
    %v2029 = vunpack.c.h.b16 %v558
    %v2030 = vunpack.c.l.b16 %v559
    %v2031 = vunpack.c.h.b16 %v559
    %v2032 = vunpack.c.l.b16 %v560
    %v2033 = vunpack.c.h.b16 %v560
    %v2034 = vunpack.c.l.b16 %v561
    %v2035 = vunpack.c.h.b16 %v561
    %v2036 = vunpack.c.l.b16 %v562
    %v2037 = vunpack.c.h.b16 %v562
    %v2038 = vunpack.c.l.b16 %v563
    %v2039 = vunpack.c.h.b16 %v563
    %v2040 = vunpack.c.l.b16 %v564
    %v2041 = vunpack.c.h.b16 %v564
    %v2042 = vunpack.c.l.b16 %v565
    %v2043 = vunpack.c.h.b16 %v565
    %v2044 = vunpack.c.l.b16 %v566
    %v2045 = vunpack.c.h.b16 %v566
    %v2046 = vunpack.c.l.b16 %v567
    %v2047 = vunpack.c.h.b16 %v567
    %v2048 = vunpack.c.l.b16 %v568
    %v2049 = vunpack.c.h.b16 %v568
    %v2050 = vunpack.c.l.b16 %v569
    %v2051 = vunpack.c.h.b16 %v569
    %v2052 = vunpack.c.l.b16 %v570
    %v2053 = vunpack.c.h.b16 %v570
    %v2054 = vunpack.c.l.b16 %v571
    %v2055 = vunpack.c.h.b16 %v571
    %v2056 = vunpack.c.l.b16 %v572
    %v2057 = vunpack.c.h.b16 %v572
    %v2058 = vunpack.c.l.b16 %v573
    %v2059 = vunpack.c.h.b16 %v573
    %v2060 = vunpack.c.l.b16 %v574
    %v2061 = vunpack.c.h.b16 %v574
    %v2062 = vunpack.c.l.b16 %v575
    %v2063 = vunpack.c.h.b16 %v575
    %v2064 = vunpack.c.l.b16 %v576
    %v2065 = vunpack.c.h.b16 %v576
    %v2066 = vunpack.c.l.b16 %v577
    %v2067 = vunpack.c.h.b16 %v577
    %v2068 = vunpack.c.l.b16 %v578
    %v2069 = vunpack.c.h.b16 %v578
    %v2070 = vunpack.c.l.b16 %v579
    %v2071 = vunpack.c.h.b16 %v579
    %v2072 = vunpack.c.l.b16 %v580
    %v2073 = vunpack.c.h.b16 %v580
    %v2074 = vunpack.c.l.b16 %v581
    %v2075 = vunpack.c.h.b16 %v581
    %v2076 = vunpack.c.l.b16 %v582
    %v2077 = vunpack.c.h.b16 %v582
    %v2078 = vunpack.c.l.b16 %v583
    %v2079 = vunpack.c.h.b16 %v583
    %v2080 = vunpack.c.l.b16 %v584
    %v2081 = vunpack.c.h.b16 %v584
    %v2082 = vunpack.c.l.b16 %v585
    %v2083 = vunpack.c.h.b16 %v585
    %v2084 = vunpack.c.l.b16 %v586
    %v2085 = vunpack.c.h.b16 %v586
    %v2086 = vunpack.c.l.b16 %v587
    %v2087 = vunpack.c.h.b16 %v587
    %v2088 = vunpack.c.l.b16 %v588
    %v2089 = vunpack.c.h.b16 %v588
    %v2090 = vunpack.c.l.b16 %v589
    %v2091 = vunpack.c.h.b16 %v589
    %v2092 = vunpack.c.l.b16 %v590
    %v2093 = vunpack.c.h.b16 %v590
    %v2094 = vunpack.c.l.b16 %v591
    %v2095 = vunpack.c.h.b16 %v591
    %v2096 = vunpack.c.l.b16 %v592
    %v2097 = vunpack.c.h.b16 %v592
    %v2098 = vunpack.c.l.b16 %v593
    %v2099 = vunpack.c.h.b16 %v593
    %v2100 = vunpack.c.l.b16 %v594
    %v2101 = vunpack.c.h.b16 %v594
    %v2102 = vunpack.c.l.b16 %v595
    %v2103 = vunpack.c.h.b16 %v595
    %v2104 = vunpack.c.l.b16 %v596
    %v2105 = vunpack.c.h.b16 %v596
    %v2106 = vunpack.c.l.b16 %v597
    %v2107 = vunpack.c.h.b16 %v597
    %v2108 = vunpack.c.l.b16 %v598
    %v2109 = vunpack.c.h.b16 %v598
    %v2110 = vunpack.c.l.b16 %v599
    %v2111 = vunpack.c.h.b16 %v599
    %v2112 = vunpack.c.l.b16 %v600
    %v2113 = vunpack.c.h.b16 %v600
    %v2114 = vunpack.c.l.b16 %v601
    %v2115 = vunpack.c.h.b16 %v601
    %v2116 = vunpack.c.l.b16 %v602
    %v2117 = vunpack.c.h.b16 %v602
    %v2118 = vunpack.c.l.b16 %v603
    %v2119 = vunpack.c.h.b16 %v603
    %v2120 = vunpack.c.l.b16 %v604
    %v2121 = vunpack.c.h.b16 %v604
    %v2122 = vunpack.c.l.b16 %v605
    %v2123 = vunpack.c.h.b16 %v605
    %v2124 = vunpack.c.l.b16 %v606
    %v2125 = vunpack.c.h.b16 %v606
    %v2126 = vunpack.c.l.b16 %v607
    %v2127 = vunpack.c.h.b16 %v607
    %v2128 = vunpack.c.l.b16 %v608
    %v2129 = vunpack.c.h.b16 %v608
    %v2130 = vunpack.c.l.b16 %v609
    %v2131 = vunpack.c.h.b16 %v609
    %v2132 = vunpack.c.l.b16 %v610
    %v2133 = vunpack.c.h.b16 %v610
    %v2134 = vunpack.c.l.b16 %v611
    %v2135 = vunpack.c.h.b16 %v611
    %v2136 = vunpack.c.l.b16 %v612
    %v2137 = vunpack.c.h.b16 %v612
    %v2138 = vunpack.c.l.b16 %v613
    %v2139 = vunpack.c.h.b16 %v613
    %v2140 = vunpack.c.l.b16 %v614
    %v2141 = vunpack.c.h.b16 %v614
    %v2142 = vunpack.c.l.b16 %v615
    %v2143 = vunpack.c.h.b16 %v615
    %v2144 = vunpack.c.l.b16 %v616
    %v2145 = vunpack.c.h.b16 %v616
    %v2146 = vunpack.c.l.b16 %v617
    %v2147 = vunpack.c.h.b16 %v617
    %v2148 = vunpack.c.l.b16 %v618
    %v2149 = vunpack.c.h.b16 %v618
    %v2150 = vunpack.c.l.b16 %v619
    %v2151 = vunpack.c.h.b16 %v619
    %v2152 = vunpack.c.l.b16 %v620
    %v2153 = vunpack.c.h.b16 %v620
    %v2154 = vunpack.c.l.b16 %v621
    %v2155 = vunpack.c.h.b16 %v621
    %v2156 = vunpack.c.l.b16 %v622
    %v2157 = vunpack.c.h.b16 %v622
    %v2158 = vunpack.c.l.b16 %v623
    %v2159 = vunpack.c.h.b16 %v623
    %v2160 = vunpack.c.l.b16 %v624
    %v2161 = vunpack.c.h.b16 %v624
    %v2162 = vunpack.c.l.b16 %v625
    %v2163 = vunpack.c.h.b16 %v625
    %v2164 = vunpack.c.l.b16 %v626
    %v2165 = vunpack.c.h.b16 %v626
    %v2166 = vunpack.c.l.b16 %v627
    %v2167 = vunpack.c.h.b16 %v627
    %v2168 = vunpack.c.l.b16 %v628
    %v2169 = vunpack.c.h.b16 %v628
    %v2170 = vunpack.c.l.b16 %v629
    %v2171 = vunpack.c.h.b16 %v629
    %v2172 = vunpack.c.l.b16 %v630
    %v2173 = vunpack.c.h.b16 %v630
    %v2174 = vunpack.c.l.b16 %v631
    %v2175 = vunpack.c.h.b16 %v631
    %v2176 = vunpack.c.l.b16 %v632
    %v2177 = vunpack.c.h.b16 %v632
    %v2178 = vunpack.c.l.b16 %v633
    %v2179 = vunpack.c.h.b16 %v633
    %v2180 = vunpack.c.l.b16 %v634
    %v2181 = vunpack.c.h.b16 %v634
    %v2182 = vunpack.c.l.b16 %v635
    %v2183 = vunpack.c.h.b16 %v635
    %v2184 = vunpack.c.l.b16 %v636
    %v2185 = vunpack.c.h.b16 %v636
    %v2186 = vunpack.c.l.b16 %v637
    %v2187 = vunpack.c.h.b16 %v637
    %v2188 = vunpack.c.l.b16 %v638
    %v2189 = vunpack.c.h.b16 %v638
    %v2190 = vunpack.c.l.b16 %v639
    %v2191 = vunpack.c.h.b16 %v639
    %v2192 = vunpack.c.l.b16 %v640
    %v2193 = vunpack.c.h.b16 %v640
    %v2194 = vunpack.c.l.b16 %v641
    %v2195 = vunpack.c.h.b16 %v641
    %v2196 = vunpack.c.l.b16 %v642
    %v2197 = vunpack.c.h.b16 %v642
    %v2198 = vunpack.c.l.b16 %v643
    %v2199 = vunpack.c.h.b16 %v643
    %v2200 = vunpack.c.l.b16 %v644
    %v2201 = vunpack.c.h.b16 %v644
    %v2202 = vunpack.c.l.b16 %v645
    %v2203 = vunpack.c.h.b16 %v645
    %v2204 = vpack.c.b16 %v1184, %v1180
    %v2205 = vpack.c.b16 %v1185, %v1181
    %v2206 = vpack.c.b16 %v1186, %v1182
    %v2207 = vpack.c.b16 %v1187, %v1183
    %v2208 = vpack.c.b16 %v1192, %v1188
    %v2209 = vpack.c.b16 %v1193, %v1189
    %v2210 = vpack.c.b16 %v1194, %v1190
    %v2211 = vpack.c.b16 %v1195, %v1191
    %v2212 = vpack.c.b16 %v1200, %v1196
    %v2213 = vpack.c.b16 %v1201, %v1197
    %v2214 = vpack.c.b16 %v1202, %v1198
    %v2215 = vpack.c.b16 %v1203, %v1199
    %v2216 = vpack.c.b16 %v1208, %v1204
    %v2217 = vpack.c.b16 %v1209, %v1205
    %v2218 = vpack.c.b16 %v1210, %v1206
    %v2219 = vpack.c.b16 %v1211, %v1207
    %v2220 = vpack.c.b16 %v1216, %v1212
    %v2221 = vpack.c.b16 %v1217, %v1213
    %v2222 = vpack.c.b16 %v1218, %v1214
    %v2223 = vpack.c.b16 %v1219, %v1215
    %v2224 = vpack.c.b16 %v1224, %v1220
    %v2225 = vpack.c.b16 %v1225, %v1221
    %v2226 = vpack.c.b16 %v1226, %v1222
    %v2227 = vpack.c.b16 %v1227, %v1223
    %v2228 = vpack.c.b16 %v1232, %v1228
    %v2229 = vpack.c.b16 %v1233, %v1229
    %v2230 = vpack.c.b16 %v1234, %v1230
    %v2231 = vpack.c.b16 %v1235, %v1231
    %v2232 = vpack.c.b16 %v1240, %v1236
    %v2233 = vpack.c.b16 %v1241, %v1237
    %v2234 = vpack.c.b16 %v1242, %v1238
    %v2235 = vpack.c.b16 %v1243, %v1239
    %v2236 = vpack.c.b16 %v1248, %v1244
    %v2237 = vpack.c.b16 %v1249, %v1245
    %v2238 = vpack.c.b16 %v1250, %v1246
    %v2239 = vpack.c.b16 %v1251, %v1247
    %v2240 = vpack.c.b16 %v1256, %v1252
    %v2241 = vpack.c.b16 %v1257, %v1253
    %v2242 = vpack.c.b16 %v1258, %v1254
    %v2243 = vpack.c.b16 %v1259, %v1255
    %v2244 = vpack.c.b16 %v1264, %v1260
    %v2245 = vpack.c.b16 %v1265, %v1261
    %v2246 = vpack.c.b16 %v1266, %v1262
    %v2247 = vpack.c.b16 %v1267, %v1263
    %v2248 = vpack.c.b16 %v1272, %v1268
    %v2249 = vpack.c.b16 %v1273, %v1269
    %v2250 = vpack.c.b16 %v1274, %v1270
    %v2251 = vpack.c.b16 %v1275, %v1271
    %v2252 = vpack.c.b16 %v1280, %v1276
    %v2253 = vpack.c.b16 %v1281, %v1277
    %v2254 = vpack.c.b16 %v1282, %v1278
    %v2255 = vpack.c.b16 %v1283, %v1279
    %v2256 = vpack.c.b16 %v1288, %v1284
    %v2257 = vpack.c.b16 %v1289, %v1285
    %v2258 = vpack.c.b16 %v1290, %v1286
    %v2259 = vpack.c.b16 %v1291, %v1287
    %v2260 = vpack.c.b16 %v1296, %v1292
    %v2261 = vpack.c.b16 %v1297, %v1293
    %v2262 = vpack.c.b16 %v1298, %v1294
    %v2263 = vpack.c.b16 %v1299, %v1295
    %v2264 = vpack.c.b16 %v1304, %v1300
    %v2265 = vpack.c.b16 %v1305, %v1301
    %v2266 = vpack.c.b16 %v1306, %v1302
    %v2267 = vpack.c.b16 %v1307, %v1303
    %v2268 = vpack.c.b16 %v1312, %v1308
    %v2269 = vpack.c.b16 %v1313, %v1309
    %v2270 = vpack.c.b16 %v1314, %v1310
    %v2271 = vpack.c.b16 %v1315, %v1311
    %v2272 = vpack.c.b16 %v1320, %v1316
    %v2273 = vpack.c.b16 %v1321, %v1317
    %v2274 = vpack.c.b16 %v1322, %v1318
    %v2275 = vpack.c.b16 %v1323, %v1319
    %v2276 = vpack.c.b16 %v1328, %v1324
    %v2277 = vpack.c.b16 %v1329, %v1325
    %v2278 = vpack.c.b16 %v1330, %v1326
    %v2279 = vpack.c.b16 %v1331, %v1327
    %v2280 = vpack.c.b16 %v1336, %v1332
    %v2281 = vpack.c.b16 %v1337, %v1333
    %v2282 = vpack.c.b16 %v1338, %v1334
    %v2283 = vpack.c.b16 %v1339, %v1335
    %v2284 = vpack.c.b16 %v1344, %v1340
    %v2285 = vpack.c.b16 %v1345, %v1341
    %v2286 = vpack.c.b16 %v1346, %v1342
    %v2287 = vpack.c.b16 %v1347, %v1343
    %v2288 = vpack.c.b16 %v1352, %v1348
    %v2289 = vpack.c.b16 %v1353, %v1349
    %v2290 = vpack.c.b16 %v1354, %v1350
    %v2291 = vpack.c.b16 %v1355, %v1351
    %v2292 = vpack.c.b16 %v1360, %v1356
    %v2293 = vpack.c.b16 %v1361, %v1357
    %v2294 = vpack.c.b16 %v1362, %v1358
    %v2295 = vpack.c.b16 %v1363, %v1359
    %v2296 = vpack.c.b16 %v1368, %v1364
    %v2297 = vpack.c.b16 %v1369, %v1365
    %v2298 = vpack.c.b16 %v1370, %v1366
    %v2299 = vpack.c.b16 %v1371, %v1367
    %v2300 = vpack.c.b16 %v1376, %v1372
    %v2301 = vpack.c.b16 %v1377, %v1373
    %v2302 = vpack.c.b16 %v1378, %v1374
    %v2303 = vpack.c.b16 %v1379, %v1375
    %v2304 = vpack.c.b16 %v1384, %v1380
    %v2305 = vpack.c.b16 %v1385, %v1381
    %v2306 = vpack.c.b16 %v1386, %v1382
    %v2307 = vpack.c.b16 %v1387, %v1383
    %v2308 = vpack.c.b16 %v1392, %v1388
    %v2309 = vpack.c.b16 %v1393, %v1389
    %v2310 = vpack.c.b16 %v1394, %v1390
    %v2311 = vpack.c.b16 %v1395, %v1391
    %v2312 = vpack.c.b16 %v1400, %v1396
    %v2313 = vpack.c.b16 %v1401, %v1397
    %v2314 = vpack.c.b16 %v1402, %v1398
    %v2315 = vpack.c.b16 %v1403, %v1399
    %v2316 = vpack.c.b16 %v1408, %v1404
    %v2317 = vpack.c.b16 %v1409, %v1405
    %v2318 = vpack.c.b16 %v1410, %v1406
    %v2319 = vpack.c.b16 %v1411, %v1407
    %v2320 = vpack.c.b16 %v1416, %v1412
    %v2321 = vpack.c.b16 %v1417, %v1413
    %v2322 = vpack.c.b16 %v1418, %v1414
    %v2323 = vpack.c.b16 %v1419, %v1415
    %v2324 = vpack.c.b16 %v1424, %v1420
    %v2325 = vpack.c.b16 %v1425, %v1421
    %v2326 = vpack.c.b16 %v1426, %v1422
    %v2327 = vpack.c.b16 %v1427, %v1423
    %v2328 = vpack.c.b16 %v1432, %v1428
    %v2329 = vpack.c.b16 %v1433, %v1429
    %v2330 = vpack.c.b16 %v1434, %v1430
    %v2331 = vpack.c.b16 %v1435, %v1431
    %v2332 = vpack.c.b16 %v1440, %v1436
    %v2333 = vpack.c.b16 %v1441, %v1437
    %v2334 = vpack.c.b16 %v1442, %v1438
    %v2335 = vpack.c.b16 %v1443, %v1439
    %v2336 = vpack.c.b16 %v1448, %v1444
    %v2337 = vpack.c.b16 %v1449, %v1445
    %v2338 = vpack.c.b16 %v1450, %v1446
    %v2339 = vpack.c.b16 %v1451, %v1447
    %v2340 = vpack.c.b16 %v1456, %v1452
    %v2341 = vpack.c.b16 %v1457, %v1453
    %v2342 = vpack.c.b16 %v1458, %v1454
    %v2343 = vpack.c.b16 %v1459, %v1455
    %v2344 = vpack.c.b16 %v1464, %v1460
    %v2345 = vpack.c.b16 %v1465, %v1461
    %v2346 = vpack.c.b16 %v1466, %v1462
    %v2347 = vpack.c.b16 %v1467, %v1463
    %v2348 = vpack.c.b16 %v1472, %v1468
    %v2349 = vpack.c.b16 %v1473, %v1469
    %v2350 = vpack.c.b16 %v1474, %v1470
    %v2351 = vpack.c.b16 %v1475, %v1471
    %v2352 = vpack.c.b16 %v1480, %v1476
    %v2353 = vpack.c.b16 %v1481, %v1477
    %v2354 = vpack.c.b16 %v1482, %v1478
    %v2355 = vpack.c.b16 %v1483, %v1479
    %v2356 = vpack.c.b16 %v1488, %v1484
    %v2357 = vpack.c.b16 %v1489, %v1485
    %v2358 = vpack.c.b16 %v1490, %v1486
    %v2359 = vpack.c.b16 %v1491, %v1487
    %v2360 = vpack.c.b16 %v1496, %v1492
    %v2361 = vpack.c.b16 %v1497, %v1493
    %v2362 = vpack.c.b16 %v1498, %v1494
    %v2363 = vpack.c.b16 %v1499, %v1495
    %v2364 = vpack.c.b16 %v1504, %v1500
    %v2365 = vpack.c.b16 %v1505, %v1501
    %v2366 = vpack.c.b16 %v1506, %v1502
    %v2367 = vpack.c.b16 %v1507, %v1503
    %v2368 = vpack.c.b16 %v1512, %v1508
    %v2369 = vpack.c.b16 %v1513, %v1509
    %v2370 = vpack.c.b16 %v1514, %v1510
    %v2371 = vpack.c.b16 %v1515, %v1511
    %v2372 = vpack.c.b16 %v1520, %v1516
    %v2373 = vpack.c.b16 %v1521, %v1517
    %v2374 = vpack.c.b16 %v1522, %v1518
    %v2375 = vpack.c.b16 %v1523, %v1519
    %v2376 = vpack.c.b16 %v1528, %v1524
    %v2377 = vpack.c.b16 %v1529, %v1525
    %v2378 = vpack.c.b16 %v1530, %v1526
    %v2379 = vpack.c.b16 %v1531, %v1527
    %v2380 = vpack.c.b16 %v1536, %v1532
    %v2381 = vpack.c.b16 %v1537, %v1533
    %v2382 = vpack.c.b16 %v1538, %v1534
    %v2383 = vpack.c.b16 %v1539, %v1535
    %v2384 = vpack.c.b16 %v1544, %v1540
    %v2385 = vpack.c.b16 %v1545, %v1541
    %v2386 = vpack.c.b16 %v1546, %v1542
    %v2387 = vpack.c.b16 %v1547, %v1543
    %v2388 = vpack.c.b16 %v1552, %v1548
    %v2389 = vpack.c.b16 %v1553, %v1549
    %v2390 = vpack.c.b16 %v1554, %v1550
    %v2391 = vpack.c.b16 %v1555, %v1551
    %v2392 = vpack.c.b16 %v1560, %v1556
    %v2393 = vpack.c.b16 %v1561, %v1557
    %v2394 = vpack.c.b16 %v1562, %v1558
    %v2395 = vpack.c.b16 %v1563, %v1559
    %v2396 = vpack.c.b16 %v1568, %v1564
    %v2397 = vpack.c.b16 %v1569, %v1565
    %v2398 = vpack.c.b16 %v1570, %v1566
    %v2399 = vpack.c.b16 %v1571, %v1567
    %v2400 = vpack.c.b16 %v1576, %v1572
    %v2401 = vpack.c.b16 %v1577, %v1573
    %v2402 = vpack.c.b16 %v1578, %v1574
    %v2403 = vpack.c.b16 %v1579, %v1575
    %v2404 = vpack.c.b16 %v1584, %v1580
    %v2405 = vpack.c.b16 %v1585, %v1581
    %v2406 = vpack.c.b16 %v1586, %v1582
    %v2407 = vpack.c.b16 %v1587, %v1583
    %v2408 = vpack.c.b16 %v1592, %v1588
    %v2409 = vpack.c.b16 %v1593, %v1589
    %v2410 = vpack.c.b16 %v1594, %v1590
    %v2411 = vpack.c.b16 %v1595, %v1591
    %v2412 = vpack.c.b16 %v1600, %v1596
    %v2413 = vpack.c.b16 %v1601, %v1597
    %v2414 = vpack.c.b16 %v1602, %v1598
    %v2415 = vpack.c.b16 %v1603, %v1599
    %v2416 = vpack.c.b16 %v1608, %v1604
    %v2417 = vpack.c.b16 %v1609, %v1605
    %v2418 = vpack.c.b16 %v1610, %v1606
    %v2419 = vpack.c.b16 %v1611, %v1607
    %v2420 = vpack.c.b16 %v1616, %v1612
    %v2421 = vpack.c.b16 %v1617, %v1613
    %v2422 = vpack.c.b16 %v1618, %v1614
    %v2423 = vpack.c.b16 %v1619, %v1615
    %v2424 = vpack.c.b16 %v1624, %v1620
    %v2425 = vpack.c.b16 %v1625, %v1621
    %v2426 = vpack.c.b16 %v1626, %v1622
    %v2427 = vpack.c.b16 %v1627, %v1623
    %v2428 = vpack.c.b16 %v1632, %v1628
    %v2429 = vpack.c.b16 %v1633, %v1629
    %v2430 = vpack.c.b16 %v1634, %v1630
    %v2431 = vpack.c.b16 %v1635, %v1631
    %v2432 = vpack.c.b16 %v1640, %v1636
    %v2433 = vpack.c.b16 %v1641, %v1637
    %v2434 = vpack.c.b16 %v1642, %v1638
    %v2435 = vpack.c.b16 %v1643, %v1639
    %v2436 = vpack.c.b16 %v1648, %v1644
    %v2437 = vpack.c.b16 %v1649, %v1645
    %v2438 = vpack.c.b16 %v1650, %v1646
    %v2439 = vpack.c.b16 %v1651, %v1647
    %v2440 = vpack.c.b16 %v1656, %v1652
    %v2441 = vpack.c.b16 %v1657, %v1653
    %v2442 = vpack.c.b16 %v1658, %v1654
    %v2443 = vpack.c.b16 %v1659, %v1655
    %v2444 = vpack.c.b16 %v1664, %v1660
    %v2445 = vpack.c.b16 %v1665, %v1661
    %v2446 = vpack.c.b16 %v1666, %v1662
    %v2447 = vpack.c.b16 %v1667, %v1663
    %v2448 = vpack.c.b16 %v1672, %v1668
    %v2449 = vpack.c.b16 %v1673, %v1669
    %v2450 = vpack.c.b16 %v1674, %v1670
    %v2451 = vpack.c.b16 %v1675, %v1671
    %v2452 = vpack.c.b16 %v1680, %v1676
    %v2453 = vpack.c.b16 %v1681, %v1677
    %v2454 = vpack.c.b16 %v1682, %v1678
    %v2455 = vpack.c.b16 %v1683, %v1679
    %v2456 = vpack.c.b16 %v1688, %v1684
    %v2457 = vpack.c.b16 %v1689, %v1685
    %v2458 = vpack.c.b16 %v1690, %v1686
    %v2459 = vpack.c.b16 %v1691, %v1687
    %v2460 = vpack.c.b16 %v1696, %v1692
    %v2461 = vpack.c.b16 %v1697, %v1693
    %v2462 = vpack.c.b16 %v1698, %v1694
    %v2463 = vpack.c.b16 %v1699, %v1695
    %v2464 = vpack.c.b16 %v1704, %v1700
    %v2465 = vpack.c.b16 %v1705, %v1701
    %v2466 = vpack.c.b16 %v1706, %v1702
    %v2467 = vpack.c.b16 %v1707, %v1703
    %v2468 = vpack.c.b16 %v1712, %v1708
    %v2469 = vpack.c.b16 %v1713, %v1709
    %v2470 = vpack.c.b16 %v1714, %v1710
    %v2471 = vpack.c.b16 %v1715, %v1711
    %v2472 = vpack.c.b16 %v1720, %v1716
    %v2473 = vpack.c.b16 %v1721, %v1717
    %v2474 = vpack.c.b16 %v1722, %v1718
    %v2475 = vpack.c.b16 %v1723, %v1719
    %v2476 = vpack.c.b16 %v1728, %v1724
    %v2477 = vpack.c.b16 %v1729, %v1725
    %v2478 = vpack.c.b16 %v1730, %v1726
    %v2479 = vpack.c.b16 %v1731, %v1727
    %v2480 = vpack.c.b16 %v1736, %v1732
    %v2481 = vpack.c.b16 %v1737, %v1733
    %v2482 = vpack.c.b16 %v1738, %v1734
    %v2483 = vpack.c.b16 %v1739, %v1735
    %v2484 = vpack.c.b16 %v1744, %v1740
    %v2485 = vpack.c.b16 %v1745, %v1741
    %v2486 = vpack.c.b16 %v1746, %v1742
    %v2487 = vpack.c.b16 %v1747, %v1743
    %v2488 = vpack.c.b16 %v1752, %v1748
    %v2489 = vpack.c.b16 %v1753, %v1749
    %v2490 = vpack.c.b16 %v1754, %v1750
    %v2491 = vpack.c.b16 %v1755, %v1751
    %v2492 = vpack.c.b16 %v1760, %v1756
    %v2493 = vpack.c.b16 %v1761, %v1757
    %v2494 = vpack.c.b16 %v1762, %v1758
    %v2495 = vpack.c.b16 %v1763, %v1759
    %v2496 = vpack.c.b16 %v1768, %v1764
    %v2497 = vpack.c.b16 %v1769, %v1765
    %v2498 = vpack.c.b16 %v1770, %v1766
    %v2499 = vpack.c.b16 %v1771, %v1767
    %v2500 = vpack.c.b16 %v1776, %v1772
    %v2501 = vpack.c.b16 %v1777, %v1773
    %v2502 = vpack.c.b16 %v1778, %v1774
    %v2503 = vpack.c.b16 %v1779, %v1775
    %v2504 = vpack.c.b16 %v1784, %v1780
    %v2505 = vpack.c.b16 %v1785, %v1781
    %v2506 = vpack.c.b16 %v1786, %v1782
    %v2507 = vpack.c.b16 %v1787, %v1783
    %v2508 = vpack.c.b16 %v1792, %v1788
    %v2509 = vpack.c.b16 %v1793, %v1789
    %v2510 = vpack.c.b16 %v1794, %v1790
    %v2511 = vpack.c.b16 %v1795, %v1791
    %v2512 = vpack.c.b16 %v1800, %v1796
    %v2513 = vpack.c.b16 %v1801, %v1797
    %v2514 = vpack.c.b16 %v1802, %v1798
    %v2515 = vpack.c.b16 %v1803, %v1799
    %v2516 = vpack.c.b16 %v1808, %v1804
    %v2517 = vpack.c.b16 %v1809, %v1805
    %v2518 = vpack.c.b16 %v1810, %v1806
    %v2519 = vpack.c.b16 %v1811, %v1807
    %v2520 = vpack.c.b16 %v1816, %v1812
    %v2521 = vpack.c.b16 %v1817, %v1813
    %v2522 = vpack.c.b16 %v1818, %v1814
    %v2523 = vpack.c.b16 %v1819, %v1815
    %v2524 = vpack.c.b16 %v1824, %v1820
    %v2525 = vpack.c.b16 %v1825, %v1821
    %v2526 = vpack.c.b16 %v1826, %v1822
    %v2527 = vpack.c.b16 %v1827, %v1823
    %v2528 = vpack.c.b16 %v1832, %v1828
    %v2529 = vpack.c.b16 %v1833, %v1829
    %v2530 = vpack.c.b16 %v1834, %v1830
    %v2531 = vpack.c.b16 %v1835, %v1831
    %v2532 = vpack.c.b16 %v1840, %v1836
    %v2533 = vpack.c.b16 %v1841, %v1837
    %v2534 = vpack.c.b16 %v1842, %v1838
    %v2535 = vpack.c.b16 %v1843, %v1839
    %v2536 = vpack.c.b16 %v1848, %v1844
    %v2537 = vpack.c.b16 %v1849, %v1845
    %v2538 = vpack.c.b16 %v1850, %v1846
    %v2539 = vpack.c.b16 %v1851, %v1847
    %v2540 = vpack.c.b16 %v1856, %v1852
    %v2541 = vpack.c.b16 %v1857, %v1853
    %v2542 = vpack.c.b16 %v1858, %v1854
    %v2543 = vpack.c.b16 %v1859, %v1855
    %v2544 = vpack.c.b16 %v1864, %v1860
    %v2545 = vpack.c.b16 %v1865, %v1861
    %v2546 = vpack.c.b16 %v1866, %v1862
    %v2547 = vpack.c.b16 %v1867, %v1863
    %v2548 = vpack.c.b16 %v1872, %v1868
    %v2549 = vpack.c.b16 %v1873, %v1869
    %v2550 = vpack.c.b16 %v1874, %v1870
    %v2551 = vpack.c.b16 %v1875, %v1871
    %v2552 = vpack.c.b16 %v1880, %v1876
    %v2553 = vpack.c.b16 %v1881, %v1877
    %v2554 = vpack.c.b16 %v1882, %v1878
    %v2555 = vpack.c.b16 %v1883, %v1879
    %v2556 = vpack.c.b16 %v1888, %v1884
    %v2557 = vpack.c.b16 %v1889, %v1885
    %v2558 = vpack.c.b16 %v1890, %v1886
    %v2559 = vpack.c.b16 %v1891, %v1887
    %v2560 = vpack.c.b16 %v1896, %v1892
    %v2561 = vpack.c.b16 %v1897, %v1893
    %v2562 = vpack.c.b16 %v1898, %v1894
    %v2563 = vpack.c.b16 %v1899, %v1895
    %v2564 = vpack.c.b16 %v1904, %v1900
    %v2565 = vpack.c.b16 %v1905, %v1901
    %v2566 = vpack.c.b16 %v1906, %v1902
    %v2567 = vpack.c.b16 %v1907, %v1903
    %v2568 = vpack.c.b16 %v1912, %v1908
    %v2569 = vpack.c.b16 %v1913, %v1909
    %v2570 = vpack.c.b16 %v1914, %v1910
    %v2571 = vpack.c.b16 %v1915, %v1911
    %v2572 = vpack.c.b16 %v1920, %v1916
    %v2573 = vpack.c.b16 %v1921, %v1917
    %v2574 = vpack.c.b16 %v1922, %v1918
    %v2575 = vpack.c.b16 %v1923, %v1919
    %v2576 = vpack.c.b16 %v1928, %v1924
    %v2577 = vpack.c.b16 %v1929, %v1925
    %v2578 = vpack.c.b16 %v1930, %v1926
    %v2579 = vpack.c.b16 %v1931, %v1927
    %v2580 = vpack.c.b16 %v1936, %v1932
    %v2581 = vpack.c.b16 %v1937, %v1933
    %v2582 = vpack.c.b16 %v1938, %v1934
    %v2583 = vpack.c.b16 %v1939, %v1935
    %v2584 = vpack.c.b16 %v1944, %v1940
    %v2585 = vpack.c.b16 %v1945, %v1941
    %v2586 = vpack.c.b16 %v1946, %v1942
    %v2587 = vpack.c.b16 %v1947, %v1943
    %v2588 = vpack.c.b16 %v1952, %v1948
    %v2589 = vpack.c.b16 %v1953, %v1949
    %v2590 = vpack.c.b16 %v1954, %v1950
    %v2591 = vpack.c.b16 %v1955, %v1951
    %v2592 = vpack.c.b16 %v1960, %v1956
    %v2593 = vpack.c.b16 %v1961, %v1957
    %v2594 = vpack.c.b16 %v1962, %v1958
    %v2595 = vpack.c.b16 %v1963, %v1959
    %v2596 = vpack.c.b16 %v1968, %v1964
    %v2597 = vpack.c.b16 %v1969, %v1965
    %v2598 = vpack.c.b16 %v1970, %v1966
    %v2599 = vpack.c.b16 %v1971, %v1967
    %v2600 = vpack.c.b16 %v1976, %v1972
    %v2601 = vpack.c.b16 %v1977, %v1973
    %v2602 = vpack.c.b16 %v1978, %v1974
    %v2603 = vpack.c.b16 %v1979, %v1975
    %v2604 = vpack.c.b16 %v1984, %v1980
    %v2605 = vpack.c.b16 %v1985, %v1981
    %v2606 = vpack.c.b16 %v1986, %v1982
    %v2607 = vpack.c.b16 %v1987, %v1983
    %v2608 = vpack.c.b16 %v1992, %v1988
    %v2609 = vpack.c.b16 %v1993, %v1989
    %v2610 = vpack.c.b16 %v1994, %v1990
    %v2611 = vpack.c.b16 %v1995, %v1991
    %v2612 = vpack.c.b16 %v2000, %v1996
    %v2613 = vpack.c.b16 %v2001, %v1997
    %v2614 = vpack.c.b16 %v2002, %v1998
    %v2615 = vpack.c.b16 %v2003, %v1999
    %v2616 = vpack.c.b16 %v2008, %v2004
    %v2617 = vpack.c.b16 %v2009, %v2005
    %v2618 = vpack.c.b16 %v2010, %v2006
    %v2619 = vpack.c.b16 %v2011, %v2007
    %v2620 = vpack.c.b16 %v2016, %v2012
    %v2621 = vpack.c.b16 %v2017, %v2013
    %v2622 = vpack.c.b16 %v2018, %v2014
    %v2623 = vpack.c.b16 %v2019, %v2015
    %v2624 = vpack.c.b16 %v2024, %v2020
    %v2625 = vpack.c.b16 %v2025, %v2021
    %v2626 = vpack.c.b16 %v2026, %v2022
    %v2627 = vpack.c.b16 %v2027, %v2023
    %v2628 = vpack.c.b16 %v2032, %v2028
    %v2629 = vpack.c.b16 %v2033, %v2029
    %v2630 = vpack.c.b16 %v2034, %v2030
    %v2631 = vpack.c.b16 %v2035, %v2031
    %v2632 = vpack.c.b16 %v2040, %v2036
    %v2633 = vpack.c.b16 %v2041, %v2037
    %v2634 = vpack.c.b16 %v2042, %v2038
    %v2635 = vpack.c.b16 %v2043, %v2039
    %v2636 = vpack.c.b16 %v2048, %v2044
    %v2637 = vpack.c.b16 %v2049, %v2045
    %v2638 = vpack.c.b16 %v2050, %v2046
    %v2639 = vpack.c.b16 %v2051, %v2047
    %v2640 = vpack.c.b16 %v2056, %v2052
    %v2641 = vpack.c.b16 %v2057, %v2053
    %v2642 = vpack.c.b16 %v2058, %v2054
    %v2643 = vpack.c.b16 %v2059, %v2055
    %v2644 = vpack.c.b16 %v2064, %v2060
    %v2645 = vpack.c.b16 %v2065, %v2061
    %v2646 = vpack.c.b16 %v2066, %v2062
    %v2647 = vpack.c.b16 %v2067, %v2063
    %v2648 = vpack.c.b16 %v2072, %v2068
    %v2649 = vpack.c.b16 %v2073, %v2069
    %v2650 = vpack.c.b16 %v2074, %v2070
    %v2651 = vpack.c.b16 %v2075, %v2071
    %v2652 = vpack.c.b16 %v2080, %v2076
    %v2653 = vpack.c.b16 %v2081, %v2077
    %v2654 = vpack.c.b16 %v2082, %v2078
    %v2655 = vpack.c.b16 %v2083, %v2079
    %v2656 = vpack.c.b16 %v2088, %v2084
    %v2657 = vpack.c.b16 %v2089, %v2085
    %v2658 = vpack.c.b16 %v2090, %v2086
    %v2659 = vpack.c.b16 %v2091, %v2087
    %v2660 = vpack.c.b16 %v2096, %v2092
    %v2661 = vpack.c.b16 %v2097, %v2093
    %v2662 = vpack.c.b16 %v2098, %v2094
    %v2663 = vpack.c.b16 %v2099, %v2095
    %v2664 = vpack.c.b16 %v2104, %v2100
    %v2665 = vpack.c.b16 %v2105, %v2101
    %v2666 = vpack.c.b16 %v2106, %v2102
    %v2667 = vpack.c.b16 %v2107, %v2103
    %v2668 = vpack.c.b16 %v2112, %v2108
    %v2669 = vpack.c.b16 %v2113, %v2109
    %v2670 = vpack.c.b16 %v2114, %v2110
    %v2671 = vpack.c.b16 %v2115, %v2111
    %v2672 = vpack.c.b16 %v2120, %v2116
    %v2673 = vpack.c.b16 %v2121, %v2117
    %v2674 = vpack.c.b16 %v2122, %v2118
    %v2675 = vpack.c.b16 %v2123, %v2119
    %v2676 = vpack.c.b16 %v2128, %v2124
    %v2677 = vpack.c.b16 %v2129, %v2125
    %v2678 = vpack.c.b16 %v2130, %v2126
    %v2679 = vpack.c.b16 %v2131, %v2127
    %v2680 = vpack.c.b16 %v2136, %v2132
    %v2681 = vpack.c.b16 %v2137, %v2133
    %v2682 = vpack.c.b16 %v2138, %v2134
    %v2683 = vpack.c.b16 %v2139, %v2135
    %v2684 = vpack.c.b16 %v2144, %v2140
    %v2685 = vpack.c.b16 %v2145, %v2141
    %v2686 = vpack.c.b16 %v2146, %v2142
    %v2687 = vpack.c.b16 %v2147, %v2143
    %v2688 = vpack.c.b16 %v2152, %v2148
    %v2689 = vpack.c.b16 %v2153, %v2149
    %v2690 = vpack.c.b16 %v2154, %v2150
    %v2691 = vpack.c.b16 %v2155, %v2151
    %v2692 = vpack.c.b16 %v2160, %v2156
    %v2693 = vpack.c.b16 %v2161, %v2157
    %v2694 = vpack.c.b16 %v2162, %v2158
    %v2695 = vpack.c.b16 %v2163, %v2159
    %v2696 = vpack.c.b16 %v2168, %v2164
    %v2697 = vpack.c.b16 %v2169, %v2165
    %v2698 = vpack.c.b16 %v2170, %v2166
    %v2699 = vpack.c.b16 %v2171, %v2167
    %v2700 = vpack.c.b16 %v2176, %v2172
    %v2701 = vpack.c.b16 %v2177, %v2173
    %v2702 = vpack.c.b16 %v2178, %v2174
    %v2703 = vpack.c.b16 %v2179, %v2175
    %v2704 = vpack.c.b16 %v2184, %v2180
    %v2705 = vpack.c.b16 %v2185, %v2181
    %v2706 = vpack.c.b16 %v2186, %v2182
    %v2707 = vpack.c.b16 %v2187, %v2183
    %v2708 = vpack.c.b16 %v2192, %v2188
    %v2709 = vpack.c.b16 %v2193, %v2189
    %v2710 = vpack.c.b16 %v2194, %v2190
    %v2711 = vpack.c.b16 %v2195, %v2191
    %v2712 = vpack.c.b16 %v2200, %v2196
    %v2713 = vpack.c.b16 %v2201, %v2197
    %v2714 = vpack.c.b16 %v2202, %v2198
    %v2715 = vpack.c.b16 %v2203, %v2199
    %3228 = vmatprep.subr.bf16.mxu0 %v2205
    %3229 = vmatpush1.bf16.msra.mxu0 %v2204
    %3230 = vmatprep.subr.bf16.mxu0 %v2209
    %3231 = vmatpush1.bf16.msra.mxu0 %v2208
    %3232 = vmatprep.subr.bf16.mxu0 %v2213
    %3233 = vmatpush1.bf16.msra.mxu0 %v2212
    %3234 = vmatprep.subr.bf16.mxu0 %v2217
    %3235 = vmatpush1.bf16.msra.mxu0 %v2216
    %3236 = vmatprep.subr.bf16.mxu0 %v2221
    %3237 = vmatpush1.bf16.msra.mxu0 %v2220
    %3238 = vmatprep.subr.bf16.mxu0 %v2225
    %3239 = vmatpush1.bf16.msra.mxu0 %v2224
    %3240 = vmatprep.subr.bf16.mxu0 %v2229
    %3241 = vmatpush1.bf16.msra.mxu0 %v2228
    %3242 = vmatprep.subr.bf16.mxu0 %v2233
    %3243 = vmatpush1.bf16.msra.mxu0 %v2232
    %3244 = vmatprep.subr.bf16.mxu0 %v2237
    %3245 = vmatpush1.bf16.msra.mxu0 %v2236
    %3246 = vmatprep.subr.bf16.mxu0 %v2241
    %3247 = vmatpush1.bf16.msra.mxu0 %v2240
    %3248 = vmatprep.subr.bf16.mxu0 %v2245
    %3249 = vmatpush1.bf16.msra.mxu0 %v2244
    %3250 = vmatprep.subr.bf16.mxu0 %v2249
    %3251 = vmatpush1.bf16.msra.mxu0 %v2248
    %3252 = vmatprep.subr.bf16.mxu0 %v2253
    %3253 = vmatpush1.bf16.msra.mxu0 %v2252
    %3254 = vmatprep.subr.bf16.mxu0 %v2257
    %3255 = vmatpush1.bf16.msra.mxu0 %v2256
    %3256 = vmatprep.subr.bf16.mxu0 %v2261
    %3257 = vmatpush1.bf16.msra.mxu0 %v2260
    %3258 = vmatprep.subr.bf16.mxu0 %v2265
    %3259 = vmatpush1.bf16.msra.mxu0 %v2264
    %3260 = vmatprep.mubr.bf16.mxu0 %v119
    %3261 = vmatmul.mubr.bf16.gmra.mrb[0].mxu0 %v118
    %v3262 = vpop.f32.mrb[0].mxu0
    %v3263 = vadd.f32 %v651, %v3262
    %v3264 = vpop.f32.mrb[0].mxu0
    %v3265 = vadd.f32 %v655, %v3264
    %v3266 = vpop.f32.mrb[0].mxu0
    %v3267 = vadd.f32 %v651, %v3266
    %v3268 = vpop.f32.mrb[0].mxu0
    %v3269 = vadd.f32 %v655, %v3268
    %3270 = vdwg.mxu0
    %3271 = vmatprep.subr.bf16.mxu0 %v2269
    %3272 = vmatpush1.bf16.msra.mxu0 %v2268
    %3273 = vmatprep.subr.bf16.mxu0 %v2273
    %3274 = vmatpush1.bf16.msra.mxu0 %v2272
    %3275 = vmatprep.subr.bf16.mxu0 %v2277
    %3276 = vmatpush1.bf16.msra.mxu0 %v2276
    %3277 = vmatprep.subr.bf16.mxu0 %v2281
    %3278 = vmatpush1.bf16.msra.mxu0 %v2280
    %3279 = vmatprep.subr.bf16.mxu0 %v2285
    %3280 = vmatpush1.bf16.msra.mxu0 %v2284
    %3281 = vmatprep.subr.bf16.mxu0 %v2289
    %3282 = vmatpush1.bf16.msra.mxu0 %v2288
    %3283 = vmatprep.subr.bf16.mxu0 %v2293
    %3284 = vmatpush1.bf16.msra.mxu0 %v2292
    %3285 = vmatprep.subr.bf16.mxu0 %v2297
    %3286 = vmatpush1.bf16.msra.mxu0 %v2296
    %3287 = vmatprep.subr.bf16.mxu0 %v2301
    %3288 = vmatpush1.bf16.msra.mxu0 %v2300
    %3289 = vmatprep.subr.bf16.mxu0 %v2305
    %3290 = vmatpush1.bf16.msra.mxu0 %v2304
    %3291 = vmatprep.subr.bf16.mxu0 %v2309
    %3292 = vmatpush1.bf16.msra.mxu0 %v2308
    %3293 = vmatprep.subr.bf16.mxu0 %v2313
    %3294 = vmatpush1.bf16.msra.mxu0 %v2312
    %3295 = vmatprep.subr.bf16.mxu0 %v2317
    %3296 = vmatpush1.bf16.msra.mxu0 %v2316
    %3297 = vmatprep.subr.bf16.mxu0 %v2321
    %3298 = vmatpush1.bf16.msra.mxu0 %v2320
    %3299 = vmatprep.subr.bf16.mxu0 %v2325
    %3300 = vmatpush1.bf16.msra.mxu0 %v2324
    %3301 = vmatprep.subr.bf16.mxu0 %v2329
    %3302 = vmatpush1.bf16.msra.mxu0 %v2328
    %3303 = vmatprep.mubr.bf16.mxu0 %v121
    %3304 = vmatmul.mubr.bf16.gmra.mrb[0].mxu0 %v120
    %v3305 = vpop.f32.mrb[0].mxu0
    %v3306 = vadd.f32 %v3263, %v3305
    %v3307 = vpop.f32.mrb[0].mxu0
    %v3308 = vadd.f32 %v3265, %v3307
    %v3309 = vpop.f32.mrb[0].mxu0
    %v3310 = vadd.f32 %v3267, %v3309
    %v3311 = vpop.f32.mrb[0].mxu0
    %v3312 = vadd.f32 %v3269, %v3311
    %3313 = vdwg.mxu0
    %3314 = vmatprep.subr.bf16.mxu0 %v2333
    %3315 = vmatpush1.bf16.msra.mxu0 %v2332
    %3316 = vmatprep.subr.bf16.mxu0 %v2337
    %3317 = vmatpush1.bf16.msra.mxu0 %v2336
    %3318 = vmatprep.subr.bf16.mxu0 %v2341
    %3319 = vmatpush1.bf16.msra.mxu0 %v2340
    %3320 = vmatprep.subr.bf16.mxu0 %v2345
    %3321 = vmatpush1.bf16.msra.mxu0 %v2344
    %3322 = vmatprep.subr.bf16.mxu0 %v2349
    %3323 = vmatpush1.bf16.msra.mxu0 %v2348
    %3324 = vmatprep.subr.bf16.mxu0 %v2353
    %3325 = vmatpush1.bf16.msra.mxu0 %v2352
    %3326 = vmatprep.subr.bf16.mxu0 %v2357
    %3327 = vmatpush1.bf16.msra.mxu0 %v2356
    %3328 = vmatprep.subr.bf16.mxu0 %v2361
    %3329 = vmatpush1.bf16.msra.mxu0 %v2360
    %3330 = vmatprep.subr.bf16.mxu0 %v2365
    %3331 = vmatpush1.bf16.msra.mxu0 %v2364
    %3332 = vmatprep.subr.bf16.mxu0 %v2369
    %3333 = vmatpush1.bf16.msra.mxu0 %v2368
    %3334 = vmatprep.subr.bf16.mxu0 %v2373
    %3335 = vmatpush1.bf16.msra.mxu0 %v2372
    %3336 = vmatprep.subr.bf16.mxu0 %v2377
    %3337 = vmatpush1.bf16.msra.mxu0 %v2376
    %3338 = vmatprep.subr.bf16.mxu0 %v2381
    %3339 = vmatpush1.bf16.msra.mxu0 %v2380
    %3340 = vmatprep.subr.bf16.mxu0 %v2385
    %3341 = vmatpush1.bf16.msra.mxu0 %v2384
    %3342 = vmatprep.subr.bf16.mxu0 %v2389
    %3343 = vmatpush1.bf16.msra.mxu0 %v2388
    %3344 = vmatprep.subr.bf16.mxu0 %v2393
    %3345 = vmatpush1.bf16.msra.mxu0 %v2392
    %3346 = vmatprep.mubr.bf16.mxu0 %v123
    %3347 = vmatmul.mubr.bf16.gmra.mrb[0].mxu0 %v122
    %v3348 = vpop.f32.mrb[0].mxu0
    %v3349 = vadd.f32 %v3306, %v3348
    %v3350 = vpop.f32.mrb[0].mxu0
    %v3351 = vadd.f32 %v3308, %v3350
    %v3352 = vpop.f32.mrb[0].mxu0
    %v3353 = vadd.f32 %v3310, %v3352
    %v3354 = vpop.f32.mrb[0].mxu0
    %v3355 = vadd.f32 %v3312, %v3354
    %3356 = vdwg.mxu0
    %3357 = vmatprep.subr.bf16.mxu0 %v2397
    %3358 = vmatpush1.bf16.msra.mxu0 %v2396
    %3359 = vmatprep.subr.bf16.mxu0 %v2401
    %3360 = vmatpush1.bf16.msra.mxu0 %v2400
    %3361 = vmatprep.subr.bf16.mxu0 %v2405
    %3362 = vmatpush1.bf16.msra.mxu0 %v2404
    %3363 = vmatprep.subr.bf16.mxu0 %v2409
    %3364 = vmatpush1.bf16.msra.mxu0 %v2408
    %3365 = vmatprep.subr.bf16.mxu0 %v2413
    %3366 = vmatpush1.bf16.msra.mxu0 %v2412
    %3367 = vmatprep.subr.bf16.mxu0 %v2417
    %3368 = vmatpush1.bf16.msra.mxu0 %v2416
    %3369 = vmatprep.subr.bf16.mxu0 %v2421
    %3370 = vmatpush1.bf16.msra.mxu0 %v2420
    %3371 = vmatprep.subr.bf16.mxu0 %v2425
    %3372 = vmatpush1.bf16.msra.mxu0 %v2424
    %3373 = vmatprep.subr.bf16.mxu0 %v2429
    %3374 = vmatpush1.bf16.msra.mxu0 %v2428
    %3375 = vmatprep.subr.bf16.mxu0 %v2433
    %3376 = vmatpush1.bf16.msra.mxu0 %v2432
    %3377 = vmatprep.subr.bf16.mxu0 %v2437
    %3378 = vmatpush1.bf16.msra.mxu0 %v2436
    %3379 = vmatprep.subr.bf16.mxu0 %v2441
    %3380 = vmatpush1.bf16.msra.mxu0 %v2440
    %3381 = vmatprep.subr.bf16.mxu0 %v2445
    %3382 = vmatpush1.bf16.msra.mxu0 %v2444
    %3383 = vmatprep.subr.bf16.mxu0 %v2449
    %3384 = vmatpush1.bf16.msra.mxu0 %v2448
    %3385 = vmatprep.subr.bf16.mxu0 %v2453
    %3386 = vmatpush1.bf16.msra.mxu0 %v2452
    %3387 = vmatprep.subr.bf16.mxu0 %v2457
    %3388 = vmatpush1.bf16.msra.mxu0 %v2456
    %3389 = vmatprep.mubr.bf16.mxu0 %v125
    %3390 = vmatmul.mubr.bf16.gmra.mrb[0].mxu0 %v124
    %v3391 = vpop.f32.mrb[0].mxu0
    %v3392 = vadd.f32 %v3349, %v3391
    %v3393 = vpop.f32.mrb[0].mxu0
    %v3394 = vadd.f32 %v3351, %v3393
    %v3395 = vpop.f32.mrb[0].mxu0
    %v3396 = vadd.f32 %v3353, %v3395
    %v3397 = vpop.f32.mrb[0].mxu0
    %v3398 = vadd.f32 %v3355, %v3397
    %3399 = vdwg.mxu0
    %3400 = vmatprep.subr.bf16.mxu0 %v2461
    %3401 = vmatpush1.bf16.msra.mxu0 %v2460
    %3402 = vmatprep.subr.bf16.mxu0 %v2465
    %3403 = vmatpush1.bf16.msra.mxu0 %v2464
    %3404 = vmatprep.subr.bf16.mxu0 %v2469
    %3405 = vmatpush1.bf16.msra.mxu0 %v2468
    %3406 = vmatprep.subr.bf16.mxu0 %v2473
    %3407 = vmatpush1.bf16.msra.mxu0 %v2472
    %3408 = vmatprep.subr.bf16.mxu0 %v2477
    %3409 = vmatpush1.bf16.msra.mxu0 %v2476
    %3410 = vmatprep.subr.bf16.mxu0 %v2481
    %3411 = vmatpush1.bf16.msra.mxu0 %v2480
    %3412 = vmatprep.subr.bf16.mxu0 %v2485
    %3413 = vmatpush1.bf16.msra.mxu0 %v2484
    %3414 = vmatprep.subr.bf16.mxu0 %v2489
    %3415 = vmatpush1.bf16.msra.mxu0 %v2488
    %3416 = vmatprep.subr.bf16.mxu0 %v2493
    %3417 = vmatpush1.bf16.msra.mxu0 %v2492
    %3418 = vmatprep.subr.bf16.mxu0 %v2497
    %3419 = vmatpush1.bf16.msra.mxu0 %v2496
    %3420 = vmatprep.subr.bf16.mxu0 %v2501
    %3421 = vmatpush1.bf16.msra.mxu0 %v2500
    %3422 = vmatprep.subr.bf16.mxu0 %v2505
    %3423 = vmatpush1.bf16.msra.mxu0 %v2504
    %3424 = vmatprep.subr.bf16.mxu0 %v2509
    %3425 = vmatpush1.bf16.msra.mxu0 %v2508
    %3426 = vmatprep.subr.bf16.mxu0 %v2513
    %3427 = vmatpush1.bf16.msra.mxu0 %v2512
    %3428 = vmatprep.subr.bf16.mxu0 %v2517
    %3429 = vmatpush1.bf16.msra.mxu0 %v2516
    %3430 = vmatprep.subr.bf16.mxu0 %v2521
    %3431 = vmatpush1.bf16.msra.mxu0 %v2520
    %3432 = vmatprep.mubr.bf16.mxu0 %v127
    %3433 = vmatmul.mubr.bf16.gmra.mrb[0].mxu0 %v126
    %v3434 = vpop.f32.mrb[0].mxu0
    %v3435 = vadd.f32 %v3392, %v3434
    %v3436 = vpop.f32.mrb[0].mxu0
    %v3437 = vadd.f32 %v3394, %v3436
    %v3438 = vpop.f32.mrb[0].mxu0
    %v3439 = vadd.f32 %v3396, %v3438
    %v3440 = vpop.f32.mrb[0].mxu0
    %v3441 = vadd.f32 %v3398, %v3440
    %3442 = vdwg.mxu0
    %3443 = vmatprep.subr.bf16.mxu0 %v2525
    %3444 = vmatpush1.bf16.msra.mxu0 %v2524
    %3445 = vmatprep.subr.bf16.mxu0 %v2529
    %3446 = vmatpush1.bf16.msra.mxu0 %v2528
    %3447 = vmatprep.subr.bf16.mxu0 %v2533
    %3448 = vmatpush1.bf16.msra.mxu0 %v2532
    %3449 = vmatprep.subr.bf16.mxu0 %v2537
    %3450 = vmatpush1.bf16.msra.mxu0 %v2536
    %3451 = vmatprep.subr.bf16.mxu0 %v2541
    %3452 = vmatpush1.bf16.msra.mxu0 %v2540
    %3453 = vmatprep.subr.bf16.mxu0 %v2545
    %3454 = vmatpush1.bf16.msra.mxu0 %v2544
    %3455 = vmatprep.subr.bf16.mxu0 %v2549
    %3456 = vmatpush1.bf16.msra.mxu0 %v2548
    %3457 = vmatprep.subr.bf16.mxu0 %v2553
    %3458 = vmatpush1.bf16.msra.mxu0 %v2552
    %3459 = vmatprep.subr.bf16.mxu0 %v2557
    %3460 = vmatpush1.bf16.msra.mxu0 %v2556
    %3461 = vmatprep.subr.bf16.mxu0 %v2561
    %3462 = vmatpush1.bf16.msra.mxu0 %v2560
    %3463 = vmatprep.subr.bf16.mxu0 %v2565
    %3464 = vmatpush1.bf16.msra.mxu0 %v2564
    %3465 = vmatprep.subr.bf16.mxu0 %v2569
    %3466 = vmatpush1.bf16.msra.mxu0 %v2568
    %3467 = vmatprep.subr.bf16.mxu0 %v2573
    %3468 = vmatpush1.bf16.msra.mxu0 %v2572
    %3469 = vmatprep.subr.bf16.mxu0 %v2577
    %3470 = vmatpush1.bf16.msra.mxu0 %v2576
    %3471 = vmatprep.subr.bf16.mxu0 %v2581
    %3472 = vmatpush1.bf16.msra.mxu0 %v2580
    %3473 = vmatprep.subr.bf16.mxu0 %v2585
    %3474 = vmatpush1.bf16.msra.mxu0 %v2584
    %3475 = vmatprep.mubr.bf16.mxu0 %v129
    %3476 = vmatmul.mubr.bf16.gmra.mrb[0].mxu0 %v128
    %v3477 = vpop.f32.mrb[0].mxu0
    %v3478 = vadd.f32 %v3435, %v3477
    %v3479 = vpop.f32.mrb[0].mxu0
    %v3480 = vadd.f32 %v3437, %v3479
    %v3481 = vpop.f32.mrb[0].mxu0
    %v3482 = vadd.f32 %v3439, %v3481
    %v3483 = vpop.f32.mrb[0].mxu0
    %v3484 = vadd.f32 %v3441, %v3483
    %3485 = vdwg.mxu0
    %3486 = vmatprep.subr.bf16.mxu0 %v2589
    %3487 = vmatpush1.bf16.msra.mxu0 %v2588
    %3488 = vmatprep.subr.bf16.mxu0 %v2593
    %3489 = vmatpush1.bf16.msra.mxu0 %v2592
    %3490 = vmatprep.subr.bf16.mxu0 %v2597
    %3491 = vmatpush1.bf16.msra.mxu0 %v2596
    %3492 = vmatprep.subr.bf16.mxu0 %v2601
    %3493 = vmatpush1.bf16.msra.mxu0 %v2600
    %3494 = vmatprep.subr.bf16.mxu0 %v2605
    %3495 = vmatpush1.bf16.msra.mxu0 %v2604
    %3496 = vmatprep.subr.bf16.mxu0 %v2609
    %3497 = vmatpush1.bf16.msra.mxu0 %v2608
    %3498 = vmatprep.subr.bf16.mxu0 %v2613
    %3499 = vmatpush1.bf16.msra.mxu0 %v2612
    %3500 = vmatprep.subr.bf16.mxu0 %v2617
    %3501 = vmatpush1.bf16.msra.mxu0 %v2616
    %3502 = vmatprep.subr.bf16.mxu0 %v2621
    %3503 = vmatpush1.bf16.msra.mxu0 %v2620
    %3504 = vmatprep.subr.bf16.mxu0 %v2625
    %3505 = vmatpush1.bf16.msra.mxu0 %v2624
    %3506 = vmatprep.subr.bf16.mxu0 %v2629
    %3507 = vmatpush1.bf16.msra.mxu0 %v2628
    %3508 = vmatprep.subr.bf16.mxu0 %v2633
    %3509 = vmatpush1.bf16.msra.mxu0 %v2632
    %3510 = vmatprep.subr.bf16.mxu0 %v2637
    %3511 = vmatpush1.bf16.msra.mxu0 %v2636
    %3512 = vmatprep.subr.bf16.mxu0 %v2641
    %3513 = vmatpush1.bf16.msra.mxu0 %v2640
    %3514 = vmatprep.subr.bf16.mxu0 %v2645
    %3515 = vmatpush1.bf16.msra.mxu0 %v2644
    %3516 = vmatprep.subr.bf16.mxu0 %v2649
    %3517 = vmatpush1.bf16.msra.mxu0 %v2648
    %3518 = vmatprep.mubr.bf16.mxu0 %v131
    %3519 = vmatmul.mubr.bf16.gmra.mrb[0].mxu0 %v130
    %v3520 = vpop.f32.mrb[0].mxu0
    %v3521 = vadd.f32 %v3478, %v3520
    %v3522 = vpop.f32.mrb[0].mxu0
    %v3523 = vadd.f32 %v3480, %v3522
    %v3524 = vpop.f32.mrb[0].mxu0
    %v3525 = vadd.f32 %v3482, %v3524
    %v3526 = vpop.f32.mrb[0].mxu0
    %v3527 = vadd.f32 %v3484, %v3526
    %3528 = vdwg.mxu0
    %3529 = vmatprep.subr.bf16.mxu0 %v2653
    %3530 = vmatpush1.bf16.msra.mxu0 %v2652
    %3531 = vmatprep.subr.bf16.mxu0 %v2657
    %3532 = vmatpush1.bf16.msra.mxu0 %v2656
    %3533 = vmatprep.subr.bf16.mxu0 %v2661
    %3534 = vmatpush1.bf16.msra.mxu0 %v2660
    %3535 = vmatprep.subr.bf16.mxu0 %v2665
    %3536 = vmatpush1.bf16.msra.mxu0 %v2664
    %3537 = vmatprep.subr.bf16.mxu0 %v2669
    %3538 = vmatpush1.bf16.msra.mxu0 %v2668
    %3539 = vmatprep.subr.bf16.mxu0 %v2673
    %3540 = vmatpush1.bf16.msra.mxu0 %v2672
    %3541 = vmatprep.subr.bf16.mxu0 %v2677
    %3542 = vmatpush1.bf16.msra.mxu0 %v2676
    %3543 = vmatprep.subr.bf16.mxu0 %v2681
    %3544 = vmatpush1.bf16.msra.mxu0 %v2680
    %3545 = vmatprep.subr.bf16.mxu0 %v2685
    %3546 = vmatpush1.bf16.msra.mxu0 %v2684
    %3547 = vmatprep.subr.bf16.mxu0 %v2689
    %3548 = vmatpush1.bf16.msra.mxu0 %v2688
    %3549 = vmatprep.subr.bf16.mxu0 %v2693
    %3550 = vmatpush1.bf16.msra.mxu0 %v2692
    %3551 = vmatprep.subr.bf16.mxu0 %v2697
    %3552 = vmatpush1.bf16.msra.mxu0 %v2696
    %3553 = vmatprep.subr.bf16.mxu0 %v2701
    %3554 = vmatpush1.bf16.msra.mxu0 %v2700
    %3555 = vmatprep.subr.bf16.mxu0 %v2705
    %3556 = vmatpush1.bf16.msra.mxu0 %v2704
    %3557 = vmatprep.subr.bf16.mxu0 %v2709
    %3558 = vmatpush1.bf16.msra.mxu0 %v2708
    %3559 = vmatprep.subr.bf16.mxu0 %v2713
    %3560 = vmatpush1.bf16.msra.mxu0 %v2712
    %3561 = vmatprep.mubr.bf16.mxu0 %v133
    %3562 = vmatmul.mubr.bf16.gmra.mrb[0].mxu0 %v132
    %v3563 = vpop.f32.mrb[0].mxu0
    %v3564 = vadd.f32 %v3521, %v3563
    %v3565 = vpop.f32.mrb[0].mxu0
    %v3566 = vadd.f32 %v3523, %v3565
    %v3567 = vpop.f32.mrb[0].mxu0
    %v3568 = vadd.f32 %v3525, %v3567
    %v3569 = vpop.f32.mrb[0].mxu0
    %v3570 = vadd.f32 %v3527, %v3569
    %3571 = vdwg.mxu0
    %3572 = vmatprep.subr.bf16.mxu0 %v2207
    %3573 = vmatpush1.bf16.msra.mxu0 %v2206
    %3574 = vmatprep.subr.bf16.mxu0 %v2211
    %3575 = vmatpush1.bf16.msra.mxu0 %v2210
    %3576 = vmatprep.subr.bf16.mxu0 %v2215
    %3577 = vmatpush1.bf16.msra.mxu0 %v2214
    %3578 = vmatprep.subr.bf16.mxu0 %v2219
    %3579 = vmatpush1.bf16.msra.mxu0 %v2218
    %3580 = vmatprep.subr.bf16.mxu0 %v2223
    %3581 = vmatpush1.bf16.msra.mxu0 %v2222
    %3582 = vmatprep.subr.bf16.mxu0 %v2227
    %3583 = vmatpush1.bf16.msra.mxu0 %v2226
    %3584 = vmatprep.subr.bf16.mxu0 %v2231
    %3585 = vmatpush1.bf16.msra.mxu0 %v2230
    %3586 = vmatprep.subr.bf16.mxu0 %v2235
    %3587 = vmatpush1.bf16.msra.mxu0 %v2234
    %3588 = vmatprep.subr.bf16.mxu0 %v2239
    %3589 = vmatpush1.bf16.msra.mxu0 %v2238
    %3590 = vmatprep.subr.bf16.mxu0 %v2243
    %3591 = vmatpush1.bf16.msra.mxu0 %v2242
    %3592 = vmatprep.subr.bf16.mxu0 %v2247
    %3593 = vmatpush1.bf16.msra.mxu0 %v2246
    %3594 = vmatprep.subr.bf16.mxu0 %v2251
    %3595 = vmatpush1.bf16.msra.mxu0 %v2250
    %3596 = vmatprep.subr.bf16.mxu0 %v2255
    %3597 = vmatpush1.bf16.msra.mxu0 %v2254
    %3598 = vmatprep.subr.bf16.mxu0 %v2259
    %3599 = vmatpush1.bf16.msra.mxu0 %v2258
    %3600 = vmatprep.subr.bf16.mxu0 %v2263
    %3601 = vmatpush1.bf16.msra.mxu0 %v2262
    %3602 = vmatprep.subr.bf16.mxu0 %v2267
    %3603 = vmatpush1.bf16.msra.mxu0 %v2266
    %3604 = vmatprep.mubr.bf16.mxu0 %v119
    %3605 = vmatmul.mubr.bf16.gmra.mrb[0].mxu0 %v118
    %v3606 = vpop.f32.mrb[0].mxu0
    %v3607 = vadd.f32 %v659, %v3606
    %v3608 = vpop.f32.mrb[0].mxu0
    %v3609 = vadd.f32 %v663, %v3608
    %v3610 = vpop.f32.mrb[0].mxu0
    %v3611 = vadd.f32 %v659, %v3610
    %v3612 = vpop.f32.mrb[0].mxu0
    %v3613 = vadd.f32 %v663, %v3612
    %3614 = vdwg.mxu0
    %3615 = vmatprep.subr.bf16.mxu0 %v2271
    %3616 = vmatpush1.bf16.msra.mxu0 %v2270
    %3617 = vmatprep.subr.bf16.mxu0 %v2275
    %3618 = vmatpush1.bf16.msra.mxu0 %v2274
    %3619 = vmatprep.subr.bf16.mxu0 %v2279
    %3620 = vmatpush1.bf16.msra.mxu0 %v2278
    %3621 = vmatprep.subr.bf16.mxu0 %v2283
    %3622 = vmatpush1.bf16.msra.mxu0 %v2282
    %3623 = vmatprep.subr.bf16.mxu0 %v2287
    %3624 = vmatpush1.bf16.msra.mxu0 %v2286
    %3625 = vmatprep.subr.bf16.mxu0 %v2291
    %3626 = vmatpush1.bf16.msra.mxu0 %v2290
    %3627 = vmatprep.subr.bf16.mxu0 %v2295
    %3628 = vmatpush1.bf16.msra.mxu0 %v2294
    %3629 = vmatprep.subr.bf16.mxu0 %v2299
    %3630 = vmatpush1.bf16.msra.mxu0 %v2298
    %3631 = vmatprep.subr.bf16.mxu0 %v2303
    %3632 = vmatpush1.bf16.msra.mxu0 %v2302
    %3633 = vmatprep.subr.bf16.mxu0 %v2307
    %3634 = vmatpush1.bf16.msra.mxu0 %v2306
    %3635 = vmatprep.subr.bf16.mxu0 %v2311
    %3636 = vmatpush1.bf16.msra.mxu0 %v2310
    %3637 = vmatprep.subr.bf16.mxu0 %v2315
    %3638 = vmatpush1.bf16.msra.mxu0 %v2314
    %3639 = vmatprep.subr.bf16.mxu0 %v2319
    %3640 = vmatpush1.bf16.msra.mxu0 %v2318
    %3641 = vmatprep.subr.bf16.mxu0 %v2323
    %3642 = vmatpush1.bf16.msra.mxu0 %v2322
    %3643 = vmatprep.subr.bf16.mxu0 %v2327
    %3644 = vmatpush1.bf16.msra.mxu0 %v2326
    %3645 = vmatprep.subr.bf16.mxu0 %v2331
    %3646 = vmatpush1.bf16.msra.mxu0 %v2330
    %3647 = vmatprep.mubr.bf16.mxu0 %v121
    %3648 = vmatmul.mubr.bf16.gmra.mrb[0].mxu0 %v120
    %v3649 = vpop.f32.mrb[0].mxu0
    %v3650 = vadd.f32 %v3607, %v3649
    %v3651 = vpop.f32.mrb[0].mxu0
    %v3652 = vadd.f32 %v3609, %v3651
    %v3653 = vpop.f32.mrb[0].mxu0
    %v3654 = vadd.f32 %v3611, %v3653
    %v3655 = vpop.f32.mrb[0].mxu0
    %v3656 = vadd.f32 %v3613, %v3655
    %3657 = vdwg.mxu0
    %3658 = vmatprep.subr.bf16.mxu0 %v2335
    %3659 = vmatpush1.bf16.msra.mxu0 %v2334
    %3660 = vmatprep.subr.bf16.mxu0 %v2339
    %3661 = vmatpush1.bf16.msra.mxu0 %v2338
    %3662 = vmatprep.subr.bf16.mxu0 %v2343
    %3663 = vmatpush1.bf16.msra.mxu0 %v2342
    %3664 = vmatprep.subr.bf16.mxu0 %v2347
    %3665 = vmatpush1.bf16.msra.mxu0 %v2346
    %3666 = vmatprep.subr.bf16.mxu0 %v2351
    %3667 = vmatpush1.bf16.msra.mxu0 %v2350
    %3668 = vmatprep.subr.bf16.mxu0 %v2355
    %3669 = vmatpush1.bf16.msra.mxu0 %v2354
    %3670 = vmatprep.subr.bf16.mxu0 %v2359
    %3671 = vmatpush1.bf16.msra.mxu0 %v2358
    %3672 = vmatprep.subr.bf16.mxu0 %v2363
    %3673 = vmatpush1.bf16.msra.mxu0 %v2362
    %3674 = vmatprep.subr.bf16.mxu0 %v2367
    %3675 = vmatpush1.bf16.msra.mxu0 %v2366
    %3676 = vmatprep.subr.bf16.mxu0 %v2371
    %3677 = vmatpush1.bf16.msra.mxu0 %v2370
    %3678 = vmatprep.subr.bf16.mxu0 %v2375
    %3679 = vmatpush1.bf16.msra.mxu0 %v2374
    %3680 = vmatprep.subr.bf16.mxu0 %v2379
    %3681 = vmatpush1.bf16.msra.mxu0 %v2378
    %3682 = vmatprep.subr.bf16.mxu0 %v2383
    %3683 = vmatpush1.bf16.msra.mxu0 %v2382
    %3684 = vmatprep.subr.bf16.mxu0 %v2387
    %3685 = vmatpush1.bf16.msra.mxu0 %v2386
    %3686 = vmatprep.subr.bf16.mxu0 %v2391
    %3687 = vmatpush1.bf16.msra.mxu0 %v2390
    %3688 = vmatprep.subr.bf16.mxu0 %v2395
    %3689 = vmatpush1.bf16.msra.mxu0 %v2394
    %3690 = vmatprep.mubr.bf16.mxu0 %v123
    %3691 = vmatmul.mubr.bf16.gmra.mrb[0].mxu0 %v122
    %v3692 = vpop.f32.mrb[0].mxu0
    %v3693 = vadd.f32 %v3650, %v3692
    %v3694 = vpop.f32.mrb[0].mxu0
    %v3695 = vadd.f32 %v3652, %v3694
    %v3696 = vpop.f32.mrb[0].mxu0
    %v3697 = vadd.f32 %v3654, %v3696
    %v3698 = vpop.f32.mrb[0].mxu0
    %v3699 = vadd.f32 %v3656, %v3698
    %3700 = vdwg.mxu0
    %3701 = vmatprep.subr.bf16.mxu0 %v2399
    %3702 = vmatpush1.bf16.msra.mxu0 %v2398
    %3703 = vmatprep.subr.bf16.mxu0 %v2403
    %3704 = vmatpush1.bf16.msra.mxu0 %v2402
    %3705 = vmatprep.subr.bf16.mxu0 %v2407
    %3706 = vmatpush1.bf16.msra.mxu0 %v2406
    %3707 = vmatprep.subr.bf16.mxu0 %v2411
    %3708 = vmatpush1.bf16.msra.mxu0 %v2410
    %3709 = vmatprep.subr.bf16.mxu0 %v2415
    %3710 = vmatpush1.bf16.msra.mxu0 %v2414
    %3711 = vmatprep.subr.bf16.mxu0 %v2419
    %3712 = vmatpush1.bf16.msra.mxu0 %v2418
    %3713 = vmatprep.subr.bf16.mxu0 %v2423
    %3714 = vmatpush1.bf16.msra.mxu0 %v2422
    %3715 = vmatprep.subr.bf16.mxu0 %v2427
    %3716 = vmatpush1.bf16.msra.mxu0 %v2426
    %3717 = vmatprep.subr.bf16.mxu0 %v2431
    %3718 = vmatpush1.bf16.msra.mxu0 %v2430
    %3719 = vmatprep.subr.bf16.mxu0 %v2435
    %3720 = vmatpush1.bf16.msra.mxu0 %v2434
    %3721 = vmatprep.subr.bf16.mxu0 %v2439
    %3722 = vmatpush1.bf16.msra.mxu0 %v2438
    %3723 = vmatprep.subr.bf16.mxu0 %v2443
    %3724 = vmatpush1.bf16.msra.mxu0 %v2442
    %3725 = vmatprep.subr.bf16.mxu0 %v2447
    %3726 = vmatpush1.bf16.msra.mxu0 %v2446
    %3727 = vmatprep.subr.bf16.mxu0 %v2451
    %3728 = vmatpush1.bf16.msra.mxu0 %v2450
    %3729 = vmatprep.subr.bf16.mxu0 %v2455
    %3730 = vmatpush1.bf16.msra.mxu0 %v2454
    %3731 = vmatprep.subr.bf16.mxu0 %v2459
    %3732 = vmatpush1.bf16.msra.mxu0 %v2458
    %3733 = vmatprep.mubr.bf16.mxu0 %v125
    %3734 = vmatmul.mubr.bf16.gmra.mrb[0].mxu0 %v124
    %v3735 = vpop.f32.mrb[0].mxu0
    %v3736 = vadd.f32 %v3693, %v3735
    %v3737 = vpop.f32.mrb[0].mxu0
    %v3738 = vadd.f32 %v3695, %v3737
    %v3739 = vpop.f32.mrb[0].mxu0
    %v3740 = vadd.f32 %v3697, %v3739
    %v3741 = vpop.f32.mrb[0].mxu0
    %v3742 = vadd.f32 %v3699, %v3741
    %3743 = vdwg.mxu0
    %3744 = vmatprep.subr.bf16.mxu0 %v2463
    %3745 = vmatpush1.bf16.msra.mxu0 %v2462
    %3746 = vmatprep.subr.bf16.mxu0 %v2467
    %3747 = vmatpush1.bf16.msra.mxu0 %v2466
    %3748 = vmatprep.subr.bf16.mxu0 %v2471
    %3749 = vmatpush1.bf16.msra.mxu0 %v2470
    %3750 = vmatprep.subr.bf16.mxu0 %v2475
    %3751 = vmatpush1.bf16.msra.mxu0 %v2474
    %3752 = vmatprep.subr.bf16.mxu0 %v2479
    %3753 = vmatpush1.bf16.msra.mxu0 %v2478
    %3754 = vmatprep.subr.bf16.mxu0 %v2483
    %3755 = vmatpush1.bf16.msra.mxu0 %v2482
    %3756 = vmatprep.subr.bf16.mxu0 %v2487
    %3757 = vmatpush1.bf16.msra.mxu0 %v2486
    %3758 = vmatprep.subr.bf16.mxu0 %v2491
    %3759 = vmatpush1.bf16.msra.mxu0 %v2490
    %3760 = vmatprep.subr.bf16.mxu0 %v2495
    %3761 = vmatpush1.bf16.msra.mxu0 %v2494
    %3762 = vmatprep.subr.bf16.mxu0 %v2499
    %3763 = vmatpush1.bf16.msra.mxu0 %v2498
    %3764 = vmatprep.subr.bf16.mxu0 %v2503
    %3765 = vmatpush1.bf16.msra.mxu0 %v2502
    %3766 = vmatprep.subr.bf16.mxu0 %v2507
    %3767 = vmatpush1.bf16.msra.mxu0 %v2506
    %3768 = vmatprep.subr.bf16.mxu0 %v2511
    %3769 = vmatpush1.bf16.msra.mxu0 %v2510
    %3770 = vmatprep.subr.bf16.mxu0 %v2515
    %3771 = vmatpush1.bf16.msra.mxu0 %v2514
    %3772 = vmatprep.subr.bf16.mxu0 %v2519
    %3773 = vmatpush1.bf16.msra.mxu0 %v2518
    %3774 = vmatprep.subr.bf16.mxu0 %v2523
    %3775 = vmatpush1.bf16.msra.mxu0 %v2522
    %3776 = vmatprep.mubr.bf16.mxu0 %v127
    %3777 = vmatmul.mubr.bf16.gmra.mrb[0].mxu0 %v126
    %v3778 = vpop.f32.mrb[0].mxu0
    %v3779 = vadd.f32 %v3736, %v3778
    %v3780 = vpop.f32.mrb[0].mxu0
    %v3781 = vadd.f32 %v3738, %v3780
    %v3782 = vpop.f32.mrb[0].mxu0
    %v3783 = vadd.f32 %v3740, %v3782
    %v3784 = vpop.f32.mrb[0].mxu0
    %v3785 = vadd.f32 %v3742, %v3784
    %3786 = vdwg.mxu0
    %3787 = vmatprep.subr.bf16.mxu0 %v2527
    %3788 = vmatpush1.bf16.msra.mxu0 %v2526
    %3789 = vmatprep.subr.bf16.mxu0 %v2531
    %3790 = vmatpush1.bf16.msra.mxu0 %v2530
    %3791 = vmatprep.subr.bf16.mxu0 %v2535
    %3792 = vmatpush1.bf16.msra.mxu0 %v2534
    %3793 = vmatprep.subr.bf16.mxu0 %v2539
    %3794 = vmatpush1.bf16.msra.mxu0 %v2538
    %3795 = vmatprep.subr.bf16.mxu0 %v2543
    %3796 = vmatpush1.bf16.msra.mxu0 %v2542
    %3797 = vmatprep.subr.bf16.mxu0 %v2547
    %3798 = vmatpush1.bf16.msra.mxu0 %v2546
    %3799 = vmatprep.subr.bf16.mxu0 %v2551
    %3800 = vmatpush1.bf16.msra.mxu0 %v2550
    %3801 = vmatprep.subr.bf16.mxu0 %v2555
    %3802 = vmatpush1.bf16.msra.mxu0 %v2554
    %3803 = vmatprep.subr.bf16.mxu0 %v2559
    %3804 = vmatpush1.bf16.msra.mxu0 %v2558
    %3805 = vmatprep.subr.bf16.mxu0 %v2563
    %3806 = vmatpush1.bf16.msra.mxu0 %v2562
    %3807 = vmatprep.subr.bf16.mxu0 %v2567
    %3808 = vmatpush1.bf16.msra.mxu0 %v2566
    %3809 = vmatprep.subr.bf16.mxu0 %v2571
    %3810 = vmatpush1.bf16.msra.mxu0 %v2570
    %3811 = vmatprep.subr.bf16.mxu0 %v2575
    %3812 = vmatpush1.bf16.msra.mxu0 %v2574
    %3813 = vmatprep.subr.bf16.mxu0 %v2579
    %3814 = vmatpush1.bf16.msra.mxu0 %v2578
    %3815 = vmatprep.subr.bf16.mxu0 %v2583
    %3816 = vmatpush1.bf16.msra.mxu0 %v2582
    %3817 = vmatprep.subr.bf16.mxu0 %v2587
    %3818 = vmatpush1.bf16.msra.mxu0 %v2586
    %3819 = vmatprep.mubr.bf16.mxu0 %v129
    %3820 = vmatmul.mubr.bf16.gmra.mrb[0].mxu0 %v128
    %v3821 = vpop.f32.mrb[0].mxu0
    %v3822 = vadd.f32 %v3779, %v3821
    %v3823 = vpop.f32.mrb[0].mxu0
    %v3824 = vadd.f32 %v3781, %v3823
    %v3825 = vpop.f32.mrb[0].mxu0
    %v3826 = vadd.f32 %v3783, %v3825
    %v3827 = vpop.f32.mrb[0].mxu0
    %v3828 = vadd.f32 %v3785, %v3827
    %3829 = vdwg.mxu0
    %3830 = vmatprep.subr.bf16.mxu0 %v2591
    %3831 = vmatpush1.bf16.msra.mxu0 %v2590
    %3832 = vmatprep.subr.bf16.mxu0 %v2595
    %3833 = vmatpush1.bf16.msra.mxu0 %v2594
    %3834 = vmatprep.subr.bf16.mxu0 %v2599
    %3835 = vmatpush1.bf16.msra.mxu0 %v2598
    %3836 = vmatprep.subr.bf16.mxu0 %v2603
    %3837 = vmatpush1.bf16.msra.mxu0 %v2602
    %3838 = vmatprep.subr.bf16.mxu0 %v2607
    %3839 = vmatpush1.bf16.msra.mxu0 %v2606
    %3840 = vmatprep.subr.bf16.mxu0 %v2611
    %3841 = vmatpush1.bf16.msra.mxu0 %v2610
    %3842 = vmatprep.subr.bf16.mxu0 %v2615
    %3843 = vmatpush1.bf16.msra.mxu0 %v2614
    %3844 = vmatprep.subr.bf16.mxu0 %v2619
    %3845 = vmatpush1.bf16.msra.mxu0 %v2618
    %3846 = vmatprep.subr.bf16.mxu0 %v2623
    %3847 = vmatpush1.bf16.msra.mxu0 %v2622
    %3848 = vmatprep.subr.bf16.mxu0 %v2627
    %3849 = vmatpush1.bf16.msra.mxu0 %v2626
    %3850 = vmatprep.subr.bf16.mxu0 %v2631
    %3851 = vmatpush1.bf16.msra.mxu0 %v2630
    %3852 = vmatprep.subr.bf16.mxu0 %v2635
    %3853 = vmatpush1.bf16.msra.mxu0 %v2634
    %3854 = vmatprep.subr.bf16.mxu0 %v2639
    %3855 = vmatpush1.bf16.msra.mxu0 %v2638
    %3856 = vmatprep.subr.bf16.mxu0 %v2643
    %3857 = vmatpush1.bf16.msra.mxu0 %v2642
    %3858 = vmatprep.subr.bf16.mxu0 %v2647
    %3859 = vmatpush1.bf16.msra.mxu0 %v2646
    %3860 = vmatprep.subr.bf16.mxu0 %v2651
    %3861 = vmatpush1.bf16.msra.mxu0 %v2650
    %3862 = vmatprep.mubr.bf16.mxu0 %v131
    %3863 = vmatmul.mubr.bf16.gmra.mrb[0].mxu0 %v130
    %v3864 = vpop.f32.mrb[0].mxu0
    %v3865 = vadd.f32 %v3822, %v3864
    %v3866 = vpop.f32.mrb[0].mxu0
    %v3867 = vadd.f32 %v3824, %v3866
    %v3868 = vpop.f32.mrb[0].mxu0
    %v3869 = vadd.f32 %v3826, %v3868
    %v3870 = vpop.f32.mrb[0].mxu0
    %v3871 = vadd.f32 %v3828, %v3870
    %3872 = vdwg.mxu0
    %3873 = vmatprep.subr.bf16.mxu0 %v2655
    %3874 = vmatpush1.bf16.msra.mxu0 %v2654
    %3875 = vmatprep.subr.bf16.mxu0 %v2659
    %3876 = vmatpush1.bf16.msra.mxu0 %v2658
    %3877 = vmatprep.subr.bf16.mxu0 %v2663
    %3878 = vmatpush1.bf16.msra.mxu0 %v2662
    %3879 = vmatprep.subr.bf16.mxu0 %v2667
    %3880 = vmatpush1.bf16.msra.mxu0 %v2666
    %3881 = vmatprep.subr.bf16.mxu0 %v2671
    %3882 = vmatpush1.bf16.msra.mxu0 %v2670
    %3883 = vmatprep.subr.bf16.mxu0 %v2675
    %3884 = vmatpush1.bf16.msra.mxu0 %v2674
    %3885 = vmatprep.subr.bf16.mxu0 %v2679
    %3886 = vmatpush1.bf16.msra.mxu0 %v2678
    %3887 = vmatprep.subr.bf16.mxu0 %v2683
    %3888 = vmatpush1.bf16.msra.mxu0 %v2682
    %3889 = vmatprep.subr.bf16.mxu0 %v2687
    %3890 = vmatpush1.bf16.msra.mxu0 %v2686
    %3891 = vmatprep.subr.bf16.mxu0 %v2691
    %3892 = vmatpush1.bf16.msra.mxu0 %v2690
    %3893 = vmatprep.subr.bf16.mxu0 %v2695
    %3894 = vmatpush1.bf16.msra.mxu0 %v2694
    %3895 = vmatprep.subr.bf16.mxu0 %v2699
    %3896 = vmatpush1.bf16.msra.mxu0 %v2698
    %3897 = vmatprep.subr.bf16.mxu0 %v2703
    %3898 = vmatpush1.bf16.msra.mxu0 %v2702
    %3899 = vmatprep.subr.bf16.mxu0 %v2707
    %3900 = vmatpush1.bf16.msra.mxu0 %v2706
    %3901 = vmatprep.subr.bf16.mxu0 %v2711
    %3902 = vmatpush1.bf16.msra.mxu0 %v2710
    %3903 = vmatprep.subr.bf16.mxu0 %v2715
    %3904 = vmatpush1.bf16.msra.mxu0 %v2714
    %3905 = vmatprep.mubr.bf16.mxu0 %v133
    %3906 = vmatmul.mubr.bf16.gmra.mrb[0].mxu0 %v132
    %v3907 = vpop.f32.mrb[0].mxu0
    %v3908 = vadd.f32 %v3865, %v3907
    %v3909 = vpop.f32.mrb[0].mxu0
    %v3910 = vadd.f32 %v3867, %v3909
    %v3911 = vpop.f32.mrb[0].mxu0
    %v3912 = vadd.f32 %v3869, %v3911
    %v3913 = vpop.f32.mrb[0].mxu0
    %v3914 = vadd.f32 %v3871, %v3913
    %3915 = vdwg.mxu0
    %v3916 = vmax.f32 %v3564, 0.0
    %v3917 = vmax.f32 %v3566, 0.0
    %v3918 = vmax.f32 %v3908, 0.0
    %v3919 = vmax.f32 %v3910, 0.0
    %v3920 = vmax.f32 %v3568, 0.0
    %v3921 = vmax.f32 %v3570, 0.0
    %v3922 = vmax.f32 %v3912, 0.0
    %v3923 = vmax.f32 %v3914, 0.0
    %v3924 = vpack.c.bf16 %v3920, %v3916
    %v3925 = vpack.c.bf16 %v3921, %v3917
    %v3926 = vpack.c.bf16 %v3922, %v3918
    %v3927 = vpack.c.bf16 %v3923, %v3919
    %v3928 = vld [vmem:[#allocation8] sm:$0xf]
    %v3929 = vld [vmem:[#allocation8 + $0x4] sm:$0xf]
    %v3930 = vld [vmem:[#allocation8 + $0x8] sm:$0xf]
    %v3931 = vld [vmem:[#allocation8 + $0xc] sm:$0xf]
    %v3932 = vld [vmem:[#allocation8 + $0x10] sm:$0xf]
    %v3933 = vld [vmem:[#allocation8 + $0x14] sm:$0xf]
    %v3934 = vld [vmem:[#allocation8 + $0x18] sm:$0xf]
    %v3935 = vld [vmem:[#allocation8 + $0x1c] sm:$0xf]
    %v3936 = vld [vmem:[#allocation8 + $0x20] sm:$0xf]
    %v3937 = vld [vmem:[#allocation8 + $0x24] sm:$0xf]
    %v3938 = vld [vmem:[#allocation8 + $0x28] sm:$0xf]
    %v3939 = vld [vmem:[#allocation8 + $0x2c] sm:$0xf]
    %v3940 = vld [vmem:[#allocation8 + $0x30] sm:$0xf]
    %v3941 = vld [vmem:[#allocation8 + $0x34] sm:$0xf]
    %v3942 = vld [vmem:[#allocation8 + $0x38] sm:$0xf]
    %v3943 = vld [vmem:[#allocation8 + $0x3c] sm:$0xf]
    %v3944 = vld [vmem:[#allocation8 + $0x40] sm:$0xf]
    %v3945 = vld [vmem:[#allocation8 + $0x44] sm:$0xf]
    %v3946 = vld [vmem:[#allocation8 + $0x48] sm:$0xf]
    %v3947 = vld [vmem:[#allocation8 + $0x4c] sm:$0xf]
    %v3948 = vld [vmem:[#allocation8 + $0x50] sm:$0xf]
    %v3949 = vld [vmem:[#allocation8 + $0x54] sm:$0xf]
    %v3950 = vld [vmem:[#allocation8 + $0x58] sm:$0xf]
    %v3951 = vld [vmem:[#allocation8 + $0x5c] sm:$0xf]
    %v3952 = vld [vmem:[#allocation8 + $0x60] sm:$0xf]
    %v3953 = vld [vmem:[#allocation8 + $0x64] sm:$0xf]
    %v3954 = vld [vmem:[#allocation8 + $0x68] sm:$0xf]
    %v3955 = vld [vmem:[#allocation8 + $0x6c] sm:$0xf]
    %v3956 = vld [vmem:[#allocation8 + $0x70] sm:$0xf]
    %v3957 = vld [vmem:[#allocation8 + $0x74] sm:$0xf]
    %v3958 = vld [vmem:[#allocation8 + $0x78] sm:$0xf]
    %v3959 = vld [vmem:[#allocation8 + $0x7c] sm:$0xf]
    %v3960 = vld [vmem:[#allocation8 + $0x80] sm:$0xf]
    %v3961 = vld [vmem:[#allocation8 + $0x84] sm:$0xf]
    %v3962 = vld [vmem:[#allocation8 + $0x88] sm:$0xf]
    %v3963 = vld [vmem:[#allocation8 + $0x8c] sm:$0xf]
    %v3964 = vld [vmem:[#allocation8 + $0x90] sm:$0xf]
    %v3965 = vld [vmem:[#allocation8 + $0x94] sm:$0xf]
    %v3966 = vld [vmem:[#allocation8 + $0x98] sm:$0xf]
    %v3967 = vld [vmem:[#allocation8 + $0x9c] sm:$0xf]
    %v3968 = vld [vmem:[#allocation8 + $0xa0] sm:$0xf]
    %v3969 = vld [vmem:[#allocation8 + $0xa4] sm:$0xf]
    %v3970 = vld [vmem:[#allocation8 + $0xa8] sm:$0xf]
    %v3971 = vld [vmem:[#allocation8 + $0xac] sm:$0xf]
    %v3972 = vld [vmem:[#allocation8 + $0xb0] sm:$0xf]
    %v3973 = vld [vmem:[#allocation8 + $0xb4] sm:$0xf]
    %v3974 = vld [vmem:[#allocation8 + $0xb8] sm:$0xf]
    %v3975 = vld [vmem:[#allocation8 + $0xbc] sm:$0xf]
    %v3976 = vld [vmem:[#allocation8 + $0xc0] sm:$0xf]
    %v3977 = vld [vmem:[#allocation8 + $0xc4] sm:$0xf]
    %v3978 = vld [vmem:[#allocation8 + $0xc8] sm:$0xf]
    %v3979 = vld [vmem:[#allocation8 + $0xcc] sm:$0xf]
    %v3980 = vld [vmem:[#allocation8 + $0xd0] sm:$0xf]
    %v3981 = vld [vmem:[#allocation8 + $0xd4] sm:$0xf]
    %v3982 = vld [vmem:[#allocation8 + $0xd8] sm:$0xf]
    %v3983 = vld [vmem:[#allocation8 + $0xdc] sm:$0xf]
    %v3984 = vld [vmem:[#allocation8 + $0xe0] sm:$0xf]
    %v3985 = vld [vmem:[#allocation8 + $0xe4] sm:$0xf]
    %v3986 = vld [vmem:[#allocation8 + $0xe8] sm:$0xf]
    %v3987 = vld [vmem:[#allocation8 + $0xec] sm:$0xf]
    %v3988 = vld [vmem:[#allocation8 + $0xf0] sm:$0xf]
    %v3989 = vld [vmem:[#allocation8 + $0xf4] sm:$0xf]
    %v3990 = vld [vmem:[#allocation8 + $0xf8] sm:$0xf]
    %v3991 = vld [vmem:[#allocation8 + $0xfc] sm:$0xf]
    %v3992 = vld [vmem:[#allocation10] sm:$0x1]
    %v3994 = vlaneseq
    %v3995 = vshrl.u32 %v3994, 7
    %v3996 = vsub.s32 0, %v3995
    %v3997 = vrot.slane %v3992, %v3996
    %v4063 = vunpack.c.l.b16 %v3928
    %v4064 = vunpack.c.l.b16 %v3929
    %v4065 = vunpack.c.l.b16 %v3930
    %v4066 = vunpack.c.l.b16 %v3931
    %v4067 = vunpack.c.l.b16 %v3932
    %v4068 = vunpack.c.l.b16 %v3933
    %v4069 = vunpack.c.l.b16 %v3934
    %v4070 = vunpack.c.l.b16 %v3935
    %v4071 = vunpack.c.l.b16 %v3936
    %v4072 = vunpack.c.l.b16 %v3937
    %v4073 = vunpack.c.l.b16 %v3938
    %v4074 = vunpack.c.l.b16 %v3939
    %v4075 = vunpack.c.l.b16 %v3940
    %v4076 = vunpack.c.l.b16 %v3941
    %v4077 = vunpack.c.l.b16 %v3942
    %v4078 = vunpack.c.l.b16 %v3943
    %v4079 = vunpack.c.l.b16 %v3944
    %v4080 = vunpack.c.l.b16 %v3945
    %v4081 = vunpack.c.l.b16 %v3946
    %v4082 = vunpack.c.l.b16 %v3947
    %v4083 = vunpack.c.l.b16 %v3948
    %v4084 = vunpack.c.l.b16 %v3949
    %v4085 = vunpack.c.l.b16 %v3950
    %v4086 = vunpack.c.l.b16 %v3951
    %v4087 = vunpack.c.l.b16 %v3952
    %v4088 = vunpack.c.l.b16 %v3953
    %v4089 = vunpack.c.l.b16 %v3954
    %v4090 = vunpack.c.l.b16 %v3955
    %v4091 = vunpack.c.l.b16 %v3956
    %v4092 = vunpack.c.l.b16 %v3957
    %v4093 = vunpack.c.l.b16 %v3958
    %v4094 = vunpack.c.l.b16 %v3959
    %v4095 = vunpack.c.l.b16 %v3960
    %v4096 = vunpack.c.l.b16 %v3961
    %v4097 = vunpack.c.l.b16 %v3962
    %v4098 = vunpack.c.l.b16 %v3963
    %v4099 = vunpack.c.l.b16 %v3964
    %v4100 = vunpack.c.l.b16 %v3965
    %v4101 = vunpack.c.l.b16 %v3966
    %v4102 = vunpack.c.l.b16 %v3967
    %v4103 = vunpack.c.l.b16 %v3968
    %v4104 = vunpack.c.l.b16 %v3969
    %v4105 = vunpack.c.l.b16 %v3970
    %v4106 = vunpack.c.l.b16 %v3971
    %v4107 = vunpack.c.l.b16 %v3972
    %v4108 = vunpack.c.l.b16 %v3973
    %v4109 = vunpack.c.l.b16 %v3974
    %v4110 = vunpack.c.l.b16 %v3975
    %v4111 = vunpack.c.l.b16 %v3976
    %v4112 = vunpack.c.l.b16 %v3977
    %v4113 = vunpack.c.l.b16 %v3978
    %v4114 = vunpack.c.l.b16 %v3979
    %v4115 = vunpack.c.l.b16 %v3980
    %v4116 = vunpack.c.l.b16 %v3981
    %v4117 = vunpack.c.l.b16 %v3982
    %v4118 = vunpack.c.l.b16 %v3983
    %v4119 = vunpack.c.l.b16 %v3984
    %v4120 = vunpack.c.l.b16 %v3985
    %v4121 = vunpack.c.l.b16 %v3986
    %v4122 = vunpack.c.l.b16 %v3987
    %v4123 = vunpack.c.l.b16 %v3988
    %v4124 = vunpack.c.l.b16 %v3989
    %v4125 = vunpack.c.l.b16 %v3990
    %v4126 = vunpack.c.l.b16 %v3991
    %v4127 = vpack.c.b16 %v4064, %v4063
    %v4128 = vpack.c.b16 %v4066, %v4065
    %v4129 = vpack.c.b16 %v4068, %v4067
    %v4130 = vpack.c.b16 %v4070, %v4069
    %v4131 = vpack.c.b16 %v4072, %v4071
    %v4132 = vpack.c.b16 %v4074, %v4073
    %v4133 = vpack.c.b16 %v4076, %v4075
    %v4134 = vpack.c.b16 %v4078, %v4077
    %v4135 = vpack.c.b16 %v4080, %v4079
    %v4136 = vpack.c.b16 %v4082, %v4081
    %v4137 = vpack.c.b16 %v4084, %v4083
    %v4138 = vpack.c.b16 %v4086, %v4085
    %v4139 = vpack.c.b16 %v4088, %v4087
    %v4140 = vpack.c.b16 %v4090, %v4089
    %v4141 = vpack.c.b16 %v4092, %v4091
    %v4142 = vpack.c.b16 %v4094, %v4093
    %v4143 = vpack.c.b16 %v4096, %v4095
    %v4144 = vpack.c.b16 %v4098, %v4097
    %v4145 = vpack.c.b16 %v4100, %v4099
    %v4146 = vpack.c.b16 %v4102, %v4101
    %v4147 = vpack.c.b16 %v4104, %v4103
    %v4148 = vpack.c.b16 %v4106, %v4105
    %v4149 = vpack.c.b16 %v4108, %v4107
    %v4150 = vpack.c.b16 %v4110, %v4109
    %v4151 = vpack.c.b16 %v4112, %v4111
    %v4152 = vpack.c.b16 %v4114, %v4113
    %v4153 = vpack.c.b16 %v4116, %v4115
    %v4154 = vpack.c.b16 %v4118, %v4117
    %v4155 = vpack.c.b16 %v4120, %v4119
    %v4156 = vpack.c.b16 %v4122, %v4121
    %v4157 = vpack.c.b16 %v4124, %v4123
    %v4158 = vpack.c.b16 %v4126, %v4125
    %4191 = vmatprep.subr.bf16.mxu0 0
    %4192 = vmatpush1.bf16.msra.mxu0 %v4127
    %4193 = vmatprep.subr.bf16.mxu0 0
    %4194 = vmatpush1.bf16.msra.mxu0 %v4128
    %4195 = vmatprep.subr.bf16.mxu0 0
    %4196 = vmatpush1.bf16.msra.mxu0 %v4129
    %4197 = vmatprep.subr.bf16.mxu0 0
    %4198 = vmatpush1.bf16.msra.mxu0 %v4130
    %4199 = vmatprep.subr.bf16.mxu0 0
    %4200 = vmatpush1.bf16.msra.mxu0 %v4131
    %4201 = vmatprep.subr.bf16.mxu0 0
    %4202 = vmatpush1.bf16.msra.mxu0 %v4132
    %4203 = vmatprep.subr.bf16.mxu0 0
    %4204 = vmatpush1.bf16.msra.mxu0 %v4133
    %4205 = vmatprep.subr.bf16.mxu0 0
    %4206 = vmatpush1.bf16.msra.mxu0 %v4134
    %4207 = vmatprep.subr.bf16.mxu0 0
    %4208 = vmatpush1.bf16.msra.mxu0 %v4135
    %4209 = vmatprep.subr.bf16.mxu0 0
    %4210 = vmatpush1.bf16.msra.mxu0 %v4136
    %4211 = vmatprep.subr.bf16.mxu0 0
    %4212 = vmatpush1.bf16.msra.mxu0 %v4137
    %4213 = vmatprep.subr.bf16.mxu0 0
    %4214 = vmatpush1.bf16.msra.mxu0 %v4138
    %4215 = vmatprep.subr.bf16.mxu0 0
    %4216 = vmatpush1.bf16.msra.mxu0 %v4139
    %4217 = vmatprep.subr.bf16.mxu0 0
    %4218 = vmatpush1.bf16.msra.mxu0 %v4140
    %4219 = vmatprep.subr.bf16.mxu0 0
    %4220 = vmatpush1.bf16.msra.mxu0 %v4141
    %4221 = vmatprep.subr.bf16.mxu0 0
    %4222 = vmatpush1.bf16.msra.mxu0 %v4142
    %4223 = vmatprep.mubr.bf16.mxu0 %v3925
    %4224 = vmatmul.mubr.bf16.gmra.mrb[0].mxu0 %v3924
    %v4225 = vpop.f32.mrb[0].mxu0
    %v4226 = vadd.f32 %v3997, %v4225
    %v4227 = vpop.f32.mrb[0].mxu0
    %v4228 = vpop.f32.mrb[0].mxu0
    %v4229 = vadd.f32 %v3997, %v4228
    %v4230 = vpop.f32.mrb[0].mxu0
    %4231 = vdwg.mxu0
    %4232 = vmatprep.subr.bf16.mxu0 0
    %4233 = vmatpush1.bf16.msra.mxu0 %v4143
    %4234 = vmatprep.subr.bf16.mxu0 0
    %4235 = vmatpush1.bf16.msra.mxu0 %v4144
    %4236 = vmatprep.subr.bf16.mxu0 0
    %4237 = vmatpush1.bf16.msra.mxu0 %v4145
    %4238 = vmatprep.subr.bf16.mxu0 0
    %4239 = vmatpush1.bf16.msra.mxu0 %v4146
    %4240 = vmatprep.subr.bf16.mxu0 0
    %4241 = vmatpush1.bf16.msra.mxu0 %v4147
    %4242 = vmatprep.subr.bf16.mxu0 0
    %4243 = vmatpush1.bf16.msra.mxu0 %v4148
    %4244 = vmatprep.subr.bf16.mxu0 0
    %4245 = vmatpush1.bf16.msra.mxu0 %v4149
    %4246 = vmatprep.subr.bf16.mxu0 0
    %4247 = vmatpush1.bf16.msra.mxu0 %v4150
    %4248 = vmatprep.subr.bf16.mxu0 0
    %4249 = vmatpush1.bf16.msra.mxu0 %v4151
    %4250 = vmatprep.subr.bf16.mxu0 0
    %4251 = vmatpush1.bf16.msra.mxu0 %v4152
    %4252 = vmatprep.subr.bf16.mxu0 0
    %4253 = vmatpush1.bf16.msra.mxu0 %v4153
    %4254 = vmatprep.subr.bf16.mxu0 0
    %4255 = vmatpush1.bf16.msra.mxu0 %v4154
    %4256 = vmatprep.subr.bf16.mxu0 0
    %4257 = vmatpush1.bf16.msra.mxu0 %v4155
    %4258 = vmatprep.subr.bf16.mxu0 0
    %4259 = vmatpush1.bf16.msra.mxu0 %v4156
    %4260 = vmatprep.subr.bf16.mxu0 0
    %4261 = vmatpush1.bf16.msra.mxu0 %v4157
    %4262 = vmatprep.subr.bf16.mxu0 0
    %4263 = vmatpush1.bf16.msra.mxu0 %v4158
    %4264 = vmatprep.mubr.bf16.mxu0 %v3927
    %4265 = vmatmul.mubr.bf16.gmra.mrb[0].mxu0 %v3926
    %v4266 = vpop.f32.mrb[0].mxu0
    %v4267 = vadd.f32 %v4226, %v4266
    %v4268 = vpop.f32.mrb[0].mxu0
    %v4269 = vpop.f32.mrb[0].mxu0
    %v4270 = vadd.f32 %v4229, %v4269
    %v4271 = vpop.f32.mrb[0].mxu0
    %4272 = vdwg.mxu0
    %4273 = vst [vmem:[#allocation11] sm:$0xff] %v4267
    %4274 = vst [vmem:[#allocation11 + $0x8] sm:$0xff] %v4270
    // Predicated region
    $region42: #{tpu_custom_call.1} parent=1 // pred_check
      _
    $region43: #{tpu_custom_call.1} parent=1 // pred_check_branch
      %4276 = sbr.rel (0) target = $region45
    $region44: #{tpu_custom_call.1} parent=1 // pred_region
      %s4278 = ssub.s32 256, 256
      %4279 = vsyncadd [#allocation4], %s4278
      %s4280 = sshll.u32 [#allocation11], 4
      %s4281 = int_to_ptr.vmem [resolvable:$true] %s4280
      %4286 = dma.vmem_to_hbm [thread:$0]  %s4281, 256, %s5, [#allocation4], 128, 128, 8
    $region45: #{tpu_custom_call.1} parent=1 // pred_fallthru
      _
    // Predicated region
    $region46: #{tpu_custom_call.1} parent=1 // pred_check
      _
    $region47: #{tpu_custom_call.1} parent=1 // pred_check_branch
      %4288 = sbr.rel (0) target = $region49
    $region48: #{tpu_custom_call.1} parent=1 // pred_region
      %4289 = dma.done [#allocation4], 256
    $region49: #{tpu_custom_call.1} parent=1 // pred_fallthru
      _
    %4290 = vsyncpa [#allocation3], 1
    %4291 = vsyncpa [#allocation6], 1
    %4292 = vsyncpa [#allocation9], 1
    %4293 = vsyncpa [#allocation4], 1

</llo_original>
